<compile_context>
chip_gen: v7x
topology: tpu7x:2x2x1
jax: 0.10.0
libtpu: 0.0.40
codegen_flags: <defaults>
</compile_context>

<pallas_src>
import functools

import numpy as np
import jax
import jax.numpy as jnp
from jax.experimental import pallas as pl
from jax.experimental.pallas import tpu as pltpu

_NEG_SLOPE = 0.01  # nn.LeakyReLU() default negative slope


# ----------------------------------------------------------------------------
# Fused Pallas kernel: one batch tile (TB samples) per grid step, 6 matmuls.
# ----------------------------------------------------------------------------
def _policy_kernel(x_ref,
                   m1, b1, m2, b2, m3, b3, m4, b4, mh, bh, w2, bl2,
                   o_ref, *, act_scale, act_bias):
    def mm(a, w_ref):
        return jnp.dot(a.astype(jnp.bfloat16), w_ref[...],
                       preferred_element_type=jnp.float32)

    def leaky(v):
        return jnp.where(v > 0, v, _NEG_SLOPE * v)

    x = x_ref[0]                                 # (TB, Cin*H*W) f32 -> bf16 on VPU
    h = leaky(mm(x, m1) + b1[...])               # conv1 (stride 2) + LeakyReLU
    h = leaky(mm(h, m2) + b2[...])               # conv2 (stride 2) + LeakyReLU
    h = leaky(mm(h, m3) + b3[...])               # conv3             + LeakyReLU
    h = mm(h, m4) + b4[...]                      # bilinear upsample ∘ conv4
    h = mm(h, mh) + bh[...]                      # mean_conv ∘ flatten ∘ Linear1
    out = mm(h, w2) + bl2[...]                   # Linear2
    out = jnp.tanh(out) * act_scale + act_bias
    o_ref[0] = out.astype(o_ref.dtype)


# ----------------------------------------------------------------------------
# Host-side, one-time lowering of the parameters to dense matmul form.
# ----------------------------------------------------------------------------
def _conv_dense(w, b, hin, win, stride, pad=2, in_order="hwc"):
    """5x5 cross-correlation conv (weights (KH,KW,Cin,Cout)) -> dense matrix.

    Maps a flattened input (layout `in_order`: 'hwc' or 'chw') to a flattened
    (h, w, c)-ordered output:  out = in_flat @ M + bias_row.
    """
    w = np.asarray(w, np.float64)
    b = np.asarray(b, np.float64)
    kh, kw, cin, cout = w.shape
    hout = (hin + 2 * pad - kh) // stride + 1
    wout = (win + 2 * pad - kw) // stride + 1
    if in_order == "hwc":
        m = np.zeros((hin, win, cin, hout, wout, cout), np.float64)
    else:  # "chw": raw NCHW flatten of the network input (no host transpose needed)
        m = np.zeros((cin, hin, win, hout, wout, cout), np.float64)
    for oh in range(hout):
        for i in range(kh):
            hh = stride * oh + i - pad
            if not (0 <= hh < hin):
                continue
            for ow in range(wout):
                for j in range(kw):
                    ww = stride * ow + j - pad
                    if not (0 <= ww < win):
                        continue
                    if in_order == "hwc":
                        m[hh, ww, :, oh, ow, :] += w[i, j]
                    else:
                        m[:, hh, ww, oh, ow, :] += w[i, j]
    m = m.reshape(hin * win * cin, hout * wout * cout)
    bias = np.tile(b, hout * wout)               # (oh, ow, co)-ordered bias row
    return m, bias, hout, wout


def _bilinear_matrix(n_in, n_out):
    # nn.Upsample(mode='bilinear', align_corners=True): src = dst*(in-1)/(out-1)
    coords = np.arange(n_out, dtype=np.float64) * (n_in - 1) / (n_out - 1)
    lo = np.floor(coords).astype(np.int64)
    hi = np.minimum(lo + 1, n_in - 1)
    frac = coords - lo
    a = np.zeros((n_out, n_in), np.float64)
    a[np.arange(n_out), lo] += 1.0 - frac
    a[np.arange(n_out), hi] += frac
    return a


def _bilinear_dense(h, w, c):
    """x2 bilinear upsample (align_corners=True) as a dense (h*w*c, 2h*2w*c) map."""
    ah = _bilinear_matrix(h, 2 * h)              # (2h, h)
    aw = _bilinear_matrix(w, 2 * w)              # (2w, w)
    m = np.einsum("uh,vw,cd->hwcuvd", ah, aw, np.eye(c, dtype=np.float64))
    return m.reshape(h * w * c, 4 * h * w * c)


def prepare_policy_params(params, in_spatial):
    """Lower raw parameters once (float64) to the flat tuple fed to the kernel."""
    H = W = in_spatial
    # conv1 takes the raw NCHW-flattened input -> build its matrix in 'chw' order.
    m1, b1, H, W = _conv_dense(params["c1_w"], params["c1_b"], H, W, 2, in_order="chw")
    m2, b2, H, W = _conv_dense(params["c2_w"], params["c2_b"], H, W, 2)
    m3, b3, H, W = _conv_dense(params["c3_w"], params["c3_b"], H, W, 1)
    c3 = params["c3_w"].shape[-1]
    mu = _bilinear_dense(H, W, c3)               # Upsample(x2, bilinear, align_corners=True)
    H, W = 2 * H, 2 * W
    m4, b4, H, W = _conv_dense(params["c4_w"], params["c4_b"], H, W, 1)
    m4u = mu @ m4                                # compose: upsample ∘ conv4 (no act between)
    m5, b5, H, W = _conv_dense(params["m_w"], params["m_b"], H, W, 1)
    # Head: mean_conv (Cout=1) ∘ Flatten ∘ Linear(num_inputs**2, hidden) composed.
    w1 = np.asarray(params["l1_w"], np.float64)
    bl1 = np.asarray(params["l1_b"], np.float64)
    assert w1.shape[0] == H * W, (w1.shape, H, W)
    mh = m5 @ w1                                 # (H*W*4, hidden)
    bh = b5 @ w1 + bl1                           # (hidden,)
    w2 = np.asarray(params["l2_w"], np.float64)
    bl2 = np.asarray(params["l2_b"], np.float64)

    def bf(a):
        return jnp.asarray(a, jnp.bfloat16)

    def frow(a):
        return jnp.asarray(a, jnp.float32).reshape(1, -1)

    return (bf(m1), frow(b1), bf(m2), frow(b2), bf(m3), frow(b3),
            bf(m4u), frow(b4), bf(mh), frow(bh), bf(w2), frow(bl2))


# ----------------------------------------------------------------------------
# Parameter init (deterministic, shapes follow the PyTorch __init__)
# ----------------------------------------------------------------------------
def init_params(key, num_inputs, num_actions, hidden_dim):
    def conv_init(k, kh, kw, cin, cout):         # default Conv2d init (kaiming-uniform-ish)
        kw_, kb = jax.random.split(k)
        bound = 1.0 / np.sqrt(kh * kw * cin)
        w = jax.random.uniform(kw_, (kh, kw, cin, cout), jnp.float32, -bound, bound)
        b = jax.random.uniform(kb, (cout,), jnp.float32, -bound, bound)
        return w, b

    def linear_init(k, fin, fout):               # weights_init_: xavier_uniform, bias=0
        bound = np.sqrt(6.0 / (fin + fout))
        w = jax.random.uniform(k, (fin, fout), jnp.float32, -bound, bound)
        return w, jnp.zeros((fout,), jnp.float32)

    ks = jax.random.split(key, 8)
    p = {}
    p["c1_w"], p["c1_b"] = conv_init(ks[0], 5, 5, 9, 16)
    p["c2_w"], p["c2_b"] = conv_init(ks[1], 5, 5, 16, 32)
    p["c3_w"], p["c3_b"] = conv_init(ks[2], 5, 5, 32, 16)
    p["c4_w"], p["c4_b"] = conv_init(ks[3], 5, 5, 16, 4)
    p["m_w"],  p["m_b"]  = conv_init(ks[4], 5, 5, 4, 1)
    p["l1_w"], p["l1_b"] = linear_init(ks[5], num_inputs ** 2, hidden_dim)
    p["l2_w"], p["l2_b"] = linear_init(ks[6], hidden_dim, num_actions)
    return p


# ----------------------------------------------------------------------------
# Forward pass (DeterministicPolicy.forward) — one pallas_call
# ----------------------------------------------------------------------------
def _pick_batch_tile(batch):
    # Target ~256 M-rows per MXU pass, but keep the grid length >= 2 so
    # dimension_semantics=("parallel",) can split the batch across v7x's 2 TCs.
    if batch <= 1:
        return 1
    tb = min(256, pl.cdiv(batch, 2))
    if tb > 8:
        tb = (tb // 8) * 8                       # sublane-align larger M tiles
    return max(tb, 1)


def deterministic_policy_forward(prep, state_nchw, action_scale=1.0,
                                 action_bias=0.0, batch_tile=None):
    (m1, b1, m2, b2, m3, b3, m4, b4, mh, bh, w2, bl2) = prep
    B, C, H, W = state_nchw.shape
    K = C * H * W
    A = w2.shape[1]

    TB = batch_tile if batch_tile is not None else _pick_batch_tile(B)
    Bg = pl.cdiv(B, TB)
    Bp = Bg * TB

    # conv1's matrix expects the raw NCHW flatten order -> this reshape is free
    # (no transpose, no extra HBM pass); cast to bf16 happens on the VPU in-kernel.
    x = state_nchw.reshape(B, K)
    if Bp != B:
        x = jnp.pad(x, ((0, Bp - B), (0, 0)))
    x = x.reshape(Bg, TB, K).astype(jnp.float32)

    weights = (m1, b1, m2, b2, m3, b3, m4, b4, mh, bh, w2, bl2)
    in_specs = [pl.BlockSpec((1, TB, K), lambda g: (g, 0, 0))]
    for wgt in weights:   # full-array blocks, constant index map -> VMEM-resident
        in_specs.append(pl.BlockSpec(wgt.shape, (lambda g, _n=wgt.ndim: (0,) * _n)))

    kernel = functools.partial(_policy_kernel,
                               act_scale=float(action_scale),
                               act_bias=float(action_bias))
    out = pl.pallas_call(
        kernel,
        grid=(Bg,),
        in_specs=in_specs,
        out_specs=pl.BlockSpec((1, TB, A), lambda g: (g, 0, 0)),
        out_shape=jax.ShapeDtypeStruct((Bg, TB, A), jnp.float32),
        compiler_params=pltpu.CompilerParams(
            dimension_semantics=("parallel",),   # shard batch tiles over TCs (v7x)
            vmem_limit_bytes=40 * 1024 * 1024),  # weights ~6 MB + TB<=256 blocks fit easily
    )(x, *weights)
    return out.reshape(Bp, A)[:B]


if __name__ == "__main__":
    # Small, shape-consistent config:
    #   input spatial 16 -> /2 -> /2 -> x2 upsample -> final spatial 8 = num_inputs
    batch, in_ch, spatial = 2, 9, 16
    num_inputs, hidden_dim, num_actions = 8, 32, 4

    key = jax.random.PRNGKey(0)
    k_param, k_state = jax.random.split(key)
    params = init_params(k_param, num_inputs, num_actions, hidden_dim)
    prep = prepare_policy_params(params, spatial)          # one-time dense lowering
    state = jax.random.normal(k_state, (batch, in_ch, spatial, spatial), jnp.float32)

    fwd = jax.jit(deterministic_policy_forward)
    mean = fwd(prep, state)
    jax.block_until_ready(mean)

    assert mean.shape == (batch, num_actions), mean.shape
    assert bool(jnp.all(jnp.isfinite(mean)))
    assert bool(jnp.all(jnp.abs(mean) <= 1.0))   # tanh-bounded (scale=1, bias=0)
    print("KERNEL_OK")
</pallas_src>

<mosaic_0001>
module attributes {stable_mosaic.version = 11 : i64} {
  func.func @_policy_kernel(%arg0: i32, %arg1: memref<1x1x2304xf32, #tpu.memory_space<vmem>>, %arg2: memref<2304x1024xbf16, #tpu.memory_space<vmem>>, %arg3: memref<1x1024xf32, #tpu.memory_space<vmem>>, %arg4: memref<1024x512xbf16, #tpu.memory_space<vmem>>, %arg5: memref<1x512xf32, #tpu.memory_space<vmem>>, %arg6: memref<512x256xbf16, #tpu.memory_space<vmem>>, %arg7: memref<1x256xf32, #tpu.memory_space<vmem>>, %arg8: memref<256x256xbf16, #tpu.memory_space<vmem>>, %arg9: memref<1x256xf32, #tpu.memory_space<vmem>>, %arg10: memref<256x32xbf16, #tpu.memory_space<vmem>>, %arg11: memref<1x32xf32, #tpu.memory_space<vmem>>, %arg12: memref<32x4xbf16, #tpu.memory_space<vmem>>, %arg13: memref<1x4xf32, #tpu.memory_space<vmem>>, %arg14: memref<1x1x4xf32, #tpu.memory_space<vmem>>) attributes {dimension_semantics = [#tpu.dimension_semantics<parallel>], iteration_bounds = array<i64: 2>, scalar_prefetch = 0 : i64, scratch_operands = 0 : i64, tpu.core_type = #tpu.core_type<tc>, window_params = [{transform_indices = @transform_0, window_bounds = array<i64: 1, 1, 2304>}, {pipeline_mode = #tpu.pipeline_mode<synchronous>, transform_indices = @transform_1, window_bounds = array<i64: 2304, 1024>}, {pipeline_mode = #tpu.pipeline_mode<synchronous>, transform_indices = @transform_2, window_bounds = array<i64: 1, 1024>}, {pipeline_mode = #tpu.pipeline_mode<synchronous>, transform_indices = @transform_3, window_bounds = array<i64: 1024, 512>}, {pipeline_mode = #tpu.pipeline_mode<synchronous>, transform_indices = @transform_4, window_bounds = array<i64: 1, 512>}, {pipeline_mode = #tpu.pipeline_mode<synchronous>, transform_indices = @transform_5, window_bounds = array<i64: 512, 256>}, {pipeline_mode = #tpu.pipeline_mode<synchronous>, transform_indices = @transform_6, window_bounds = array<i64: 1, 256>}, {pipeline_mode = #tpu.pipeline_mode<synchronous>, transform_indices = @transform_7, window_bounds = array<i64: 256, 256>}, {pipeline_mode = #tpu.pipeline_mode<synchronous>, transform_indices = @transform_8, window_bounds = array<i64: 1, 256>}, {pipeline_mode = #tpu.pipeline_mode<synchronous>, transform_indices = @transform_9, window_bounds = array<i64: 256, 32>}, {pipeline_mode = #tpu.pipeline_mode<synchronous>, transform_indices = @transform_10, window_bounds = array<i64: 1, 32>}, {pipeline_mode = #tpu.pipeline_mode<synchronous>, transform_indices = @transform_11, window_bounds = array<i64: 32, 4>}, {pipeline_mode = #tpu.pipeline_mode<synchronous>, transform_indices = @transform_12, window_bounds = array<i64: 1, 4>}, {transform_indices = @transform_13, window_bounds = array<i64: 1, 1, 4>}]} {
    %c0 = arith.constant 0 : index
    %c0_0 = arith.constant 0 : index
    %c0_1 = arith.constant 0 : index
    %0 = vector.load %arg1[%c0, %c0_0, %c0_1] : memref<1x1x2304xf32, #tpu.memory_space<vmem>>, vector<1x1x2304xf32>
    %1 = vector.shape_cast %0 : vector<1x1x2304xf32> to vector<1x2304xf32>
    %2 = arith.truncf %1 : vector<1x2304xf32> to vector<1x2304xbf16>
    %c0_2 = arith.constant 0 : index
    %c0_3 = arith.constant 0 : index
    %3 = vector.load %arg2[%c0_2, %c0_3] : memref<2304x1024xbf16, #tpu.memory_space<vmem>>, vector<2304x1024xbf16>
    %cst = arith.constant dense<0.000000e+00> : vector<1x1024xf32>
    %4 = tpu.matmul %2, %3, %cst {dimension_numbers = #tpu.dot_dimension_numbers<[1], [0], [0], [1], [0, 0, 1, 1], [], []>} : vector<1x2304xbf16>, vector<2304x1024xbf16>, vector<1x1024xf32> -> vector<1x1024xf32>
    %c0_4 = arith.constant 0 : index
    %c0_5 = arith.constant 0 : index
    %5 = vector.load %arg3[%c0_4, %c0_5] : memref<1x1024xf32, #tpu.memory_space<vmem>>, vector<1x1024xf32>
    %6 = arith.addf %4, %5 : vector<1x1024xf32>
    %cst_6 = arith.constant 0.000000e+00 : f32
    %7 = vector.broadcast %cst_6 : f32 to vector<1x1024xf32>
    %8 = arith.cmpf ogt, %6, %7 : vector<1x1024xf32>
    %cst_7 = arith.constant 0.00999999977 : f32
    %9 = vector.broadcast %cst_7 : f32 to vector<1x1024xf32>
    %10 = arith.mulf %9, %6 : vector<1x1024xf32>
    %11 = arith.select %8, %6, %10 : vector<1x1024xi1>, vector<1x1024xf32>
    %12 = arith.truncf %11 : vector<1x1024xf32> to vector<1x1024xbf16>
    %c0_8 = arith.constant 0 : index
    %c0_9 = arith.constant 0 : index
    %13 = vector.load %arg4[%c0_8, %c0_9] : memref<1024x512xbf16, #tpu.memory_space<vmem>>, vector<1024x512xbf16>
    %cst_10 = arith.constant dense<0.000000e+00> : vector<1x512xf32>
    %14 = tpu.matmul %12, %13, %cst_10 {dimension_numbers = #tpu.dot_dimension_numbers<[1], [0], [0], [1], [0, 0, 1, 1], [], []>} : vector<1x1024xbf16>, vector<1024x512xbf16>, vector<1x512xf32> -> vector<1x512xf32>
    %c0_11 = arith.constant 0 : index
    %c0_12 = arith.constant 0 : index
    %15 = vector.load %arg5[%c0_11, %c0_12] : memref<1x512xf32, #tpu.memory_space<vmem>>, vector<1x512xf32>
    %16 = arith.addf %14, %15 : vector<1x512xf32>
    %cst_13 = arith.constant 0.000000e+00 : f32
    %17 = vector.broadcast %cst_13 : f32 to vector<1x512xf32>
    %18 = arith.cmpf ogt, %16, %17 : vector<1x512xf32>
    %cst_14 = arith.constant 0.00999999977 : f32
    %19 = vector.broadcast %cst_14 : f32 to vector<1x512xf32>
    %20 = arith.mulf %19, %16 : vector<1x512xf32>
    %21 = arith.select %18, %16, %20 : vector<1x512xi1>, vector<1x512xf32>
    %22 = arith.truncf %21 : vector<1x512xf32> to vector<1x512xbf16>
    %c0_15 = arith.constant 0 : index
    %c0_16 = arith.constant 0 : index
    %23 = vector.load %arg6[%c0_15, %c0_16] : memref<512x256xbf16, #tpu.memory_space<vmem>>, vector<512x256xbf16>
    %cst_17 = arith.constant dense<0.000000e+00> : vector<1x256xf32>
    %24 = tpu.matmul %22, %23, %cst_17 {dimension_numbers = #tpu.dot_dimension_numbers<[1], [0], [0], [1], [0, 0, 1, 1], [], []>} : vector<1x512xbf16>, vector<512x256xbf16>, vector<1x256xf32> -> vector<1x256xf32>
    %c0_18 = arith.constant 0 : index
    %c0_19 = arith.constant 0 : index
    %25 = vector.load %arg7[%c0_18, %c0_19] : memref<1x256xf32, #tpu.memory_space<vmem>>, vector<1x256xf32>
    %26 = arith.addf %24, %25 : vector<1x256xf32>
    %cst_20 = arith.constant 0.000000e+00 : f32
    %27 = vector.broadcast %cst_20 : f32 to vector<1x256xf32>
    %28 = arith.cmpf ogt, %26, %27 : vector<1x256xf32>
    %cst_21 = arith.constant 0.00999999977 : f32
    %29 = vector.broadcast %cst_21 : f32 to vector<1x256xf32>
    %30 = arith.mulf %29, %26 : vector<1x256xf32>
    %31 = arith.select %28, %26, %30 : vector<1x256xi1>, vector<1x256xf32>
    %32 = arith.truncf %31 : vector<1x256xf32> to vector<1x256xbf16>
    %c0_22 = arith.constant 0 : index
    %c0_23 = arith.constant 0 : index
    %33 = vector.load %arg8[%c0_22, %c0_23] : memref<256x256xbf16, #tpu.memory_space<vmem>>, vector<256x256xbf16>
    %cst_24 = arith.constant dense<0.000000e+00> : vector<1x256xf32>
    %34 = tpu.matmul %32, %33, %cst_24 {dimension_numbers = #tpu.dot_dimension_numbers<[1], [0], [0], [1], [0, 0, 1, 1], [], []>} : vector<1x256xbf16>, vector<256x256xbf16>, vector<1x256xf32> -> vector<1x256xf32>
    %c0_25 = arith.constant 0 : index
    %c0_26 = arith.constant 0 : index
    %35 = vector.load %arg9[%c0_25, %c0_26] : memref<1x256xf32, #tpu.memory_space<vmem>>, vector<1x256xf32>
    %36 = arith.addf %34, %35 : vector<1x256xf32>
    %37 = arith.truncf %36 : vector<1x256xf32> to vector<1x256xbf16>
    %c0_27 = arith.constant 0 : index
    %c0_28 = arith.constant 0 : index
    %38 = vector.load %arg10[%c0_27, %c0_28] : memref<256x32xbf16, #tpu.memory_space<vmem>>, vector<256x32xbf16>
    %cst_29 = arith.constant dense<0.000000e+00> : vector<1x32xf32>
    %39 = tpu.matmul %37, %38, %cst_29 {dimension_numbers = #tpu.dot_dimension_numbers<[1], [0], [0], [1], [0, 0, 1, 1], [], []>} : vector<1x256xbf16>, vector<256x32xbf16>, vector<1x32xf32> -> vector<1x32xf32>
    %c0_30 = arith.constant 0 : index
    %c0_31 = arith.constant 0 : index
    %40 = vector.load %arg11[%c0_30, %c0_31] : memref<1x32xf32, #tpu.memory_space<vmem>>, vector<1x32xf32>
    %41 = arith.addf %39, %40 : vector<1x32xf32>
    %42 = arith.truncf %41 : vector<1x32xf32> to vector<1x32xbf16>
    %c0_32 = arith.constant 0 : index
    %c0_33 = arith.constant 0 : index
    %43 = vector.load %arg12[%c0_32, %c0_33] : memref<32x4xbf16, #tpu.memory_space<vmem>>, vector<32x4xbf16>
    %cst_34 = arith.constant dense<0.000000e+00> : vector<1x4xf32>
    %44 = tpu.matmul %42, %43, %cst_34 {dimension_numbers = #tpu.dot_dimension_numbers<[1], [0], [0], [1], [0, 0, 1, 1], [], []>} : vector<1x32xbf16>, vector<32x4xbf16>, vector<1x4xf32> -> vector<1x4xf32>
    %c0_35 = arith.constant 0 : index
    %c0_36 = arith.constant 0 : index
    %45 = vector.load %arg13[%c0_35, %c0_36] : memref<1x4xf32, #tpu.memory_space<vmem>>, vector<1x4xf32>
    %46 = arith.addf %44, %45 : vector<1x4xf32>
    %47 = math.tanh %46 : vector<1x4xf32>
    %cst_37 = arith.constant 1.000000e+00 : f32
    %48 = vector.broadcast %cst_37 : f32 to vector<1x4xf32>
    %49 = arith.mulf %47, %48 : vector<1x4xf32>
    %cst_38 = arith.constant 0.000000e+00 : f32
    %50 = vector.broadcast %cst_38 : f32 to vector<1x4xf32>
    %51 = arith.addf %49, %50 : vector<1x4xf32>
    %c0_39 = arith.constant 0 : index
    %c0_40 = arith.constant 0 : index
    %c0_41 = arith.constant 0 : index
    %52 = vector.load %arg14[%c0_39, %c0_40, %c0_41] : memref<1x1x4xf32, #tpu.memory_space<vmem>>, vector<1x1x4xf32>
    %53 = vector.shape_cast %52 : vector<1x1x4xf32> to vector<1x4xf32>
    %54 = vector.shape_cast %51 : vector<1x4xf32> to vector<1x1x4xf32>
    tpu.vector_store %arg14[%c0_39, %c0_40, %c0_41], %54 {strides = array<i32>} : memref<1x1x4xf32, #tpu.memory_space<vmem>>, vector<1x1x4xf32>,
    return
  }
  func.func @transform_0(%arg0: i32) -> (i32, i32, i32) {
    %c0_i32 = arith.constant 0 : i32
    %c0_i32_0 = arith.constant 0 : i32
    %c0_i32_1 = arith.constant 0 : i32
    return %arg0, %c0_i32, %c0_i32_0 : i32, i32, i32
  }
  func.func @transform_1(%arg0: i32) -> (i32, i32) {
    %c0_i32 = arith.constant 0 : i32
    %c0_i32_0 = arith.constant 0 : i32
    %c0_i32_1 = arith.constant 0 : i32
    return %c0_i32, %c0_i32_0 : i32, i32
  }
  func.func @transform_2(%arg0: i32) -> (i32, i32) {
    %c0_i32 = arith.constant 0 : i32
    %c0_i32_0 = arith.constant 0 : i32
    %c0_i32_1 = arith.constant 0 : i32
    return %c0_i32, %c0_i32_0 : i32, i32
  }
  func.func @transform_3(%arg0: i32) -> (i32, i32) {
    %c0_i32 = arith.constant 0 : i32
    %c0_i32_0 = arith.constant 0 : i32
    %c0_i32_1 = arith.constant 0 : i32
    return %c0_i32, %c0_i32_0 : i32, i32
  }
  func.func @transform_4(%arg0: i32) -> (i32, i32) {
    %c0_i32 = arith.constant 0 : i32
    %c0_i32_0 = arith.constant 0 : i32
    %c0_i32_1 = arith.constant 0 : i32
    return %c0_i32, %c0_i32_0 : i32, i32
  }
  func.func @transform_5(%arg0: i32) -> (i32, i32) {
    %c0_i32 = arith.constant 0 : i32
    %c0_i32_0 = arith.constant 0 : i32
    %c0_i32_1 = arith.constant 0 : i32
    return %c0_i32, %c0_i32_0 : i32, i32
  }
  func.func @transform_6(%arg0: i32) -> (i32, i32) {
    %c0_i32 = arith.constant 0 : i32
    %c0_i32_0 = arith.constant 0 : i32
    %c0_i32_1 = arith.constant 0 : i32
    return %c0_i32, %c0_i32_0 : i32, i32
  }
  func.func @transform_7(%arg0: i32) -> (i32, i32) {
    %c0_i32 = arith.constant 0 : i32
    %c0_i32_0 = arith.constant 0 : i32
    %c0_i32_1 = arith.constant 0 : i32
    return %c0_i32, %c0_i32_0 : i32, i32
  }
  func.func @transform_8(%arg0: i32) -> (i32, i32) {
    %c0_i32 = arith.constant 0 : i32
    %c0_i32_0 = arith.constant 0 : i32
    %c0_i32_1 = arith.constant 0 : i32
    return %c0_i32, %c0_i32_0 : i32, i32
  }
  func.func @transform_9(%arg0: i32) -> (i32, i32) {
    %c0_i32 = arith.constant 0 : i32
    %c0_i32_0 = arith.constant 0 : i32
    %c0_i32_1 = arith.constant 0 : i32
    return %c0_i32, %c0_i32_0 : i32, i32
  }
  func.func @transform_10(%arg0: i32) -> (i32, i32) {
    %c0_i32 = arith.constant 0 : i32
    %c0_i32_0 = arith.constant 0 : i32
    %c0_i32_1 = arith.constant 0 : i32
    return %c0_i32, %c0_i32_0 : i32, i32
  }
  func.func @transform_11(%arg0: i32) -> (i32, i32) {
    %c0_i32 = arith.constant 0 : i32
    %c0_i32_0 = arith.constant 0 : i32
    %c0_i32_1 = arith.constant 0 : i32
    return %c0_i32, %c0_i32_0 : i32, i32
  }
  func.func @transform_12(%arg0: i32) -> (i32, i32) {
    %c0_i32 = arith.constant 0 : i32
    %c0_i32_0 = arith.constant 0 : i32
    %c0_i32_1 = arith.constant 0 : i32
    return %c0_i32, %c0_i32_0 : i32, i32
  }
  func.func @transform_13(%arg0: i32) -> (i32, i32, i32) {
    %c0_i32 = arith.constant 0 : i32
    %c0_i32_0 = arith.constant 0 : i32
    %c0_i32_1 = arith.constant 0 : i32
    return %arg0, %c0_i32, %c0_i32_0 : i32, i32, i32
  }
}

</mosaic_0001>

<llo_original>
// kernel: deterministic_policy_forward.1
$region0: #{deterministic_policy_forward.1}
  #allocation0 [shape = 'u32[]', space=smem, size = 0x4, offset = 0x4, fixed_abs, tag = 'smem constant byte address 0x4 - core index']
  #allocation1 [shape = 'u32[144,128]{1,0:T(1,128)}', space=vmem, size = 0x12000, scoped, tag = 'internal scratch']
  %s0 = inlined_call_operand.vmem [shape: f32[2,1,2304], index: 0, kind: input, shape index: {}]
  %s1 = inlined_call_operand.hbm [shape: bf16[2304,1024], index: 1, kind: input, shape index: {}]
  %s2 = inlined_call_operand.hbm [shape: f32[1,1024], index: 2, kind: input, shape index: {}]
  %s3 = inlined_call_operand.hbm [shape: bf16[1024,512], index: 3, kind: input, shape index: {}]
  %s4 = inlined_call_operand.hbm [shape: f32[1,512], index: 4, kind: input, shape index: {}]
  %s5 = inlined_call_operand.hbm [shape: bf16[512,256], index: 5, kind: input, shape index: {}]
  %s6 = inlined_call_operand.hbm [shape: f32[1,256], index: 6, kind: input, shape index: {}]
  %s7 = inlined_call_operand.hbm [shape: bf16[256,256], index: 7, kind: input, shape index: {}]
  %s8 = inlined_call_operand.hbm [shape: f32[1,256], index: 8, kind: input, shape index: {}]
  %s9 = inlined_call_operand.vmem [shape: bf16[256,32], index: 9, kind: input, shape index: {}]
  %s10 = inlined_call_operand.hbm [shape: f32[1,32], index: 10, kind: input, shape index: {}]
  %s11 = inlined_call_operand.vmem [shape: bf16[32,4], index: 11, kind: input, shape index: {}]
  %s12 = inlined_call_operand.hbm [shape: f32[1,4], index: 12, kind: input, shape index: {}]
  %s13 = inlined_call_operand.hbm [shape: f32[2,1,4], index: 13, kind: output, shape index: {}]
  %s14 = sld [smem:[#allocation0]]
  $region125: #{deterministic_policy_forward.1} parent=0
    _
  %s16 = ssub.s32 1, %s14
  %s17 = scalar_select 0, %s16, %s14
  $region1: #{deterministic_policy_forward.1} parent=0
    #allocation2 [shape = 'u8[4718592]{0}', space=vmem, size = 0x480000, scoped, tag = 'input window, operand 1, single buffered']
    #allocation3 [shape = 's32[2]{0}', space=sflag, size = 0x8, scoped, tag = 'scoped memory for deterministic_policy_forward.1']
    #allocation4 [shape = 's32[2]{0}', space=sflag, size = 0x8, scoped, tag = 'scoped memory for deterministic_policy_forward.1']
    #allocation5 [shape = 'u8[4096]{0}', space=vmem, size = 0x1000, scoped, tag = 'input window, operand 2, single buffered']
    #allocation6 [shape = 's32[1]{0}', space=sflag, size = 0x4, scoped, tag = 'scoped memory for deterministic_policy_forward.1']
    #allocation7 [shape = 'u8[1048576]{0}', space=vmem, size = 0x100000, scoped, tag = 'input window, operand 3, single buffered']
    #allocation8 [shape = 'u8[2048]{0}', space=vmem, size = 0x800, scoped, tag = 'input window, operand 4, single buffered']
    #allocation9 [shape = 's32[1]{0}', space=sflag, size = 0x4, scoped, tag = 'scoped memory for deterministic_policy_forward.1']
    #allocation10 [shape = 'u8[262144]{0}', space=vmem, size = 0x40000, scoped, tag = 'input window, operand 5, single buffered']
    #allocation11 [shape = 'u8[1024]{0}', space=vmem, size = 0x400, scoped, tag = 'input window, operand 6, single buffered']
    #allocation12 [shape = 's32[1]{0}', space=sflag, size = 0x4, scoped, tag = 'scoped memory for deterministic_policy_forward.1']
    #allocation13 [shape = 'u8[131072]{0}', space=vmem, size = 0x20000, scoped, tag = 'input window, operand 7, single buffered']
    #allocation14 [shape = 'u8[1024]{0}', space=vmem, size = 0x400, scoped, tag = 'input window, operand 8, single buffered']
    #allocation15 [shape = 's32[1]{0}', space=sflag, size = 0x4, scoped, tag = 'scoped memory for deterministic_policy_forward.1']
    #allocation16 [shape = 'u8[512]{0}', space=vmem, size = 0x400, scoped, tag = 'input window, operand 10, single buffered']
    #allocation17 [shape = 'u8[512]{0}', space=vmem, size = 0x400, scoped, tag = 'input window, operand 12, single buffered']
    #allocation18 [shape = 's32[1]{0}', space=sflag, size = 0x4, scoped, tag = 'scoped memory for deterministic_policy_forward.1']
    #allocation19 [shape = 'u8[1024]{0}', space=vmem, size = 0x400, scoped, tag = 'output window, operand 0']
    %18 = vsyncpa [#allocation3], 0
    %19 = vsyncpa [#allocation6], 0
    %20 = vsyncpa [#allocation9], 0
    %21 = vsyncpa [#allocation12], 0
    %22 = vsyncpa [#allocation15], 0
    %23 = vsyncpa [#allocation18], 0
    %24 = vsyncpa [#allocation4], 0
    %s25 = scalar_lea.sflag [#allocation4], 1
    %26 = vsyncpa %s25, 0
    loop: start=0, step=1, limit=4
    $region2: #{deterministic_policy_forward.1} parent=1 // loop_pre_header
      _
    $region3: #{deterministic_policy_forward.1} parent=1 // loop_header
      %s28 = sphi 0, %s32
      %p29 = scmp.ge.s32.totalorder %s28, 4
      %s38 = sphi 0, %s40
      %s41 = sphi 0, %s38
      %s42 = sphi 0, %s41
      %s58 = sphi 0, %s42
      %s62 = sphi 0, %s62
      %s64 = sphi 0, %s62
      %s65 = sphi 0, %s64
      %s79 = sphi 0, %s65
      %s83 = sphi 0, %s83
      %s85 = sphi 0, %s83
      %s86 = sphi 0, %s85
      %s100 = sphi 0, %s86
      %s104 = sphi 0, %s104
      %s106 = sphi 0, %s104
      %s107 = sphi 0, %s106
      %s121 = sphi 0, %s107
      %s125 = sphi 0, %s125
      %s127 = sphi 0, %s125
      %s128 = sphi 0, %s127
      %s142 = sphi 0, %s128
      %s146 = sphi 0, %s146
      %s148 = sphi 0, %s146
      %s149 = sphi 0, %s148
      %s163 = sphi 0, %s149
      %s167 = sphi 0, %s167
      %s169 = sphi 0, %s167
      %s170 = sphi 0, %s169
      %s184 = sphi 0, %s170
      %s188 = sphi 0, %s188
      %s190 = sphi 0, %s188
      %s191 = sphi 0, %s190
      %s205 = sphi 0, %s191
      %s209 = sphi 0, %s209
      %s211 = sphi 0, %s209
      %s212 = sphi 0, %s211
      %s226 = sphi 0, %s212
      %s230 = sphi 0, %s230
      %s232 = sphi 0, %s230
      %s233 = sphi 0, %s232
      %s247 = sphi 0, %s233
      %s251 = sphi 0, %s251
      %s253 = sphi 0, %s251
      %s254 = sphi 0, %s253
      %s268 = sphi 0, %s254
      %s272 = sphi 0, %s272
      %s274 = sphi 0, %s272
      %s275 = sphi 0, %s274
      %s289 = sphi 0, %s275
      %s293 = sphi 0, %s293
      %s295 = sphi 0, %s293
      %s296 = sphi 0, %s295
      %s310 = sphi 0, %s296
      %s316 = sphi 0, %s318
      %s319 = sphi 0, %s316
      %s320 = sphi 0, %s319
      %s336 = sphi 0, %s320
    $region4: #{deterministic_policy_forward.1} parent=1 // loop_header_branch
      %31 = sbr.rel (%p29) target = $region8
    $region5: #{deterministic_policy_forward.1} parent=1 // loop_body
      %s33 = ssub.s32 %s28, 1
      %s34 = ssub.s32 %s28, 2
      %s35 = sadd.s32 %s28, 1
      %s36 = ssub.s32 %s28, %s35
      %p37 = scmp.eq.s32.totalorder %s36, 0
      %s39 = sadd.s32 %s38, 1
      %s40 = scalar_select %p37, %s38, %s39
      %p43 = pneg %p37
      %p44 = scmp.eq.s32.totalorder %s28, 1
      %p45 = por %p43, %p44
      %p46 = scmp.ne.s32.totalorder %s38, %s41
      %p47 = scmp.eq.s32.totalorder %s28, 0
      %p48 = por %p46, %p47
      %p49 = scmp.ne.s32.totalorder %s38, %s41
      %p50 = scmp.eq.s32.totalorder %s33, 1
      %p51 = por %p49, %p50
      %p52 = scmp.ne.s32.totalorder %s41, %s42
      %p53 = scmp.eq.s32.totalorder %s33, 0
      %p54 = por %p52, %p53
      %p55 = scmp.ne.s32.totalorder %s41, %s42
      %p56 = scmp.eq.s32.totalorder %s34, 1
      %p57 = por %p55, %p56
      %p59 = scmp.ne.s32.totalorder %s42, %s58
      %p60 = scmp.eq.s32.totalorder %s34, 0
      %p61 = por %p59, %p60
      %s63 = sadd.s32 %s62, 1
      %p66 = scmp.eq.s32.totalorder %s28, 1
      %p67 = scmp.ne.s32.totalorder %s62, %s64
      %p68 = scmp.eq.s32.totalorder %s28, 0
      %p69 = por %p67, %p68
      %p70 = scmp.ne.s32.totalorder %s62, %s64
      %p71 = scmp.eq.s32.totalorder %s33, 1
      %p72 = por %p70, %p71
      %p73 = scmp.ne.s32.totalorder %s64, %s65
      %p74 = scmp.eq.s32.totalorder %s33, 0
      %p75 = por %p73, %p74
      %p76 = scmp.ne.s32.totalorder %s64, %s65
      %p77 = scmp.eq.s32.totalorder %s34, 1
      %p78 = por %p76, %p77
      %p80 = scmp.ne.s32.totalorder %s65, %s79
      %p81 = scmp.eq.s32.totalorder %s34, 0
      %p82 = por %p80, %p81
      %s84 = sadd.s32 %s83, 1
      %p87 = scmp.eq.s32.totalorder %s28, 1
      %p88 = scmp.ne.s32.totalorder %s83, %s85
      %p89 = scmp.eq.s32.totalorder %s28, 0
      %p90 = por %p88, %p89
      %p91 = scmp.ne.s32.totalorder %s83, %s85
      %p92 = scmp.eq.s32.totalorder %s33, 1
      %p93 = por %p91, %p92
      %p94 = scmp.ne.s32.totalorder %s85, %s86
      %p95 = scmp.eq.s32.totalorder %s33, 0
      %p96 = por %p94, %p95
      %p97 = scmp.ne.s32.totalorder %s85, %s86
      %p98 = scmp.eq.s32.totalorder %s34, 1
      %p99 = por %p97, %p98
      %p101 = scmp.ne.s32.totalorder %s86, %s100
      %p102 = scmp.eq.s32.totalorder %s34, 0
      %p103 = por %p101, %p102
      %s105 = sadd.s32 %s104, 1
      %p108 = scmp.eq.s32.totalorder %s28, 1
      %p109 = scmp.ne.s32.totalorder %s104, %s106
      %p110 = scmp.eq.s32.totalorder %s28, 0
      %p111 = por %p109, %p110
      %p112 = scmp.ne.s32.totalorder %s104, %s106
      %p113 = scmp.eq.s32.totalorder %s33, 1
      %p114 = por %p112, %p113
      %p115 = scmp.ne.s32.totalorder %s106, %s107
      %p116 = scmp.eq.s32.totalorder %s33, 0
      %p117 = por %p115, %p116
      %p118 = scmp.ne.s32.totalorder %s106, %s107
      %p119 = scmp.eq.s32.totalorder %s34, 1
      %p120 = por %p118, %p119
      %p122 = scmp.ne.s32.totalorder %s107, %s121
      %p123 = scmp.eq.s32.totalorder %s34, 0
      %p124 = por %p122, %p123
      %s126 = sadd.s32 %s125, 1
      %p129 = scmp.eq.s32.totalorder %s28, 1
      %p130 = scmp.ne.s32.totalorder %s125, %s127
      %p131 = scmp.eq.s32.totalorder %s28, 0
      %p132 = por %p130, %p131
      %p133 = scmp.ne.s32.totalorder %s125, %s127
      %p134 = scmp.eq.s32.totalorder %s33, 1
      %p135 = por %p133, %p134
      %p136 = scmp.ne.s32.totalorder %s127, %s128
      %p137 = scmp.eq.s32.totalorder %s33, 0
      %p138 = por %p136, %p137
      %p139 = scmp.ne.s32.totalorder %s127, %s128
      %p140 = scmp.eq.s32.totalorder %s34, 1
      %p141 = por %p139, %p140
      %p143 = scmp.ne.s32.totalorder %s128, %s142
      %p144 = scmp.eq.s32.totalorder %s34, 0
      %p145 = por %p143, %p144
      %s147 = sadd.s32 %s146, 1
      %p150 = scmp.eq.s32.totalorder %s28, 1
      %p151 = scmp.ne.s32.totalorder %s146, %s148
      %p152 = scmp.eq.s32.totalorder %s28, 0
      %p153 = por %p151, %p152
      %p154 = scmp.ne.s32.totalorder %s146, %s148
      %p155 = scmp.eq.s32.totalorder %s33, 1
      %p156 = por %p154, %p155
      %p157 = scmp.ne.s32.totalorder %s148, %s149
      %p158 = scmp.eq.s32.totalorder %s33, 0
      %p159 = por %p157, %p158
      %p160 = scmp.ne.s32.totalorder %s148, %s149
      %p161 = scmp.eq.s32.totalorder %s34, 1
      %p162 = por %p160, %p161
      %p164 = scmp.ne.s32.totalorder %s149, %s163
      %p165 = scmp.eq.s32.totalorder %s34, 0
      %p166 = por %p164, %p165
      %s168 = sadd.s32 %s167, 1
      %p171 = scmp.eq.s32.totalorder %s28, 1
      %p172 = scmp.ne.s32.totalorder %s167, %s169
      %p173 = scmp.eq.s32.totalorder %s28, 0
      %p174 = por %p172, %p173
      %p175 = scmp.ne.s32.totalorder %s167, %s169
      %p176 = scmp.eq.s32.totalorder %s33, 1
      %p177 = por %p175, %p176
      %p178 = scmp.ne.s32.totalorder %s169, %s170
      %p179 = scmp.eq.s32.totalorder %s33, 0
      %p180 = por %p178, %p179
      %p181 = scmp.ne.s32.totalorder %s169, %s170
      %p182 = scmp.eq.s32.totalorder %s34, 1
      %p183 = por %p181, %p182
      %p185 = scmp.ne.s32.totalorder %s170, %s184
      %p186 = scmp.eq.s32.totalorder %s34, 0
      %p187 = por %p185, %p186
      %s189 = sadd.s32 %s188, 1
      %p192 = scmp.eq.s32.totalorder %s28, 1
      %p193 = scmp.ne.s32.totalorder %s188, %s190
      %p194 = scmp.eq.s32.totalorder %s28, 0
      %p195 = por %p193, %p194
      %p196 = scmp.ne.s32.totalorder %s188, %s190
      %p197 = scmp.eq.s32.totalorder %s33, 1
      %p198 = por %p196, %p197
      %p199 = scmp.ne.s32.totalorder %s190, %s191
      %p200 = scmp.eq.s32.totalorder %s33, 0
      %p201 = por %p199, %p200
      %p202 = scmp.ne.s32.totalorder %s190, %s191
      %p203 = scmp.eq.s32.totalorder %s34, 1
      %p204 = por %p202, %p203
      %p206 = scmp.ne.s32.totalorder %s191, %s205
      %p207 = scmp.eq.s32.totalorder %s34, 0
      %p208 = por %p206, %p207
      %s210 = sadd.s32 %s209, 1
      %p213 = scmp.eq.s32.totalorder %s28, 1
      %p214 = scmp.ne.s32.totalorder %s209, %s211
      %p215 = scmp.eq.s32.totalorder %s28, 0
      %p216 = por %p214, %p215
      %p217 = scmp.ne.s32.totalorder %s209, %s211
      %p218 = scmp.eq.s32.totalorder %s33, 1
      %p219 = por %p217, %p218
      %p220 = scmp.ne.s32.totalorder %s211, %s212
      %p221 = scmp.eq.s32.totalorder %s33, 0
      %p222 = por %p220, %p221
      %p223 = scmp.ne.s32.totalorder %s211, %s212
      %p224 = scmp.eq.s32.totalorder %s34, 1
      %p225 = por %p223, %p224
      %p227 = scmp.ne.s32.totalorder %s212, %s226
      %p228 = scmp.eq.s32.totalorder %s34, 0
      %p229 = por %p227, %p228
      %s231 = sadd.s32 %s230, 1
      %p234 = scmp.eq.s32.totalorder %s28, 1
      %p235 = scmp.ne.s32.totalorder %s230, %s232
      %p236 = scmp.eq.s32.totalorder %s28, 0
      %p237 = por %p235, %p236
      %p238 = scmp.ne.s32.totalorder %s230, %s232
      %p239 = scmp.eq.s32.totalorder %s33, 1
      %p240 = por %p238, %p239
      %p241 = scmp.ne.s32.totalorder %s232, %s233
      %p242 = scmp.eq.s32.totalorder %s33, 0
      %p243 = por %p241, %p242
      %p244 = scmp.ne.s32.totalorder %s232, %s233
      %p245 = scmp.eq.s32.totalorder %s34, 1
      %p246 = por %p244, %p245
      %p248 = scmp.ne.s32.totalorder %s233, %s247
      %p249 = scmp.eq.s32.totalorder %s34, 0
      %p250 = por %p248, %p249
      %s252 = sadd.s32 %s251, 1
      %p255 = scmp.eq.s32.totalorder %s28, 1
      %p256 = scmp.ne.s32.totalorder %s251, %s253
      %p257 = scmp.eq.s32.totalorder %s28, 0
      %p258 = por %p256, %p257
      %p259 = scmp.ne.s32.totalorder %s251, %s253
      %p260 = scmp.eq.s32.totalorder %s33, 1
      %p261 = por %p259, %p260
      %p262 = scmp.ne.s32.totalorder %s253, %s254
      %p263 = scmp.eq.s32.totalorder %s33, 0
      %p264 = por %p262, %p263
      %p265 = scmp.ne.s32.totalorder %s253, %s254
      %p266 = scmp.eq.s32.totalorder %s34, 1
      %p267 = por %p265, %p266
      %p269 = scmp.ne.s32.totalorder %s254, %s268
      %p270 = scmp.eq.s32.totalorder %s34, 0
      %p271 = por %p269, %p270
      %s273 = sadd.s32 %s272, 1
      %p276 = scmp.eq.s32.totalorder %s28, 1
      %p277 = scmp.ne.s32.totalorder %s272, %s274
      %p278 = scmp.eq.s32.totalorder %s28, 0
      %p279 = por %p277, %p278
      %p280 = scmp.ne.s32.totalorder %s272, %s274
      %p281 = scmp.eq.s32.totalorder %s33, 1
      %p282 = por %p280, %p281
      %p283 = scmp.ne.s32.totalorder %s274, %s275
      %p284 = scmp.eq.s32.totalorder %s33, 0
      %p285 = por %p283, %p284
      %p286 = scmp.ne.s32.totalorder %s274, %s275
      %p287 = scmp.eq.s32.totalorder %s34, 1
      %p288 = por %p286, %p287
      %p290 = scmp.ne.s32.totalorder %s275, %s289
      %p291 = scmp.eq.s32.totalorder %s34, 0
      %p292 = por %p290, %p291
      %s294 = sadd.s32 %s293, 1
      %p297 = scmp.eq.s32.totalorder %s28, 1
      %p298 = scmp.ne.s32.totalorder %s293, %s295
      %p299 = scmp.eq.s32.totalorder %s28, 0
      %p300 = por %p298, %p299
      %p301 = scmp.ne.s32.totalorder %s293, %s295
      %p302 = scmp.eq.s32.totalorder %s33, 1
      %p303 = por %p301, %p302
      %p304 = scmp.ne.s32.totalorder %s295, %s296
      %p305 = scmp.eq.s32.totalorder %s33, 0
      %p306 = por %p304, %p305
      %p307 = scmp.ne.s32.totalorder %s295, %s296
      %p308 = scmp.eq.s32.totalorder %s34, 1
      %p309 = por %p307, %p308
      %p311 = scmp.ne.s32.totalorder %s296, %s310
      %p312 = scmp.eq.s32.totalorder %s34, 0
      %p313 = por %p311, %p312
      %s314 = ssub.s32 %s28, %s35
      %p315 = scmp.eq.s32.totalorder %s314, 0
      %s317 = sadd.s32 %s316, 1
      %s318 = scalar_select %p315, %s316, %s317
      %p321 = pneg %p315
      %p322 = scmp.eq.s32.totalorder %s28, 1
      %p323 = por %p321, %p322
      %p324 = scmp.ne.s32.totalorder %s316, %s319
      %p325 = scmp.eq.s32.totalorder %s28, 0
      %p326 = por %p324, %p325
      %p327 = scmp.ne.s32.totalorder %s316, %s319
      %p328 = scmp.eq.s32.totalorder %s33, 1
      %p329 = por %p327, %p328
      %p330 = scmp.ne.s32.totalorder %s319, %s320
      %p331 = scmp.eq.s32.totalorder %s33, 0
      %p332 = por %p330, %p331
      %p333 = scmp.ne.s32.totalorder %s319, %s320
      %p334 = scmp.eq.s32.totalorder %s34, 1
      %p335 = por %p333, %p334
      %p337 = scmp.ne.s32.totalorder %s320, %s336
      %p338 = scmp.eq.s32.totalorder %s34, 0
      %p339 = por %p337, %p338
      %p340 = scmp.le.s32.totalorder 1, %s28
      %p341 = scmp.lt.s32.totalorder %s28, 3
      %p342 = pnand %p340, %p341
      %p343 = pneg %p342
      // Predicated region
      $region9: #{deterministic_policy_forward.1} parent=5 // pred_check
        _
      $region10: #{deterministic_policy_forward.1} parent=5 // pred_check_branch
        %345 = sbr.rel (%p342) target = $region12
      $region11: #{deterministic_policy_forward.1} parent=5 // pred_region
        %s346 = ssub.s32 %s28, 1
        // Predicated region
        $region13: #{deterministic_policy_forward.1} parent=11 // pred_check
          %p347 = pneg %p75
        $region14: #{deterministic_policy_forward.1} parent=11 // pred_check_branch
          %349 = sbr.rel (%p347) target = $region16
        $region15: #{deterministic_policy_forward.1} parent=11 // pred_region
          %s351 = ssub.s32 147456, 147456
          %352 = vsyncadd [#allocation3], %s351
          %s353 = sshll.u32 [#allocation2], 4
          %s354 = int_to_ptr.vmem [resolvable:$true] %s353
          %359 = dma.hbm_to_vmem [thread:$0]  %s1, 147456, %s354, [#allocation3], 512, 512, 32
        $region16: #{deterministic_policy_forward.1} parent=11 // pred_fallthru
          _
        // Predicated region
        $region17: #{deterministic_policy_forward.1} parent=11 // pred_check
          %p360 = pneg %p96
        $region18: #{deterministic_policy_forward.1} parent=11 // pred_check_branch
          %362 = sbr.rel (%p360) target = $region20
        $region19: #{deterministic_policy_forward.1} parent=11 // pred_region
          %s364 = ssub.s32 128, 128
          %365 = vsyncadd [#allocation6], %s364
          %s367 = sshll.u32 [#allocation5], 4
          %s368 = int_to_ptr.vmem [resolvable:$true] %s367
          %370 = dma.hbm_to_vmem [thread:$0]  %s2, 128, %s368, [#allocation6]
        $region20: #{deterministic_policy_forward.1} parent=11 // pred_fallthru
          _
        // Predicated region
        $region21: #{deterministic_policy_forward.1} parent=11 // pred_check
          %p371 = pneg %p117
        $region22: #{deterministic_policy_forward.1} parent=11 // pred_check_branch
          %373 = sbr.rel (%p371) target = $region24
        $region23: #{deterministic_policy_forward.1} parent=11 // pred_region
          %s375 = ssub.s32 32768, 32768
          %376 = vsyncadd [#allocation6], %s375
          %s377 = sshll.u32 [#allocation7], 4
          %s378 = int_to_ptr.vmem [resolvable:$true] %s377
          %383 = dma.hbm_to_vmem [thread:$0]  %s3, 32768, %s378, [#allocation6], 256, 256, 16
        $region24: #{deterministic_policy_forward.1} parent=11 // pred_fallthru
          _
        // Predicated region
        $region25: #{deterministic_policy_forward.1} parent=11 // pred_check
          %p384 = pneg %p138
        $region26: #{deterministic_policy_forward.1} parent=11 // pred_check_branch
          %386 = sbr.rel (%p384) target = $region28
        $region27: #{deterministic_policy_forward.1} parent=11 // pred_region
          %s388 = ssub.s32 64, 64
          %389 = vsyncadd [#allocation9], %s388
          %s391 = sshll.u32 [#allocation8], 4
          %s392 = int_to_ptr.vmem [resolvable:$true] %s391
          %394 = dma.hbm_to_vmem [thread:$0]  %s4, 64, %s392, [#allocation9]
        $region28: #{deterministic_policy_forward.1} parent=11 // pred_fallthru
          _
        // Predicated region
        $region29: #{deterministic_policy_forward.1} parent=11 // pred_check
          %p395 = pneg %p159
        $region30: #{deterministic_policy_forward.1} parent=11 // pred_check_branch
          %397 = sbr.rel (%p395) target = $region32
        $region31: #{deterministic_policy_forward.1} parent=11 // pred_region
          %s399 = ssub.s32 8192, 8192
          %400 = vsyncadd [#allocation9], %s399
          %s401 = sshll.u32 [#allocation10], 4
          %s402 = int_to_ptr.vmem [resolvable:$true] %s401
          %407 = dma.hbm_to_vmem [thread:$0]  %s5, 8192, %s402, [#allocation9], 128, 128, 8
        $region32: #{deterministic_policy_forward.1} parent=11 // pred_fallthru
          _
        // Predicated region
        $region33: #{deterministic_policy_forward.1} parent=11 // pred_check
          %p408 = pneg %p180
        $region34: #{deterministic_policy_forward.1} parent=11 // pred_check_branch
          %410 = sbr.rel (%p408) target = $region36
        $region35: #{deterministic_policy_forward.1} parent=11 // pred_region
          %s412 = ssub.s32 32, 32
          %413 = vsyncadd [#allocation12], %s412
          %s415 = sshll.u32 [#allocation11], 4
          %s416 = int_to_ptr.vmem [resolvable:$true] %s415
          %418 = dma.hbm_to_vmem [thread:$0]  %s6, 32, %s416, [#allocation12]
        $region36: #{deterministic_policy_forward.1} parent=11 // pred_fallthru
          _
        // Predicated region
        $region37: #{deterministic_policy_forward.1} parent=11 // pred_check
          %p419 = pneg %p201
        $region38: #{deterministic_policy_forward.1} parent=11 // pred_check_branch
          %421 = sbr.rel (%p419) target = $region40
        $region39: #{deterministic_policy_forward.1} parent=11 // pred_region
          %s423 = ssub.s32 4096, 4096
          %424 = vsyncadd [#allocation12], %s423
          %s425 = sshll.u32 [#allocation13], 4
          %s426 = int_to_ptr.vmem [resolvable:$true] %s425
          %431 = dma.hbm_to_vmem [thread:$0]  %s7, 4096, %s426, [#allocation12], 128, 128, 8
        $region40: #{deterministic_policy_forward.1} parent=11 // pred_fallthru
          _
        // Predicated region
        $region41: #{deterministic_policy_forward.1} parent=11 // pred_check
          %p432 = pneg %p222
        $region42: #{deterministic_policy_forward.1} parent=11 // pred_check_branch
          %434 = sbr.rel (%p432) target = $region44
        $region43: #{deterministic_policy_forward.1} parent=11 // pred_region
          %s436 = ssub.s32 32, 32
          %437 = vsyncadd [#allocation15], %s436
          %s439 = sshll.u32 [#allocation14], 4
          %s440 = int_to_ptr.vmem [resolvable:$true] %s439
          %442 = dma.hbm_to_vmem [thread:$0]  %s8, 32, %s440, [#allocation15]
        $region44: #{deterministic_policy_forward.1} parent=11 // pred_fallthru
          _
        // Predicated region
        $region45: #{deterministic_policy_forward.1} parent=11 // pred_check
          %p443 = pneg %p243
        $region46: #{deterministic_policy_forward.1} parent=11 // pred_check_branch
          %445 = sbr.rel (%p443) target = $region48
        $region47: #{deterministic_policy_forward.1} parent=11 // pred_region
          _
        $region48: #{deterministic_policy_forward.1} parent=11 // pred_fallthru
          _
        // Predicated region
        $region49: #{deterministic_policy_forward.1} parent=11 // pred_check
          %p446 = pneg %p264
        $region50: #{deterministic_policy_forward.1} parent=11 // pred_check_branch
          %448 = sbr.rel (%p446) target = $region52
        $region51: #{deterministic_policy_forward.1} parent=11 // pred_region
          %s450 = ssub.s32 16, 16
          %451 = vsyncadd [#allocation15], %s450
          %s453 = sshll.u32 [#allocation16], 4
          %s454 = int_to_ptr.vmem [resolvable:$true] %s453
          %456 = dma.hbm_to_vmem [thread:$0]  %s10, 16, %s454, [#allocation15]
        $region52: #{deterministic_policy_forward.1} parent=11 // pred_fallthru
          _
        // Predicated region
        $region53: #{deterministic_policy_forward.1} parent=11 // pred_check
          %p457 = pneg %p285
        $region54: #{deterministic_policy_forward.1} parent=11 // pred_check_branch
          %459 = sbr.rel (%p457) target = $region56
        $region55: #{deterministic_policy_forward.1} parent=11 // pred_region
          _
        $region56: #{deterministic_policy_forward.1} parent=11 // pred_fallthru
          _
        // Predicated region
        $region57: #{deterministic_policy_forward.1} parent=11 // pred_check
          %p460 = pneg %p306
        $region58: #{deterministic_policy_forward.1} parent=11 // pred_check_branch
          %462 = sbr.rel (%p460) target = $region60
        $region59: #{deterministic_policy_forward.1} parent=11 // pred_region
          %s464 = ssub.s32 16, 16
          %465 = vsyncadd [#allocation18], %s464
          %s467 = sshll.u32 [#allocation17], 4
          %s468 = int_to_ptr.vmem [resolvable:$true] %s467
          %470 = dma.hbm_to_vmem [thread:$0]  %s12, 16, %s468, [#allocation18]
        $region60: #{deterministic_policy_forward.1} parent=11 // pred_fallthru
          _
      $region12: #{deterministic_policy_forward.1} parent=5 // pred_fallthru
        _
      %p471 = scmp.lt.s32.totalorder %s28, 2
      // Predicated region
      $region61: #{deterministic_policy_forward.1} parent=5 // pred_check
        %p472 = pneg %p471
      $region62: #{deterministic_policy_forward.1} parent=5 // pred_check_branch
        %474 = sbr.rel (%p472) target = $region64
      $region63: #{deterministic_policy_forward.1} parent=5 // pred_region
        // Predicated region
        $region65: #{deterministic_policy_forward.1} parent=63 // pred_check
          %p475 = pneg %p48
        $region66: #{deterministic_policy_forward.1} parent=63 // pred_check_branch
          %477 = sbr.rel (%p475) target = $region68
        $region67: #{deterministic_policy_forward.1} parent=63 // pred_region
          %p478 = scmp.lt.s32.totalorder %s28, 1
          %s479 = scalar_select %p478, %s28, 1
          %s480 = smul.addr %s479, 18
          %s481 = scalar_lea.vmem %s0, %s480
        $region68: #{deterministic_policy_forward.1} parent=63 // pred_fallthru
          _
      $region64: #{deterministic_policy_forward.1} parent=5 // pred_fallthru
        _
      %p482 = scmp.le.s32.totalorder 1, %s28
      %p483 = scmp.lt.s32.totalorder %s28, 3
      %p484 = pnand %p482, %p483
      %p485 = pneg %p484
      // Predicated region
      $region69: #{deterministic_policy_forward.1} parent=5 // pred_check
        _
      $region70: #{deterministic_policy_forward.1} parent=5 // pred_check_branch
        %487 = sbr.rel (%p484) target = $region72
      $region71: #{deterministic_policy_forward.1} parent=5 // pred_region
        %s488 = ssub.s32 %s28, 1
        // Predicated region
        $region73: #{deterministic_policy_forward.1} parent=71 // pred_check
          %p489 = pneg %p75
        $region74: #{deterministic_policy_forward.1} parent=71 // pred_check_branch
          %491 = sbr.rel (%p489) target = $region76
        $region75: #{deterministic_policy_forward.1} parent=71 // pred_region
          %492 = dma.done [#allocation3], 147456
        $region76: #{deterministic_policy_forward.1} parent=71 // pred_fallthru
          _
        // Predicated region
        $region77: #{deterministic_policy_forward.1} parent=71 // pred_check
          %p493 = pneg %p96
        $region78: #{deterministic_policy_forward.1} parent=71 // pred_check_branch
          %495 = sbr.rel (%p493) target = $region80
        $region79: #{deterministic_policy_forward.1} parent=71 // pred_region
          %496 = dma.done [#allocation6], 128
        $region80: #{deterministic_policy_forward.1} parent=71 // pred_fallthru
          _
        // Predicated region
        $region81: #{deterministic_policy_forward.1} parent=71 // pred_check
          %p497 = pneg %p117
        $region82: #{deterministic_policy_forward.1} parent=71 // pred_check_branch
          %499 = sbr.rel (%p497) target = $region84
        $region83: #{deterministic_policy_forward.1} parent=71 // pred_region
          %500 = dma.done [#allocation6], 32768
        $region84: #{deterministic_policy_forward.1} parent=71 // pred_fallthru
          _
        // Predicated region
        $region85: #{deterministic_policy_forward.1} parent=71 // pred_check
          %p501 = pneg %p138
        $region86: #{deterministic_policy_forward.1} parent=71 // pred_check_branch
          %503 = sbr.rel (%p501) target = $region88
        $region87: #{deterministic_policy_forward.1} parent=71 // pred_region
          %504 = dma.done [#allocation9], 64
        $region88: #{deterministic_policy_forward.1} parent=71 // pred_fallthru
          _
        // Predicated region
        $region89: #{deterministic_policy_forward.1} parent=71 // pred_check
          %p505 = pneg %p159
        $region90: #{deterministic_policy_forward.1} parent=71 // pred_check_branch
          %507 = sbr.rel (%p505) target = $region92
        $region91: #{deterministic_policy_forward.1} parent=71 // pred_region
          %508 = dma.done [#allocation9], 8192
        $region92: #{deterministic_policy_forward.1} parent=71 // pred_fallthru
          _
        // Predicated region
        $region93: #{deterministic_policy_forward.1} parent=71 // pred_check
          %p509 = pneg %p180
        $region94: #{deterministic_policy_forward.1} parent=71 // pred_check_branch
          %511 = sbr.rel (%p509) target = $region96
        $region95: #{deterministic_policy_forward.1} parent=71 // pred_region
          %512 = dma.done [#allocation12], 32
        $region96: #{deterministic_policy_forward.1} parent=71 // pred_fallthru
          _
        // Predicated region
        $region97: #{deterministic_policy_forward.1} parent=71 // pred_check
          %p513 = pneg %p201
        $region98: #{deterministic_policy_forward.1} parent=71 // pred_check_branch
          %515 = sbr.rel (%p513) target = $region100
        $region99: #{deterministic_policy_forward.1} parent=71 // pred_region
          %516 = dma.done [#allocation12], 4096
        $region100: #{deterministic_policy_forward.1} parent=71 // pred_fallthru
          _
        // Predicated region
        $region101: #{deterministic_policy_forward.1} parent=71 // pred_check
          %p517 = pneg %p222
        $region102: #{deterministic_policy_forward.1} parent=71 // pred_check_branch
          %519 = sbr.rel (%p517) target = $region104
        $region103: #{deterministic_policy_forward.1} parent=71 // pred_region
          %520 = dma.done [#allocation15], 32
        $region104: #{deterministic_policy_forward.1} parent=71 // pred_fallthru
          _
        // Predicated region
        $region105: #{deterministic_policy_forward.1} parent=71 // pred_check
          %p521 = pneg %p264
        $region106: #{deterministic_policy_forward.1} parent=71 // pred_check_branch
          %523 = sbr.rel (%p521) target = $region108
        $region107: #{deterministic_policy_forward.1} parent=71 // pred_region
          %524 = dma.done [#allocation15], 16
        $region108: #{deterministic_policy_forward.1} parent=71 // pred_fallthru
          _
        // Predicated region
        $region109: #{deterministic_policy_forward.1} parent=71 // pred_check
          %p525 = pneg %p306
        $region110: #{deterministic_policy_forward.1} parent=71 // pred_check_branch
          %527 = sbr.rel (%p525) target = $region112
        $region111: #{deterministic_policy_forward.1} parent=71 // pred_region
          %528 = dma.done [#allocation18], 16
        $region112: #{deterministic_policy_forward.1} parent=71 // pred_fallthru
          _
        %p529 = scmp.lt.s32.totalorder %s33, 1
        %s530 = scalar_select %p529, %s33, 1
        %s531 = smul.addr %s530, 18
        %s532 = scalar_lea.vmem %s0, %s531
        %p533 = pneg %p54
        %p534 = pneg %p51
        %p535 = pneg %p75
        %p536 = pneg %p72
        %p537 = pneg %p96
        %p538 = pneg %p93
        %p539 = pneg %p117
        %p540 = pneg %p114
        %p541 = pneg %p138
        %p542 = pneg %p135
        %p543 = pneg %p159
        %p544 = pneg %p156
        %p545 = pneg %p180
        %p546 = pneg %p177
        %p547 = pneg %p201
        %p548 = pneg %p198
        %p549 = pneg %p222
        %p550 = pneg %p219
        %p551 = pneg %p243
        %p552 = pneg %p240
        %p553 = pneg %p264
        %p554 = pneg %p261
        %p555 = pneg %p285
        %p556 = pneg %p282
        %p557 = pneg %p306
        %p558 = pneg %p303
        %p559 = pneg %p332
        %p560 = pneg %p329
        %s561 = sand.u32 %s319, 1
        %s562 = scalar_lea.sflag [#allocation4], %s561
        %s563 = sand.u32 %s319, 1
        %s564 = scalar_lea.vmem [#allocation19], %s563
        %p565 = scmp.lt.s32.totalorder %s33, 1
        %s566 = scalar_select %p565, %s33, 1
        %s567 = smul.addr %s566, 18
        %s568 = scalar_lea.vmem %s0, %s567
        %v570 = vld [vmem:[%s568] sm:$0xff]
        %v571 = vld [vmem:[%s568 + $0x8] sm:$0xff]
        %v572 = vld [vmem:[%s568 + $0x10] sm:$0x3]
        %v576 = vlaneseq
        %v577 = vshrl.u32 %v576, 7
        %v578 = vsub.s32 0, %v577
        %v579 = vrot.slane %v570, %v578
        %v580 = vlaneseq
        %v581 = vshrl.u32 %v580, 7
        %v582 = vsub.s32 1, %v581
        %v583 = vrot.slane %v570, %v582
        %v584 = vlaneseq
        %v585 = vshrl.u32 %v584, 7
        %v586 = vsub.s32 2, %v585
        %v587 = vrot.slane %v570, %v586
        %v588 = vlaneseq
        %v589 = vshrl.u32 %v588, 7
        %v590 = vsub.s32 3, %v589
        %v591 = vrot.slane %v570, %v590
        %v592 = vlaneseq
        %v593 = vshrl.u32 %v592, 7
        %v594 = vsub.s32 4, %v593
        %v595 = vrot.slane %v570, %v594
        %v596 = vlaneseq
        %v597 = vshrl.u32 %v596, 7
        %v598 = vsub.s32 5, %v597
        %v599 = vrot.slane %v570, %v598
        %v600 = vlaneseq
        %v601 = vshrl.u32 %v600, 7
        %v602 = vsub.s32 6, %v601
        %v603 = vrot.slane %v570, %v602
        %v604 = vlaneseq
        %v605 = vshrl.u32 %v604, 7
        %v606 = vsub.s32 7, %v605
        %v607 = vrot.slane %v570, %v606
        %v608 = vlaneseq
        %v609 = vshrl.u32 %v608, 7
        %v610 = vsub.s32 0, %v609
        %v611 = vrot.slane %v571, %v610
        %v612 = vlaneseq
        %v613 = vshrl.u32 %v612, 7
        %v614 = vsub.s32 1, %v613
        %v615 = vrot.slane %v571, %v614
        %v616 = vlaneseq
        %v617 = vshrl.u32 %v616, 7
        %v618 = vsub.s32 2, %v617
        %v619 = vrot.slane %v571, %v618
        %v620 = vlaneseq
        %v621 = vshrl.u32 %v620, 7
        %v622 = vsub.s32 3, %v621
        %v623 = vrot.slane %v571, %v622
        %v624 = vlaneseq
        %v625 = vshrl.u32 %v624, 7
        %v626 = vsub.s32 4, %v625
        %v627 = vrot.slane %v571, %v626
        %v628 = vlaneseq
        %v629 = vshrl.u32 %v628, 7
        %v630 = vsub.s32 5, %v629
        %v631 = vrot.slane %v571, %v630
        %v632 = vlaneseq
        %v633 = vshrl.u32 %v632, 7
        %v634 = vsub.s32 6, %v633
        %v635 = vrot.slane %v571, %v634
        %v636 = vlaneseq
        %v637 = vshrl.u32 %v636, 7
        %v638 = vsub.s32 7, %v637
        %v639 = vrot.slane %v571, %v638
        %v640 = vlaneseq
        %v641 = vshrl.u32 %v640, 7
        %v642 = vsub.s32 0, %v641
        %v643 = vrot.slane %v572, %v642
        %v644 = vlaneseq
        %v645 = vshrl.u32 %v644, 7
        %v646 = vsub.s32 1, %v645
        %v647 = vrot.slane %v572, %v646
        %v666 = vpack.c.bf16 %v579, %v579
        %v667 = vpack.c.bf16 %v583, %v583
        %v668 = vpack.c.bf16 %v587, %v587
        %v669 = vpack.c.bf16 %v591, %v591
        %v670 = vpack.c.bf16 %v595, %v595
        %v671 = vpack.c.bf16 %v599, %v599
        %v672 = vpack.c.bf16 %v603, %v603
        %v673 = vpack.c.bf16 %v607, %v607
        %v674 = vpack.c.bf16 %v611, %v611
        %v675 = vpack.c.bf16 %v615, %v615
        %v676 = vpack.c.bf16 %v619, %v619
        %v677 = vpack.c.bf16 %v623, %v623
        %v678 = vpack.c.bf16 %v627, %v627
        %v679 = vpack.c.bf16 %v631, %v631
        %v680 = vpack.c.bf16 %v635, %v635
        %v681 = vpack.c.bf16 %v639, %v639
        %v682 = vpack.c.bf16 %v643, %v643
        %v683 = vpack.c.bf16 %v647, %v647
        %v684 = vld [vmem:[#allocation2] sm:$0xff]
        %v685 = vld [vmem:[#allocation2 + $0x8] sm:$0xff]
        %v686 = vld [vmem:[#allocation2 + $0x10] sm:$0xff]
        %v687 = vld [vmem:[#allocation2 + $0x18] sm:$0xff]
        %v688 = vld [vmem:[#allocation2 + $0x20] sm:$0xff]
        %v689 = vld [vmem:[#allocation2 + $0x28] sm:$0xff]
        %v690 = vld [vmem:[#allocation2 + $0x30] sm:$0xff]
        %v691 = vld [vmem:[#allocation2 + $0x38] sm:$0xff]
        %v692 = vld [vmem:[#allocation2 + $0x40] sm:$0xff]
        %v693 = vld [vmem:[#allocation2 + $0x48] sm:$0xff]
        %v694 = vld [vmem:[#allocation2 + $0x50] sm:$0xff]
        %v695 = vld [vmem:[#allocation2 + $0x58] sm:$0xff]
        %v696 = vld [vmem:[#allocation2 + $0x60] sm:$0xff]
        %v697 = vld [vmem:[#allocation2 + $0x68] sm:$0xff]
        %v698 = vld [vmem:[#allocation2 + $0x70] sm:$0xff]
        %v699 = vld [vmem:[#allocation2 + $0x78] sm:$0xff]
        %v700 = vld [vmem:[#allocation2 + $0x80] sm:$0xff]
        %v701 = vld [vmem:[#allocation2 + $0x88] sm:$0xff]
        %v702 = vld [vmem:[#allocation2 + $0x90] sm:$0xff]
        %v703 = vld [vmem:[#allocation2 + $0x98] sm:$0xff]
        %v704 = vld [vmem:[#allocation2 + $0xa0] sm:$0xff]
        %v705 = vld [vmem:[#allocation2 + $0xa8] sm:$0xff]
        %v706 = vld [vmem:[#allocation2 + $0xb0] sm:$0xff]
        %v707 = vld [vmem:[#allocation2 + $0xb8] sm:$0xff]
        %v708 = vld [vmem:[#allocation2 + $0xc0] sm:$0xff]
        %v709 = vld [vmem:[#allocation2 + $0xc8] sm:$0xff]
        %v710 = vld [vmem:[#allocation2 + $0xd0] sm:$0xff]
        %v711 = vld [vmem:[#allocation2 + $0xd8] sm:$0xff]
        %v712 = vld [vmem:[#allocation2 + $0xe0] sm:$0xff]
        %v713 = vld [vmem:[#allocation2 + $0xe8] sm:$0xff]
        %v714 = vld [vmem:[#allocation2 + $0xf0] sm:$0xff]
        %v715 = vld [vmem:[#allocation2 + $0xf8] sm:$0xff]
        %v716 = vld [vmem:[#allocation2 + $0x100] sm:$0xff]
        %v717 = vld [vmem:[#allocation2 + $0x108] sm:$0xff]
        %v718 = vld [vmem:[#allocation2 + $0x110] sm:$0xff]
        %v719 = vld [vmem:[#allocation2 + $0x118] sm:$0xff]
        %v720 = vld [vmem:[#allocation2 + $0x120] sm:$0xff]
        %v721 = vld [vmem:[#allocation2 + $0x128] sm:$0xff]
        %v722 = vld [vmem:[#allocation2 + $0x130] sm:$0xff]
        %v723 = vld [vmem:[#allocation2 + $0x138] sm:$0xff]
        %v724 = vld [vmem:[#allocation2 + $0x140] sm:$0xff]
        %v725 = vld [vmem:[#allocation2 + $0x148] sm:$0xff]
        %v726 = vld [vmem:[#allocation2 + $0x150] sm:$0xff]
        %v727 = vld [vmem:[#allocation2 + $0x158] sm:$0xff]
        %v728 = vld [vmem:[#allocation2 + $0x160] sm:$0xff]
        %v729 = vld [vmem:[#allocation2 + $0x168] sm:$0xff]
        %v730 = vld [vmem:[#allocation2 + $0x170] sm:$0xff]
        %v731 = vld [vmem:[#allocation2 + $0x178] sm:$0xff]
        %v732 = vld [vmem:[#allocation2 + $0x180] sm:$0xff]
        %v733 = vld [vmem:[#allocation2 + $0x188] sm:$0xff]
        %v734 = vld [vmem:[#allocation2 + $0x190] sm:$0xff]
        %v735 = vld [vmem:[#allocation2 + $0x198] sm:$0xff]
        %v736 = vld [vmem:[#allocation2 + $0x1a0] sm:$0xff]
        %v737 = vld [vmem:[#allocation2 + $0x1a8] sm:$0xff]
        %v738 = vld [vmem:[#allocation2 + $0x1b0] sm:$0xff]
        %v739 = vld [vmem:[#allocation2 + $0x1b8] sm:$0xff]
        %v740 = vld [vmem:[#allocation2 + $0x1c0] sm:$0xff]
        %v741 = vld [vmem:[#allocation2 + $0x1c8] sm:$0xff]
        %v742 = vld [vmem:[#allocation2 + $0x1d0] sm:$0xff]
        %v743 = vld [vmem:[#allocation2 + $0x1d8] sm:$0xff]
        %v744 = vld [vmem:[#allocation2 + $0x1e0] sm:$0xff]
        %v745 = vld [vmem:[#allocation2 + $0x1e8] sm:$0xff]
        %v746 = vld [vmem:[#allocation2 + $0x1f0] sm:$0xff]
        %v747 = vld [vmem:[#allocation2 + $0x1f8] sm:$0xff]
        %v748 = vld [vmem:[#allocation2 + $0x200] sm:$0xff]
        %v749 = vld [vmem:[#allocation2 + $0x208] sm:$0xff]
        %v750 = vld [vmem:[#allocation2 + $0x210] sm:$0xff]
        %v751 = vld [vmem:[#allocation2 + $0x218] sm:$0xff]
        %v752 = vld [vmem:[#allocation2 + $0x220] sm:$0xff]
        %v753 = vld [vmem:[#allocation2 + $0x228] sm:$0xff]
        %v754 = vld [vmem:[#allocation2 + $0x230] sm:$0xff]
        %v755 = vld [vmem:[#allocation2 + $0x238] sm:$0xff]
        %v756 = vld [vmem:[#allocation2 + $0x240] sm:$0xff]
        %v757 = vld [vmem:[#allocation2 + $0x248] sm:$0xff]
        %v758 = vld [vmem:[#allocation2 + $0x250] sm:$0xff]
        %v759 = vld [vmem:[#allocation2 + $0x258] sm:$0xff]
        %v760 = vld [vmem:[#allocation2 + $0x260] sm:$0xff]
        %v761 = vld [vmem:[#allocation2 + $0x268] sm:$0xff]
        %v762 = vld [vmem:[#allocation2 + $0x270] sm:$0xff]
        %v763 = vld [vmem:[#allocation2 + $0x278] sm:$0xff]
        %v764 = vld [vmem:[#allocation2 + $0x280] sm:$0xff]
        %v765 = vld [vmem:[#allocation2 + $0x288] sm:$0xff]
        %v766 = vld [vmem:[#allocation2 + $0x290] sm:$0xff]
        %v767 = vld [vmem:[#allocation2 + $0x298] sm:$0xff]
        %v768 = vld [vmem:[#allocation2 + $0x2a0] sm:$0xff]
        %v769 = vld [vmem:[#allocation2 + $0x2a8] sm:$0xff]
        %v770 = vld [vmem:[#allocation2 + $0x2b0] sm:$0xff]
        %v771 = vld [vmem:[#allocation2 + $0x2b8] sm:$0xff]
        %v772 = vld [vmem:[#allocation2 + $0x2c0] sm:$0xff]
        %v773 = vld [vmem:[#allocation2 + $0x2c8] sm:$0xff]
        %v774 = vld [vmem:[#allocation2 + $0x2d0] sm:$0xff]
        %v775 = vld [vmem:[#allocation2 + $0x2d8] sm:$0xff]
        %v776 = vld [vmem:[#allocation2 + $0x2e0] sm:$0xff]
        %v777 = vld [vmem:[#allocation2 + $0x2e8] sm:$0xff]
        %v778 = vld [vmem:[#allocation2 + $0x2f0] sm:$0xff]
        %v779 = vld [vmem:[#allocation2 + $0x2f8] sm:$0xff]
        %v780 = vld [vmem:[#allocation2 + $0x300] sm:$0xff]
        %v781 = vld [vmem:[#allocation2 + $0x308] sm:$0xff]
        %v782 = vld [vmem:[#allocation2 + $0x310] sm:$0xff]
        %v783 = vld [vmem:[#allocation2 + $0x318] sm:$0xff]
        %v784 = vld [vmem:[#allocation2 + $0x320] sm:$0xff]
        %v785 = vld [vmem:[#allocation2 + $0x328] sm:$0xff]
        %v786 = vld [vmem:[#allocation2 + $0x330] sm:$0xff]
        %v787 = vld [vmem:[#allocation2 + $0x338] sm:$0xff]
        %v788 = vld [vmem:[#allocation2 + $0x340] sm:$0xff]
        %v789 = vld [vmem:[#allocation2 + $0x348] sm:$0xff]
        %v790 = vld [vmem:[#allocation2 + $0x350] sm:$0xff]
        %v791 = vld [vmem:[#allocation2 + $0x358] sm:$0xff]
        %v792 = vld [vmem:[#allocation2 + $0x360] sm:$0xff]
        %v793 = vld [vmem:[#allocation2 + $0x368] sm:$0xff]
        %v794 = vld [vmem:[#allocation2 + $0x370] sm:$0xff]
        %v795 = vld [vmem:[#allocation2 + $0x378] sm:$0xff]
        %v796 = vld [vmem:[#allocation2 + $0x380] sm:$0xff]
        %v797 = vld [vmem:[#allocation2 + $0x388] sm:$0xff]
        %v798 = vld [vmem:[#allocation2 + $0x390] sm:$0xff]
        %v799 = vld [vmem:[#allocation2 + $0x398] sm:$0xff]
        %v800 = vld [vmem:[#allocation2 + $0x3a0] sm:$0xff]
        %v801 = vld [vmem:[#allocation2 + $0x3a8] sm:$0xff]
        %v802 = vld [vmem:[#allocation2 + $0x3b0] sm:$0xff]
        %v803 = vld [vmem:[#allocation2 + $0x3b8] sm:$0xff]
        %v804 = vld [vmem:[#allocation2 + $0x3c0] sm:$0xff]
        %v805 = vld [vmem:[#allocation2 + $0x3c8] sm:$0xff]
        %v806 = vld [vmem:[#allocation2 + $0x3d0] sm:$0xff]
        %v807 = vld [vmem:[#allocation2 + $0x3d8] sm:$0xff]
        %v808 = vld [vmem:[#allocation2 + $0x3e0] sm:$0xff]
        %v809 = vld [vmem:[#allocation2 + $0x3e8] sm:$0xff]
        %v810 = vld [vmem:[#allocation2 + $0x3f0] sm:$0xff]
        %v811 = vld [vmem:[#allocation2 + $0x3f8] sm:$0xff]
        %v812 = vld [vmem:[#allocation2 + $0x400] sm:$0xff]
        %v813 = vld [vmem:[#allocation2 + $0x408] sm:$0xff]
        %v814 = vld [vmem:[#allocation2 + $0x410] sm:$0xff]
        %v815 = vld [vmem:[#allocation2 + $0x418] sm:$0xff]
        %v816 = vld [vmem:[#allocation2 + $0x420] sm:$0xff]
        %v817 = vld [vmem:[#allocation2 + $0x428] sm:$0xff]
        %v818 = vld [vmem:[#allocation2 + $0x430] sm:$0xff]
        %v819 = vld [vmem:[#allocation2 + $0x438] sm:$0xff]
        %v820 = vld [vmem:[#allocation2 + $0x440] sm:$0xff]
        %v821 = vld [vmem:[#allocation2 + $0x448] sm:$0xff]
        %v822 = vld [vmem:[#allocation2 + $0x450] sm:$0xff]
        %v823 = vld [vmem:[#allocation2 + $0x458] sm:$0xff]
        %v824 = vld [vmem:[#allocation2 + $0x460] sm:$0xff]
        %v825 = vld [vmem:[#allocation2 + $0x468] sm:$0xff]
        %v826 = vld [vmem:[#allocation2 + $0x470] sm:$0xff]
        %v827 = vld [vmem:[#allocation2 + $0x478] sm:$0xff]
        %v828 = vld [vmem:[#allocation2 + $0x480] sm:$0xff]
        %v829 = vld [vmem:[#allocation2 + $0x488] sm:$0xff]
        %v830 = vld [vmem:[#allocation2 + $0x490] sm:$0xff]
        %v831 = vld [vmem:[#allocation2 + $0x498] sm:$0xff]
        %v832 = vld [vmem:[#allocation2 + $0x4a0] sm:$0xff]
        %v833 = vld [vmem:[#allocation2 + $0x4a8] sm:$0xff]
        %v834 = vld [vmem:[#allocation2 + $0x4b0] sm:$0xff]
        %v835 = vld [vmem:[#allocation2 + $0x4b8] sm:$0xff]
        %v836 = vld [vmem:[#allocation2 + $0x4c0] sm:$0xff]
        %v837 = vld [vmem:[#allocation2 + $0x4c8] sm:$0xff]
        %v838 = vld [vmem:[#allocation2 + $0x4d0] sm:$0xff]
        %v839 = vld [vmem:[#allocation2 + $0x4d8] sm:$0xff]
        %v840 = vld [vmem:[#allocation2 + $0x4e0] sm:$0xff]
        %v841 = vld [vmem:[#allocation2 + $0x4e8] sm:$0xff]
        %v842 = vld [vmem:[#allocation2 + $0x4f0] sm:$0xff]
        %v843 = vld [vmem:[#allocation2 + $0x4f8] sm:$0xff]
        %v844 = vld [vmem:[#allocation2 + $0x500] sm:$0xff]
        %v845 = vld [vmem:[#allocation2 + $0x508] sm:$0xff]
        %v846 = vld [vmem:[#allocation2 + $0x510] sm:$0xff]
        %v847 = vld [vmem:[#allocation2 + $0x518] sm:$0xff]
        %v848 = vld [vmem:[#allocation2 + $0x520] sm:$0xff]
        %v849 = vld [vmem:[#allocation2 + $0x528] sm:$0xff]
        %v850 = vld [vmem:[#allocation2 + $0x530] sm:$0xff]
        %v851 = vld [vmem:[#allocation2 + $0x538] sm:$0xff]
        %v852 = vld [vmem:[#allocation2 + $0x540] sm:$0xff]
        %v853 = vld [vmem:[#allocation2 + $0x548] sm:$0xff]
        %v854 = vld [vmem:[#allocation2 + $0x550] sm:$0xff]
        %v855 = vld [vmem:[#allocation2 + $0x558] sm:$0xff]
        %v856 = vld [vmem:[#allocation2 + $0x560] sm:$0xff]
        %v857 = vld [vmem:[#allocation2 + $0x568] sm:$0xff]
        %v858 = vld [vmem:[#allocation2 + $0x570] sm:$0xff]
        %v859 = vld [vmem:[#allocation2 + $0x578] sm:$0xff]
        %v860 = vld [vmem:[#allocation2 + $0x580] sm:$0xff]
        %v861 = vld [vmem:[#allocation2 + $0x588] sm:$0xff]
        %v862 = vld [vmem:[#allocation2 + $0x590] sm:$0xff]
        %v863 = vld [vmem:[#allocation2 + $0x598] sm:$0xff]
        %v864 = vld [vmem:[#allocation2 + $0x5a0] sm:$0xff]
        %v865 = vld [vmem:[#allocation2 + $0x5a8] sm:$0xff]
        %v866 = vld [vmem:[#allocation2 + $0x5b0] sm:$0xff]
        %v867 = vld [vmem:[#allocation2 + $0x5b8] sm:$0xff]
        %v868 = vld [vmem:[#allocation2 + $0x5c0] sm:$0xff]
        %v869 = vld [vmem:[#allocation2 + $0x5c8] sm:$0xff]
        %v870 = vld [vmem:[#allocation2 + $0x5d0] sm:$0xff]
        %v871 = vld [vmem:[#allocation2 + $0x5d8] sm:$0xff]
        %v872 = vld [vmem:[#allocation2 + $0x5e0] sm:$0xff]
        %v873 = vld [vmem:[#allocation2 + $0x5e8] sm:$0xff]
        %v874 = vld [vmem:[#allocation2 + $0x5f0] sm:$0xff]
        %v875 = vld [vmem:[#allocation2 + $0x5f8] sm:$0xff]
        %v876 = vld [vmem:[#allocation2 + $0x600] sm:$0xff]
        %v877 = vld [vmem:[#allocation2 + $0x608] sm:$0xff]
        %v878 = vld [vmem:[#allocation2 + $0x610] sm:$0xff]
        %v879 = vld [vmem:[#allocation2 + $0x618] sm:$0xff]
        %v880 = vld [vmem:[#allocation2 + $0x620] sm:$0xff]
        %v881 = vld [vmem:[#allocation2 + $0x628] sm:$0xff]
        %v882 = vld [vmem:[#allocation2 + $0x630] sm:$0xff]
        %v883 = vld [vmem:[#allocation2 + $0x638] sm:$0xff]
        %v884 = vld [vmem:[#allocation2 + $0x640] sm:$0xff]
        %v885 = vld [vmem:[#allocation2 + $0x648] sm:$0xff]
        %v886 = vld [vmem:[#allocation2 + $0x650] sm:$0xff]
        %v887 = vld [vmem:[#allocation2 + $0x658] sm:$0xff]
        %v888 = vld [vmem:[#allocation2 + $0x660] sm:$0xff]
        %v889 = vld [vmem:[#allocation2 + $0x668] sm:$0xff]
        %v890 = vld [vmem:[#allocation2 + $0x670] sm:$0xff]
        %v891 = vld [vmem:[#allocation2 + $0x678] sm:$0xff]
        %v892 = vld [vmem:[#allocation2 + $0x680] sm:$0xff]
        %v893 = vld [vmem:[#allocation2 + $0x688] sm:$0xff]
        %v894 = vld [vmem:[#allocation2 + $0x690] sm:$0xff]
        %v895 = vld [vmem:[#allocation2 + $0x698] sm:$0xff]
        %v896 = vld [vmem:[#allocation2 + $0x6a0] sm:$0xff]
        %v897 = vld [vmem:[#allocation2 + $0x6a8] sm:$0xff]
        %v898 = vld [vmem:[#allocation2 + $0x6b0] sm:$0xff]
        %v899 = vld [vmem:[#allocation2 + $0x6b8] sm:$0xff]
        %v900 = vld [vmem:[#allocation2 + $0x6c0] sm:$0xff]
        %v901 = vld [vmem:[#allocation2 + $0x6c8] sm:$0xff]
        %v902 = vld [vmem:[#allocation2 + $0x6d0] sm:$0xff]
        %v903 = vld [vmem:[#allocation2 + $0x6d8] sm:$0xff]
        %v904 = vld [vmem:[#allocation2 + $0x6e0] sm:$0xff]
        %v905 = vld [vmem:[#allocation2 + $0x6e8] sm:$0xff]
        %v906 = vld [vmem:[#allocation2 + $0x6f0] sm:$0xff]
        %v907 = vld [vmem:[#allocation2 + $0x6f8] sm:$0xff]
        %v908 = vld [vmem:[#allocation2 + $0x700] sm:$0xff]
        %v909 = vld [vmem:[#allocation2 + $0x708] sm:$0xff]
        %v910 = vld [vmem:[#allocation2 + $0x710] sm:$0xff]
        %v911 = vld [vmem:[#allocation2 + $0x718] sm:$0xff]
        %v912 = vld [vmem:[#allocation2 + $0x720] sm:$0xff]
        %v913 = vld [vmem:[#allocation2 + $0x728] sm:$0xff]
        %v914 = vld [vmem:[#allocation2 + $0x730] sm:$0xff]
        %v915 = vld [vmem:[#allocation2 + $0x738] sm:$0xff]
        %v916 = vld [vmem:[#allocation2 + $0x740] sm:$0xff]
        %v917 = vld [vmem:[#allocation2 + $0x748] sm:$0xff]
        %v918 = vld [vmem:[#allocation2 + $0x750] sm:$0xff]
        %v919 = vld [vmem:[#allocation2 + $0x758] sm:$0xff]
        %v920 = vld [vmem:[#allocation2 + $0x760] sm:$0xff]
        %v921 = vld [vmem:[#allocation2 + $0x768] sm:$0xff]
        %v922 = vld [vmem:[#allocation2 + $0x770] sm:$0xff]
        %v923 = vld [vmem:[#allocation2 + $0x778] sm:$0xff]
        %v924 = vld [vmem:[#allocation2 + $0x780] sm:$0xff]
        %v925 = vld [vmem:[#allocation2 + $0x788] sm:$0xff]
        %v926 = vld [vmem:[#allocation2 + $0x790] sm:$0xff]
        %v927 = vld [vmem:[#allocation2 + $0x798] sm:$0xff]
        %v928 = vld [vmem:[#allocation2 + $0x7a0] sm:$0xff]
        %v929 = vld [vmem:[#allocation2 + $0x7a8] sm:$0xff]
        %v930 = vld [vmem:[#allocation2 + $0x7b0] sm:$0xff]
        %v931 = vld [vmem:[#allocation2 + $0x7b8] sm:$0xff]
        %v932 = vld [vmem:[#allocation2 + $0x7c0] sm:$0xff]
        %v933 = vld [vmem:[#allocation2 + $0x7c8] sm:$0xff]
        %v934 = vld [vmem:[#allocation2 + $0x7d0] sm:$0xff]
        %v935 = vld [vmem:[#allocation2 + $0x7d8] sm:$0xff]
        %v936 = vld [vmem:[#allocation2 + $0x7e0] sm:$0xff]
        %v937 = vld [vmem:[#allocation2 + $0x7e8] sm:$0xff]
        %v938 = vld [vmem:[#allocation2 + $0x7f0] sm:$0xff]
        %v939 = vld [vmem:[#allocation2 + $0x7f8] sm:$0xff]
        %v940 = vld [vmem:[#allocation2 + $0x800] sm:$0xff]
        %v941 = vld [vmem:[#allocation2 + $0x808] sm:$0xff]
        %v942 = vld [vmem:[#allocation2 + $0x810] sm:$0xff]
        %v943 = vld [vmem:[#allocation2 + $0x818] sm:$0xff]
        %v944 = vld [vmem:[#allocation2 + $0x820] sm:$0xff]
        %v945 = vld [vmem:[#allocation2 + $0x828] sm:$0xff]
        %v946 = vld [vmem:[#allocation2 + $0x830] sm:$0xff]
        %v947 = vld [vmem:[#allocation2 + $0x838] sm:$0xff]
        %v948 = vld [vmem:[#allocation2 + $0x840] sm:$0xff]
        %v949 = vld [vmem:[#allocation2 + $0x848] sm:$0xff]
        %v950 = vld [vmem:[#allocation2 + $0x850] sm:$0xff]
        %v951 = vld [vmem:[#allocation2 + $0x858] sm:$0xff]
        %v952 = vld [vmem:[#allocation2 + $0x860] sm:$0xff]
        %v953 = vld [vmem:[#allocation2 + $0x868] sm:$0xff]
        %v954 = vld [vmem:[#allocation2 + $0x870] sm:$0xff]
        %v955 = vld [vmem:[#allocation2 + $0x878] sm:$0xff]
        %v956 = vld [vmem:[#allocation2 + $0x880] sm:$0xff]
        %v957 = vld [vmem:[#allocation2 + $0x888] sm:$0xff]
        %v958 = vld [vmem:[#allocation2 + $0x890] sm:$0xff]
        %v959 = vld [vmem:[#allocation2 + $0x898] sm:$0xff]
        %v960 = vld [vmem:[#allocation2 + $0x8a0] sm:$0xff]
        %v961 = vld [vmem:[#allocation2 + $0x8a8] sm:$0xff]
        %v962 = vld [vmem:[#allocation2 + $0x8b0] sm:$0xff]
        %v963 = vld [vmem:[#allocation2 + $0x8b8] sm:$0xff]
        %v964 = vld [vmem:[#allocation2 + $0x8c0] sm:$0xff]
        %v965 = vld [vmem:[#allocation2 + $0x8c8] sm:$0xff]
        %v966 = vld [vmem:[#allocation2 + $0x8d0] sm:$0xff]
        %v967 = vld [vmem:[#allocation2 + $0x8d8] sm:$0xff]
        %v968 = vld [vmem:[#allocation2 + $0x8e0] sm:$0xff]
        %v969 = vld [vmem:[#allocation2 + $0x8e8] sm:$0xff]
        %v970 = vld [vmem:[#allocation2 + $0x8f0] sm:$0xff]
        %v971 = vld [vmem:[#allocation2 + $0x8f8] sm:$0xff]
        %v972 = vld [vmem:[#allocation2 + $0x900] sm:$0xff]
        %v973 = vld [vmem:[#allocation2 + $0x908] sm:$0xff]
        %v974 = vld [vmem:[#allocation2 + $0x910] sm:$0xff]
        %v975 = vld [vmem:[#allocation2 + $0x918] sm:$0xff]
        %v976 = vld [vmem:[#allocation2 + $0x920] sm:$0xff]
        %v977 = vld [vmem:[#allocation2 + $0x928] sm:$0xff]
        %v978 = vld [vmem:[#allocation2 + $0x930] sm:$0xff]
        %v979 = vld [vmem:[#allocation2 + $0x938] sm:$0xff]
        %v980 = vld [vmem:[#allocation2 + $0x940] sm:$0xff]
        %v981 = vld [vmem:[#allocation2 + $0x948] sm:$0xff]
        %v982 = vld [vmem:[#allocation2 + $0x950] sm:$0xff]
        %v983 = vld [vmem:[#allocation2 + $0x958] sm:$0xff]
        %v984 = vld [vmem:[#allocation2 + $0x960] sm:$0xff]
        %v985 = vld [vmem:[#allocation2 + $0x968] sm:$0xff]
        %v986 = vld [vmem:[#allocation2 + $0x970] sm:$0xff]
        %v987 = vld [vmem:[#allocation2 + $0x978] sm:$0xff]
        %v988 = vld [vmem:[#allocation2 + $0x980] sm:$0xff]
        %v989 = vld [vmem:[#allocation2 + $0x988] sm:$0xff]
        %v990 = vld [vmem:[#allocation2 + $0x990] sm:$0xff]
        %v991 = vld [vmem:[#allocation2 + $0x998] sm:$0xff]
        %v992 = vld [vmem:[#allocation2 + $0x9a0] sm:$0xff]
        %v993 = vld [vmem:[#allocation2 + $0x9a8] sm:$0xff]
        %v994 = vld [vmem:[#allocation2 + $0x9b0] sm:$0xff]
        %v995 = vld [vmem:[#allocation2 + $0x9b8] sm:$0xff]
        %v996 = vld [vmem:[#allocation2 + $0x9c0] sm:$0xff]
        %v997 = vld [vmem:[#allocation2 + $0x9c8] sm:$0xff]
        %v998 = vld [vmem:[#allocation2 + $0x9d0] sm:$0xff]
        %v999 = vld [vmem:[#allocation2 + $0x9d8] sm:$0xff]
        %v1000 = vld [vmem:[#allocation2 + $0x9e0] sm:$0xff]
        %v1001 = vld [vmem:[#allocation2 + $0x9e8] sm:$0xff]
        %v1002 = vld [vmem:[#allocation2 + $0x9f0] sm:$0xff]
        %v1003 = vld [vmem:[#allocation2 + $0x9f8] sm:$0xff]
        %v1004 = vld [vmem:[#allocation2 + $0xa00] sm:$0xff]
        %v1005 = vld [vmem:[#allocation2 + $0xa08] sm:$0xff]
        %v1006 = vld [vmem:[#allocation2 + $0xa10] sm:$0xff]
        %v1007 = vld [vmem:[#allocation2 + $0xa18] sm:$0xff]
        %v1008 = vld [vmem:[#allocation2 + $0xa20] sm:$0xff]
        %v1009 = vld [vmem:[#allocation2 + $0xa28] sm:$0xff]
        %v1010 = vld [vmem:[#allocation2 + $0xa30] sm:$0xff]
        %v1011 = vld [vmem:[#allocation2 + $0xa38] sm:$0xff]
        %v1012 = vld [vmem:[#allocation2 + $0xa40] sm:$0xff]
        %v1013 = vld [vmem:[#allocation2 + $0xa48] sm:$0xff]
        %v1014 = vld [vmem:[#allocation2 + $0xa50] sm:$0xff]
        %v1015 = vld [vmem:[#allocation2 + $0xa58] sm:$0xff]
        %v1016 = vld [vmem:[#allocation2 + $0xa60] sm:$0xff]
        %v1017 = vld [vmem:[#allocation2 + $0xa68] sm:$0xff]
        %v1018 = vld [vmem:[#allocation2 + $0xa70] sm:$0xff]
        %v1019 = vld [vmem:[#allocation2 + $0xa78] sm:$0xff]
        %v1020 = vld [vmem:[#allocation2 + $0xa80] sm:$0xff]
        %v1021 = vld [vmem:[#allocation2 + $0xa88] sm:$0xff]
        %v1022 = vld [vmem:[#allocation2 + $0xa90] sm:$0xff]
        %v1023 = vld [vmem:[#allocation2 + $0xa98] sm:$0xff]
        %v1024 = vld [vmem:[#allocation2 + $0xaa0] sm:$0xff]
        %v1025 = vld [vmem:[#allocation2 + $0xaa8] sm:$0xff]
        %v1026 = vld [vmem:[#allocation2 + $0xab0] sm:$0xff]
        %v1027 = vld [vmem:[#allocation2 + $0xab8] sm:$0xff]
        %v1028 = vld [vmem:[#allocation2 + $0xac0] sm:$0xff]
        %v1029 = vld [vmem:[#allocation2 + $0xac8] sm:$0xff]
        %v1030 = vld [vmem:[#allocation2 + $0xad0] sm:$0xff]
        %v1031 = vld [vmem:[#allocation2 + $0xad8] sm:$0xff]
        %v1032 = vld [vmem:[#allocation2 + $0xae0] sm:$0xff]
        %v1033 = vld [vmem:[#allocation2 + $0xae8] sm:$0xff]
        %v1034 = vld [vmem:[#allocation2 + $0xaf0] sm:$0xff]
        %v1035 = vld [vmem:[#allocation2 + $0xaf8] sm:$0xff]
        %v1036 = vld [vmem:[#allocation2 + $0xb00] sm:$0xff]
        %v1037 = vld [vmem:[#allocation2 + $0xb08] sm:$0xff]
        %v1038 = vld [vmem:[#allocation2 + $0xb10] sm:$0xff]
        %v1039 = vld [vmem:[#allocation2 + $0xb18] sm:$0xff]
        %v1040 = vld [vmem:[#allocation2 + $0xb20] sm:$0xff]
        %v1041 = vld [vmem:[#allocation2 + $0xb28] sm:$0xff]
        %v1042 = vld [vmem:[#allocation2 + $0xb30] sm:$0xff]
        %v1043 = vld [vmem:[#allocation2 + $0xb38] sm:$0xff]
        %v1044 = vld [vmem:[#allocation2 + $0xb40] sm:$0xff]
        %v1045 = vld [vmem:[#allocation2 + $0xb48] sm:$0xff]
        %v1046 = vld [vmem:[#allocation2 + $0xb50] sm:$0xff]
        %v1047 = vld [vmem:[#allocation2 + $0xb58] sm:$0xff]
        %v1048 = vld [vmem:[#allocation2 + $0xb60] sm:$0xff]
        %v1049 = vld [vmem:[#allocation2 + $0xb68] sm:$0xff]
        %v1050 = vld [vmem:[#allocation2 + $0xb70] sm:$0xff]
        %v1051 = vld [vmem:[#allocation2 + $0xb78] sm:$0xff]
        %v1052 = vld [vmem:[#allocation2 + $0xb80] sm:$0xff]
        %v1053 = vld [vmem:[#allocation2 + $0xb88] sm:$0xff]
        %v1054 = vld [vmem:[#allocation2 + $0xb90] sm:$0xff]
        %v1055 = vld [vmem:[#allocation2 + $0xb98] sm:$0xff]
        %v1056 = vld [vmem:[#allocation2 + $0xba0] sm:$0xff]
        %v1057 = vld [vmem:[#allocation2 + $0xba8] sm:$0xff]
        %v1058 = vld [vmem:[#allocation2 + $0xbb0] sm:$0xff]
        %v1059 = vld [vmem:[#allocation2 + $0xbb8] sm:$0xff]
        %v1060 = vld [vmem:[#allocation2 + $0xbc0] sm:$0xff]
        %v1061 = vld [vmem:[#allocation2 + $0xbc8] sm:$0xff]
        %v1062 = vld [vmem:[#allocation2 + $0xbd0] sm:$0xff]
        %v1063 = vld [vmem:[#allocation2 + $0xbd8] sm:$0xff]
        %v1064 = vld [vmem:[#allocation2 + $0xbe0] sm:$0xff]
        %v1065 = vld [vmem:[#allocation2 + $0xbe8] sm:$0xff]
        %v1066 = vld [vmem:[#allocation2 + $0xbf0] sm:$0xff]
        %v1067 = vld [vmem:[#allocation2 + $0xbf8] sm:$0xff]
        %v1068 = vld [vmem:[#allocation2 + $0xc00] sm:$0xff]
        %v1069 = vld [vmem:[#allocation2 + $0xc08] sm:$0xff]
        %v1070 = vld [vmem:[#allocation2 + $0xc10] sm:$0xff]
        %v1071 = vld [vmem:[#allocation2 + $0xc18] sm:$0xff]
        %v1072 = vld [vmem:[#allocation2 + $0xc20] sm:$0xff]
        %v1073 = vld [vmem:[#allocation2 + $0xc28] sm:$0xff]
        %v1074 = vld [vmem:[#allocation2 + $0xc30] sm:$0xff]
        %v1075 = vld [vmem:[#allocation2 + $0xc38] sm:$0xff]
        %v1076 = vld [vmem:[#allocation2 + $0xc40] sm:$0xff]
        %v1077 = vld [vmem:[#allocation2 + $0xc48] sm:$0xff]
        %v1078 = vld [vmem:[#allocation2 + $0xc50] sm:$0xff]
        %v1079 = vld [vmem:[#allocation2 + $0xc58] sm:$0xff]
        %v1080 = vld [vmem:[#allocation2 + $0xc60] sm:$0xff]
        %v1081 = vld [vmem:[#allocation2 + $0xc68] sm:$0xff]
        %v1082 = vld [vmem:[#allocation2 + $0xc70] sm:$0xff]
        %v1083 = vld [vmem:[#allocation2 + $0xc78] sm:$0xff]
        %v1084 = vld [vmem:[#allocation2 + $0xc80] sm:$0xff]
        %v1085 = vld [vmem:[#allocation2 + $0xc88] sm:$0xff]
        %v1086 = vld [vmem:[#allocation2 + $0xc90] sm:$0xff]
        %v1087 = vld [vmem:[#allocation2 + $0xc98] sm:$0xff]
        %v1088 = vld [vmem:[#allocation2 + $0xca0] sm:$0xff]
        %v1089 = vld [vmem:[#allocation2 + $0xca8] sm:$0xff]
        %v1090 = vld [vmem:[#allocation2 + $0xcb0] sm:$0xff]
        %v1091 = vld [vmem:[#allocation2 + $0xcb8] sm:$0xff]
        %v1092 = vld [vmem:[#allocation2 + $0xcc0] sm:$0xff]
        %v1093 = vld [vmem:[#allocation2 + $0xcc8] sm:$0xff]
        %v1094 = vld [vmem:[#allocation2 + $0xcd0] sm:$0xff]
        %v1095 = vld [vmem:[#allocation2 + $0xcd8] sm:$0xff]
        %v1096 = vld [vmem:[#allocation2 + $0xce0] sm:$0xff]
        %v1097 = vld [vmem:[#allocation2 + $0xce8] sm:$0xff]
        %v1098 = vld [vmem:[#allocation2 + $0xcf0] sm:$0xff]
        %v1099 = vld [vmem:[#allocation2 + $0xcf8] sm:$0xff]
        %v1100 = vld [vmem:[#allocation2 + $0xd00] sm:$0xff]
        %v1101 = vld [vmem:[#allocation2 + $0xd08] sm:$0xff]
        %v1102 = vld [vmem:[#allocation2 + $0xd10] sm:$0xff]
        %v1103 = vld [vmem:[#allocation2 + $0xd18] sm:$0xff]
        %v1104 = vld [vmem:[#allocation2 + $0xd20] sm:$0xff]
        %v1105 = vld [vmem:[#allocation2 + $0xd28] sm:$0xff]
        %v1106 = vld [vmem:[#allocation2 + $0xd30] sm:$0xff]
        %v1107 = vld [vmem:[#allocation2 + $0xd38] sm:$0xff]
        %v1108 = vld [vmem:[#allocation2 + $0xd40] sm:$0xff]
        %v1109 = vld [vmem:[#allocation2 + $0xd48] sm:$0xff]
        %v1110 = vld [vmem:[#allocation2 + $0xd50] sm:$0xff]
        %v1111 = vld [vmem:[#allocation2 + $0xd58] sm:$0xff]
        %v1112 = vld [vmem:[#allocation2 + $0xd60] sm:$0xff]
        %v1113 = vld [vmem:[#allocation2 + $0xd68] sm:$0xff]
        %v1114 = vld [vmem:[#allocation2 + $0xd70] sm:$0xff]
        %v1115 = vld [vmem:[#allocation2 + $0xd78] sm:$0xff]
        %v1116 = vld [vmem:[#allocation2 + $0xd80] sm:$0xff]
        %v1117 = vld [vmem:[#allocation2 + $0xd88] sm:$0xff]
        %v1118 = vld [vmem:[#allocation2 + $0xd90] sm:$0xff]
        %v1119 = vld [vmem:[#allocation2 + $0xd98] sm:$0xff]
        %v1120 = vld [vmem:[#allocation2 + $0xda0] sm:$0xff]
        %v1121 = vld [vmem:[#allocation2 + $0xda8] sm:$0xff]
        %v1122 = vld [vmem:[#allocation2 + $0xdb0] sm:$0xff]
        %v1123 = vld [vmem:[#allocation2 + $0xdb8] sm:$0xff]
        %v1124 = vld [vmem:[#allocation2 + $0xdc0] sm:$0xff]
        %v1125 = vld [vmem:[#allocation2 + $0xdc8] sm:$0xff]
        %v1126 = vld [vmem:[#allocation2 + $0xdd0] sm:$0xff]
        %v1127 = vld [vmem:[#allocation2 + $0xdd8] sm:$0xff]
        %v1128 = vld [vmem:[#allocation2 + $0xde0] sm:$0xff]
        %v1129 = vld [vmem:[#allocation2 + $0xde8] sm:$0xff]
        %v1130 = vld [vmem:[#allocation2 + $0xdf0] sm:$0xff]
        %v1131 = vld [vmem:[#allocation2 + $0xdf8] sm:$0xff]
        %v1132 = vld [vmem:[#allocation2 + $0xe00] sm:$0xff]
        %v1133 = vld [vmem:[#allocation2 + $0xe08] sm:$0xff]
        %v1134 = vld [vmem:[#allocation2 + $0xe10] sm:$0xff]
        %v1135 = vld [vmem:[#allocation2 + $0xe18] sm:$0xff]
        %v1136 = vld [vmem:[#allocation2 + $0xe20] sm:$0xff]
        %v1137 = vld [vmem:[#allocation2 + $0xe28] sm:$0xff]
        %v1138 = vld [vmem:[#allocation2 + $0xe30] sm:$0xff]
        %v1139 = vld [vmem:[#allocation2 + $0xe38] sm:$0xff]
        %v1140 = vld [vmem:[#allocation2 + $0xe40] sm:$0xff]
        %v1141 = vld [vmem:[#allocation2 + $0xe48] sm:$0xff]
        %v1142 = vld [vmem:[#allocation2 + $0xe50] sm:$0xff]
        %v1143 = vld [vmem:[#allocation2 + $0xe58] sm:$0xff]
        %v1144 = vld [vmem:[#allocation2 + $0xe60] sm:$0xff]
        %v1145 = vld [vmem:[#allocation2 + $0xe68] sm:$0xff]
        %v1146 = vld [vmem:[#allocation2 + $0xe70] sm:$0xff]
        %v1147 = vld [vmem:[#allocation2 + $0xe78] sm:$0xff]
        %v1148 = vld [vmem:[#allocation2 + $0xe80] sm:$0xff]
        %v1149 = vld [vmem:[#allocation2 + $0xe88] sm:$0xff]
        %v1150 = vld [vmem:[#allocation2 + $0xe90] sm:$0xff]
        %v1151 = vld [vmem:[#allocation2 + $0xe98] sm:$0xff]
        %v1152 = vld [vmem:[#allocation2 + $0xea0] sm:$0xff]
        %v1153 = vld [vmem:[#allocation2 + $0xea8] sm:$0xff]
        %v1154 = vld [vmem:[#allocation2 + $0xeb0] sm:$0xff]
        %v1155 = vld [vmem:[#allocation2 + $0xeb8] sm:$0xff]
        %v1156 = vld [vmem:[#allocation2 + $0xec0] sm:$0xff]
        %v1157 = vld [vmem:[#allocation2 + $0xec8] sm:$0xff]
        %v1158 = vld [vmem:[#allocation2 + $0xed0] sm:$0xff]
        %v1159 = vld [vmem:[#allocation2 + $0xed8] sm:$0xff]
        %v1160 = vld [vmem:[#allocation2 + $0xee0] sm:$0xff]
        %v1161 = vld [vmem:[#allocation2 + $0xee8] sm:$0xff]
        %v1162 = vld [vmem:[#allocation2 + $0xef0] sm:$0xff]
        %v1163 = vld [vmem:[#allocation2 + $0xef8] sm:$0xff]
        %v1164 = vld [vmem:[#allocation2 + $0xf00] sm:$0xff]
        %v1165 = vld [vmem:[#allocation2 + $0xf08] sm:$0xff]
        %v1166 = vld [vmem:[#allocation2 + $0xf10] sm:$0xff]
        %v1167 = vld [vmem:[#allocation2 + $0xf18] sm:$0xff]
        %v1168 = vld [vmem:[#allocation2 + $0xf20] sm:$0xff]
        %v1169 = vld [vmem:[#allocation2 + $0xf28] sm:$0xff]
        %v1170 = vld [vmem:[#allocation2 + $0xf30] sm:$0xff]
        %v1171 = vld [vmem:[#allocation2 + $0xf38] sm:$0xff]
        %v1172 = vld [vmem:[#allocation2 + $0xf40] sm:$0xff]
        %v1173 = vld [vmem:[#allocation2 + $0xf48] sm:$0xff]
        %v1174 = vld [vmem:[#allocation2 + $0xf50] sm:$0xff]
        %v1175 = vld [vmem:[#allocation2 + $0xf58] sm:$0xff]
        %v1176 = vld [vmem:[#allocation2 + $0xf60] sm:$0xff]
        %v1177 = vld [vmem:[#allocation2 + $0xf68] sm:$0xff]
        %v1178 = vld [vmem:[#allocation2 + $0xf70] sm:$0xff]
        %v1179 = vld [vmem:[#allocation2 + $0xf78] sm:$0xff]
        %v1180 = vld [vmem:[#allocation2 + $0xf80] sm:$0xff]
        %v1181 = vld [vmem:[#allocation2 + $0xf88] sm:$0xff]
        %v1182 = vld [vmem:[#allocation2 + $0xf90] sm:$0xff]
        %v1183 = vld [vmem:[#allocation2 + $0xf98] sm:$0xff]
        %v1184 = vld [vmem:[#allocation2 + $0xfa0] sm:$0xff]
        %v1185 = vld [vmem:[#allocation2 + $0xfa8] sm:$0xff]
        %v1186 = vld [vmem:[#allocation2 + $0xfb0] sm:$0xff]
        %v1187 = vld [vmem:[#allocation2 + $0xfb8] sm:$0xff]
        %v1188 = vld [vmem:[#allocation2 + $0xfc0] sm:$0xff]
        %v1189 = vld [vmem:[#allocation2 + $0xfc8] sm:$0xff]
        %v1190 = vld [vmem:[#allocation2 + $0xfd0] sm:$0xff]
        %v1191 = vld [vmem:[#allocation2 + $0xfd8] sm:$0xff]
        %v1192 = vld [vmem:[#allocation2 + $0xfe0] sm:$0xff]
        %v1193 = vld [vmem:[#allocation2 + $0xfe8] sm:$0xff]
        %v1194 = vld [vmem:[#allocation2 + $0xff0] sm:$0xff]
        %v1195 = vld [vmem:[#allocation2 + $0xff8] sm:$0xff]
        %v1196 = vld [vmem:[#allocation2 + $0x1000] sm:$0xff]
        %v1197 = vld [vmem:[#allocation2 + $0x1008] sm:$0xff]
        %v1198 = vld [vmem:[#allocation2 + $0x1010] sm:$0xff]
        %v1199 = vld [vmem:[#allocation2 + $0x1018] sm:$0xff]
        %v1200 = vld [vmem:[#allocation2 + $0x1020] sm:$0xff]
        %v1201 = vld [vmem:[#allocation2 + $0x1028] sm:$0xff]
        %v1202 = vld [vmem:[#allocation2 + $0x1030] sm:$0xff]
        %v1203 = vld [vmem:[#allocation2 + $0x1038] sm:$0xff]
        %v1204 = vld [vmem:[#allocation2 + $0x1040] sm:$0xff]
        %v1205 = vld [vmem:[#allocation2 + $0x1048] sm:$0xff]
        %v1206 = vld [vmem:[#allocation2 + $0x1050] sm:$0xff]
        %v1207 = vld [vmem:[#allocation2 + $0x1058] sm:$0xff]
        %v1208 = vld [vmem:[#allocation2 + $0x1060] sm:$0xff]
        %v1209 = vld [vmem:[#allocation2 + $0x1068] sm:$0xff]
        %v1210 = vld [vmem:[#allocation2 + $0x1070] sm:$0xff]
        %v1211 = vld [vmem:[#allocation2 + $0x1078] sm:$0xff]
        %v1212 = vld [vmem:[#allocation2 + $0x1080] sm:$0xff]
        %v1213 = vld [vmem:[#allocation2 + $0x1088] sm:$0xff]
        %v1214 = vld [vmem:[#allocation2 + $0x1090] sm:$0xff]
        %v1215 = vld [vmem:[#allocation2 + $0x1098] sm:$0xff]
        %v1216 = vld [vmem:[#allocation2 + $0x10a0] sm:$0xff]
        %v1217 = vld [vmem:[#allocation2 + $0x10a8] sm:$0xff]
        %v1218 = vld [vmem:[#allocation2 + $0x10b0] sm:$0xff]
        %v1219 = vld [vmem:[#allocation2 + $0x10b8] sm:$0xff]
        %v1220 = vld [vmem:[#allocation2 + $0x10c0] sm:$0xff]
        %v1221 = vld [vmem:[#allocation2 + $0x10c8] sm:$0xff]
        %v1222 = vld [vmem:[#allocation2 + $0x10d0] sm:$0xff]
        %v1223 = vld [vmem:[#allocation2 + $0x10d8] sm:$0xff]
        %v1224 = vld [vmem:[#allocation2 + $0x10e0] sm:$0xff]
        %v1225 = vld [vmem:[#allocation2 + $0x10e8] sm:$0xff]
        %v1226 = vld [vmem:[#allocation2 + $0x10f0] sm:$0xff]
        %v1227 = vld [vmem:[#allocation2 + $0x10f8] sm:$0xff]
        %v1228 = vld [vmem:[#allocation2 + $0x1100] sm:$0xff]
        %v1229 = vld [vmem:[#allocation2 + $0x1108] sm:$0xff]
        %v1230 = vld [vmem:[#allocation2 + $0x1110] sm:$0xff]
        %v1231 = vld [vmem:[#allocation2 + $0x1118] sm:$0xff]
        %v1232 = vld [vmem:[#allocation2 + $0x1120] sm:$0xff]
        %v1233 = vld [vmem:[#allocation2 + $0x1128] sm:$0xff]
        %v1234 = vld [vmem:[#allocation2 + $0x1130] sm:$0xff]
        %v1235 = vld [vmem:[#allocation2 + $0x1138] sm:$0xff]
        %v1236 = vld [vmem:[#allocation2 + $0x1140] sm:$0xff]
        %v1237 = vld [vmem:[#allocation2 + $0x1148] sm:$0xff]
        %v1238 = vld [vmem:[#allocation2 + $0x1150] sm:$0xff]
        %v1239 = vld [vmem:[#allocation2 + $0x1158] sm:$0xff]
        %v1240 = vld [vmem:[#allocation2 + $0x1160] sm:$0xff]
        %v1241 = vld [vmem:[#allocation2 + $0x1168] sm:$0xff]
        %v1242 = vld [vmem:[#allocation2 + $0x1170] sm:$0xff]
        %v1243 = vld [vmem:[#allocation2 + $0x1178] sm:$0xff]
        %v1244 = vld [vmem:[#allocation2 + $0x1180] sm:$0xff]
        %v1245 = vld [vmem:[#allocation2 + $0x1188] sm:$0xff]
        %v1246 = vld [vmem:[#allocation2 + $0x1190] sm:$0xff]
        %v1247 = vld [vmem:[#allocation2 + $0x1198] sm:$0xff]
        %v1248 = vld [vmem:[#allocation2 + $0x11a0] sm:$0xff]
        %v1249 = vld [vmem:[#allocation2 + $0x11a8] sm:$0xff]
        %v1250 = vld [vmem:[#allocation2 + $0x11b0] sm:$0xff]
        %v1251 = vld [vmem:[#allocation2 + $0x11b8] sm:$0xff]
        %v1252 = vld [vmem:[#allocation2 + $0x11c0] sm:$0xff]
        %v1253 = vld [vmem:[#allocation2 + $0x11c8] sm:$0xff]
        %v1254 = vld [vmem:[#allocation2 + $0x11d0] sm:$0xff]
        %v1255 = vld [vmem:[#allocation2 + $0x11d8] sm:$0xff]
        %v1256 = vld [vmem:[#allocation2 + $0x11e0] sm:$0xff]
        %v1257 = vld [vmem:[#allocation2 + $0x11e8] sm:$0xff]
        %v1258 = vld [vmem:[#allocation2 + $0x11f0] sm:$0xff]
        %v1259 = vld [vmem:[#allocation2 + $0x11f8] sm:$0xff]
        %v1260 = vld [vmem:[#allocation2 + $0x1200] sm:$0xff]
        %v1261 = vld [vmem:[#allocation2 + $0x1208] sm:$0xff]
        %v1262 = vld [vmem:[#allocation2 + $0x1210] sm:$0xff]
        %v1263 = vld [vmem:[#allocation2 + $0x1218] sm:$0xff]
        %v1264 = vld [vmem:[#allocation2 + $0x1220] sm:$0xff]
        %v1265 = vld [vmem:[#allocation2 + $0x1228] sm:$0xff]
        %v1266 = vld [vmem:[#allocation2 + $0x1230] sm:$0xff]
        %v1267 = vld [vmem:[#allocation2 + $0x1238] sm:$0xff]
        %v1268 = vld [vmem:[#allocation2 + $0x1240] sm:$0xff]
        %v1269 = vld [vmem:[#allocation2 + $0x1248] sm:$0xff]
        %v1270 = vld [vmem:[#allocation2 + $0x1250] sm:$0xff]
        %v1271 = vld [vmem:[#allocation2 + $0x1258] sm:$0xff]
        %v1272 = vld [vmem:[#allocation2 + $0x1260] sm:$0xff]
        %v1273 = vld [vmem:[#allocation2 + $0x1268] sm:$0xff]
        %v1274 = vld [vmem:[#allocation2 + $0x1270] sm:$0xff]
        %v1275 = vld [vmem:[#allocation2 + $0x1278] sm:$0xff]
        %v1276 = vld [vmem:[#allocation2 + $0x1280] sm:$0xff]
        %v1277 = vld [vmem:[#allocation2 + $0x1288] sm:$0xff]
        %v1278 = vld [vmem:[#allocation2 + $0x1290] sm:$0xff]
        %v1279 = vld [vmem:[#allocation2 + $0x1298] sm:$0xff]
        %v1280 = vld [vmem:[#allocation2 + $0x12a0] sm:$0xff]
        %v1281 = vld [vmem:[#allocation2 + $0x12a8] sm:$0xff]
        %v1282 = vld [vmem:[#allocation2 + $0x12b0] sm:$0xff]
        %v1283 = vld [vmem:[#allocation2 + $0x12b8] sm:$0xff]
        %v1284 = vld [vmem:[#allocation2 + $0x12c0] sm:$0xff]
        %v1285 = vld [vmem:[#allocation2 + $0x12c8] sm:$0xff]
        %v1286 = vld [vmem:[#allocation2 + $0x12d0] sm:$0xff]
        %v1287 = vld [vmem:[#allocation2 + $0x12d8] sm:$0xff]
        %v1288 = vld [vmem:[#allocation2 + $0x12e0] sm:$0xff]
        %v1289 = vld [vmem:[#allocation2 + $0x12e8] sm:$0xff]
        %v1290 = vld [vmem:[#allocation2 + $0x12f0] sm:$0xff]
        %v1291 = vld [vmem:[#allocation2 + $0x12f8] sm:$0xff]
        %v1292 = vld [vmem:[#allocation2 + $0x1300] sm:$0xff]
        %v1293 = vld [vmem:[#allocation2 + $0x1308] sm:$0xff]
        %v1294 = vld [vmem:[#allocation2 + $0x1310] sm:$0xff]
        %v1295 = vld [vmem:[#allocation2 + $0x1318] sm:$0xff]
        %v1296 = vld [vmem:[#allocation2 + $0x1320] sm:$0xff]
        %v1297 = vld [vmem:[#allocation2 + $0x1328] sm:$0xff]
        %v1298 = vld [vmem:[#allocation2 + $0x1330] sm:$0xff]
        %v1299 = vld [vmem:[#allocation2 + $0x1338] sm:$0xff]
        %v1300 = vld [vmem:[#allocation2 + $0x1340] sm:$0xff]
        %v1301 = vld [vmem:[#allocation2 + $0x1348] sm:$0xff]
        %v1302 = vld [vmem:[#allocation2 + $0x1350] sm:$0xff]
        %v1303 = vld [vmem:[#allocation2 + $0x1358] sm:$0xff]
        %v1304 = vld [vmem:[#allocation2 + $0x1360] sm:$0xff]
        %v1305 = vld [vmem:[#allocation2 + $0x1368] sm:$0xff]
        %v1306 = vld [vmem:[#allocation2 + $0x1370] sm:$0xff]
        %v1307 = vld [vmem:[#allocation2 + $0x1378] sm:$0xff]
        %v1308 = vld [vmem:[#allocation2 + $0x1380] sm:$0xff]
        %v1309 = vld [vmem:[#allocation2 + $0x1388] sm:$0xff]
        %v1310 = vld [vmem:[#allocation2 + $0x1390] sm:$0xff]
        %v1311 = vld [vmem:[#allocation2 + $0x1398] sm:$0xff]
        %v1312 = vld [vmem:[#allocation2 + $0x13a0] sm:$0xff]
        %v1313 = vld [vmem:[#allocation2 + $0x13a8] sm:$0xff]
        %v1314 = vld [vmem:[#allocation2 + $0x13b0] sm:$0xff]
        %v1315 = vld [vmem:[#allocation2 + $0x13b8] sm:$0xff]
        %v1316 = vld [vmem:[#allocation2 + $0x13c0] sm:$0xff]
        %v1317 = vld [vmem:[#allocation2 + $0x13c8] sm:$0xff]
        %v1318 = vld [vmem:[#allocation2 + $0x13d0] sm:$0xff]
        %v1319 = vld [vmem:[#allocation2 + $0x13d8] sm:$0xff]
        %v1320 = vld [vmem:[#allocation2 + $0x13e0] sm:$0xff]
        %v1321 = vld [vmem:[#allocation2 + $0x13e8] sm:$0xff]
        %v1322 = vld [vmem:[#allocation2 + $0x13f0] sm:$0xff]
        %v1323 = vld [vmem:[#allocation2 + $0x13f8] sm:$0xff]
        %v1324 = vld [vmem:[#allocation2 + $0x1400] sm:$0xff]
        %v1325 = vld [vmem:[#allocation2 + $0x1408] sm:$0xff]
        %v1326 = vld [vmem:[#allocation2 + $0x1410] sm:$0xff]
        %v1327 = vld [vmem:[#allocation2 + $0x1418] sm:$0xff]
        %v1328 = vld [vmem:[#allocation2 + $0x1420] sm:$0xff]
        %v1329 = vld [vmem:[#allocation2 + $0x1428] sm:$0xff]
        %v1330 = vld [vmem:[#allocation2 + $0x1430] sm:$0xff]
        %v1331 = vld [vmem:[#allocation2 + $0x1438] sm:$0xff]
        %v1332 = vld [vmem:[#allocation2 + $0x1440] sm:$0xff]
        %v1333 = vld [vmem:[#allocation2 + $0x1448] sm:$0xff]
        %v1334 = vld [vmem:[#allocation2 + $0x1450] sm:$0xff]
        %v1335 = vld [vmem:[#allocation2 + $0x1458] sm:$0xff]
        %v1336 = vld [vmem:[#allocation2 + $0x1460] sm:$0xff]
        %v1337 = vld [vmem:[#allocation2 + $0x1468] sm:$0xff]
        %v1338 = vld [vmem:[#allocation2 + $0x1470] sm:$0xff]
        %v1339 = vld [vmem:[#allocation2 + $0x1478] sm:$0xff]
        %v1340 = vld [vmem:[#allocation2 + $0x1480] sm:$0xff]
        %v1341 = vld [vmem:[#allocation2 + $0x1488] sm:$0xff]
        %v1342 = vld [vmem:[#allocation2 + $0x1490] sm:$0xff]
        %v1343 = vld [vmem:[#allocation2 + $0x1498] sm:$0xff]
        %v1344 = vld [vmem:[#allocation2 + $0x14a0] sm:$0xff]
        %v1345 = vld [vmem:[#allocation2 + $0x14a8] sm:$0xff]
        %v1346 = vld [vmem:[#allocation2 + $0x14b0] sm:$0xff]
        %v1347 = vld [vmem:[#allocation2 + $0x14b8] sm:$0xff]
        %v1348 = vld [vmem:[#allocation2 + $0x14c0] sm:$0xff]
        %v1349 = vld [vmem:[#allocation2 + $0x14c8] sm:$0xff]
        %v1350 = vld [vmem:[#allocation2 + $0x14d0] sm:$0xff]
        %v1351 = vld [vmem:[#allocation2 + $0x14d8] sm:$0xff]
        %v1352 = vld [vmem:[#allocation2 + $0x14e0] sm:$0xff]
        %v1353 = vld [vmem:[#allocation2 + $0x14e8] sm:$0xff]
        %v1354 = vld [vmem:[#allocation2 + $0x14f0] sm:$0xff]
        %v1355 = vld [vmem:[#allocation2 + $0x14f8] sm:$0xff]
        %v1356 = vld [vmem:[#allocation2 + $0x1500] sm:$0xff]
        %v1357 = vld [vmem:[#allocation2 + $0x1508] sm:$0xff]
        %v1358 = vld [vmem:[#allocation2 + $0x1510] sm:$0xff]
        %v1359 = vld [vmem:[#allocation2 + $0x1518] sm:$0xff]
        %v1360 = vld [vmem:[#allocation2 + $0x1520] sm:$0xff]
        %v1361 = vld [vmem:[#allocation2 + $0x1528] sm:$0xff]
        %v1362 = vld [vmem:[#allocation2 + $0x1530] sm:$0xff]
        %v1363 = vld [vmem:[#allocation2 + $0x1538] sm:$0xff]
        %v1364 = vld [vmem:[#allocation2 + $0x1540] sm:$0xff]
        %v1365 = vld [vmem:[#allocation2 + $0x1548] sm:$0xff]
        %v1366 = vld [vmem:[#allocation2 + $0x1550] sm:$0xff]
        %v1367 = vld [vmem:[#allocation2 + $0x1558] sm:$0xff]
        %v1368 = vld [vmem:[#allocation2 + $0x1560] sm:$0xff]
        %v1369 = vld [vmem:[#allocation2 + $0x1568] sm:$0xff]
        %v1370 = vld [vmem:[#allocation2 + $0x1570] sm:$0xff]
        %v1371 = vld [vmem:[#allocation2 + $0x1578] sm:$0xff]
        %v1372 = vld [vmem:[#allocation2 + $0x1580] sm:$0xff]
        %v1373 = vld [vmem:[#allocation2 + $0x1588] sm:$0xff]
        %v1374 = vld [vmem:[#allocation2 + $0x1590] sm:$0xff]
        %v1375 = vld [vmem:[#allocation2 + $0x1598] sm:$0xff]
        %v1376 = vld [vmem:[#allocation2 + $0x15a0] sm:$0xff]
        %v1377 = vld [vmem:[#allocation2 + $0x15a8] sm:$0xff]
        %v1378 = vld [vmem:[#allocation2 + $0x15b0] sm:$0xff]
        %v1379 = vld [vmem:[#allocation2 + $0x15b8] sm:$0xff]
        %v1380 = vld [vmem:[#allocation2 + $0x15c0] sm:$0xff]
        %v1381 = vld [vmem:[#allocation2 + $0x15c8] sm:$0xff]
        %v1382 = vld [vmem:[#allocation2 + $0x15d0] sm:$0xff]
        %v1383 = vld [vmem:[#allocation2 + $0x15d8] sm:$0xff]
        %v1384 = vld [vmem:[#allocation2 + $0x15e0] sm:$0xff]
        %v1385 = vld [vmem:[#allocation2 + $0x15e8] sm:$0xff]
        %v1386 = vld [vmem:[#allocation2 + $0x15f0] sm:$0xff]
        %v1387 = vld [vmem:[#allocation2 + $0x15f8] sm:$0xff]
        %v1388 = vld [vmem:[#allocation2 + $0x1600] sm:$0xff]
        %v1389 = vld [vmem:[#allocation2 + $0x1608] sm:$0xff]
        %v1390 = vld [vmem:[#allocation2 + $0x1610] sm:$0xff]
        %v1391 = vld [vmem:[#allocation2 + $0x1618] sm:$0xff]
        %v1392 = vld [vmem:[#allocation2 + $0x1620] sm:$0xff]
        %v1393 = vld [vmem:[#allocation2 + $0x1628] sm:$0xff]
        %v1394 = vld [vmem:[#allocation2 + $0x1630] sm:$0xff]
        %v1395 = vld [vmem:[#allocation2 + $0x1638] sm:$0xff]
        %v1396 = vld [vmem:[#allocation2 + $0x1640] sm:$0xff]
        %v1397 = vld [vmem:[#allocation2 + $0x1648] sm:$0xff]
        %v1398 = vld [vmem:[#allocation2 + $0x1650] sm:$0xff]
        %v1399 = vld [vmem:[#allocation2 + $0x1658] sm:$0xff]
        %v1400 = vld [vmem:[#allocation2 + $0x1660] sm:$0xff]
        %v1401 = vld [vmem:[#allocation2 + $0x1668] sm:$0xff]
        %v1402 = vld [vmem:[#allocation2 + $0x1670] sm:$0xff]
        %v1403 = vld [vmem:[#allocation2 + $0x1678] sm:$0xff]
        %v1404 = vld [vmem:[#allocation2 + $0x1680] sm:$0xff]
        %v1405 = vld [vmem:[#allocation2 + $0x1688] sm:$0xff]
        %v1406 = vld [vmem:[#allocation2 + $0x1690] sm:$0xff]
        %v1407 = vld [vmem:[#allocation2 + $0x1698] sm:$0xff]
        %v1408 = vld [vmem:[#allocation2 + $0x16a0] sm:$0xff]
        %v1409 = vld [vmem:[#allocation2 + $0x16a8] sm:$0xff]
        %v1410 = vld [vmem:[#allocation2 + $0x16b0] sm:$0xff]
        %v1411 = vld [vmem:[#allocation2 + $0x16b8] sm:$0xff]
        %v1412 = vld [vmem:[#allocation2 + $0x16c0] sm:$0xff]
        %v1413 = vld [vmem:[#allocation2 + $0x16c8] sm:$0xff]
        %v1414 = vld [vmem:[#allocation2 + $0x16d0] sm:$0xff]
        %v1415 = vld [vmem:[#allocation2 + $0x16d8] sm:$0xff]
        %v1416 = vld [vmem:[#allocation2 + $0x16e0] sm:$0xff]
        %v1417 = vld [vmem:[#allocation2 + $0x16e8] sm:$0xff]
        %v1418 = vld [vmem:[#allocation2 + $0x16f0] sm:$0xff]
        %v1419 = vld [vmem:[#allocation2 + $0x16f8] sm:$0xff]
        %v1420 = vld [vmem:[#allocation2 + $0x1700] sm:$0xff]
        %v1421 = vld [vmem:[#allocation2 + $0x1708] sm:$0xff]
        %v1422 = vld [vmem:[#allocation2 + $0x1710] sm:$0xff]
        %v1423 = vld [vmem:[#allocation2 + $0x1718] sm:$0xff]
        %v1424 = vld [vmem:[#allocation2 + $0x1720] sm:$0xff]
        %v1425 = vld [vmem:[#allocation2 + $0x1728] sm:$0xff]
        %v1426 = vld [vmem:[#allocation2 + $0x1730] sm:$0xff]
        %v1427 = vld [vmem:[#allocation2 + $0x1738] sm:$0xff]
        %v1428 = vld [vmem:[#allocation2 + $0x1740] sm:$0xff]
        %v1429 = vld [vmem:[#allocation2 + $0x1748] sm:$0xff]
        %v1430 = vld [vmem:[#allocation2 + $0x1750] sm:$0xff]
        %v1431 = vld [vmem:[#allocation2 + $0x1758] sm:$0xff]
        %v1432 = vld [vmem:[#allocation2 + $0x1760] sm:$0xff]
        %v1433 = vld [vmem:[#allocation2 + $0x1768] sm:$0xff]
        %v1434 = vld [vmem:[#allocation2 + $0x1770] sm:$0xff]
        %v1435 = vld [vmem:[#allocation2 + $0x1778] sm:$0xff]
        %v1436 = vld [vmem:[#allocation2 + $0x1780] sm:$0xff]
        %v1437 = vld [vmem:[#allocation2 + $0x1788] sm:$0xff]
        %v1438 = vld [vmem:[#allocation2 + $0x1790] sm:$0xff]
        %v1439 = vld [vmem:[#allocation2 + $0x1798] sm:$0xff]
        %v1440 = vld [vmem:[#allocation2 + $0x17a0] sm:$0xff]
        %v1441 = vld [vmem:[#allocation2 + $0x17a8] sm:$0xff]
        %v1442 = vld [vmem:[#allocation2 + $0x17b0] sm:$0xff]
        %v1443 = vld [vmem:[#allocation2 + $0x17b8] sm:$0xff]
        %v1444 = vld [vmem:[#allocation2 + $0x17c0] sm:$0xff]
        %v1445 = vld [vmem:[#allocation2 + $0x17c8] sm:$0xff]
        %v1446 = vld [vmem:[#allocation2 + $0x17d0] sm:$0xff]
        %v1447 = vld [vmem:[#allocation2 + $0x17d8] sm:$0xff]
        %v1448 = vld [vmem:[#allocation2 + $0x17e0] sm:$0xff]
        %v1449 = vld [vmem:[#allocation2 + $0x17e8] sm:$0xff]
        %v1450 = vld [vmem:[#allocation2 + $0x17f0] sm:$0xff]
        %v1451 = vld [vmem:[#allocation2 + $0x17f8] sm:$0xff]
        %v1452 = vld [vmem:[#allocation2 + $0x1800] sm:$0xff]
        %v1453 = vld [vmem:[#allocation2 + $0x1808] sm:$0xff]
        %v1454 = vld [vmem:[#allocation2 + $0x1810] sm:$0xff]
        %v1455 = vld [vmem:[#allocation2 + $0x1818] sm:$0xff]
        %v1456 = vld [vmem:[#allocation2 + $0x1820] sm:$0xff]
        %v1457 = vld [vmem:[#allocation2 + $0x1828] sm:$0xff]
        %v1458 = vld [vmem:[#allocation2 + $0x1830] sm:$0xff]
        %v1459 = vld [vmem:[#allocation2 + $0x1838] sm:$0xff]
        %v1460 = vld [vmem:[#allocation2 + $0x1840] sm:$0xff]
        %v1461 = vld [vmem:[#allocation2 + $0x1848] sm:$0xff]
        %v1462 = vld [vmem:[#allocation2 + $0x1850] sm:$0xff]
        %v1463 = vld [vmem:[#allocation2 + $0x1858] sm:$0xff]
        %v1464 = vld [vmem:[#allocation2 + $0x1860] sm:$0xff]
        %v1465 = vld [vmem:[#allocation2 + $0x1868] sm:$0xff]
        %v1466 = vld [vmem:[#allocation2 + $0x1870] sm:$0xff]
        %v1467 = vld [vmem:[#allocation2 + $0x1878] sm:$0xff]
        %v1468 = vld [vmem:[#allocation2 + $0x1880] sm:$0xff]
        %v1469 = vld [vmem:[#allocation2 + $0x1888] sm:$0xff]
        %v1470 = vld [vmem:[#allocation2 + $0x1890] sm:$0xff]
        %v1471 = vld [vmem:[#allocation2 + $0x1898] sm:$0xff]
        %v1472 = vld [vmem:[#allocation2 + $0x18a0] sm:$0xff]
        %v1473 = vld [vmem:[#allocation2 + $0x18a8] sm:$0xff]
        %v1474 = vld [vmem:[#allocation2 + $0x18b0] sm:$0xff]
        %v1475 = vld [vmem:[#allocation2 + $0x18b8] sm:$0xff]
        %v1476 = vld [vmem:[#allocation2 + $0x18c0] sm:$0xff]
        %v1477 = vld [vmem:[#allocation2 + $0x18c8] sm:$0xff]
        %v1478 = vld [vmem:[#allocation2 + $0x18d0] sm:$0xff]
        %v1479 = vld [vmem:[#allocation2 + $0x18d8] sm:$0xff]
        %v1480 = vld [vmem:[#allocation2 + $0x18e0] sm:$0xff]
        %v1481 = vld [vmem:[#allocation2 + $0x18e8] sm:$0xff]
        %v1482 = vld [vmem:[#allocation2 + $0x18f0] sm:$0xff]
        %v1483 = vld [vmem:[#allocation2 + $0x18f8] sm:$0xff]
        %v1484 = vld [vmem:[#allocation2 + $0x1900] sm:$0xff]
        %v1485 = vld [vmem:[#allocation2 + $0x1908] sm:$0xff]
        %v1486 = vld [vmem:[#allocation2 + $0x1910] sm:$0xff]
        %v1487 = vld [vmem:[#allocation2 + $0x1918] sm:$0xff]
        %v1488 = vld [vmem:[#allocation2 + $0x1920] sm:$0xff]
        %v1489 = vld [vmem:[#allocation2 + $0x1928] sm:$0xff]
        %v1490 = vld [vmem:[#allocation2 + $0x1930] sm:$0xff]
        %v1491 = vld [vmem:[#allocation2 + $0x1938] sm:$0xff]
        %v1492 = vld [vmem:[#allocation2 + $0x1940] sm:$0xff]
        %v1493 = vld [vmem:[#allocation2 + $0x1948] sm:$0xff]
        %v1494 = vld [vmem:[#allocation2 + $0x1950] sm:$0xff]
        %v1495 = vld [vmem:[#allocation2 + $0x1958] sm:$0xff]
        %v1496 = vld [vmem:[#allocation2 + $0x1960] sm:$0xff]
        %v1497 = vld [vmem:[#allocation2 + $0x1968] sm:$0xff]
        %v1498 = vld [vmem:[#allocation2 + $0x1970] sm:$0xff]
        %v1499 = vld [vmem:[#allocation2 + $0x1978] sm:$0xff]
        %v1500 = vld [vmem:[#allocation2 + $0x1980] sm:$0xff]
        %v1501 = vld [vmem:[#allocation2 + $0x1988] sm:$0xff]
        %v1502 = vld [vmem:[#allocation2 + $0x1990] sm:$0xff]
        %v1503 = vld [vmem:[#allocation2 + $0x1998] sm:$0xff]
        %v1504 = vld [vmem:[#allocation2 + $0x19a0] sm:$0xff]
        %v1505 = vld [vmem:[#allocation2 + $0x19a8] sm:$0xff]
        %v1506 = vld [vmem:[#allocation2 + $0x19b0] sm:$0xff]
        %v1507 = vld [vmem:[#allocation2 + $0x19b8] sm:$0xff]
        %v1508 = vld [vmem:[#allocation2 + $0x19c0] sm:$0xff]
        %v1509 = vld [vmem:[#allocation2 + $0x19c8] sm:$0xff]
        %v1510 = vld [vmem:[#allocation2 + $0x19d0] sm:$0xff]
        %v1511 = vld [vmem:[#allocation2 + $0x19d8] sm:$0xff]
        %v1512 = vld [vmem:[#allocation2 + $0x19e0] sm:$0xff]
        %v1513 = vld [vmem:[#allocation2 + $0x19e8] sm:$0xff]
        %v1514 = vld [vmem:[#allocation2 + $0x19f0] sm:$0xff]
        %v1515 = vld [vmem:[#allocation2 + $0x19f8] sm:$0xff]
        %v1516 = vld [vmem:[#allocation2 + $0x1a00] sm:$0xff]
        %v1517 = vld [vmem:[#allocation2 + $0x1a08] sm:$0xff]
        %v1518 = vld [vmem:[#allocation2 + $0x1a10] sm:$0xff]
        %v1519 = vld [vmem:[#allocation2 + $0x1a18] sm:$0xff]
        %v1520 = vld [vmem:[#allocation2 + $0x1a20] sm:$0xff]
        %v1521 = vld [vmem:[#allocation2 + $0x1a28] sm:$0xff]
        %v1522 = vld [vmem:[#allocation2 + $0x1a30] sm:$0xff]
        %v1523 = vld [vmem:[#allocation2 + $0x1a38] sm:$0xff]
        %v1524 = vld [vmem:[#allocation2 + $0x1a40] sm:$0xff]
        %v1525 = vld [vmem:[#allocation2 + $0x1a48] sm:$0xff]
        %v1526 = vld [vmem:[#allocation2 + $0x1a50] sm:$0xff]
        %v1527 = vld [vmem:[#allocation2 + $0x1a58] sm:$0xff]
        %v1528 = vld [vmem:[#allocation2 + $0x1a60] sm:$0xff]
        %v1529 = vld [vmem:[#allocation2 + $0x1a68] sm:$0xff]
        %v1530 = vld [vmem:[#allocation2 + $0x1a70] sm:$0xff]
        %v1531 = vld [vmem:[#allocation2 + $0x1a78] sm:$0xff]
        %v1532 = vld [vmem:[#allocation2 + $0x1a80] sm:$0xff]
        %v1533 = vld [vmem:[#allocation2 + $0x1a88] sm:$0xff]
        %v1534 = vld [vmem:[#allocation2 + $0x1a90] sm:$0xff]
        %v1535 = vld [vmem:[#allocation2 + $0x1a98] sm:$0xff]
        %v1536 = vld [vmem:[#allocation2 + $0x1aa0] sm:$0xff]
        %v1537 = vld [vmem:[#allocation2 + $0x1aa8] sm:$0xff]
        %v1538 = vld [vmem:[#allocation2 + $0x1ab0] sm:$0xff]
        %v1539 = vld [vmem:[#allocation2 + $0x1ab8] sm:$0xff]
        %v1540 = vld [vmem:[#allocation2 + $0x1ac0] sm:$0xff]
        %v1541 = vld [vmem:[#allocation2 + $0x1ac8] sm:$0xff]
        %v1542 = vld [vmem:[#allocation2 + $0x1ad0] sm:$0xff]
        %v1543 = vld [vmem:[#allocation2 + $0x1ad8] sm:$0xff]
        %v1544 = vld [vmem:[#allocation2 + $0x1ae0] sm:$0xff]
        %v1545 = vld [vmem:[#allocation2 + $0x1ae8] sm:$0xff]
        %v1546 = vld [vmem:[#allocation2 + $0x1af0] sm:$0xff]
        %v1547 = vld [vmem:[#allocation2 + $0x1af8] sm:$0xff]
        %v1548 = vld [vmem:[#allocation2 + $0x1b00] sm:$0xff]
        %v1549 = vld [vmem:[#allocation2 + $0x1b08] sm:$0xff]
        %v1550 = vld [vmem:[#allocation2 + $0x1b10] sm:$0xff]
        %v1551 = vld [vmem:[#allocation2 + $0x1b18] sm:$0xff]
        %v1552 = vld [vmem:[#allocation2 + $0x1b20] sm:$0xff]
        %v1553 = vld [vmem:[#allocation2 + $0x1b28] sm:$0xff]
        %v1554 = vld [vmem:[#allocation2 + $0x1b30] sm:$0xff]
        %v1555 = vld [vmem:[#allocation2 + $0x1b38] sm:$0xff]
        %v1556 = vld [vmem:[#allocation2 + $0x1b40] sm:$0xff]
        %v1557 = vld [vmem:[#allocation2 + $0x1b48] sm:$0xff]
        %v1558 = vld [vmem:[#allocation2 + $0x1b50] sm:$0xff]
        %v1559 = vld [vmem:[#allocation2 + $0x1b58] sm:$0xff]
        %v1560 = vld [vmem:[#allocation2 + $0x1b60] sm:$0xff]
        %v1561 = vld [vmem:[#allocation2 + $0x1b68] sm:$0xff]
        %v1562 = vld [vmem:[#allocation2 + $0x1b70] sm:$0xff]
        %v1563 = vld [vmem:[#allocation2 + $0x1b78] sm:$0xff]
        %v1564 = vld [vmem:[#allocation2 + $0x1b80] sm:$0xff]
        %v1565 = vld [vmem:[#allocation2 + $0x1b88] sm:$0xff]
        %v1566 = vld [vmem:[#allocation2 + $0x1b90] sm:$0xff]
        %v1567 = vld [vmem:[#allocation2 + $0x1b98] sm:$0xff]
        %v1568 = vld [vmem:[#allocation2 + $0x1ba0] sm:$0xff]
        %v1569 = vld [vmem:[#allocation2 + $0x1ba8] sm:$0xff]
        %v1570 = vld [vmem:[#allocation2 + $0x1bb0] sm:$0xff]
        %v1571 = vld [vmem:[#allocation2 + $0x1bb8] sm:$0xff]
        %v1572 = vld [vmem:[#allocation2 + $0x1bc0] sm:$0xff]
        %v1573 = vld [vmem:[#allocation2 + $0x1bc8] sm:$0xff]
        %v1574 = vld [vmem:[#allocation2 + $0x1bd0] sm:$0xff]
        %v1575 = vld [vmem:[#allocation2 + $0x1bd8] sm:$0xff]
        %v1576 = vld [vmem:[#allocation2 + $0x1be0] sm:$0xff]
        %v1577 = vld [vmem:[#allocation2 + $0x1be8] sm:$0xff]
        %v1578 = vld [vmem:[#allocation2 + $0x1bf0] sm:$0xff]
        %v1579 = vld [vmem:[#allocation2 + $0x1bf8] sm:$0xff]
        %v1580 = vld [vmem:[#allocation2 + $0x1c00] sm:$0xff]
        %v1581 = vld [vmem:[#allocation2 + $0x1c08] sm:$0xff]
        %v1582 = vld [vmem:[#allocation2 + $0x1c10] sm:$0xff]
        %v1583 = vld [vmem:[#allocation2 + $0x1c18] sm:$0xff]
        %v1584 = vld [vmem:[#allocation2 + $0x1c20] sm:$0xff]
        %v1585 = vld [vmem:[#allocation2 + $0x1c28] sm:$0xff]
        %v1586 = vld [vmem:[#allocation2 + $0x1c30] sm:$0xff]
        %v1587 = vld [vmem:[#allocation2 + $0x1c38] sm:$0xff]
        %v1588 = vld [vmem:[#allocation2 + $0x1c40] sm:$0xff]
        %v1589 = vld [vmem:[#allocation2 + $0x1c48] sm:$0xff]
        %v1590 = vld [vmem:[#allocation2 + $0x1c50] sm:$0xff]
        %v1591 = vld [vmem:[#allocation2 + $0x1c58] sm:$0xff]
        %v1592 = vld [vmem:[#allocation2 + $0x1c60] sm:$0xff]
        %v1593 = vld [vmem:[#allocation2 + $0x1c68] sm:$0xff]
        %v1594 = vld [vmem:[#allocation2 + $0x1c70] sm:$0xff]
        %v1595 = vld [vmem:[#allocation2 + $0x1c78] sm:$0xff]
        %v1596 = vld [vmem:[#allocation2 + $0x1c80] sm:$0xff]
        %v1597 = vld [vmem:[#allocation2 + $0x1c88] sm:$0xff]
        %v1598 = vld [vmem:[#allocation2 + $0x1c90] sm:$0xff]
        %v1599 = vld [vmem:[#allocation2 + $0x1c98] sm:$0xff]
        %v1600 = vld [vmem:[#allocation2 + $0x1ca0] sm:$0xff]
        %v1601 = vld [vmem:[#allocation2 + $0x1ca8] sm:$0xff]
        %v1602 = vld [vmem:[#allocation2 + $0x1cb0] sm:$0xff]
        %v1603 = vld [vmem:[#allocation2 + $0x1cb8] sm:$0xff]
        %v1604 = vld [vmem:[#allocation2 + $0x1cc0] sm:$0xff]
        %v1605 = vld [vmem:[#allocation2 + $0x1cc8] sm:$0xff]
        %v1606 = vld [vmem:[#allocation2 + $0x1cd0] sm:$0xff]
        %v1607 = vld [vmem:[#allocation2 + $0x1cd8] sm:$0xff]
        %v1608 = vld [vmem:[#allocation2 + $0x1ce0] sm:$0xff]
        %v1609 = vld [vmem:[#allocation2 + $0x1ce8] sm:$0xff]
        %v1610 = vld [vmem:[#allocation2 + $0x1cf0] sm:$0xff]
        %v1611 = vld [vmem:[#allocation2 + $0x1cf8] sm:$0xff]
        %v1612 = vld [vmem:[#allocation2 + $0x1d00] sm:$0xff]
        %v1613 = vld [vmem:[#allocation2 + $0x1d08] sm:$0xff]
        %v1614 = vld [vmem:[#allocation2 + $0x1d10] sm:$0xff]
        %v1615 = vld [vmem:[#allocation2 + $0x1d18] sm:$0xff]
        %v1616 = vld [vmem:[#allocation2 + $0x1d20] sm:$0xff]
        %v1617 = vld [vmem:[#allocation2 + $0x1d28] sm:$0xff]
        %v1618 = vld [vmem:[#allocation2 + $0x1d30] sm:$0xff]
        %v1619 = vld [vmem:[#allocation2 + $0x1d38] sm:$0xff]
        %v1620 = vld [vmem:[#allocation2 + $0x1d40] sm:$0xff]
        %v1621 = vld [vmem:[#allocation2 + $0x1d48] sm:$0xff]
        %v1622 = vld [vmem:[#allocation2 + $0x1d50] sm:$0xff]
        %v1623 = vld [vmem:[#allocation2 + $0x1d58] sm:$0xff]
        %v1624 = vld [vmem:[#allocation2 + $0x1d60] sm:$0xff]
        %v1625 = vld [vmem:[#allocation2 + $0x1d68] sm:$0xff]
        %v1626 = vld [vmem:[#allocation2 + $0x1d70] sm:$0xff]
        %v1627 = vld [vmem:[#allocation2 + $0x1d78] sm:$0xff]
        %v1628 = vld [vmem:[#allocation2 + $0x1d80] sm:$0xff]
        %v1629 = vld [vmem:[#allocation2 + $0x1d88] sm:$0xff]
        %v1630 = vld [vmem:[#allocation2 + $0x1d90] sm:$0xff]
        %v1631 = vld [vmem:[#allocation2 + $0x1d98] sm:$0xff]
        %v1632 = vld [vmem:[#allocation2 + $0x1da0] sm:$0xff]
        %v1633 = vld [vmem:[#allocation2 + $0x1da8] sm:$0xff]
        %v1634 = vld [vmem:[#allocation2 + $0x1db0] sm:$0xff]
        %v1635 = vld [vmem:[#allocation2 + $0x1db8] sm:$0xff]
        %v1636 = vld [vmem:[#allocation2 + $0x1dc0] sm:$0xff]
        %v1637 = vld [vmem:[#allocation2 + $0x1dc8] sm:$0xff]
        %v1638 = vld [vmem:[#allocation2 + $0x1dd0] sm:$0xff]
        %v1639 = vld [vmem:[#allocation2 + $0x1dd8] sm:$0xff]
        %v1640 = vld [vmem:[#allocation2 + $0x1de0] sm:$0xff]
        %v1641 = vld [vmem:[#allocation2 + $0x1de8] sm:$0xff]
        %v1642 = vld [vmem:[#allocation2 + $0x1df0] sm:$0xff]
        %v1643 = vld [vmem:[#allocation2 + $0x1df8] sm:$0xff]
        %v1644 = vld [vmem:[#allocation2 + $0x1e00] sm:$0xff]
        %v1645 = vld [vmem:[#allocation2 + $0x1e08] sm:$0xff]
        %v1646 = vld [vmem:[#allocation2 + $0x1e10] sm:$0xff]
        %v1647 = vld [vmem:[#allocation2 + $0x1e18] sm:$0xff]
        %v1648 = vld [vmem:[#allocation2 + $0x1e20] sm:$0xff]
        %v1649 = vld [vmem:[#allocation2 + $0x1e28] sm:$0xff]
        %v1650 = vld [vmem:[#allocation2 + $0x1e30] sm:$0xff]
        %v1651 = vld [vmem:[#allocation2 + $0x1e38] sm:$0xff]
        %v1652 = vld [vmem:[#allocation2 + $0x1e40] sm:$0xff]
        %v1653 = vld [vmem:[#allocation2 + $0x1e48] sm:$0xff]
        %v1654 = vld [vmem:[#allocation2 + $0x1e50] sm:$0xff]
        %v1655 = vld [vmem:[#allocation2 + $0x1e58] sm:$0xff]
        %v1656 = vld [vmem:[#allocation2 + $0x1e60] sm:$0xff]
        %v1657 = vld [vmem:[#allocation2 + $0x1e68] sm:$0xff]
        %v1658 = vld [vmem:[#allocation2 + $0x1e70] sm:$0xff]
        %v1659 = vld [vmem:[#allocation2 + $0x1e78] sm:$0xff]
        %v1660 = vld [vmem:[#allocation2 + $0x1e80] sm:$0xff]
        %v1661 = vld [vmem:[#allocation2 + $0x1e88] sm:$0xff]
        %v1662 = vld [vmem:[#allocation2 + $0x1e90] sm:$0xff]
        %v1663 = vld [vmem:[#allocation2 + $0x1e98] sm:$0xff]
        %v1664 = vld [vmem:[#allocation2 + $0x1ea0] sm:$0xff]
        %v1665 = vld [vmem:[#allocation2 + $0x1ea8] sm:$0xff]
        %v1666 = vld [vmem:[#allocation2 + $0x1eb0] sm:$0xff]
        %v1667 = vld [vmem:[#allocation2 + $0x1eb8] sm:$0xff]
        %v1668 = vld [vmem:[#allocation2 + $0x1ec0] sm:$0xff]
        %v1669 = vld [vmem:[#allocation2 + $0x1ec8] sm:$0xff]
        %v1670 = vld [vmem:[#allocation2 + $0x1ed0] sm:$0xff]
        %v1671 = vld [vmem:[#allocation2 + $0x1ed8] sm:$0xff]
        %v1672 = vld [vmem:[#allocation2 + $0x1ee0] sm:$0xff]
        %v1673 = vld [vmem:[#allocation2 + $0x1ee8] sm:$0xff]
        %v1674 = vld [vmem:[#allocation2 + $0x1ef0] sm:$0xff]
        %v1675 = vld [vmem:[#allocation2 + $0x1ef8] sm:$0xff]
        %v1676 = vld [vmem:[#allocation2 + $0x1f00] sm:$0xff]
        %v1677 = vld [vmem:[#allocation2 + $0x1f08] sm:$0xff]
        %v1678 = vld [vmem:[#allocation2 + $0x1f10] sm:$0xff]
        %v1679 = vld [vmem:[#allocation2 + $0x1f18] sm:$0xff]
        %v1680 = vld [vmem:[#allocation2 + $0x1f20] sm:$0xff]
        %v1681 = vld [vmem:[#allocation2 + $0x1f28] sm:$0xff]
        %v1682 = vld [vmem:[#allocation2 + $0x1f30] sm:$0xff]
        %v1683 = vld [vmem:[#allocation2 + $0x1f38] sm:$0xff]
        %v1684 = vld [vmem:[#allocation2 + $0x1f40] sm:$0xff]
        %v1685 = vld [vmem:[#allocation2 + $0x1f48] sm:$0xff]
        %v1686 = vld [vmem:[#allocation2 + $0x1f50] sm:$0xff]
        %v1687 = vld [vmem:[#allocation2 + $0x1f58] sm:$0xff]
        %v1688 = vld [vmem:[#allocation2 + $0x1f60] sm:$0xff]
        %v1689 = vld [vmem:[#allocation2 + $0x1f68] sm:$0xff]
        %v1690 = vld [vmem:[#allocation2 + $0x1f70] sm:$0xff]
        %v1691 = vld [vmem:[#allocation2 + $0x1f78] sm:$0xff]
        %v1692 = vld [vmem:[#allocation2 + $0x1f80] sm:$0xff]
        %v1693 = vld [vmem:[#allocation2 + $0x1f88] sm:$0xff]
        %v1694 = vld [vmem:[#allocation2 + $0x1f90] sm:$0xff]
        %v1695 = vld [vmem:[#allocation2 + $0x1f98] sm:$0xff]
        %v1696 = vld [vmem:[#allocation2 + $0x1fa0] sm:$0xff]
        %v1697 = vld [vmem:[#allocation2 + $0x1fa8] sm:$0xff]
        %v1698 = vld [vmem:[#allocation2 + $0x1fb0] sm:$0xff]
        %v1699 = vld [vmem:[#allocation2 + $0x1fb8] sm:$0xff]
        %v1700 = vld [vmem:[#allocation2 + $0x1fc0] sm:$0xff]
        %v1701 = vld [vmem:[#allocation2 + $0x1fc8] sm:$0xff]
        %v1702 = vld [vmem:[#allocation2 + $0x1fd0] sm:$0xff]
        %v1703 = vld [vmem:[#allocation2 + $0x1fd8] sm:$0xff]
        %v1704 = vld [vmem:[#allocation2 + $0x1fe0] sm:$0xff]
        %v1705 = vld [vmem:[#allocation2 + $0x1fe8] sm:$0xff]
        %v1706 = vld [vmem:[#allocation2 + $0x1ff0] sm:$0xff]
        %v1707 = vld [vmem:[#allocation2 + $0x1ff8] sm:$0xff]
        %v1708 = vld [vmem:[#allocation2 + $0x2000] sm:$0xff]
        %v1709 = vld [vmem:[#allocation2 + $0x2008] sm:$0xff]
        %v1710 = vld [vmem:[#allocation2 + $0x2010] sm:$0xff]
        %v1711 = vld [vmem:[#allocation2 + $0x2018] sm:$0xff]
        %v1712 = vld [vmem:[#allocation2 + $0x2020] sm:$0xff]
        %v1713 = vld [vmem:[#allocation2 + $0x2028] sm:$0xff]
        %v1714 = vld [vmem:[#allocation2 + $0x2030] sm:$0xff]
        %v1715 = vld [vmem:[#allocation2 + $0x2038] sm:$0xff]
        %v1716 = vld [vmem:[#allocation2 + $0x2040] sm:$0xff]
        %v1717 = vld [vmem:[#allocation2 + $0x2048] sm:$0xff]
        %v1718 = vld [vmem:[#allocation2 + $0x2050] sm:$0xff]
        %v1719 = vld [vmem:[#allocation2 + $0x2058] sm:$0xff]
        %v1720 = vld [vmem:[#allocation2 + $0x2060] sm:$0xff]
        %v1721 = vld [vmem:[#allocation2 + $0x2068] sm:$0xff]
        %v1722 = vld [vmem:[#allocation2 + $0x2070] sm:$0xff]
        %v1723 = vld [vmem:[#allocation2 + $0x2078] sm:$0xff]
        %v1724 = vld [vmem:[#allocation2 + $0x2080] sm:$0xff]
        %v1725 = vld [vmem:[#allocation2 + $0x2088] sm:$0xff]
        %v1726 = vld [vmem:[#allocation2 + $0x2090] sm:$0xff]
        %v1727 = vld [vmem:[#allocation2 + $0x2098] sm:$0xff]
        %v1728 = vld [vmem:[#allocation2 + $0x20a0] sm:$0xff]
        %v1729 = vld [vmem:[#allocation2 + $0x20a8] sm:$0xff]
        %v1730 = vld [vmem:[#allocation2 + $0x20b0] sm:$0xff]
        %v1731 = vld [vmem:[#allocation2 + $0x20b8] sm:$0xff]
        %v1732 = vld [vmem:[#allocation2 + $0x20c0] sm:$0xff]
        %v1733 = vld [vmem:[#allocation2 + $0x20c8] sm:$0xff]
        %v1734 = vld [vmem:[#allocation2 + $0x20d0] sm:$0xff]
        %v1735 = vld [vmem:[#allocation2 + $0x20d8] sm:$0xff]
        %v1736 = vld [vmem:[#allocation2 + $0x20e0] sm:$0xff]
        %v1737 = vld [vmem:[#allocation2 + $0x20e8] sm:$0xff]
        %v1738 = vld [vmem:[#allocation2 + $0x20f0] sm:$0xff]
        %v1739 = vld [vmem:[#allocation2 + $0x20f8] sm:$0xff]
        %v1740 = vld [vmem:[#allocation2 + $0x2100] sm:$0xff]
        %v1741 = vld [vmem:[#allocation2 + $0x2108] sm:$0xff]
        %v1742 = vld [vmem:[#allocation2 + $0x2110] sm:$0xff]
        %v1743 = vld [vmem:[#allocation2 + $0x2118] sm:$0xff]
        %v1744 = vld [vmem:[#allocation2 + $0x2120] sm:$0xff]
        %v1745 = vld [vmem:[#allocation2 + $0x2128] sm:$0xff]
        %v1746 = vld [vmem:[#allocation2 + $0x2130] sm:$0xff]
        %v1747 = vld [vmem:[#allocation2 + $0x2138] sm:$0xff]
        %v1748 = vld [vmem:[#allocation2 + $0x2140] sm:$0xff]
        %v1749 = vld [vmem:[#allocation2 + $0x2148] sm:$0xff]
        %v1750 = vld [vmem:[#allocation2 + $0x2150] sm:$0xff]
        %v1751 = vld [vmem:[#allocation2 + $0x2158] sm:$0xff]
        %v1752 = vld [vmem:[#allocation2 + $0x2160] sm:$0xff]
        %v1753 = vld [vmem:[#allocation2 + $0x2168] sm:$0xff]
        %v1754 = vld [vmem:[#allocation2 + $0x2170] sm:$0xff]
        %v1755 = vld [vmem:[#allocation2 + $0x2178] sm:$0xff]
        %v1756 = vld [vmem:[#allocation2 + $0x2180] sm:$0xff]
        %v1757 = vld [vmem:[#allocation2 + $0x2188] sm:$0xff]
        %v1758 = vld [vmem:[#allocation2 + $0x2190] sm:$0xff]
        %v1759 = vld [vmem:[#allocation2 + $0x2198] sm:$0xff]
        %v1760 = vld [vmem:[#allocation2 + $0x21a0] sm:$0xff]
        %v1761 = vld [vmem:[#allocation2 + $0x21a8] sm:$0xff]
        %v1762 = vld [vmem:[#allocation2 + $0x21b0] sm:$0xff]
        %v1763 = vld [vmem:[#allocation2 + $0x21b8] sm:$0xff]
        %v1764 = vld [vmem:[#allocation2 + $0x21c0] sm:$0xff]
        %v1765 = vld [vmem:[#allocation2 + $0x21c8] sm:$0xff]
        %v1766 = vld [vmem:[#allocation2 + $0x21d0] sm:$0xff]
        %v1767 = vld [vmem:[#allocation2 + $0x21d8] sm:$0xff]
        %v1768 = vld [vmem:[#allocation2 + $0x21e0] sm:$0xff]
        %v1769 = vld [vmem:[#allocation2 + $0x21e8] sm:$0xff]
        %v1770 = vld [vmem:[#allocation2 + $0x21f0] sm:$0xff]
        %v1771 = vld [vmem:[#allocation2 + $0x21f8] sm:$0xff]
        %v1772 = vld [vmem:[#allocation2 + $0x2200] sm:$0xff]
        %v1773 = vld [vmem:[#allocation2 + $0x2208] sm:$0xff]
        %v1774 = vld [vmem:[#allocation2 + $0x2210] sm:$0xff]
        %v1775 = vld [vmem:[#allocation2 + $0x2218] sm:$0xff]
        %v1776 = vld [vmem:[#allocation2 + $0x2220] sm:$0xff]
        %v1777 = vld [vmem:[#allocation2 + $0x2228] sm:$0xff]
        %v1778 = vld [vmem:[#allocation2 + $0x2230] sm:$0xff]
        %v1779 = vld [vmem:[#allocation2 + $0x2238] sm:$0xff]
        %v1780 = vld [vmem:[#allocation2 + $0x2240] sm:$0xff]
        %v1781 = vld [vmem:[#allocation2 + $0x2248] sm:$0xff]
        %v1782 = vld [vmem:[#allocation2 + $0x2250] sm:$0xff]
        %v1783 = vld [vmem:[#allocation2 + $0x2258] sm:$0xff]
        %v1784 = vld [vmem:[#allocation2 + $0x2260] sm:$0xff]
        %v1785 = vld [vmem:[#allocation2 + $0x2268] sm:$0xff]
        %v1786 = vld [vmem:[#allocation2 + $0x2270] sm:$0xff]
        %v1787 = vld [vmem:[#allocation2 + $0x2278] sm:$0xff]
        %v1788 = vld [vmem:[#allocation2 + $0x2280] sm:$0xff]
        %v1789 = vld [vmem:[#allocation2 + $0x2288] sm:$0xff]
        %v1790 = vld [vmem:[#allocation2 + $0x2290] sm:$0xff]
        %v1791 = vld [vmem:[#allocation2 + $0x2298] sm:$0xff]
        %v1792 = vld [vmem:[#allocation2 + $0x22a0] sm:$0xff]
        %v1793 = vld [vmem:[#allocation2 + $0x22a8] sm:$0xff]
        %v1794 = vld [vmem:[#allocation2 + $0x22b0] sm:$0xff]
        %v1795 = vld [vmem:[#allocation2 + $0x22b8] sm:$0xff]
        %v1796 = vld [vmem:[#allocation2 + $0x22c0] sm:$0xff]
        %v1797 = vld [vmem:[#allocation2 + $0x22c8] sm:$0xff]
        %v1798 = vld [vmem:[#allocation2 + $0x22d0] sm:$0xff]
        %v1799 = vld [vmem:[#allocation2 + $0x22d8] sm:$0xff]
        %v1800 = vld [vmem:[#allocation2 + $0x22e0] sm:$0xff]
        %v1801 = vld [vmem:[#allocation2 + $0x22e8] sm:$0xff]
        %v1802 = vld [vmem:[#allocation2 + $0x22f0] sm:$0xff]
        %v1803 = vld [vmem:[#allocation2 + $0x22f8] sm:$0xff]
        %v1804 = vld [vmem:[#allocation2 + $0x2300] sm:$0xff]
        %v1805 = vld [vmem:[#allocation2 + $0x2308] sm:$0xff]
        %v1806 = vld [vmem:[#allocation2 + $0x2310] sm:$0xff]
        %v1807 = vld [vmem:[#allocation2 + $0x2318] sm:$0xff]
        %v1808 = vld [vmem:[#allocation2 + $0x2320] sm:$0xff]
        %v1809 = vld [vmem:[#allocation2 + $0x2328] sm:$0xff]
        %v1810 = vld [vmem:[#allocation2 + $0x2330] sm:$0xff]
        %v1811 = vld [vmem:[#allocation2 + $0x2338] sm:$0xff]
        %v1812 = vld [vmem:[#allocation2 + $0x2340] sm:$0xff]
        %v1813 = vld [vmem:[#allocation2 + $0x2348] sm:$0xff]
        %v1814 = vld [vmem:[#allocation2 + $0x2350] sm:$0xff]
        %v1815 = vld [vmem:[#allocation2 + $0x2358] sm:$0xff]
        %v1816 = vld [vmem:[#allocation2 + $0x2360] sm:$0xff]
        %v1817 = vld [vmem:[#allocation2 + $0x2368] sm:$0xff]
        %v1818 = vld [vmem:[#allocation2 + $0x2370] sm:$0xff]
        %v1819 = vld [vmem:[#allocation2 + $0x2378] sm:$0xff]
        %v1820 = vld [vmem:[#allocation2 + $0x2380] sm:$0xff]
        %v1821 = vld [vmem:[#allocation2 + $0x2388] sm:$0xff]
        %v1822 = vld [vmem:[#allocation2 + $0x2390] sm:$0xff]
        %v1823 = vld [vmem:[#allocation2 + $0x2398] sm:$0xff]
        %v1824 = vld [vmem:[#allocation2 + $0x23a0] sm:$0xff]
        %v1825 = vld [vmem:[#allocation2 + $0x23a8] sm:$0xff]
        %v1826 = vld [vmem:[#allocation2 + $0x23b0] sm:$0xff]
        %v1827 = vld [vmem:[#allocation2 + $0x23b8] sm:$0xff]
        %v1828 = vld [vmem:[#allocation2 + $0x23c0] sm:$0xff]
        %v1829 = vld [vmem:[#allocation2 + $0x23c8] sm:$0xff]
        %v1830 = vld [vmem:[#allocation2 + $0x23d0] sm:$0xff]
        %v1831 = vld [vmem:[#allocation2 + $0x23d8] sm:$0xff]
        %v1832 = vld [vmem:[#allocation2 + $0x23e0] sm:$0xff]
        %v1833 = vld [vmem:[#allocation2 + $0x23e8] sm:$0xff]
        %v1834 = vld [vmem:[#allocation2 + $0x23f0] sm:$0xff]
        %v1835 = vld [vmem:[#allocation2 + $0x23f8] sm:$0xff]
        %v1836 = vld [vmem:[#allocation5] sm:$0xff]
        %v2989 = vunpack.c.l.b16 %v684
        %v2990 = vunpack.c.h.b16 %v684
        %v2991 = vunpack.c.l.b16 %v685
        %v2992 = vunpack.c.h.b16 %v685
        %v2993 = vunpack.c.l.b16 %v686
        %v2994 = vunpack.c.h.b16 %v686
        %v2995 = vunpack.c.l.b16 %v687
        %v2996 = vunpack.c.h.b16 %v687
        %v2997 = vunpack.c.l.b16 %v688
        %v2998 = vunpack.c.h.b16 %v688
        %v2999 = vunpack.c.l.b16 %v689
        %v3000 = vunpack.c.h.b16 %v689
        %v3001 = vunpack.c.l.b16 %v690
        %v3002 = vunpack.c.h.b16 %v690
        %v3003 = vunpack.c.l.b16 %v691
        %v3004 = vunpack.c.h.b16 %v691
        %v3005 = vunpack.c.l.b16 %v692
        %v3006 = vunpack.c.h.b16 %v692
        %v3007 = vunpack.c.l.b16 %v693
        %v3008 = vunpack.c.h.b16 %v693
        %v3009 = vunpack.c.l.b16 %v694
        %v3010 = vunpack.c.h.b16 %v694
        %v3011 = vunpack.c.l.b16 %v695
        %v3012 = vunpack.c.h.b16 %v695
        %v3013 = vunpack.c.l.b16 %v696
        %v3014 = vunpack.c.h.b16 %v696
        %v3015 = vunpack.c.l.b16 %v697
        %v3016 = vunpack.c.h.b16 %v697
        %v3017 = vunpack.c.l.b16 %v698
        %v3018 = vunpack.c.h.b16 %v698
        %v3019 = vunpack.c.l.b16 %v699
        %v3020 = vunpack.c.h.b16 %v699
        %v3021 = vunpack.c.l.b16 %v700
        %v3022 = vunpack.c.h.b16 %v700
        %v3023 = vunpack.c.l.b16 %v701
        %v3024 = vunpack.c.h.b16 %v701
        %v3025 = vunpack.c.l.b16 %v702
        %v3026 = vunpack.c.h.b16 %v702
        %v3027 = vunpack.c.l.b16 %v703
        %v3028 = vunpack.c.h.b16 %v703
        %v3029 = vunpack.c.l.b16 %v704
        %v3030 = vunpack.c.h.b16 %v704
        %v3031 = vunpack.c.l.b16 %v705
        %v3032 = vunpack.c.h.b16 %v705
        %v3033 = vunpack.c.l.b16 %v706
        %v3034 = vunpack.c.h.b16 %v706
        %v3035 = vunpack.c.l.b16 %v707
        %v3036 = vunpack.c.h.b16 %v707
        %v3037 = vunpack.c.l.b16 %v708
        %v3038 = vunpack.c.h.b16 %v708
        %v3039 = vunpack.c.l.b16 %v709
        %v3040 = vunpack.c.h.b16 %v709
        %v3041 = vunpack.c.l.b16 %v710
        %v3042 = vunpack.c.h.b16 %v710
        %v3043 = vunpack.c.l.b16 %v711
        %v3044 = vunpack.c.h.b16 %v711
        %v3045 = vunpack.c.l.b16 %v712
        %v3046 = vunpack.c.h.b16 %v712
        %v3047 = vunpack.c.l.b16 %v713
        %v3048 = vunpack.c.h.b16 %v713
        %v3049 = vunpack.c.l.b16 %v714
        %v3050 = vunpack.c.h.b16 %v714
        %v3051 = vunpack.c.l.b16 %v715
        %v3052 = vunpack.c.h.b16 %v715
        %v3053 = vunpack.c.l.b16 %v716
        %v3054 = vunpack.c.h.b16 %v716
        %v3055 = vunpack.c.l.b16 %v717
        %v3056 = vunpack.c.h.b16 %v717
        %v3057 = vunpack.c.l.b16 %v718
        %v3058 = vunpack.c.h.b16 %v718
        %v3059 = vunpack.c.l.b16 %v719
        %v3060 = vunpack.c.h.b16 %v719
        %v3061 = vunpack.c.l.b16 %v720
        %v3062 = vunpack.c.h.b16 %v720
        %v3063 = vunpack.c.l.b16 %v721
        %v3064 = vunpack.c.h.b16 %v721
        %v3065 = vunpack.c.l.b16 %v722
        %v3066 = vunpack.c.h.b16 %v722
        %v3067 = vunpack.c.l.b16 %v723
        %v3068 = vunpack.c.h.b16 %v723
        %v3069 = vunpack.c.l.b16 %v724
        %v3070 = vunpack.c.h.b16 %v724
        %v3071 = vunpack.c.l.b16 %v725
        %v3072 = vunpack.c.h.b16 %v725
        %v3073 = vunpack.c.l.b16 %v726
        %v3074 = vunpack.c.h.b16 %v726
        %v3075 = vunpack.c.l.b16 %v727
        %v3076 = vunpack.c.h.b16 %v727
        %v3077 = vunpack.c.l.b16 %v728
        %v3078 = vunpack.c.h.b16 %v728
        %v3079 = vunpack.c.l.b16 %v729
        %v3080 = vunpack.c.h.b16 %v729
        %v3081 = vunpack.c.l.b16 %v730
        %v3082 = vunpack.c.h.b16 %v730
        %v3083 = vunpack.c.l.b16 %v731
        %v3084 = vunpack.c.h.b16 %v731
        %v3085 = vunpack.c.l.b16 %v732
        %v3086 = vunpack.c.h.b16 %v732
        %v3087 = vunpack.c.l.b16 %v733
        %v3088 = vunpack.c.h.b16 %v733
        %v3089 = vunpack.c.l.b16 %v734
        %v3090 = vunpack.c.h.b16 %v734
        %v3091 = vunpack.c.l.b16 %v735
        %v3092 = vunpack.c.h.b16 %v735
        %v3093 = vunpack.c.l.b16 %v736
        %v3094 = vunpack.c.h.b16 %v736
        %v3095 = vunpack.c.l.b16 %v737
        %v3096 = vunpack.c.h.b16 %v737
        %v3097 = vunpack.c.l.b16 %v738
        %v3098 = vunpack.c.h.b16 %v738
        %v3099 = vunpack.c.l.b16 %v739
        %v3100 = vunpack.c.h.b16 %v739
        %v3101 = vunpack.c.l.b16 %v740
        %v3102 = vunpack.c.h.b16 %v740
        %v3103 = vunpack.c.l.b16 %v741
        %v3104 = vunpack.c.h.b16 %v741
        %v3105 = vunpack.c.l.b16 %v742
        %v3106 = vunpack.c.h.b16 %v742
        %v3107 = vunpack.c.l.b16 %v743
        %v3108 = vunpack.c.h.b16 %v743
        %v3109 = vunpack.c.l.b16 %v744
        %v3110 = vunpack.c.h.b16 %v744
        %v3111 = vunpack.c.l.b16 %v745
        %v3112 = vunpack.c.h.b16 %v745
        %v3113 = vunpack.c.l.b16 %v746
        %v3114 = vunpack.c.h.b16 %v746
        %v3115 = vunpack.c.l.b16 %v747
        %v3116 = vunpack.c.h.b16 %v747
        %v3117 = vunpack.c.l.b16 %v748
        %v3118 = vunpack.c.h.b16 %v748
        %v3119 = vunpack.c.l.b16 %v749
        %v3120 = vunpack.c.h.b16 %v749
        %v3121 = vunpack.c.l.b16 %v750
        %v3122 = vunpack.c.h.b16 %v750
        %v3123 = vunpack.c.l.b16 %v751
        %v3124 = vunpack.c.h.b16 %v751
        %v3125 = vunpack.c.l.b16 %v752
        %v3126 = vunpack.c.h.b16 %v752
        %v3127 = vunpack.c.l.b16 %v753
        %v3128 = vunpack.c.h.b16 %v753
        %v3129 = vunpack.c.l.b16 %v754
        %v3130 = vunpack.c.h.b16 %v754
        %v3131 = vunpack.c.l.b16 %v755
        %v3132 = vunpack.c.h.b16 %v755
        %v3133 = vunpack.c.l.b16 %v756
        %v3134 = vunpack.c.h.b16 %v756
        %v3135 = vunpack.c.l.b16 %v757
        %v3136 = vunpack.c.h.b16 %v757
        %v3137 = vunpack.c.l.b16 %v758
        %v3138 = vunpack.c.h.b16 %v758
        %v3139 = vunpack.c.l.b16 %v759
        %v3140 = vunpack.c.h.b16 %v759
        %v3141 = vunpack.c.l.b16 %v760
        %v3142 = vunpack.c.h.b16 %v760
        %v3143 = vunpack.c.l.b16 %v761
        %v3144 = vunpack.c.h.b16 %v761
        %v3145 = vunpack.c.l.b16 %v762
        %v3146 = vunpack.c.h.b16 %v762
        %v3147 = vunpack.c.l.b16 %v763
        %v3148 = vunpack.c.h.b16 %v763
        %v3149 = vunpack.c.l.b16 %v764
        %v3150 = vunpack.c.h.b16 %v764
        %v3151 = vunpack.c.l.b16 %v765
        %v3152 = vunpack.c.h.b16 %v765
        %v3153 = vunpack.c.l.b16 %v766
        %v3154 = vunpack.c.h.b16 %v766
        %v3155 = vunpack.c.l.b16 %v767
        %v3156 = vunpack.c.h.b16 %v767
        %v3157 = vunpack.c.l.b16 %v768
        %v3158 = vunpack.c.h.b16 %v768
        %v3159 = vunpack.c.l.b16 %v769
        %v3160 = vunpack.c.h.b16 %v769
        %v3161 = vunpack.c.l.b16 %v770
        %v3162 = vunpack.c.h.b16 %v770
        %v3163 = vunpack.c.l.b16 %v771
        %v3164 = vunpack.c.h.b16 %v771
        %v3165 = vunpack.c.l.b16 %v772
        %v3166 = vunpack.c.h.b16 %v772
        %v3167 = vunpack.c.l.b16 %v773
        %v3168 = vunpack.c.h.b16 %v773
        %v3169 = vunpack.c.l.b16 %v774
        %v3170 = vunpack.c.h.b16 %v774
        %v3171 = vunpack.c.l.b16 %v775
        %v3172 = vunpack.c.h.b16 %v775
        %v3173 = vunpack.c.l.b16 %v776
        %v3174 = vunpack.c.h.b16 %v776
        %v3175 = vunpack.c.l.b16 %v777
        %v3176 = vunpack.c.h.b16 %v777
        %v3177 = vunpack.c.l.b16 %v778
        %v3178 = vunpack.c.h.b16 %v778
        %v3179 = vunpack.c.l.b16 %v779
        %v3180 = vunpack.c.h.b16 %v779
        %v3181 = vunpack.c.l.b16 %v780
        %v3182 = vunpack.c.h.b16 %v780
        %v3183 = vunpack.c.l.b16 %v781
        %v3184 = vunpack.c.h.b16 %v781
        %v3185 = vunpack.c.l.b16 %v782
        %v3186 = vunpack.c.h.b16 %v782
        %v3187 = vunpack.c.l.b16 %v783
        %v3188 = vunpack.c.h.b16 %v783
        %v3189 = vunpack.c.l.b16 %v784
        %v3190 = vunpack.c.h.b16 %v784
        %v3191 = vunpack.c.l.b16 %v785
        %v3192 = vunpack.c.h.b16 %v785
        %v3193 = vunpack.c.l.b16 %v786
        %v3194 = vunpack.c.h.b16 %v786
        %v3195 = vunpack.c.l.b16 %v787
        %v3196 = vunpack.c.h.b16 %v787
        %v3197 = vunpack.c.l.b16 %v788
        %v3198 = vunpack.c.h.b16 %v788
        %v3199 = vunpack.c.l.b16 %v789
        %v3200 = vunpack.c.h.b16 %v789
        %v3201 = vunpack.c.l.b16 %v790
        %v3202 = vunpack.c.h.b16 %v790
        %v3203 = vunpack.c.l.b16 %v791
        %v3204 = vunpack.c.h.b16 %v791
        %v3205 = vunpack.c.l.b16 %v792
        %v3206 = vunpack.c.h.b16 %v792
        %v3207 = vunpack.c.l.b16 %v793
        %v3208 = vunpack.c.h.b16 %v793
        %v3209 = vunpack.c.l.b16 %v794
        %v3210 = vunpack.c.h.b16 %v794
        %v3211 = vunpack.c.l.b16 %v795
        %v3212 = vunpack.c.h.b16 %v795
        %v3213 = vunpack.c.l.b16 %v796
        %v3214 = vunpack.c.h.b16 %v796
        %v3215 = vunpack.c.l.b16 %v797
        %v3216 = vunpack.c.h.b16 %v797
        %v3217 = vunpack.c.l.b16 %v798
        %v3218 = vunpack.c.h.b16 %v798
        %v3219 = vunpack.c.l.b16 %v799
        %v3220 = vunpack.c.h.b16 %v799
        %v3221 = vunpack.c.l.b16 %v800
        %v3222 = vunpack.c.h.b16 %v800
        %v3223 = vunpack.c.l.b16 %v801
        %v3224 = vunpack.c.h.b16 %v801
        %v3225 = vunpack.c.l.b16 %v802
        %v3226 = vunpack.c.h.b16 %v802
        %v3227 = vunpack.c.l.b16 %v803
        %v3228 = vunpack.c.h.b16 %v803
        %v3229 = vunpack.c.l.b16 %v804
        %v3230 = vunpack.c.h.b16 %v804
        %v3231 = vunpack.c.l.b16 %v805
        %v3232 = vunpack.c.h.b16 %v805
        %v3233 = vunpack.c.l.b16 %v806
        %v3234 = vunpack.c.h.b16 %v806
        %v3235 = vunpack.c.l.b16 %v807
        %v3236 = vunpack.c.h.b16 %v807
        %v3237 = vunpack.c.l.b16 %v808
        %v3238 = vunpack.c.h.b16 %v808
        %v3239 = vunpack.c.l.b16 %v809
        %v3240 = vunpack.c.h.b16 %v809
        %v3241 = vunpack.c.l.b16 %v810
        %v3242 = vunpack.c.h.b16 %v810
        %v3243 = vunpack.c.l.b16 %v811
        %v3244 = vunpack.c.h.b16 %v811
        %v3245 = vunpack.c.l.b16 %v812
        %v3246 = vunpack.c.h.b16 %v812
        %v3247 = vunpack.c.l.b16 %v813
        %v3248 = vunpack.c.h.b16 %v813
        %v3249 = vunpack.c.l.b16 %v814
        %v3250 = vunpack.c.h.b16 %v814
        %v3251 = vunpack.c.l.b16 %v815
        %v3252 = vunpack.c.h.b16 %v815
        %v3253 = vunpack.c.l.b16 %v816
        %v3254 = vunpack.c.h.b16 %v816
        %v3255 = vunpack.c.l.b16 %v817
        %v3256 = vunpack.c.h.b16 %v817
        %v3257 = vunpack.c.l.b16 %v818
        %v3258 = vunpack.c.h.b16 %v818
        %v3259 = vunpack.c.l.b16 %v819
        %v3260 = vunpack.c.h.b16 %v819
        %v3261 = vunpack.c.l.b16 %v820
        %v3262 = vunpack.c.h.b16 %v820
        %v3263 = vunpack.c.l.b16 %v821
        %v3264 = vunpack.c.h.b16 %v821
        %v3265 = vunpack.c.l.b16 %v822
        %v3266 = vunpack.c.h.b16 %v822
        %v3267 = vunpack.c.l.b16 %v823
        %v3268 = vunpack.c.h.b16 %v823
        %v3269 = vunpack.c.l.b16 %v824
        %v3270 = vunpack.c.h.b16 %v824
        %v3271 = vunpack.c.l.b16 %v825
        %v3272 = vunpack.c.h.b16 %v825
        %v3273 = vunpack.c.l.b16 %v826
        %v3274 = vunpack.c.h.b16 %v826
        %v3275 = vunpack.c.l.b16 %v827
        %v3276 = vunpack.c.h.b16 %v827
        %v3277 = vunpack.c.l.b16 %v828
        %v3278 = vunpack.c.h.b16 %v828
        %v3279 = vunpack.c.l.b16 %v829
        %v3280 = vunpack.c.h.b16 %v829
        %v3281 = vunpack.c.l.b16 %v830
        %v3282 = vunpack.c.h.b16 %v830
        %v3283 = vunpack.c.l.b16 %v831
        %v3284 = vunpack.c.h.b16 %v831
        %v3285 = vunpack.c.l.b16 %v832
        %v3286 = vunpack.c.h.b16 %v832
        %v3287 = vunpack.c.l.b16 %v833
        %v3288 = vunpack.c.h.b16 %v833
        %v3289 = vunpack.c.l.b16 %v834
        %v3290 = vunpack.c.h.b16 %v834
        %v3291 = vunpack.c.l.b16 %v835
        %v3292 = vunpack.c.h.b16 %v835
        %v3293 = vunpack.c.l.b16 %v836
        %v3294 = vunpack.c.h.b16 %v836
        %v3295 = vunpack.c.l.b16 %v837
        %v3296 = vunpack.c.h.b16 %v837
        %v3297 = vunpack.c.l.b16 %v838
        %v3298 = vunpack.c.h.b16 %v838
        %v3299 = vunpack.c.l.b16 %v839
        %v3300 = vunpack.c.h.b16 %v839
        %v3301 = vunpack.c.l.b16 %v840
        %v3302 = vunpack.c.h.b16 %v840
        %v3303 = vunpack.c.l.b16 %v841
        %v3304 = vunpack.c.h.b16 %v841
        %v3305 = vunpack.c.l.b16 %v842
        %v3306 = vunpack.c.h.b16 %v842
        %v3307 = vunpack.c.l.b16 %v843
        %v3308 = vunpack.c.h.b16 %v843
        %v3309 = vunpack.c.l.b16 %v844
        %v3310 = vunpack.c.h.b16 %v844
        %v3311 = vunpack.c.l.b16 %v845
        %v3312 = vunpack.c.h.b16 %v845
        %v3313 = vunpack.c.l.b16 %v846
        %v3314 = vunpack.c.h.b16 %v846
        %v3315 = vunpack.c.l.b16 %v847
        %v3316 = vunpack.c.h.b16 %v847
        %v3317 = vunpack.c.l.b16 %v848
        %v3318 = vunpack.c.h.b16 %v848
        %v3319 = vunpack.c.l.b16 %v849
        %v3320 = vunpack.c.h.b16 %v849
        %v3321 = vunpack.c.l.b16 %v850
        %v3322 = vunpack.c.h.b16 %v850
        %v3323 = vunpack.c.l.b16 %v851
        %v3324 = vunpack.c.h.b16 %v851
        %v3325 = vunpack.c.l.b16 %v852
        %v3326 = vunpack.c.h.b16 %v852
        %v3327 = vunpack.c.l.b16 %v853
        %v3328 = vunpack.c.h.b16 %v853
        %v3329 = vunpack.c.l.b16 %v854
        %v3330 = vunpack.c.h.b16 %v854
        %v3331 = vunpack.c.l.b16 %v855
        %v3332 = vunpack.c.h.b16 %v855
        %v3333 = vunpack.c.l.b16 %v856
        %v3334 = vunpack.c.h.b16 %v856
        %v3335 = vunpack.c.l.b16 %v857
        %v3336 = vunpack.c.h.b16 %v857
        %v3337 = vunpack.c.l.b16 %v858
        %v3338 = vunpack.c.h.b16 %v858
        %v3339 = vunpack.c.l.b16 %v859
        %v3340 = vunpack.c.h.b16 %v859
        %v3341 = vunpack.c.l.b16 %v860
        %v3342 = vunpack.c.h.b16 %v860
        %v3343 = vunpack.c.l.b16 %v861
        %v3344 = vunpack.c.h.b16 %v861
        %v3345 = vunpack.c.l.b16 %v862
        %v3346 = vunpack.c.h.b16 %v862
        %v3347 = vunpack.c.l.b16 %v863
        %v3348 = vunpack.c.h.b16 %v863
        %v3349 = vunpack.c.l.b16 %v864
        %v3350 = vunpack.c.h.b16 %v864
        %v3351 = vunpack.c.l.b16 %v865
        %v3352 = vunpack.c.h.b16 %v865
        %v3353 = vunpack.c.l.b16 %v866
        %v3354 = vunpack.c.h.b16 %v866
        %v3355 = vunpack.c.l.b16 %v867
        %v3356 = vunpack.c.h.b16 %v867
        %v3357 = vunpack.c.l.b16 %v868
        %v3358 = vunpack.c.h.b16 %v868
        %v3359 = vunpack.c.l.b16 %v869
        %v3360 = vunpack.c.h.b16 %v869
        %v3361 = vunpack.c.l.b16 %v870
        %v3362 = vunpack.c.h.b16 %v870
        %v3363 = vunpack.c.l.b16 %v871
        %v3364 = vunpack.c.h.b16 %v871
        %v3365 = vunpack.c.l.b16 %v872
        %v3366 = vunpack.c.h.b16 %v872
        %v3367 = vunpack.c.l.b16 %v873
        %v3368 = vunpack.c.h.b16 %v873
        %v3369 = vunpack.c.l.b16 %v874
        %v3370 = vunpack.c.h.b16 %v874
        %v3371 = vunpack.c.l.b16 %v875
        %v3372 = vunpack.c.h.b16 %v875
        %v3373 = vunpack.c.l.b16 %v876
        %v3374 = vunpack.c.h.b16 %v876
        %v3375 = vunpack.c.l.b16 %v877
        %v3376 = vunpack.c.h.b16 %v877
        %v3377 = vunpack.c.l.b16 %v878
        %v3378 = vunpack.c.h.b16 %v878
        %v3379 = vunpack.c.l.b16 %v879
        %v3380 = vunpack.c.h.b16 %v879
        %v3381 = vunpack.c.l.b16 %v880
        %v3382 = vunpack.c.h.b16 %v880
        %v3383 = vunpack.c.l.b16 %v881
        %v3384 = vunpack.c.h.b16 %v881
        %v3385 = vunpack.c.l.b16 %v882
        %v3386 = vunpack.c.h.b16 %v882
        %v3387 = vunpack.c.l.b16 %v883
        %v3388 = vunpack.c.h.b16 %v883
        %v3389 = vunpack.c.l.b16 %v884
        %v3390 = vunpack.c.h.b16 %v884
        %v3391 = vunpack.c.l.b16 %v885
        %v3392 = vunpack.c.h.b16 %v885
        %v3393 = vunpack.c.l.b16 %v886
        %v3394 = vunpack.c.h.b16 %v886
        %v3395 = vunpack.c.l.b16 %v887
        %v3396 = vunpack.c.h.b16 %v887
        %v3397 = vunpack.c.l.b16 %v888
        %v3398 = vunpack.c.h.b16 %v888
        %v3399 = vunpack.c.l.b16 %v889
        %v3400 = vunpack.c.h.b16 %v889
        %v3401 = vunpack.c.l.b16 %v890
        %v3402 = vunpack.c.h.b16 %v890
        %v3403 = vunpack.c.l.b16 %v891
        %v3404 = vunpack.c.h.b16 %v891
        %v3405 = vunpack.c.l.b16 %v892
        %v3406 = vunpack.c.h.b16 %v892
        %v3407 = vunpack.c.l.b16 %v893
        %v3408 = vunpack.c.h.b16 %v893
        %v3409 = vunpack.c.l.b16 %v894
        %v3410 = vunpack.c.h.b16 %v894
        %v3411 = vunpack.c.l.b16 %v895
        %v3412 = vunpack.c.h.b16 %v895
        %v3413 = vunpack.c.l.b16 %v896
        %v3414 = vunpack.c.h.b16 %v896
        %v3415 = vunpack.c.l.b16 %v897
        %v3416 = vunpack.c.h.b16 %v897
        %v3417 = vunpack.c.l.b16 %v898
        %v3418 = vunpack.c.h.b16 %v898
        %v3419 = vunpack.c.l.b16 %v899
        %v3420 = vunpack.c.h.b16 %v899
        %v3421 = vunpack.c.l.b16 %v900
        %v3422 = vunpack.c.h.b16 %v900
        %v3423 = vunpack.c.l.b16 %v901
        %v3424 = vunpack.c.h.b16 %v901
        %v3425 = vunpack.c.l.b16 %v902
        %v3426 = vunpack.c.h.b16 %v902
        %v3427 = vunpack.c.l.b16 %v903
        %v3428 = vunpack.c.h.b16 %v903
        %v3429 = vunpack.c.l.b16 %v904
        %v3430 = vunpack.c.h.b16 %v904
        %v3431 = vunpack.c.l.b16 %v905
        %v3432 = vunpack.c.h.b16 %v905
        %v3433 = vunpack.c.l.b16 %v906
        %v3434 = vunpack.c.h.b16 %v906
        %v3435 = vunpack.c.l.b16 %v907
        %v3436 = vunpack.c.h.b16 %v907
        %v3437 = vunpack.c.l.b16 %v908
        %v3438 = vunpack.c.h.b16 %v908
        %v3439 = vunpack.c.l.b16 %v909
        %v3440 = vunpack.c.h.b16 %v909
        %v3441 = vunpack.c.l.b16 %v910
        %v3442 = vunpack.c.h.b16 %v910
        %v3443 = vunpack.c.l.b16 %v911
        %v3444 = vunpack.c.h.b16 %v911
        %v3445 = vunpack.c.l.b16 %v912
        %v3446 = vunpack.c.h.b16 %v912
        %v3447 = vunpack.c.l.b16 %v913
        %v3448 = vunpack.c.h.b16 %v913
        %v3449 = vunpack.c.l.b16 %v914
        %v3450 = vunpack.c.h.b16 %v914
        %v3451 = vunpack.c.l.b16 %v915
        %v3452 = vunpack.c.h.b16 %v915
        %v3453 = vunpack.c.l.b16 %v916
        %v3454 = vunpack.c.h.b16 %v916
        %v3455 = vunpack.c.l.b16 %v917
        %v3456 = vunpack.c.h.b16 %v917
        %v3457 = vunpack.c.l.b16 %v918
        %v3458 = vunpack.c.h.b16 %v918
        %v3459 = vunpack.c.l.b16 %v919
        %v3460 = vunpack.c.h.b16 %v919
        %v3461 = vunpack.c.l.b16 %v920
        %v3462 = vunpack.c.h.b16 %v920
        %v3463 = vunpack.c.l.b16 %v921
        %v3464 = vunpack.c.h.b16 %v921
        %v3465 = vunpack.c.l.b16 %v922
        %v3466 = vunpack.c.h.b16 %v922
        %v3467 = vunpack.c.l.b16 %v923
        %v3468 = vunpack.c.h.b16 %v923
        %v3469 = vunpack.c.l.b16 %v924
        %v3470 = vunpack.c.h.b16 %v924
        %v3471 = vunpack.c.l.b16 %v925
        %v3472 = vunpack.c.h.b16 %v925
        %v3473 = vunpack.c.l.b16 %v926
        %v3474 = vunpack.c.h.b16 %v926
        %v3475 = vunpack.c.l.b16 %v927
        %v3476 = vunpack.c.h.b16 %v927
        %v3477 = vunpack.c.l.b16 %v928
        %v3478 = vunpack.c.h.b16 %v928
        %v3479 = vunpack.c.l.b16 %v929
        %v3480 = vunpack.c.h.b16 %v929
        %v3481 = vunpack.c.l.b16 %v930
        %v3482 = vunpack.c.h.b16 %v930
        %v3483 = vunpack.c.l.b16 %v931
        %v3484 = vunpack.c.h.b16 %v931
        %v3485 = vunpack.c.l.b16 %v932
        %v3486 = vunpack.c.h.b16 %v932
        %v3487 = vunpack.c.l.b16 %v933
        %v3488 = vunpack.c.h.b16 %v933
        %v3489 = vunpack.c.l.b16 %v934
        %v3490 = vunpack.c.h.b16 %v934
        %v3491 = vunpack.c.l.b16 %v935
        %v3492 = vunpack.c.h.b16 %v935
        %v3493 = vunpack.c.l.b16 %v936
        %v3494 = vunpack.c.h.b16 %v936
        %v3495 = vunpack.c.l.b16 %v937
        %v3496 = vunpack.c.h.b16 %v937
        %v3497 = vunpack.c.l.b16 %v938
        %v3498 = vunpack.c.h.b16 %v938
        %v3499 = vunpack.c.l.b16 %v939
        %v3500 = vunpack.c.h.b16 %v939
        %v3501 = vunpack.c.l.b16 %v940
        %v3502 = vunpack.c.h.b16 %v940
        %v3503 = vunpack.c.l.b16 %v941
        %v3504 = vunpack.c.h.b16 %v941
        %v3505 = vunpack.c.l.b16 %v942
        %v3506 = vunpack.c.h.b16 %v942
        %v3507 = vunpack.c.l.b16 %v943
        %v3508 = vunpack.c.h.b16 %v943
        %v3509 = vunpack.c.l.b16 %v944
        %v3510 = vunpack.c.h.b16 %v944
        %v3511 = vunpack.c.l.b16 %v945
        %v3512 = vunpack.c.h.b16 %v945
        %v3513 = vunpack.c.l.b16 %v946
        %v3514 = vunpack.c.h.b16 %v946
        %v3515 = vunpack.c.l.b16 %v947
        %v3516 = vunpack.c.h.b16 %v947
        %v3517 = vunpack.c.l.b16 %v948
        %v3518 = vunpack.c.h.b16 %v948
        %v3519 = vunpack.c.l.b16 %v949
        %v3520 = vunpack.c.h.b16 %v949
        %v3521 = vunpack.c.l.b16 %v950
        %v3522 = vunpack.c.h.b16 %v950
        %v3523 = vunpack.c.l.b16 %v951
        %v3524 = vunpack.c.h.b16 %v951
        %v3525 = vunpack.c.l.b16 %v952
        %v3526 = vunpack.c.h.b16 %v952
        %v3527 = vunpack.c.l.b16 %v953
        %v3528 = vunpack.c.h.b16 %v953
        %v3529 = vunpack.c.l.b16 %v954
        %v3530 = vunpack.c.h.b16 %v954
        %v3531 = vunpack.c.l.b16 %v955
        %v3532 = vunpack.c.h.b16 %v955
        %v3533 = vunpack.c.l.b16 %v956
        %v3534 = vunpack.c.h.b16 %v956
        %v3535 = vunpack.c.l.b16 %v957
        %v3536 = vunpack.c.h.b16 %v957
        %v3537 = vunpack.c.l.b16 %v958
        %v3538 = vunpack.c.h.b16 %v958
        %v3539 = vunpack.c.l.b16 %v959
        %v3540 = vunpack.c.h.b16 %v959
        %v3541 = vunpack.c.l.b16 %v960
        %v3542 = vunpack.c.h.b16 %v960
        %v3543 = vunpack.c.l.b16 %v961
        %v3544 = vunpack.c.h.b16 %v961
        %v3545 = vunpack.c.l.b16 %v962
        %v3546 = vunpack.c.h.b16 %v962
        %v3547 = vunpack.c.l.b16 %v963
        %v3548 = vunpack.c.h.b16 %v963
        %v3549 = vunpack.c.l.b16 %v964
        %v3550 = vunpack.c.h.b16 %v964
        %v3551 = vunpack.c.l.b16 %v965
        %v3552 = vunpack.c.h.b16 %v965
        %v3553 = vunpack.c.l.b16 %v966
        %v3554 = vunpack.c.h.b16 %v966
        %v3555 = vunpack.c.l.b16 %v967
        %v3556 = vunpack.c.h.b16 %v967
        %v3557 = vunpack.c.l.b16 %v968
        %v3558 = vunpack.c.h.b16 %v968
        %v3559 = vunpack.c.l.b16 %v969
        %v3560 = vunpack.c.h.b16 %v969
        %v3561 = vunpack.c.l.b16 %v970
        %v3562 = vunpack.c.h.b16 %v970
        %v3563 = vunpack.c.l.b16 %v971
        %v3564 = vunpack.c.h.b16 %v971
        %v3565 = vunpack.c.l.b16 %v972
        %v3566 = vunpack.c.h.b16 %v972
        %v3567 = vunpack.c.l.b16 %v973
        %v3568 = vunpack.c.h.b16 %v973
        %v3569 = vunpack.c.l.b16 %v974
        %v3570 = vunpack.c.h.b16 %v974
        %v3571 = vunpack.c.l.b16 %v975
        %v3572 = vunpack.c.h.b16 %v975
        %v3573 = vunpack.c.l.b16 %v976
        %v3574 = vunpack.c.h.b16 %v976
        %v3575 = vunpack.c.l.b16 %v977
        %v3576 = vunpack.c.h.b16 %v977
        %v3577 = vunpack.c.l.b16 %v978
        %v3578 = vunpack.c.h.b16 %v978
        %v3579 = vunpack.c.l.b16 %v979
        %v3580 = vunpack.c.h.b16 %v979
        %v3581 = vunpack.c.l.b16 %v980
        %v3582 = vunpack.c.h.b16 %v980
        %v3583 = vunpack.c.l.b16 %v981
        %v3584 = vunpack.c.h.b16 %v981
        %v3585 = vunpack.c.l.b16 %v982
        %v3586 = vunpack.c.h.b16 %v982
        %v3587 = vunpack.c.l.b16 %v983
        %v3588 = vunpack.c.h.b16 %v983
        %v3589 = vunpack.c.l.b16 %v984
        %v3590 = vunpack.c.h.b16 %v984
        %v3591 = vunpack.c.l.b16 %v985
        %v3592 = vunpack.c.h.b16 %v985
        %v3593 = vunpack.c.l.b16 %v986
        %v3594 = vunpack.c.h.b16 %v986
        %v3595 = vunpack.c.l.b16 %v987
        %v3596 = vunpack.c.h.b16 %v987
        %v3597 = vunpack.c.l.b16 %v988
        %v3598 = vunpack.c.h.b16 %v988
        %v3599 = vunpack.c.l.b16 %v989
        %v3600 = vunpack.c.h.b16 %v989
        %v3601 = vunpack.c.l.b16 %v990
        %v3602 = vunpack.c.h.b16 %v990
        %v3603 = vunpack.c.l.b16 %v991
        %v3604 = vunpack.c.h.b16 %v991
        %v3605 = vunpack.c.l.b16 %v992
        %v3606 = vunpack.c.h.b16 %v992
        %v3607 = vunpack.c.l.b16 %v993
        %v3608 = vunpack.c.h.b16 %v993
        %v3609 = vunpack.c.l.b16 %v994
        %v3610 = vunpack.c.h.b16 %v994
        %v3611 = vunpack.c.l.b16 %v995
        %v3612 = vunpack.c.h.b16 %v995
        %v3613 = vunpack.c.l.b16 %v996
        %v3614 = vunpack.c.h.b16 %v996
        %v3615 = vunpack.c.l.b16 %v997
        %v3616 = vunpack.c.h.b16 %v997
        %v3617 = vunpack.c.l.b16 %v998
        %v3618 = vunpack.c.h.b16 %v998
        %v3619 = vunpack.c.l.b16 %v999
        %v3620 = vunpack.c.h.b16 %v999
        %v3621 = vunpack.c.l.b16 %v1000
        %v3622 = vunpack.c.h.b16 %v1000
        %v3623 = vunpack.c.l.b16 %v1001
        %v3624 = vunpack.c.h.b16 %v1001
        %v3625 = vunpack.c.l.b16 %v1002
        %v3626 = vunpack.c.h.b16 %v1002
        %v3627 = vunpack.c.l.b16 %v1003
        %v3628 = vunpack.c.h.b16 %v1003
        %v3629 = vunpack.c.l.b16 %v1004
        %v3630 = vunpack.c.h.b16 %v1004
        %v3631 = vunpack.c.l.b16 %v1005
        %v3632 = vunpack.c.h.b16 %v1005
        %v3633 = vunpack.c.l.b16 %v1006
        %v3634 = vunpack.c.h.b16 %v1006
        %v3635 = vunpack.c.l.b16 %v1007
        %v3636 = vunpack.c.h.b16 %v1007
        %v3637 = vunpack.c.l.b16 %v1008
        %v3638 = vunpack.c.h.b16 %v1008
        %v3639 = vunpack.c.l.b16 %v1009
        %v3640 = vunpack.c.h.b16 %v1009
        %v3641 = vunpack.c.l.b16 %v1010
        %v3642 = vunpack.c.h.b16 %v1010
        %v3643 = vunpack.c.l.b16 %v1011
        %v3644 = vunpack.c.h.b16 %v1011
        %v3645 = vunpack.c.l.b16 %v1012
        %v3646 = vunpack.c.h.b16 %v1012
        %v3647 = vunpack.c.l.b16 %v1013
        %v3648 = vunpack.c.h.b16 %v1013
        %v3649 = vunpack.c.l.b16 %v1014
        %v3650 = vunpack.c.h.b16 %v1014
        %v3651 = vunpack.c.l.b16 %v1015
        %v3652 = vunpack.c.h.b16 %v1015
        %v3653 = vunpack.c.l.b16 %v1016
        %v3654 = vunpack.c.h.b16 %v1016
        %v3655 = vunpack.c.l.b16 %v1017
        %v3656 = vunpack.c.h.b16 %v1017
        %v3657 = vunpack.c.l.b16 %v1018
        %v3658 = vunpack.c.h.b16 %v1018
        %v3659 = vunpack.c.l.b16 %v1019
        %v3660 = vunpack.c.h.b16 %v1019
        %v3661 = vunpack.c.l.b16 %v1020
        %v3662 = vunpack.c.h.b16 %v1020
        %v3663 = vunpack.c.l.b16 %v1021
        %v3664 = vunpack.c.h.b16 %v1021
        %v3665 = vunpack.c.l.b16 %v1022
        %v3666 = vunpack.c.h.b16 %v1022
        %v3667 = vunpack.c.l.b16 %v1023
        %v3668 = vunpack.c.h.b16 %v1023
        %v3669 = vunpack.c.l.b16 %v1024
        %v3670 = vunpack.c.h.b16 %v1024
        %v3671 = vunpack.c.l.b16 %v1025
        %v3672 = vunpack.c.h.b16 %v1025
        %v3673 = vunpack.c.l.b16 %v1026
        %v3674 = vunpack.c.h.b16 %v1026
        %v3675 = vunpack.c.l.b16 %v1027
        %v3676 = vunpack.c.h.b16 %v1027
        %v3677 = vunpack.c.l.b16 %v1028
        %v3678 = vunpack.c.h.b16 %v1028
        %v3679 = vunpack.c.l.b16 %v1029
        %v3680 = vunpack.c.h.b16 %v1029
        %v3681 = vunpack.c.l.b16 %v1030
        %v3682 = vunpack.c.h.b16 %v1030
        %v3683 = vunpack.c.l.b16 %v1031
        %v3684 = vunpack.c.h.b16 %v1031
        %v3685 = vunpack.c.l.b16 %v1032
        %v3686 = vunpack.c.h.b16 %v1032
        %v3687 = vunpack.c.l.b16 %v1033
        %v3688 = vunpack.c.h.b16 %v1033
        %v3689 = vunpack.c.l.b16 %v1034
        %v3690 = vunpack.c.h.b16 %v1034
        %v3691 = vunpack.c.l.b16 %v1035
        %v3692 = vunpack.c.h.b16 %v1035
        %v3693 = vunpack.c.l.b16 %v1036
        %v3694 = vunpack.c.h.b16 %v1036
        %v3695 = vunpack.c.l.b16 %v1037
        %v3696 = vunpack.c.h.b16 %v1037
        %v3697 = vunpack.c.l.b16 %v1038
        %v3698 = vunpack.c.h.b16 %v1038
        %v3699 = vunpack.c.l.b16 %v1039
        %v3700 = vunpack.c.h.b16 %v1039
        %v3701 = vunpack.c.l.b16 %v1040
        %v3702 = vunpack.c.h.b16 %v1040
        %v3703 = vunpack.c.l.b16 %v1041
        %v3704 = vunpack.c.h.b16 %v1041
        %v3705 = vunpack.c.l.b16 %v1042
        %v3706 = vunpack.c.h.b16 %v1042
        %v3707 = vunpack.c.l.b16 %v1043
        %v3708 = vunpack.c.h.b16 %v1043
        %v3709 = vunpack.c.l.b16 %v1044
        %v3710 = vunpack.c.h.b16 %v1044
        %v3711 = vunpack.c.l.b16 %v1045
        %v3712 = vunpack.c.h.b16 %v1045
        %v3713 = vunpack.c.l.b16 %v1046
        %v3714 = vunpack.c.h.b16 %v1046
        %v3715 = vunpack.c.l.b16 %v1047
        %v3716 = vunpack.c.h.b16 %v1047
        %v3717 = vunpack.c.l.b16 %v1048
        %v3718 = vunpack.c.h.b16 %v1048
        %v3719 = vunpack.c.l.b16 %v1049
        %v3720 = vunpack.c.h.b16 %v1049
        %v3721 = vunpack.c.l.b16 %v1050
        %v3722 = vunpack.c.h.b16 %v1050
        %v3723 = vunpack.c.l.b16 %v1051
        %v3724 = vunpack.c.h.b16 %v1051
        %v3725 = vunpack.c.l.b16 %v1052
        %v3726 = vunpack.c.h.b16 %v1052
        %v3727 = vunpack.c.l.b16 %v1053
        %v3728 = vunpack.c.h.b16 %v1053
        %v3729 = vunpack.c.l.b16 %v1054
        %v3730 = vunpack.c.h.b16 %v1054
        %v3731 = vunpack.c.l.b16 %v1055
        %v3732 = vunpack.c.h.b16 %v1055
        %v3733 = vunpack.c.l.b16 %v1056
        %v3734 = vunpack.c.h.b16 %v1056
        %v3735 = vunpack.c.l.b16 %v1057
        %v3736 = vunpack.c.h.b16 %v1057
        %v3737 = vunpack.c.l.b16 %v1058
        %v3738 = vunpack.c.h.b16 %v1058
        %v3739 = vunpack.c.l.b16 %v1059
        %v3740 = vunpack.c.h.b16 %v1059
        %v3741 = vunpack.c.l.b16 %v1060
        %v3742 = vunpack.c.h.b16 %v1060
        %v3743 = vunpack.c.l.b16 %v1061
        %v3744 = vunpack.c.h.b16 %v1061
        %v3745 = vunpack.c.l.b16 %v1062
        %v3746 = vunpack.c.h.b16 %v1062
        %v3747 = vunpack.c.l.b16 %v1063
        %v3748 = vunpack.c.h.b16 %v1063
        %v3749 = vunpack.c.l.b16 %v1064
        %v3750 = vunpack.c.h.b16 %v1064
        %v3751 = vunpack.c.l.b16 %v1065
        %v3752 = vunpack.c.h.b16 %v1065
        %v3753 = vunpack.c.l.b16 %v1066
        %v3754 = vunpack.c.h.b16 %v1066
        %v3755 = vunpack.c.l.b16 %v1067
        %v3756 = vunpack.c.h.b16 %v1067
        %v3757 = vunpack.c.l.b16 %v1068
        %v3758 = vunpack.c.h.b16 %v1068
        %v3759 = vunpack.c.l.b16 %v1069
        %v3760 = vunpack.c.h.b16 %v1069
        %v3761 = vunpack.c.l.b16 %v1070
        %v3762 = vunpack.c.h.b16 %v1070
        %v3763 = vunpack.c.l.b16 %v1071
        %v3764 = vunpack.c.h.b16 %v1071
        %v3765 = vunpack.c.l.b16 %v1072
        %v3766 = vunpack.c.h.b16 %v1072
        %v3767 = vunpack.c.l.b16 %v1073
        %v3768 = vunpack.c.h.b16 %v1073
        %v3769 = vunpack.c.l.b16 %v1074
        %v3770 = vunpack.c.h.b16 %v1074
        %v3771 = vunpack.c.l.b16 %v1075
        %v3772 = vunpack.c.h.b16 %v1075
        %v3773 = vunpack.c.l.b16 %v1076
        %v3774 = vunpack.c.h.b16 %v1076
        %v3775 = vunpack.c.l.b16 %v1077
        %v3776 = vunpack.c.h.b16 %v1077
        %v3777 = vunpack.c.l.b16 %v1078
        %v3778 = vunpack.c.h.b16 %v1078
        %v3779 = vunpack.c.l.b16 %v1079
        %v3780 = vunpack.c.h.b16 %v1079
        %v3781 = vunpack.c.l.b16 %v1080
        %v3782 = vunpack.c.h.b16 %v1080
        %v3783 = vunpack.c.l.b16 %v1081
        %v3784 = vunpack.c.h.b16 %v1081
        %v3785 = vunpack.c.l.b16 %v1082
        %v3786 = vunpack.c.h.b16 %v1082
        %v3787 = vunpack.c.l.b16 %v1083
        %v3788 = vunpack.c.h.b16 %v1083
        %v3789 = vunpack.c.l.b16 %v1084
        %v3790 = vunpack.c.h.b16 %v1084
        %v3791 = vunpack.c.l.b16 %v1085
        %v3792 = vunpack.c.h.b16 %v1085
        %v3793 = vunpack.c.l.b16 %v1086
        %v3794 = vunpack.c.h.b16 %v1086
        %v3795 = vunpack.c.l.b16 %v1087
        %v3796 = vunpack.c.h.b16 %v1087
        %v3797 = vunpack.c.l.b16 %v1088
        %v3798 = vunpack.c.h.b16 %v1088
        %v3799 = vunpack.c.l.b16 %v1089
        %v3800 = vunpack.c.h.b16 %v1089
        %v3801 = vunpack.c.l.b16 %v1090
        %v3802 = vunpack.c.h.b16 %v1090
        %v3803 = vunpack.c.l.b16 %v1091
        %v3804 = vunpack.c.h.b16 %v1091
        %v3805 = vunpack.c.l.b16 %v1092
        %v3806 = vunpack.c.h.b16 %v1092
        %v3807 = vunpack.c.l.b16 %v1093
        %v3808 = vunpack.c.h.b16 %v1093
        %v3809 = vunpack.c.l.b16 %v1094
        %v3810 = vunpack.c.h.b16 %v1094
        %v3811 = vunpack.c.l.b16 %v1095
        %v3812 = vunpack.c.h.b16 %v1095
        %v3813 = vunpack.c.l.b16 %v1096
        %v3814 = vunpack.c.h.b16 %v1096
        %v3815 = vunpack.c.l.b16 %v1097
        %v3816 = vunpack.c.h.b16 %v1097
        %v3817 = vunpack.c.l.b16 %v1098
        %v3818 = vunpack.c.h.b16 %v1098
        %v3819 = vunpack.c.l.b16 %v1099
        %v3820 = vunpack.c.h.b16 %v1099
        %v3821 = vunpack.c.l.b16 %v1100
        %v3822 = vunpack.c.h.b16 %v1100
        %v3823 = vunpack.c.l.b16 %v1101
        %v3824 = vunpack.c.h.b16 %v1101
        %v3825 = vunpack.c.l.b16 %v1102
        %v3826 = vunpack.c.h.b16 %v1102
        %v3827 = vunpack.c.l.b16 %v1103
        %v3828 = vunpack.c.h.b16 %v1103
        %v3829 = vunpack.c.l.b16 %v1104
        %v3830 = vunpack.c.h.b16 %v1104
        %v3831 = vunpack.c.l.b16 %v1105
        %v3832 = vunpack.c.h.b16 %v1105
        %v3833 = vunpack.c.l.b16 %v1106
        %v3834 = vunpack.c.h.b16 %v1106
        %v3835 = vunpack.c.l.b16 %v1107
        %v3836 = vunpack.c.h.b16 %v1107
        %v3837 = vunpack.c.l.b16 %v1108
        %v3838 = vunpack.c.h.b16 %v1108
        %v3839 = vunpack.c.l.b16 %v1109
        %v3840 = vunpack.c.h.b16 %v1109
        %v3841 = vunpack.c.l.b16 %v1110
        %v3842 = vunpack.c.h.b16 %v1110
        %v3843 = vunpack.c.l.b16 %v1111
        %v3844 = vunpack.c.h.b16 %v1111
        %v3845 = vunpack.c.l.b16 %v1112
        %v3846 = vunpack.c.h.b16 %v1112
        %v3847 = vunpack.c.l.b16 %v1113
        %v3848 = vunpack.c.h.b16 %v1113
        %v3849 = vunpack.c.l.b16 %v1114
        %v3850 = vunpack.c.h.b16 %v1114
        %v3851 = vunpack.c.l.b16 %v1115
        %v3852 = vunpack.c.h.b16 %v1115
        %v3853 = vunpack.c.l.b16 %v1116
        %v3854 = vunpack.c.h.b16 %v1116
        %v3855 = vunpack.c.l.b16 %v1117
        %v3856 = vunpack.c.h.b16 %v1117
        %v3857 = vunpack.c.l.b16 %v1118
        %v3858 = vunpack.c.h.b16 %v1118
        %v3859 = vunpack.c.l.b16 %v1119
        %v3860 = vunpack.c.h.b16 %v1119
        %v3861 = vunpack.c.l.b16 %v1120
        %v3862 = vunpack.c.h.b16 %v1120
        %v3863 = vunpack.c.l.b16 %v1121
        %v3864 = vunpack.c.h.b16 %v1121
        %v3865 = vunpack.c.l.b16 %v1122
        %v3866 = vunpack.c.h.b16 %v1122
        %v3867 = vunpack.c.l.b16 %v1123
        %v3868 = vunpack.c.h.b16 %v1123
        %v3869 = vunpack.c.l.b16 %v1124
        %v3870 = vunpack.c.h.b16 %v1124
        %v3871 = vunpack.c.l.b16 %v1125
        %v3872 = vunpack.c.h.b16 %v1125
        %v3873 = vunpack.c.l.b16 %v1126
        %v3874 = vunpack.c.h.b16 %v1126
        %v3875 = vunpack.c.l.b16 %v1127
        %v3876 = vunpack.c.h.b16 %v1127
        %v3877 = vunpack.c.l.b16 %v1128
        %v3878 = vunpack.c.h.b16 %v1128
        %v3879 = vunpack.c.l.b16 %v1129
        %v3880 = vunpack.c.h.b16 %v1129
        %v3881 = vunpack.c.l.b16 %v1130
        %v3882 = vunpack.c.h.b16 %v1130
        %v3883 = vunpack.c.l.b16 %v1131
        %v3884 = vunpack.c.h.b16 %v1131
        %v3885 = vunpack.c.l.b16 %v1132
        %v3886 = vunpack.c.h.b16 %v1132
        %v3887 = vunpack.c.l.b16 %v1133
        %v3888 = vunpack.c.h.b16 %v1133
        %v3889 = vunpack.c.l.b16 %v1134
        %v3890 = vunpack.c.h.b16 %v1134
        %v3891 = vunpack.c.l.b16 %v1135
        %v3892 = vunpack.c.h.b16 %v1135
        %v3893 = vunpack.c.l.b16 %v1136
        %v3894 = vunpack.c.h.b16 %v1136
        %v3895 = vunpack.c.l.b16 %v1137
        %v3896 = vunpack.c.h.b16 %v1137
        %v3897 = vunpack.c.l.b16 %v1138
        %v3898 = vunpack.c.h.b16 %v1138
        %v3899 = vunpack.c.l.b16 %v1139
        %v3900 = vunpack.c.h.b16 %v1139
        %v3901 = vunpack.c.l.b16 %v1140
        %v3902 = vunpack.c.h.b16 %v1140
        %v3903 = vunpack.c.l.b16 %v1141
        %v3904 = vunpack.c.h.b16 %v1141
        %v3905 = vunpack.c.l.b16 %v1142
        %v3906 = vunpack.c.h.b16 %v1142
        %v3907 = vunpack.c.l.b16 %v1143
        %v3908 = vunpack.c.h.b16 %v1143
        %v3909 = vunpack.c.l.b16 %v1144
        %v3910 = vunpack.c.h.b16 %v1144
        %v3911 = vunpack.c.l.b16 %v1145
        %v3912 = vunpack.c.h.b16 %v1145
        %v3913 = vunpack.c.l.b16 %v1146
        %v3914 = vunpack.c.h.b16 %v1146
        %v3915 = vunpack.c.l.b16 %v1147
        %v3916 = vunpack.c.h.b16 %v1147
        %v3917 = vunpack.c.l.b16 %v1148
        %v3918 = vunpack.c.h.b16 %v1148
        %v3919 = vunpack.c.l.b16 %v1149
        %v3920 = vunpack.c.h.b16 %v1149
        %v3921 = vunpack.c.l.b16 %v1150
        %v3922 = vunpack.c.h.b16 %v1150
        %v3923 = vunpack.c.l.b16 %v1151
        %v3924 = vunpack.c.h.b16 %v1151
        %v3925 = vunpack.c.l.b16 %v1152
        %v3926 = vunpack.c.h.b16 %v1152
        %v3927 = vunpack.c.l.b16 %v1153
        %v3928 = vunpack.c.h.b16 %v1153
        %v3929 = vunpack.c.l.b16 %v1154
        %v3930 = vunpack.c.h.b16 %v1154
        %v3931 = vunpack.c.l.b16 %v1155
        %v3932 = vunpack.c.h.b16 %v1155
        %v3933 = vunpack.c.l.b16 %v1156
        %v3934 = vunpack.c.h.b16 %v1156
        %v3935 = vunpack.c.l.b16 %v1157
        %v3936 = vunpack.c.h.b16 %v1157
        %v3937 = vunpack.c.l.b16 %v1158
        %v3938 = vunpack.c.h.b16 %v1158
        %v3939 = vunpack.c.l.b16 %v1159
        %v3940 = vunpack.c.h.b16 %v1159
        %v3941 = vunpack.c.l.b16 %v1160
        %v3942 = vunpack.c.h.b16 %v1160
        %v3943 = vunpack.c.l.b16 %v1161
        %v3944 = vunpack.c.h.b16 %v1161
        %v3945 = vunpack.c.l.b16 %v1162
        %v3946 = vunpack.c.h.b16 %v1162
        %v3947 = vunpack.c.l.b16 %v1163
        %v3948 = vunpack.c.h.b16 %v1163
        %v3949 = vunpack.c.l.b16 %v1164
        %v3950 = vunpack.c.h.b16 %v1164
        %v3951 = vunpack.c.l.b16 %v1165
        %v3952 = vunpack.c.h.b16 %v1165
        %v3953 = vunpack.c.l.b16 %v1166
        %v3954 = vunpack.c.h.b16 %v1166
        %v3955 = vunpack.c.l.b16 %v1167
        %v3956 = vunpack.c.h.b16 %v1167
        %v3957 = vunpack.c.l.b16 %v1168
        %v3958 = vunpack.c.h.b16 %v1168
        %v3959 = vunpack.c.l.b16 %v1169
        %v3960 = vunpack.c.h.b16 %v1169
        %v3961 = vunpack.c.l.b16 %v1170
        %v3962 = vunpack.c.h.b16 %v1170
        %v3963 = vunpack.c.l.b16 %v1171
        %v3964 = vunpack.c.h.b16 %v1171
        %v3965 = vunpack.c.l.b16 %v1172
        %v3966 = vunpack.c.h.b16 %v1172
        %v3967 = vunpack.c.l.b16 %v1173
        %v3968 = vunpack.c.h.b16 %v1173
        %v3969 = vunpack.c.l.b16 %v1174
        %v3970 = vunpack.c.h.b16 %v1174
        %v3971 = vunpack.c.l.b16 %v1175
        %v3972 = vunpack.c.h.b16 %v1175
        %v3973 = vunpack.c.l.b16 %v1176
        %v3974 = vunpack.c.h.b16 %v1176
        %v3975 = vunpack.c.l.b16 %v1177
        %v3976 = vunpack.c.h.b16 %v1177
        %v3977 = vunpack.c.l.b16 %v1178
        %v3978 = vunpack.c.h.b16 %v1178
        %v3979 = vunpack.c.l.b16 %v1179
        %v3980 = vunpack.c.h.b16 %v1179
        %v3981 = vunpack.c.l.b16 %v1180
        %v3982 = vunpack.c.h.b16 %v1180
        %v3983 = vunpack.c.l.b16 %v1181
        %v3984 = vunpack.c.h.b16 %v1181
        %v3985 = vunpack.c.l.b16 %v1182
        %v3986 = vunpack.c.h.b16 %v1182
        %v3987 = vunpack.c.l.b16 %v1183
        %v3988 = vunpack.c.h.b16 %v1183
        %v3989 = vunpack.c.l.b16 %v1184
        %v3990 = vunpack.c.h.b16 %v1184
        %v3991 = vunpack.c.l.b16 %v1185
        %v3992 = vunpack.c.h.b16 %v1185
        %v3993 = vunpack.c.l.b16 %v1186
        %v3994 = vunpack.c.h.b16 %v1186
        %v3995 = vunpack.c.l.b16 %v1187
        %v3996 = vunpack.c.h.b16 %v1187
        %v3997 = vunpack.c.l.b16 %v1188
        %v3998 = vunpack.c.h.b16 %v1188
        %v3999 = vunpack.c.l.b16 %v1189
        %v4000 = vunpack.c.h.b16 %v1189
        %v4001 = vunpack.c.l.b16 %v1190
        %v4002 = vunpack.c.h.b16 %v1190
        %v4003 = vunpack.c.l.b16 %v1191
        %v4004 = vunpack.c.h.b16 %v1191
        %v4005 = vunpack.c.l.b16 %v1192
        %v4006 = vunpack.c.h.b16 %v1192
        %v4007 = vunpack.c.l.b16 %v1193
        %v4008 = vunpack.c.h.b16 %v1193
        %v4009 = vunpack.c.l.b16 %v1194
        %v4010 = vunpack.c.h.b16 %v1194
        %v4011 = vunpack.c.l.b16 %v1195
        %v4012 = vunpack.c.h.b16 %v1195
        %v4013 = vunpack.c.l.b16 %v1196
        %v4014 = vunpack.c.h.b16 %v1196
        %v4015 = vunpack.c.l.b16 %v1197
        %v4016 = vunpack.c.h.b16 %v1197
        %v4017 = vunpack.c.l.b16 %v1198
        %v4018 = vunpack.c.h.b16 %v1198
        %v4019 = vunpack.c.l.b16 %v1199
        %v4020 = vunpack.c.h.b16 %v1199
        %v4021 = vunpack.c.l.b16 %v1200
        %v4022 = vunpack.c.h.b16 %v1200
        %v4023 = vunpack.c.l.b16 %v1201
        %v4024 = vunpack.c.h.b16 %v1201
        %v4025 = vunpack.c.l.b16 %v1202
        %v4026 = vunpack.c.h.b16 %v1202
        %v4027 = vunpack.c.l.b16 %v1203
        %v4028 = vunpack.c.h.b16 %v1203
        %v4029 = vunpack.c.l.b16 %v1204
        %v4030 = vunpack.c.h.b16 %v1204
        %v4031 = vunpack.c.l.b16 %v1205
        %v4032 = vunpack.c.h.b16 %v1205
        %v4033 = vunpack.c.l.b16 %v1206
        %v4034 = vunpack.c.h.b16 %v1206
        %v4035 = vunpack.c.l.b16 %v1207
        %v4036 = vunpack.c.h.b16 %v1207
        %v4037 = vunpack.c.l.b16 %v1208
        %v4038 = vunpack.c.h.b16 %v1208
        %v4039 = vunpack.c.l.b16 %v1209
        %v4040 = vunpack.c.h.b16 %v1209
        %v4041 = vunpack.c.l.b16 %v1210
        %v4042 = vunpack.c.h.b16 %v1210
        %v4043 = vunpack.c.l.b16 %v1211
        %v4044 = vunpack.c.h.b16 %v1211
        %v4045 = vunpack.c.l.b16 %v1212
        %v4046 = vunpack.c.h.b16 %v1212
        %v4047 = vunpack.c.l.b16 %v1213
        %v4048 = vunpack.c.h.b16 %v1213
        %v4049 = vunpack.c.l.b16 %v1214
        %v4050 = vunpack.c.h.b16 %v1214
        %v4051 = vunpack.c.l.b16 %v1215
        %v4052 = vunpack.c.h.b16 %v1215
        %v4053 = vunpack.c.l.b16 %v1216
        %v4054 = vunpack.c.h.b16 %v1216
        %v4055 = vunpack.c.l.b16 %v1217
        %v4056 = vunpack.c.h.b16 %v1217
        %v4057 = vunpack.c.l.b16 %v1218
        %v4058 = vunpack.c.h.b16 %v1218
        %v4059 = vunpack.c.l.b16 %v1219
        %v4060 = vunpack.c.h.b16 %v1219
        %v4061 = vunpack.c.l.b16 %v1220
        %v4062 = vunpack.c.h.b16 %v1220
        %v4063 = vunpack.c.l.b16 %v1221
        %v4064 = vunpack.c.h.b16 %v1221
        %v4065 = vunpack.c.l.b16 %v1222
        %v4066 = vunpack.c.h.b16 %v1222
        %v4067 = vunpack.c.l.b16 %v1223
        %v4068 = vunpack.c.h.b16 %v1223
        %v4069 = vunpack.c.l.b16 %v1224
        %v4070 = vunpack.c.h.b16 %v1224
        %v4071 = vunpack.c.l.b16 %v1225
        %v4072 = vunpack.c.h.b16 %v1225
        %v4073 = vunpack.c.l.b16 %v1226
        %v4074 = vunpack.c.h.b16 %v1226
        %v4075 = vunpack.c.l.b16 %v1227
        %v4076 = vunpack.c.h.b16 %v1227
        %v4077 = vunpack.c.l.b16 %v1228
        %v4078 = vunpack.c.h.b16 %v1228
        %v4079 = vunpack.c.l.b16 %v1229
        %v4080 = vunpack.c.h.b16 %v1229
        %v4081 = vunpack.c.l.b16 %v1230
        %v4082 = vunpack.c.h.b16 %v1230
        %v4083 = vunpack.c.l.b16 %v1231
        %v4084 = vunpack.c.h.b16 %v1231
        %v4085 = vunpack.c.l.b16 %v1232
        %v4086 = vunpack.c.h.b16 %v1232
        %v4087 = vunpack.c.l.b16 %v1233
        %v4088 = vunpack.c.h.b16 %v1233
        %v4089 = vunpack.c.l.b16 %v1234
        %v4090 = vunpack.c.h.b16 %v1234
        %v4091 = vunpack.c.l.b16 %v1235
        %v4092 = vunpack.c.h.b16 %v1235
        %v4093 = vunpack.c.l.b16 %v1236
        %v4094 = vunpack.c.h.b16 %v1236
        %v4095 = vunpack.c.l.b16 %v1237
        %v4096 = vunpack.c.h.b16 %v1237
        %v4097 = vunpack.c.l.b16 %v1238
        %v4098 = vunpack.c.h.b16 %v1238
        %v4099 = vunpack.c.l.b16 %v1239
        %v4100 = vunpack.c.h.b16 %v1239
        %v4101 = vunpack.c.l.b16 %v1240
        %v4102 = vunpack.c.h.b16 %v1240
        %v4103 = vunpack.c.l.b16 %v1241
        %v4104 = vunpack.c.h.b16 %v1241
        %v4105 = vunpack.c.l.b16 %v1242
        %v4106 = vunpack.c.h.b16 %v1242
        %v4107 = vunpack.c.l.b16 %v1243
        %v4108 = vunpack.c.h.b16 %v1243
        %v4109 = vunpack.c.l.b16 %v1244
        %v4110 = vunpack.c.h.b16 %v1244
        %v4111 = vunpack.c.l.b16 %v1245
        %v4112 = vunpack.c.h.b16 %v1245
        %v4113 = vunpack.c.l.b16 %v1246
        %v4114 = vunpack.c.h.b16 %v1246
        %v4115 = vunpack.c.l.b16 %v1247
        %v4116 = vunpack.c.h.b16 %v1247
        %v4117 = vunpack.c.l.b16 %v1248
        %v4118 = vunpack.c.h.b16 %v1248
        %v4119 = vunpack.c.l.b16 %v1249
        %v4120 = vunpack.c.h.b16 %v1249
        %v4121 = vunpack.c.l.b16 %v1250
        %v4122 = vunpack.c.h.b16 %v1250
        %v4123 = vunpack.c.l.b16 %v1251
        %v4124 = vunpack.c.h.b16 %v1251
        %v4125 = vunpack.c.l.b16 %v1252
        %v4126 = vunpack.c.h.b16 %v1252
        %v4127 = vunpack.c.l.b16 %v1253
        %v4128 = vunpack.c.h.b16 %v1253
        %v4129 = vunpack.c.l.b16 %v1254
        %v4130 = vunpack.c.h.b16 %v1254
        %v4131 = vunpack.c.l.b16 %v1255
        %v4132 = vunpack.c.h.b16 %v1255
        %v4133 = vunpack.c.l.b16 %v1256
        %v4134 = vunpack.c.h.b16 %v1256
        %v4135 = vunpack.c.l.b16 %v1257
        %v4136 = vunpack.c.h.b16 %v1257
        %v4137 = vunpack.c.l.b16 %v1258
        %v4138 = vunpack.c.h.b16 %v1258
        %v4139 = vunpack.c.l.b16 %v1259
        %v4140 = vunpack.c.h.b16 %v1259
        %v4141 = vunpack.c.l.b16 %v1260
        %v4142 = vunpack.c.h.b16 %v1260
        %v4143 = vunpack.c.l.b16 %v1261
        %v4144 = vunpack.c.h.b16 %v1261
        %v4145 = vunpack.c.l.b16 %v1262
        %v4146 = vunpack.c.h.b16 %v1262
        %v4147 = vunpack.c.l.b16 %v1263
        %v4148 = vunpack.c.h.b16 %v1263
        %v4149 = vunpack.c.l.b16 %v1264
        %v4150 = vunpack.c.h.b16 %v1264
        %v4151 = vunpack.c.l.b16 %v1265
        %v4152 = vunpack.c.h.b16 %v1265
        %v4153 = vunpack.c.l.b16 %v1266
        %v4154 = vunpack.c.h.b16 %v1266
        %v4155 = vunpack.c.l.b16 %v1267
        %v4156 = vunpack.c.h.b16 %v1267
        %v4157 = vunpack.c.l.b16 %v1268
        %v4158 = vunpack.c.h.b16 %v1268
        %v4159 = vunpack.c.l.b16 %v1269
        %v4160 = vunpack.c.h.b16 %v1269
        %v4161 = vunpack.c.l.b16 %v1270
        %v4162 = vunpack.c.h.b16 %v1270
        %v4163 = vunpack.c.l.b16 %v1271
        %v4164 = vunpack.c.h.b16 %v1271
        %v4165 = vunpack.c.l.b16 %v1272
        %v4166 = vunpack.c.h.b16 %v1272
        %v4167 = vunpack.c.l.b16 %v1273
        %v4168 = vunpack.c.h.b16 %v1273
        %v4169 = vunpack.c.l.b16 %v1274
        %v4170 = vunpack.c.h.b16 %v1274
        %v4171 = vunpack.c.l.b16 %v1275
        %v4172 = vunpack.c.h.b16 %v1275
        %v4173 = vunpack.c.l.b16 %v1276
        %v4174 = vunpack.c.h.b16 %v1276
        %v4175 = vunpack.c.l.b16 %v1277
        %v4176 = vunpack.c.h.b16 %v1277
        %v4177 = vunpack.c.l.b16 %v1278
        %v4178 = vunpack.c.h.b16 %v1278
        %v4179 = vunpack.c.l.b16 %v1279
        %v4180 = vunpack.c.h.b16 %v1279
        %v4181 = vunpack.c.l.b16 %v1280
        %v4182 = vunpack.c.h.b16 %v1280
        %v4183 = vunpack.c.l.b16 %v1281
        %v4184 = vunpack.c.h.b16 %v1281
        %v4185 = vunpack.c.l.b16 %v1282
        %v4186 = vunpack.c.h.b16 %v1282
        %v4187 = vunpack.c.l.b16 %v1283
        %v4188 = vunpack.c.h.b16 %v1283
        %v4189 = vunpack.c.l.b16 %v1284
        %v4190 = vunpack.c.h.b16 %v1284
        %v4191 = vunpack.c.l.b16 %v1285
        %v4192 = vunpack.c.h.b16 %v1285
        %v4193 = vunpack.c.l.b16 %v1286
        %v4194 = vunpack.c.h.b16 %v1286
        %v4195 = vunpack.c.l.b16 %v1287
        %v4196 = vunpack.c.h.b16 %v1287
        %v4197 = vunpack.c.l.b16 %v1288
        %v4198 = vunpack.c.h.b16 %v1288
        %v4199 = vunpack.c.l.b16 %v1289
        %v4200 = vunpack.c.h.b16 %v1289
        %v4201 = vunpack.c.l.b16 %v1290
        %v4202 = vunpack.c.h.b16 %v1290
        %v4203 = vunpack.c.l.b16 %v1291
        %v4204 = vunpack.c.h.b16 %v1291
        %v4205 = vunpack.c.l.b16 %v1292
        %v4206 = vunpack.c.h.b16 %v1292
        %v4207 = vunpack.c.l.b16 %v1293
        %v4208 = vunpack.c.h.b16 %v1293
        %v4209 = vunpack.c.l.b16 %v1294
        %v4210 = vunpack.c.h.b16 %v1294
        %v4211 = vunpack.c.l.b16 %v1295
        %v4212 = vunpack.c.h.b16 %v1295
        %v4213 = vunpack.c.l.b16 %v1296
        %v4214 = vunpack.c.h.b16 %v1296
        %v4215 = vunpack.c.l.b16 %v1297
        %v4216 = vunpack.c.h.b16 %v1297
        %v4217 = vunpack.c.l.b16 %v1298
        %v4218 = vunpack.c.h.b16 %v1298
        %v4219 = vunpack.c.l.b16 %v1299
        %v4220 = vunpack.c.h.b16 %v1299
        %v4221 = vunpack.c.l.b16 %v1300
        %v4222 = vunpack.c.h.b16 %v1300
        %v4223 = vunpack.c.l.b16 %v1301
        %v4224 = vunpack.c.h.b16 %v1301
        %v4225 = vunpack.c.l.b16 %v1302
        %v4226 = vunpack.c.h.b16 %v1302
        %v4227 = vunpack.c.l.b16 %v1303
        %v4228 = vunpack.c.h.b16 %v1303
        %v4229 = vunpack.c.l.b16 %v1304
        %v4230 = vunpack.c.h.b16 %v1304
        %v4231 = vunpack.c.l.b16 %v1305
        %v4232 = vunpack.c.h.b16 %v1305
        %v4233 = vunpack.c.l.b16 %v1306
        %v4234 = vunpack.c.h.b16 %v1306
        %v4235 = vunpack.c.l.b16 %v1307
        %v4236 = vunpack.c.h.b16 %v1307
        %v4237 = vunpack.c.l.b16 %v1308
        %v4238 = vunpack.c.h.b16 %v1308
        %v4239 = vunpack.c.l.b16 %v1309
        %v4240 = vunpack.c.h.b16 %v1309
        %v4241 = vunpack.c.l.b16 %v1310
        %v4242 = vunpack.c.h.b16 %v1310
        %v4243 = vunpack.c.l.b16 %v1311
        %v4244 = vunpack.c.h.b16 %v1311
        %v4245 = vunpack.c.l.b16 %v1312
        %v4246 = vunpack.c.h.b16 %v1312
        %v4247 = vunpack.c.l.b16 %v1313
        %v4248 = vunpack.c.h.b16 %v1313
        %v4249 = vunpack.c.l.b16 %v1314
        %v4250 = vunpack.c.h.b16 %v1314
        %v4251 = vunpack.c.l.b16 %v1315
        %v4252 = vunpack.c.h.b16 %v1315
        %v4253 = vunpack.c.l.b16 %v1316
        %v4254 = vunpack.c.h.b16 %v1316
        %v4255 = vunpack.c.l.b16 %v1317
        %v4256 = vunpack.c.h.b16 %v1317
        %v4257 = vunpack.c.l.b16 %v1318
        %v4258 = vunpack.c.h.b16 %v1318
        %v4259 = vunpack.c.l.b16 %v1319
        %v4260 = vunpack.c.h.b16 %v1319
        %v4261 = vunpack.c.l.b16 %v1320
        %v4262 = vunpack.c.h.b16 %v1320
        %v4263 = vunpack.c.l.b16 %v1321
        %v4264 = vunpack.c.h.b16 %v1321
        %v4265 = vunpack.c.l.b16 %v1322
        %v4266 = vunpack.c.h.b16 %v1322
        %v4267 = vunpack.c.l.b16 %v1323
        %v4268 = vunpack.c.h.b16 %v1323
        %v4269 = vunpack.c.l.b16 %v1324
        %v4270 = vunpack.c.h.b16 %v1324
        %v4271 = vunpack.c.l.b16 %v1325
        %v4272 = vunpack.c.h.b16 %v1325
        %v4273 = vunpack.c.l.b16 %v1326
        %v4274 = vunpack.c.h.b16 %v1326
        %v4275 = vunpack.c.l.b16 %v1327
        %v4276 = vunpack.c.h.b16 %v1327
        %v4277 = vunpack.c.l.b16 %v1328
        %v4278 = vunpack.c.h.b16 %v1328
        %v4279 = vunpack.c.l.b16 %v1329
        %v4280 = vunpack.c.h.b16 %v1329
        %v4281 = vunpack.c.l.b16 %v1330
        %v4282 = vunpack.c.h.b16 %v1330
        %v4283 = vunpack.c.l.b16 %v1331
        %v4284 = vunpack.c.h.b16 %v1331
        %v4285 = vunpack.c.l.b16 %v1332
        %v4286 = vunpack.c.h.b16 %v1332
        %v4287 = vunpack.c.l.b16 %v1333
        %v4288 = vunpack.c.h.b16 %v1333
        %v4289 = vunpack.c.l.b16 %v1334
        %v4290 = vunpack.c.h.b16 %v1334
        %v4291 = vunpack.c.l.b16 %v1335
        %v4292 = vunpack.c.h.b16 %v1335
        %v4293 = vunpack.c.l.b16 %v1336
        %v4294 = vunpack.c.h.b16 %v1336
        %v4295 = vunpack.c.l.b16 %v1337
        %v4296 = vunpack.c.h.b16 %v1337
        %v4297 = vunpack.c.l.b16 %v1338
        %v4298 = vunpack.c.h.b16 %v1338
        %v4299 = vunpack.c.l.b16 %v1339
        %v4300 = vunpack.c.h.b16 %v1339
        %v4301 = vunpack.c.l.b16 %v1340
        %v4302 = vunpack.c.h.b16 %v1340
        %v4303 = vunpack.c.l.b16 %v1341
        %v4304 = vunpack.c.h.b16 %v1341
        %v4305 = vunpack.c.l.b16 %v1342
        %v4306 = vunpack.c.h.b16 %v1342
        %v4307 = vunpack.c.l.b16 %v1343
        %v4308 = vunpack.c.h.b16 %v1343
        %v4309 = vunpack.c.l.b16 %v1344
        %v4310 = vunpack.c.h.b16 %v1344
        %v4311 = vunpack.c.l.b16 %v1345
        %v4312 = vunpack.c.h.b16 %v1345
        %v4313 = vunpack.c.l.b16 %v1346
        %v4314 = vunpack.c.h.b16 %v1346
        %v4315 = vunpack.c.l.b16 %v1347
        %v4316 = vunpack.c.h.b16 %v1347
        %v4317 = vunpack.c.l.b16 %v1348
        %v4318 = vunpack.c.h.b16 %v1348
        %v4319 = vunpack.c.l.b16 %v1349
        %v4320 = vunpack.c.h.b16 %v1349
        %v4321 = vunpack.c.l.b16 %v1350
        %v4322 = vunpack.c.h.b16 %v1350
        %v4323 = vunpack.c.l.b16 %v1351
        %v4324 = vunpack.c.h.b16 %v1351
        %v4325 = vunpack.c.l.b16 %v1352
        %v4326 = vunpack.c.h.b16 %v1352
        %v4327 = vunpack.c.l.b16 %v1353
        %v4328 = vunpack.c.h.b16 %v1353
        %v4329 = vunpack.c.l.b16 %v1354
        %v4330 = vunpack.c.h.b16 %v1354
        %v4331 = vunpack.c.l.b16 %v1355
        %v4332 = vunpack.c.h.b16 %v1355
        %v4333 = vunpack.c.l.b16 %v1356
        %v4334 = vunpack.c.h.b16 %v1356
        %v4335 = vunpack.c.l.b16 %v1357
        %v4336 = vunpack.c.h.b16 %v1357
        %v4337 = vunpack.c.l.b16 %v1358
        %v4338 = vunpack.c.h.b16 %v1358
        %v4339 = vunpack.c.l.b16 %v1359
        %v4340 = vunpack.c.h.b16 %v1359
        %v4341 = vunpack.c.l.b16 %v1360
        %v4342 = vunpack.c.h.b16 %v1360
        %v4343 = vunpack.c.l.b16 %v1361
        %v4344 = vunpack.c.h.b16 %v1361
        %v4345 = vunpack.c.l.b16 %v1362
        %v4346 = vunpack.c.h.b16 %v1362
        %v4347 = vunpack.c.l.b16 %v1363
        %v4348 = vunpack.c.h.b16 %v1363
        %v4349 = vunpack.c.l.b16 %v1364
        %v4350 = vunpack.c.h.b16 %v1364
        %v4351 = vunpack.c.l.b16 %v1365
        %v4352 = vunpack.c.h.b16 %v1365
        %v4353 = vunpack.c.l.b16 %v1366
        %v4354 = vunpack.c.h.b16 %v1366
        %v4355 = vunpack.c.l.b16 %v1367
        %v4356 = vunpack.c.h.b16 %v1367
        %v4357 = vunpack.c.l.b16 %v1368
        %v4358 = vunpack.c.h.b16 %v1368
        %v4359 = vunpack.c.l.b16 %v1369
        %v4360 = vunpack.c.h.b16 %v1369
        %v4361 = vunpack.c.l.b16 %v1370
        %v4362 = vunpack.c.h.b16 %v1370
        %v4363 = vunpack.c.l.b16 %v1371
        %v4364 = vunpack.c.h.b16 %v1371
        %v4365 = vunpack.c.l.b16 %v1372
        %v4366 = vunpack.c.h.b16 %v1372
        %v4367 = vunpack.c.l.b16 %v1373
        %v4368 = vunpack.c.h.b16 %v1373
        %v4369 = vunpack.c.l.b16 %v1374
        %v4370 = vunpack.c.h.b16 %v1374
        %v4371 = vunpack.c.l.b16 %v1375
        %v4372 = vunpack.c.h.b16 %v1375
        %v4373 = vunpack.c.l.b16 %v1376
        %v4374 = vunpack.c.h.b16 %v1376
        %v4375 = vunpack.c.l.b16 %v1377
        %v4376 = vunpack.c.h.b16 %v1377
        %v4377 = vunpack.c.l.b16 %v1378
        %v4378 = vunpack.c.h.b16 %v1378
        %v4379 = vunpack.c.l.b16 %v1379
        %v4380 = vunpack.c.h.b16 %v1379
        %v4381 = vunpack.c.l.b16 %v1380
        %v4382 = vunpack.c.h.b16 %v1380
        %v4383 = vunpack.c.l.b16 %v1381
        %v4384 = vunpack.c.h.b16 %v1381
        %v4385 = vunpack.c.l.b16 %v1382
        %v4386 = vunpack.c.h.b16 %v1382
        %v4387 = vunpack.c.l.b16 %v1383
        %v4388 = vunpack.c.h.b16 %v1383
        %v4389 = vunpack.c.l.b16 %v1384
        %v4390 = vunpack.c.h.b16 %v1384
        %v4391 = vunpack.c.l.b16 %v1385
        %v4392 = vunpack.c.h.b16 %v1385
        %v4393 = vunpack.c.l.b16 %v1386
        %v4394 = vunpack.c.h.b16 %v1386
        %v4395 = vunpack.c.l.b16 %v1387
        %v4396 = vunpack.c.h.b16 %v1387
        %v4397 = vunpack.c.l.b16 %v1388
        %v4398 = vunpack.c.h.b16 %v1388
        %v4399 = vunpack.c.l.b16 %v1389
        %v4400 = vunpack.c.h.b16 %v1389
        %v4401 = vunpack.c.l.b16 %v1390
        %v4402 = vunpack.c.h.b16 %v1390
        %v4403 = vunpack.c.l.b16 %v1391
        %v4404 = vunpack.c.h.b16 %v1391
        %v4405 = vunpack.c.l.b16 %v1392
        %v4406 = vunpack.c.h.b16 %v1392
        %v4407 = vunpack.c.l.b16 %v1393
        %v4408 = vunpack.c.h.b16 %v1393
        %v4409 = vunpack.c.l.b16 %v1394
        %v4410 = vunpack.c.h.b16 %v1394
        %v4411 = vunpack.c.l.b16 %v1395
        %v4412 = vunpack.c.h.b16 %v1395
        %v4413 = vunpack.c.l.b16 %v1396
        %v4414 = vunpack.c.h.b16 %v1396
        %v4415 = vunpack.c.l.b16 %v1397
        %v4416 = vunpack.c.h.b16 %v1397
        %v4417 = vunpack.c.l.b16 %v1398
        %v4418 = vunpack.c.h.b16 %v1398
        %v4419 = vunpack.c.l.b16 %v1399
        %v4420 = vunpack.c.h.b16 %v1399
        %v4421 = vunpack.c.l.b16 %v1400
        %v4422 = vunpack.c.h.b16 %v1400
        %v4423 = vunpack.c.l.b16 %v1401
        %v4424 = vunpack.c.h.b16 %v1401
        %v4425 = vunpack.c.l.b16 %v1402
        %v4426 = vunpack.c.h.b16 %v1402
        %v4427 = vunpack.c.l.b16 %v1403
        %v4428 = vunpack.c.h.b16 %v1403
        %v4429 = vunpack.c.l.b16 %v1404
        %v4430 = vunpack.c.h.b16 %v1404
        %v4431 = vunpack.c.l.b16 %v1405
        %v4432 = vunpack.c.h.b16 %v1405
        %v4433 = vunpack.c.l.b16 %v1406
        %v4434 = vunpack.c.h.b16 %v1406
        %v4435 = vunpack.c.l.b16 %v1407
        %v4436 = vunpack.c.h.b16 %v1407
        %v4437 = vunpack.c.l.b16 %v1408
        %v4438 = vunpack.c.h.b16 %v1408
        %v4439 = vunpack.c.l.b16 %v1409
        %v4440 = vunpack.c.h.b16 %v1409
        %v4441 = vunpack.c.l.b16 %v1410
        %v4442 = vunpack.c.h.b16 %v1410
        %v4443 = vunpack.c.l.b16 %v1411
        %v4444 = vunpack.c.h.b16 %v1411
        %v4445 = vunpack.c.l.b16 %v1412
        %v4446 = vunpack.c.h.b16 %v1412
        %v4447 = vunpack.c.l.b16 %v1413
        %v4448 = vunpack.c.h.b16 %v1413
        %v4449 = vunpack.c.l.b16 %v1414
        %v4450 = vunpack.c.h.b16 %v1414
        %v4451 = vunpack.c.l.b16 %v1415
        %v4452 = vunpack.c.h.b16 %v1415
        %v4453 = vunpack.c.l.b16 %v1416
        %v4454 = vunpack.c.h.b16 %v1416
        %v4455 = vunpack.c.l.b16 %v1417
        %v4456 = vunpack.c.h.b16 %v1417
        %v4457 = vunpack.c.l.b16 %v1418
        %v4458 = vunpack.c.h.b16 %v1418
        %v4459 = vunpack.c.l.b16 %v1419
        %v4460 = vunpack.c.h.b16 %v1419
        %v4461 = vunpack.c.l.b16 %v1420
        %v4462 = vunpack.c.h.b16 %v1420
        %v4463 = vunpack.c.l.b16 %v1421
        %v4464 = vunpack.c.h.b16 %v1421
        %v4465 = vunpack.c.l.b16 %v1422
        %v4466 = vunpack.c.h.b16 %v1422
        %v4467 = vunpack.c.l.b16 %v1423
        %v4468 = vunpack.c.h.b16 %v1423
        %v4469 = vunpack.c.l.b16 %v1424
        %v4470 = vunpack.c.h.b16 %v1424
        %v4471 = vunpack.c.l.b16 %v1425
        %v4472 = vunpack.c.h.b16 %v1425
        %v4473 = vunpack.c.l.b16 %v1426
        %v4474 = vunpack.c.h.b16 %v1426
        %v4475 = vunpack.c.l.b16 %v1427
        %v4476 = vunpack.c.h.b16 %v1427
        %v4477 = vunpack.c.l.b16 %v1428
        %v4478 = vunpack.c.h.b16 %v1428
        %v4479 = vunpack.c.l.b16 %v1429
        %v4480 = vunpack.c.h.b16 %v1429
        %v4481 = vunpack.c.l.b16 %v1430
        %v4482 = vunpack.c.h.b16 %v1430
        %v4483 = vunpack.c.l.b16 %v1431
        %v4484 = vunpack.c.h.b16 %v1431
        %v4485 = vunpack.c.l.b16 %v1432
        %v4486 = vunpack.c.h.b16 %v1432
        %v4487 = vunpack.c.l.b16 %v1433
        %v4488 = vunpack.c.h.b16 %v1433
        %v4489 = vunpack.c.l.b16 %v1434
        %v4490 = vunpack.c.h.b16 %v1434
        %v4491 = vunpack.c.l.b16 %v1435
        %v4492 = vunpack.c.h.b16 %v1435
        %v4493 = vunpack.c.l.b16 %v1436
        %v4494 = vunpack.c.h.b16 %v1436
        %v4495 = vunpack.c.l.b16 %v1437
        %v4496 = vunpack.c.h.b16 %v1437
        %v4497 = vunpack.c.l.b16 %v1438
        %v4498 = vunpack.c.h.b16 %v1438
        %v4499 = vunpack.c.l.b16 %v1439
        %v4500 = vunpack.c.h.b16 %v1439
        %v4501 = vunpack.c.l.b16 %v1440
        %v4502 = vunpack.c.h.b16 %v1440
        %v4503 = vunpack.c.l.b16 %v1441
        %v4504 = vunpack.c.h.b16 %v1441
        %v4505 = vunpack.c.l.b16 %v1442
        %v4506 = vunpack.c.h.b16 %v1442
        %v4507 = vunpack.c.l.b16 %v1443
        %v4508 = vunpack.c.h.b16 %v1443
        %v4509 = vunpack.c.l.b16 %v1444
        %v4510 = vunpack.c.h.b16 %v1444
        %v4511 = vunpack.c.l.b16 %v1445
        %v4512 = vunpack.c.h.b16 %v1445
        %v4513 = vunpack.c.l.b16 %v1446
        %v4514 = vunpack.c.h.b16 %v1446
        %v4515 = vunpack.c.l.b16 %v1447
        %v4516 = vunpack.c.h.b16 %v1447
        %v4517 = vunpack.c.l.b16 %v1448
        %v4518 = vunpack.c.h.b16 %v1448
        %v4519 = vunpack.c.l.b16 %v1449
        %v4520 = vunpack.c.h.b16 %v1449
        %v4521 = vunpack.c.l.b16 %v1450
        %v4522 = vunpack.c.h.b16 %v1450
        %v4523 = vunpack.c.l.b16 %v1451
        %v4524 = vunpack.c.h.b16 %v1451
        %v4525 = vunpack.c.l.b16 %v1452
        %v4526 = vunpack.c.h.b16 %v1452
        %v4527 = vunpack.c.l.b16 %v1453
        %v4528 = vunpack.c.h.b16 %v1453
        %v4529 = vunpack.c.l.b16 %v1454
        %v4530 = vunpack.c.h.b16 %v1454
        %v4531 = vunpack.c.l.b16 %v1455
        %v4532 = vunpack.c.h.b16 %v1455
        %v4533 = vunpack.c.l.b16 %v1456
        %v4534 = vunpack.c.h.b16 %v1456
        %v4535 = vunpack.c.l.b16 %v1457
        %v4536 = vunpack.c.h.b16 %v1457
        %v4537 = vunpack.c.l.b16 %v1458
        %v4538 = vunpack.c.h.b16 %v1458
        %v4539 = vunpack.c.l.b16 %v1459
        %v4540 = vunpack.c.h.b16 %v1459
        %v4541 = vunpack.c.l.b16 %v1460
        %v4542 = vunpack.c.h.b16 %v1460
        %v4543 = vunpack.c.l.b16 %v1461
        %v4544 = vunpack.c.h.b16 %v1461
        %v4545 = vunpack.c.l.b16 %v1462
        %v4546 = vunpack.c.h.b16 %v1462
        %v4547 = vunpack.c.l.b16 %v1463
        %v4548 = vunpack.c.h.b16 %v1463
        %v4549 = vunpack.c.l.b16 %v1464
        %v4550 = vunpack.c.h.b16 %v1464
        %v4551 = vunpack.c.l.b16 %v1465
        %v4552 = vunpack.c.h.b16 %v1465
        %v4553 = vunpack.c.l.b16 %v1466
        %v4554 = vunpack.c.h.b16 %v1466
        %v4555 = vunpack.c.l.b16 %v1467
        %v4556 = vunpack.c.h.b16 %v1467
        %v4557 = vunpack.c.l.b16 %v1468
        %v4558 = vunpack.c.h.b16 %v1468
        %v4559 = vunpack.c.l.b16 %v1469
        %v4560 = vunpack.c.h.b16 %v1469
        %v4561 = vunpack.c.l.b16 %v1470
        %v4562 = vunpack.c.h.b16 %v1470
        %v4563 = vunpack.c.l.b16 %v1471
        %v4564 = vunpack.c.h.b16 %v1471
        %v4565 = vunpack.c.l.b16 %v1472
        %v4566 = vunpack.c.h.b16 %v1472
        %v4567 = vunpack.c.l.b16 %v1473
        %v4568 = vunpack.c.h.b16 %v1473
        %v4569 = vunpack.c.l.b16 %v1474
        %v4570 = vunpack.c.h.b16 %v1474
        %v4571 = vunpack.c.l.b16 %v1475
        %v4572 = vunpack.c.h.b16 %v1475
        %v4573 = vunpack.c.l.b16 %v1476
        %v4574 = vunpack.c.h.b16 %v1476
        %v4575 = vunpack.c.l.b16 %v1477
        %v4576 = vunpack.c.h.b16 %v1477
        %v4577 = vunpack.c.l.b16 %v1478
        %v4578 = vunpack.c.h.b16 %v1478
        %v4579 = vunpack.c.l.b16 %v1479
        %v4580 = vunpack.c.h.b16 %v1479
        %v4581 = vunpack.c.l.b16 %v1480
        %v4582 = vunpack.c.h.b16 %v1480
        %v4583 = vunpack.c.l.b16 %v1481
        %v4584 = vunpack.c.h.b16 %v1481
        %v4585 = vunpack.c.l.b16 %v1482
        %v4586 = vunpack.c.h.b16 %v1482
        %v4587 = vunpack.c.l.b16 %v1483
        %v4588 = vunpack.c.h.b16 %v1483
        %v4589 = vunpack.c.l.b16 %v1484
        %v4590 = vunpack.c.h.b16 %v1484
        %v4591 = vunpack.c.l.b16 %v1485
        %v4592 = vunpack.c.h.b16 %v1485
        %v4593 = vunpack.c.l.b16 %v1486
        %v4594 = vunpack.c.h.b16 %v1486
        %v4595 = vunpack.c.l.b16 %v1487
        %v4596 = vunpack.c.h.b16 %v1487
        %v4597 = vunpack.c.l.b16 %v1488
        %v4598 = vunpack.c.h.b16 %v1488
        %v4599 = vunpack.c.l.b16 %v1489
        %v4600 = vunpack.c.h.b16 %v1489
        %v4601 = vunpack.c.l.b16 %v1490
        %v4602 = vunpack.c.h.b16 %v1490
        %v4603 = vunpack.c.l.b16 %v1491
        %v4604 = vunpack.c.h.b16 %v1491
        %v4605 = vunpack.c.l.b16 %v1492
        %v4606 = vunpack.c.h.b16 %v1492
        %v4607 = vunpack.c.l.b16 %v1493
        %v4608 = vunpack.c.h.b16 %v1493
        %v4609 = vunpack.c.l.b16 %v1494
        %v4610 = vunpack.c.h.b16 %v1494
        %v4611 = vunpack.c.l.b16 %v1495
        %v4612 = vunpack.c.h.b16 %v1495
        %v4613 = vunpack.c.l.b16 %v1496
        %v4614 = vunpack.c.h.b16 %v1496
        %v4615 = vunpack.c.l.b16 %v1497
        %v4616 = vunpack.c.h.b16 %v1497
        %v4617 = vunpack.c.l.b16 %v1498
        %v4618 = vunpack.c.h.b16 %v1498
        %v4619 = vunpack.c.l.b16 %v1499
        %v4620 = vunpack.c.h.b16 %v1499
        %v4621 = vunpack.c.l.b16 %v1500
        %v4622 = vunpack.c.h.b16 %v1500
        %v4623 = vunpack.c.l.b16 %v1501
        %v4624 = vunpack.c.h.b16 %v1501
        %v4625 = vunpack.c.l.b16 %v1502
        %v4626 = vunpack.c.h.b16 %v1502
        %v4627 = vunpack.c.l.b16 %v1503
        %v4628 = vunpack.c.h.b16 %v1503
        %v4629 = vunpack.c.l.b16 %v1504
        %v4630 = vunpack.c.h.b16 %v1504
        %v4631 = vunpack.c.l.b16 %v1505
        %v4632 = vunpack.c.h.b16 %v1505
        %v4633 = vunpack.c.l.b16 %v1506
        %v4634 = vunpack.c.h.b16 %v1506
        %v4635 = vunpack.c.l.b16 %v1507
        %v4636 = vunpack.c.h.b16 %v1507
        %v4637 = vunpack.c.l.b16 %v1508
        %v4638 = vunpack.c.h.b16 %v1508
        %v4639 = vunpack.c.l.b16 %v1509
        %v4640 = vunpack.c.h.b16 %v1509
        %v4641 = vunpack.c.l.b16 %v1510
        %v4642 = vunpack.c.h.b16 %v1510
        %v4643 = vunpack.c.l.b16 %v1511
        %v4644 = vunpack.c.h.b16 %v1511
        %v4645 = vunpack.c.l.b16 %v1512
        %v4646 = vunpack.c.h.b16 %v1512
        %v4647 = vunpack.c.l.b16 %v1513
        %v4648 = vunpack.c.h.b16 %v1513
        %v4649 = vunpack.c.l.b16 %v1514
        %v4650 = vunpack.c.h.b16 %v1514
        %v4651 = vunpack.c.l.b16 %v1515
        %v4652 = vunpack.c.h.b16 %v1515
        %v4653 = vunpack.c.l.b16 %v1516
        %v4654 = vunpack.c.h.b16 %v1516
        %v4655 = vunpack.c.l.b16 %v1517
        %v4656 = vunpack.c.h.b16 %v1517
        %v4657 = vunpack.c.l.b16 %v1518
        %v4658 = vunpack.c.h.b16 %v1518
        %v4659 = vunpack.c.l.b16 %v1519
        %v4660 = vunpack.c.h.b16 %v1519
        %v4661 = vunpack.c.l.b16 %v1520
        %v4662 = vunpack.c.h.b16 %v1520
        %v4663 = vunpack.c.l.b16 %v1521
        %v4664 = vunpack.c.h.b16 %v1521
        %v4665 = vunpack.c.l.b16 %v1522
        %v4666 = vunpack.c.h.b16 %v1522
        %v4667 = vunpack.c.l.b16 %v1523
        %v4668 = vunpack.c.h.b16 %v1523
        %v4669 = vunpack.c.l.b16 %v1524
        %v4670 = vunpack.c.h.b16 %v1524
        %v4671 = vunpack.c.l.b16 %v1525
        %v4672 = vunpack.c.h.b16 %v1525
        %v4673 = vunpack.c.l.b16 %v1526
        %v4674 = vunpack.c.h.b16 %v1526
        %v4675 = vunpack.c.l.b16 %v1527
        %v4676 = vunpack.c.h.b16 %v1527
        %v4677 = vunpack.c.l.b16 %v1528
        %v4678 = vunpack.c.h.b16 %v1528
        %v4679 = vunpack.c.l.b16 %v1529
        %v4680 = vunpack.c.h.b16 %v1529
        %v4681 = vunpack.c.l.b16 %v1530
        %v4682 = vunpack.c.h.b16 %v1530
        %v4683 = vunpack.c.l.b16 %v1531
        %v4684 = vunpack.c.h.b16 %v1531
        %v4685 = vunpack.c.l.b16 %v1532
        %v4686 = vunpack.c.h.b16 %v1532
        %v4687 = vunpack.c.l.b16 %v1533
        %v4688 = vunpack.c.h.b16 %v1533
        %v4689 = vunpack.c.l.b16 %v1534
        %v4690 = vunpack.c.h.b16 %v1534
        %v4691 = vunpack.c.l.b16 %v1535
        %v4692 = vunpack.c.h.b16 %v1535
        %v4693 = vunpack.c.l.b16 %v1536
        %v4694 = vunpack.c.h.b16 %v1536
        %v4695 = vunpack.c.l.b16 %v1537
        %v4696 = vunpack.c.h.b16 %v1537
        %v4697 = vunpack.c.l.b16 %v1538
        %v4698 = vunpack.c.h.b16 %v1538
        %v4699 = vunpack.c.l.b16 %v1539
        %v4700 = vunpack.c.h.b16 %v1539
        %v4701 = vunpack.c.l.b16 %v1540
        %v4702 = vunpack.c.h.b16 %v1540
        %v4703 = vunpack.c.l.b16 %v1541
        %v4704 = vunpack.c.h.b16 %v1541
        %v4705 = vunpack.c.l.b16 %v1542
        %v4706 = vunpack.c.h.b16 %v1542
        %v4707 = vunpack.c.l.b16 %v1543
        %v4708 = vunpack.c.h.b16 %v1543
        %v4709 = vunpack.c.l.b16 %v1544
        %v4710 = vunpack.c.h.b16 %v1544
        %v4711 = vunpack.c.l.b16 %v1545
        %v4712 = vunpack.c.h.b16 %v1545
        %v4713 = vunpack.c.l.b16 %v1546
        %v4714 = vunpack.c.h.b16 %v1546
        %v4715 = vunpack.c.l.b16 %v1547
        %v4716 = vunpack.c.h.b16 %v1547
        %v4717 = vunpack.c.l.b16 %v1548
        %v4718 = vunpack.c.h.b16 %v1548
        %v4719 = vunpack.c.l.b16 %v1549
        %v4720 = vunpack.c.h.b16 %v1549
        %v4721 = vunpack.c.l.b16 %v1550
        %v4722 = vunpack.c.h.b16 %v1550
        %v4723 = vunpack.c.l.b16 %v1551
        %v4724 = vunpack.c.h.b16 %v1551
        %v4725 = vunpack.c.l.b16 %v1552
        %v4726 = vunpack.c.h.b16 %v1552
        %v4727 = vunpack.c.l.b16 %v1553
        %v4728 = vunpack.c.h.b16 %v1553
        %v4729 = vunpack.c.l.b16 %v1554
        %v4730 = vunpack.c.h.b16 %v1554
        %v4731 = vunpack.c.l.b16 %v1555
        %v4732 = vunpack.c.h.b16 %v1555
        %v4733 = vunpack.c.l.b16 %v1556
        %v4734 = vunpack.c.h.b16 %v1556
        %v4735 = vunpack.c.l.b16 %v1557
        %v4736 = vunpack.c.h.b16 %v1557
        %v4737 = vunpack.c.l.b16 %v1558
        %v4738 = vunpack.c.h.b16 %v1558
        %v4739 = vunpack.c.l.b16 %v1559
        %v4740 = vunpack.c.h.b16 %v1559
        %v4741 = vunpack.c.l.b16 %v1560
        %v4742 = vunpack.c.h.b16 %v1560
        %v4743 = vunpack.c.l.b16 %v1561
        %v4744 = vunpack.c.h.b16 %v1561
        %v4745 = vunpack.c.l.b16 %v1562
        %v4746 = vunpack.c.h.b16 %v1562
        %v4747 = vunpack.c.l.b16 %v1563
        %v4748 = vunpack.c.h.b16 %v1563
        %v4749 = vunpack.c.l.b16 %v1564
        %v4750 = vunpack.c.h.b16 %v1564
        %v4751 = vunpack.c.l.b16 %v1565
        %v4752 = vunpack.c.h.b16 %v1565
        %v4753 = vunpack.c.l.b16 %v1566
        %v4754 = vunpack.c.h.b16 %v1566
        %v4755 = vunpack.c.l.b16 %v1567
        %v4756 = vunpack.c.h.b16 %v1567
        %v4757 = vunpack.c.l.b16 %v1568
        %v4758 = vunpack.c.h.b16 %v1568
        %v4759 = vunpack.c.l.b16 %v1569
        %v4760 = vunpack.c.h.b16 %v1569
        %v4761 = vunpack.c.l.b16 %v1570
        %v4762 = vunpack.c.h.b16 %v1570
        %v4763 = vunpack.c.l.b16 %v1571
        %v4764 = vunpack.c.h.b16 %v1571
        %v4765 = vunpack.c.l.b16 %v1572
        %v4766 = vunpack.c.h.b16 %v1572
        %v4767 = vunpack.c.l.b16 %v1573
        %v4768 = vunpack.c.h.b16 %v1573
        %v4769 = vunpack.c.l.b16 %v1574
        %v4770 = vunpack.c.h.b16 %v1574
        %v4771 = vunpack.c.l.b16 %v1575
        %v4772 = vunpack.c.h.b16 %v1575
        %v4773 = vunpack.c.l.b16 %v1576
        %v4774 = vunpack.c.h.b16 %v1576
        %v4775 = vunpack.c.l.b16 %v1577
        %v4776 = vunpack.c.h.b16 %v1577
        %v4777 = vunpack.c.l.b16 %v1578
        %v4778 = vunpack.c.h.b16 %v1578
        %v4779 = vunpack.c.l.b16 %v1579
        %v4780 = vunpack.c.h.b16 %v1579
        %v4781 = vunpack.c.l.b16 %v1580
        %v4782 = vunpack.c.h.b16 %v1580
        %v4783 = vunpack.c.l.b16 %v1581
        %v4784 = vunpack.c.h.b16 %v1581
        %v4785 = vunpack.c.l.b16 %v1582
        %v4786 = vunpack.c.h.b16 %v1582
        %v4787 = vunpack.c.l.b16 %v1583
        %v4788 = vunpack.c.h.b16 %v1583
        %v4789 = vunpack.c.l.b16 %v1584
        %v4790 = vunpack.c.h.b16 %v1584
        %v4791 = vunpack.c.l.b16 %v1585
        %v4792 = vunpack.c.h.b16 %v1585
        %v4793 = vunpack.c.l.b16 %v1586
        %v4794 = vunpack.c.h.b16 %v1586
        %v4795 = vunpack.c.l.b16 %v1587
        %v4796 = vunpack.c.h.b16 %v1587
        %v4797 = vunpack.c.l.b16 %v1588
        %v4798 = vunpack.c.h.b16 %v1588
        %v4799 = vunpack.c.l.b16 %v1589
        %v4800 = vunpack.c.h.b16 %v1589
        %v4801 = vunpack.c.l.b16 %v1590
        %v4802 = vunpack.c.h.b16 %v1590
        %v4803 = vunpack.c.l.b16 %v1591
        %v4804 = vunpack.c.h.b16 %v1591
        %v4805 = vunpack.c.l.b16 %v1592
        %v4806 = vunpack.c.h.b16 %v1592
        %v4807 = vunpack.c.l.b16 %v1593
        %v4808 = vunpack.c.h.b16 %v1593
        %v4809 = vunpack.c.l.b16 %v1594
        %v4810 = vunpack.c.h.b16 %v1594
        %v4811 = vunpack.c.l.b16 %v1595
        %v4812 = vunpack.c.h.b16 %v1595
        %v4813 = vunpack.c.l.b16 %v1596
        %v4814 = vunpack.c.h.b16 %v1596
        %v4815 = vunpack.c.l.b16 %v1597
        %v4816 = vunpack.c.h.b16 %v1597
        %v4817 = vunpack.c.l.b16 %v1598
        %v4818 = vunpack.c.h.b16 %v1598
        %v4819 = vunpack.c.l.b16 %v1599
        %v4820 = vunpack.c.h.b16 %v1599
        %v4821 = vunpack.c.l.b16 %v1600
        %v4822 = vunpack.c.h.b16 %v1600
        %v4823 = vunpack.c.l.b16 %v1601
        %v4824 = vunpack.c.h.b16 %v1601
        %v4825 = vunpack.c.l.b16 %v1602
        %v4826 = vunpack.c.h.b16 %v1602
        %v4827 = vunpack.c.l.b16 %v1603
        %v4828 = vunpack.c.h.b16 %v1603
        %v4829 = vunpack.c.l.b16 %v1604
        %v4830 = vunpack.c.h.b16 %v1604
        %v4831 = vunpack.c.l.b16 %v1605
        %v4832 = vunpack.c.h.b16 %v1605
        %v4833 = vunpack.c.l.b16 %v1606
        %v4834 = vunpack.c.h.b16 %v1606
        %v4835 = vunpack.c.l.b16 %v1607
        %v4836 = vunpack.c.h.b16 %v1607
        %v4837 = vunpack.c.l.b16 %v1608
        %v4838 = vunpack.c.h.b16 %v1608
        %v4839 = vunpack.c.l.b16 %v1609
        %v4840 = vunpack.c.h.b16 %v1609
        %v4841 = vunpack.c.l.b16 %v1610
        %v4842 = vunpack.c.h.b16 %v1610
        %v4843 = vunpack.c.l.b16 %v1611
        %v4844 = vunpack.c.h.b16 %v1611
        %v4845 = vunpack.c.l.b16 %v1612
        %v4846 = vunpack.c.h.b16 %v1612
        %v4847 = vunpack.c.l.b16 %v1613
        %v4848 = vunpack.c.h.b16 %v1613
        %v4849 = vunpack.c.l.b16 %v1614
        %v4850 = vunpack.c.h.b16 %v1614
        %v4851 = vunpack.c.l.b16 %v1615
        %v4852 = vunpack.c.h.b16 %v1615
        %v4853 = vunpack.c.l.b16 %v1616
        %v4854 = vunpack.c.h.b16 %v1616
        %v4855 = vunpack.c.l.b16 %v1617
        %v4856 = vunpack.c.h.b16 %v1617
        %v4857 = vunpack.c.l.b16 %v1618
        %v4858 = vunpack.c.h.b16 %v1618
        %v4859 = vunpack.c.l.b16 %v1619
        %v4860 = vunpack.c.h.b16 %v1619
        %v4861 = vunpack.c.l.b16 %v1620
        %v4862 = vunpack.c.h.b16 %v1620
        %v4863 = vunpack.c.l.b16 %v1621
        %v4864 = vunpack.c.h.b16 %v1621
        %v4865 = vunpack.c.l.b16 %v1622
        %v4866 = vunpack.c.h.b16 %v1622
        %v4867 = vunpack.c.l.b16 %v1623
        %v4868 = vunpack.c.h.b16 %v1623
        %v4869 = vunpack.c.l.b16 %v1624
        %v4870 = vunpack.c.h.b16 %v1624
        %v4871 = vunpack.c.l.b16 %v1625
        %v4872 = vunpack.c.h.b16 %v1625
        %v4873 = vunpack.c.l.b16 %v1626
        %v4874 = vunpack.c.h.b16 %v1626
        %v4875 = vunpack.c.l.b16 %v1627
        %v4876 = vunpack.c.h.b16 %v1627
        %v4877 = vunpack.c.l.b16 %v1628
        %v4878 = vunpack.c.h.b16 %v1628
        %v4879 = vunpack.c.l.b16 %v1629
        %v4880 = vunpack.c.h.b16 %v1629
        %v4881 = vunpack.c.l.b16 %v1630
        %v4882 = vunpack.c.h.b16 %v1630
        %v4883 = vunpack.c.l.b16 %v1631
        %v4884 = vunpack.c.h.b16 %v1631
        %v4885 = vunpack.c.l.b16 %v1632
        %v4886 = vunpack.c.h.b16 %v1632
        %v4887 = vunpack.c.l.b16 %v1633
        %v4888 = vunpack.c.h.b16 %v1633
        %v4889 = vunpack.c.l.b16 %v1634
        %v4890 = vunpack.c.h.b16 %v1634
        %v4891 = vunpack.c.l.b16 %v1635
        %v4892 = vunpack.c.h.b16 %v1635
        %v4893 = vunpack.c.l.b16 %v1636
        %v4894 = vunpack.c.h.b16 %v1636
        %v4895 = vunpack.c.l.b16 %v1637
        %v4896 = vunpack.c.h.b16 %v1637
        %v4897 = vunpack.c.l.b16 %v1638
        %v4898 = vunpack.c.h.b16 %v1638
        %v4899 = vunpack.c.l.b16 %v1639
        %v4900 = vunpack.c.h.b16 %v1639
        %v4901 = vunpack.c.l.b16 %v1640
        %v4902 = vunpack.c.h.b16 %v1640
        %v4903 = vunpack.c.l.b16 %v1641
        %v4904 = vunpack.c.h.b16 %v1641
        %v4905 = vunpack.c.l.b16 %v1642
        %v4906 = vunpack.c.h.b16 %v1642
        %v4907 = vunpack.c.l.b16 %v1643
        %v4908 = vunpack.c.h.b16 %v1643
        %v4909 = vunpack.c.l.b16 %v1644
        %v4910 = vunpack.c.h.b16 %v1644
        %v4911 = vunpack.c.l.b16 %v1645
        %v4912 = vunpack.c.h.b16 %v1645
        %v4913 = vunpack.c.l.b16 %v1646
        %v4914 = vunpack.c.h.b16 %v1646
        %v4915 = vunpack.c.l.b16 %v1647
        %v4916 = vunpack.c.h.b16 %v1647
        %v4917 = vunpack.c.l.b16 %v1648
        %v4918 = vunpack.c.h.b16 %v1648
        %v4919 = vunpack.c.l.b16 %v1649
        %v4920 = vunpack.c.h.b16 %v1649
        %v4921 = vunpack.c.l.b16 %v1650
        %v4922 = vunpack.c.h.b16 %v1650
        %v4923 = vunpack.c.l.b16 %v1651
        %v4924 = vunpack.c.h.b16 %v1651
        %v4925 = vunpack.c.l.b16 %v1652
        %v4926 = vunpack.c.h.b16 %v1652
        %v4927 = vunpack.c.l.b16 %v1653
        %v4928 = vunpack.c.h.b16 %v1653
        %v4929 = vunpack.c.l.b16 %v1654
        %v4930 = vunpack.c.h.b16 %v1654
        %v4931 = vunpack.c.l.b16 %v1655
        %v4932 = vunpack.c.h.b16 %v1655
        %v4933 = vunpack.c.l.b16 %v1656
        %v4934 = vunpack.c.h.b16 %v1656
        %v4935 = vunpack.c.l.b16 %v1657
        %v4936 = vunpack.c.h.b16 %v1657
        %v4937 = vunpack.c.l.b16 %v1658
        %v4938 = vunpack.c.h.b16 %v1658
        %v4939 = vunpack.c.l.b16 %v1659
        %v4940 = vunpack.c.h.b16 %v1659
        %v4941 = vunpack.c.l.b16 %v1660
        %v4942 = vunpack.c.h.b16 %v1660
        %v4943 = vunpack.c.l.b16 %v1661
        %v4944 = vunpack.c.h.b16 %v1661
        %v4945 = vunpack.c.l.b16 %v1662
        %v4946 = vunpack.c.h.b16 %v1662
        %v4947 = vunpack.c.l.b16 %v1663
        %v4948 = vunpack.c.h.b16 %v1663
        %v4949 = vunpack.c.l.b16 %v1664
        %v4950 = vunpack.c.h.b16 %v1664
        %v4951 = vunpack.c.l.b16 %v1665
        %v4952 = vunpack.c.h.b16 %v1665
        %v4953 = vunpack.c.l.b16 %v1666
        %v4954 = vunpack.c.h.b16 %v1666
        %v4955 = vunpack.c.l.b16 %v1667
        %v4956 = vunpack.c.h.b16 %v1667
        %v4957 = vunpack.c.l.b16 %v1668
        %v4958 = vunpack.c.h.b16 %v1668
        %v4959 = vunpack.c.l.b16 %v1669
        %v4960 = vunpack.c.h.b16 %v1669
        %v4961 = vunpack.c.l.b16 %v1670
        %v4962 = vunpack.c.h.b16 %v1670
        %v4963 = vunpack.c.l.b16 %v1671
        %v4964 = vunpack.c.h.b16 %v1671
        %v4965 = vunpack.c.l.b16 %v1672
        %v4966 = vunpack.c.h.b16 %v1672
        %v4967 = vunpack.c.l.b16 %v1673
        %v4968 = vunpack.c.h.b16 %v1673
        %v4969 = vunpack.c.l.b16 %v1674
        %v4970 = vunpack.c.h.b16 %v1674
        %v4971 = vunpack.c.l.b16 %v1675
        %v4972 = vunpack.c.h.b16 %v1675
        %v4973 = vunpack.c.l.b16 %v1676
        %v4974 = vunpack.c.h.b16 %v1676
        %v4975 = vunpack.c.l.b16 %v1677
        %v4976 = vunpack.c.h.b16 %v1677
        %v4977 = vunpack.c.l.b16 %v1678
        %v4978 = vunpack.c.h.b16 %v1678
        %v4979 = vunpack.c.l.b16 %v1679
        %v4980 = vunpack.c.h.b16 %v1679
        %v4981 = vunpack.c.l.b16 %v1680
        %v4982 = vunpack.c.h.b16 %v1680
        %v4983 = vunpack.c.l.b16 %v1681
        %v4984 = vunpack.c.h.b16 %v1681
        %v4985 = vunpack.c.l.b16 %v1682
        %v4986 = vunpack.c.h.b16 %v1682
        %v4987 = vunpack.c.l.b16 %v1683
        %v4988 = vunpack.c.h.b16 %v1683
        %v4989 = vunpack.c.l.b16 %v1684
        %v4990 = vunpack.c.h.b16 %v1684
        %v4991 = vunpack.c.l.b16 %v1685
        %v4992 = vunpack.c.h.b16 %v1685
        %v4993 = vunpack.c.l.b16 %v1686
        %v4994 = vunpack.c.h.b16 %v1686
        %v4995 = vunpack.c.l.b16 %v1687
        %v4996 = vunpack.c.h.b16 %v1687
        %v4997 = vunpack.c.l.b16 %v1688
        %v4998 = vunpack.c.h.b16 %v1688
        %v4999 = vunpack.c.l.b16 %v1689
        %v5000 = vunpack.c.h.b16 %v1689
        %v5001 = vunpack.c.l.b16 %v1690
        %v5002 = vunpack.c.h.b16 %v1690
        %v5003 = vunpack.c.l.b16 %v1691
        %v5004 = vunpack.c.h.b16 %v1691
        %v5005 = vunpack.c.l.b16 %v1692
        %v5006 = vunpack.c.h.b16 %v1692
        %v5007 = vunpack.c.l.b16 %v1693
        %v5008 = vunpack.c.h.b16 %v1693
        %v5009 = vunpack.c.l.b16 %v1694
        %v5010 = vunpack.c.h.b16 %v1694
        %v5011 = vunpack.c.l.b16 %v1695
        %v5012 = vunpack.c.h.b16 %v1695
        %v5013 = vunpack.c.l.b16 %v1696
        %v5014 = vunpack.c.h.b16 %v1696
        %v5015 = vunpack.c.l.b16 %v1697
        %v5016 = vunpack.c.h.b16 %v1697
        %v5017 = vunpack.c.l.b16 %v1698
        %v5018 = vunpack.c.h.b16 %v1698
        %v5019 = vunpack.c.l.b16 %v1699
        %v5020 = vunpack.c.h.b16 %v1699
        %v5021 = vunpack.c.l.b16 %v1700
        %v5022 = vunpack.c.h.b16 %v1700
        %v5023 = vunpack.c.l.b16 %v1701
        %v5024 = vunpack.c.h.b16 %v1701
        %v5025 = vunpack.c.l.b16 %v1702
        %v5026 = vunpack.c.h.b16 %v1702
        %v5027 = vunpack.c.l.b16 %v1703
        %v5028 = vunpack.c.h.b16 %v1703
        %v5029 = vunpack.c.l.b16 %v1704
        %v5030 = vunpack.c.h.b16 %v1704
        %v5031 = vunpack.c.l.b16 %v1705
        %v5032 = vunpack.c.h.b16 %v1705
        %v5033 = vunpack.c.l.b16 %v1706
        %v5034 = vunpack.c.h.b16 %v1706
        %v5035 = vunpack.c.l.b16 %v1707
        %v5036 = vunpack.c.h.b16 %v1707
        %v5037 = vunpack.c.l.b16 %v1708
        %v5038 = vunpack.c.h.b16 %v1708
        %v5039 = vunpack.c.l.b16 %v1709
        %v5040 = vunpack.c.h.b16 %v1709
        %v5041 = vunpack.c.l.b16 %v1710
        %v5042 = vunpack.c.h.b16 %v1710
        %v5043 = vunpack.c.l.b16 %v1711
        %v5044 = vunpack.c.h.b16 %v1711
        %v5045 = vunpack.c.l.b16 %v1712
        %v5046 = vunpack.c.h.b16 %v1712
        %v5047 = vunpack.c.l.b16 %v1713
        %v5048 = vunpack.c.h.b16 %v1713
        %v5049 = vunpack.c.l.b16 %v1714
        %v5050 = vunpack.c.h.b16 %v1714
        %v5051 = vunpack.c.l.b16 %v1715
        %v5052 = vunpack.c.h.b16 %v1715
        %v5053 = vunpack.c.l.b16 %v1716
        %v5054 = vunpack.c.h.b16 %v1716
        %v5055 = vunpack.c.l.b16 %v1717
        %v5056 = vunpack.c.h.b16 %v1717
        %v5057 = vunpack.c.l.b16 %v1718
        %v5058 = vunpack.c.h.b16 %v1718
        %v5059 = vunpack.c.l.b16 %v1719
        %v5060 = vunpack.c.h.b16 %v1719
        %v5061 = vunpack.c.l.b16 %v1720
        %v5062 = vunpack.c.h.b16 %v1720
        %v5063 = vunpack.c.l.b16 %v1721
        %v5064 = vunpack.c.h.b16 %v1721
        %v5065 = vunpack.c.l.b16 %v1722
        %v5066 = vunpack.c.h.b16 %v1722
        %v5067 = vunpack.c.l.b16 %v1723
        %v5068 = vunpack.c.h.b16 %v1723
        %v5069 = vunpack.c.l.b16 %v1724
        %v5070 = vunpack.c.h.b16 %v1724
        %v5071 = vunpack.c.l.b16 %v1725
        %v5072 = vunpack.c.h.b16 %v1725
        %v5073 = vunpack.c.l.b16 %v1726
        %v5074 = vunpack.c.h.b16 %v1726
        %v5075 = vunpack.c.l.b16 %v1727
        %v5076 = vunpack.c.h.b16 %v1727
        %v5077 = vunpack.c.l.b16 %v1728
        %v5078 = vunpack.c.h.b16 %v1728
        %v5079 = vunpack.c.l.b16 %v1729
        %v5080 = vunpack.c.h.b16 %v1729
        %v5081 = vunpack.c.l.b16 %v1730
        %v5082 = vunpack.c.h.b16 %v1730
        %v5083 = vunpack.c.l.b16 %v1731
        %v5084 = vunpack.c.h.b16 %v1731
        %v5085 = vunpack.c.l.b16 %v1732
        %v5086 = vunpack.c.h.b16 %v1732
        %v5087 = vunpack.c.l.b16 %v1733
        %v5088 = vunpack.c.h.b16 %v1733
        %v5089 = vunpack.c.l.b16 %v1734
        %v5090 = vunpack.c.h.b16 %v1734
        %v5091 = vunpack.c.l.b16 %v1735
        %v5092 = vunpack.c.h.b16 %v1735
        %v5093 = vunpack.c.l.b16 %v1736
        %v5094 = vunpack.c.h.b16 %v1736
        %v5095 = vunpack.c.l.b16 %v1737
        %v5096 = vunpack.c.h.b16 %v1737
        %v5097 = vunpack.c.l.b16 %v1738
        %v5098 = vunpack.c.h.b16 %v1738
        %v5099 = vunpack.c.l.b16 %v1739
        %v5100 = vunpack.c.h.b16 %v1739
        %v5101 = vunpack.c.l.b16 %v1740
        %v5102 = vunpack.c.h.b16 %v1740
        %v5103 = vunpack.c.l.b16 %v1741
        %v5104 = vunpack.c.h.b16 %v1741
        %v5105 = vunpack.c.l.b16 %v1742
        %v5106 = vunpack.c.h.b16 %v1742
        %v5107 = vunpack.c.l.b16 %v1743
        %v5108 = vunpack.c.h.b16 %v1743
        %v5109 = vunpack.c.l.b16 %v1744
        %v5110 = vunpack.c.h.b16 %v1744
        %v5111 = vunpack.c.l.b16 %v1745
        %v5112 = vunpack.c.h.b16 %v1745
        %v5113 = vunpack.c.l.b16 %v1746
        %v5114 = vunpack.c.h.b16 %v1746
        %v5115 = vunpack.c.l.b16 %v1747
        %v5116 = vunpack.c.h.b16 %v1747
        %v5117 = vunpack.c.l.b16 %v1748
        %v5118 = vunpack.c.h.b16 %v1748
        %v5119 = vunpack.c.l.b16 %v1749
        %v5120 = vunpack.c.h.b16 %v1749
        %v5121 = vunpack.c.l.b16 %v1750
        %v5122 = vunpack.c.h.b16 %v1750
        %v5123 = vunpack.c.l.b16 %v1751
        %v5124 = vunpack.c.h.b16 %v1751
        %v5125 = vunpack.c.l.b16 %v1752
        %v5126 = vunpack.c.h.b16 %v1752
        %v5127 = vunpack.c.l.b16 %v1753
        %v5128 = vunpack.c.h.b16 %v1753
        %v5129 = vunpack.c.l.b16 %v1754
        %v5130 = vunpack.c.h.b16 %v1754
        %v5131 = vunpack.c.l.b16 %v1755
        %v5132 = vunpack.c.h.b16 %v1755
        %v5133 = vunpack.c.l.b16 %v1756
        %v5134 = vunpack.c.h.b16 %v1756
        %v5135 = vunpack.c.l.b16 %v1757
        %v5136 = vunpack.c.h.b16 %v1757
        %v5137 = vunpack.c.l.b16 %v1758
        %v5138 = vunpack.c.h.b16 %v1758
        %v5139 = vunpack.c.l.b16 %v1759
        %v5140 = vunpack.c.h.b16 %v1759
        %v5141 = vunpack.c.l.b16 %v1760
        %v5142 = vunpack.c.h.b16 %v1760
        %v5143 = vunpack.c.l.b16 %v1761
        %v5144 = vunpack.c.h.b16 %v1761
        %v5145 = vunpack.c.l.b16 %v1762
        %v5146 = vunpack.c.h.b16 %v1762
        %v5147 = vunpack.c.l.b16 %v1763
        %v5148 = vunpack.c.h.b16 %v1763
        %v5149 = vunpack.c.l.b16 %v1764
        %v5150 = vunpack.c.h.b16 %v1764
        %v5151 = vunpack.c.l.b16 %v1765
        %v5152 = vunpack.c.h.b16 %v1765
        %v5153 = vunpack.c.l.b16 %v1766
        %v5154 = vunpack.c.h.b16 %v1766
        %v5155 = vunpack.c.l.b16 %v1767
        %v5156 = vunpack.c.h.b16 %v1767
        %v5157 = vunpack.c.l.b16 %v1768
        %v5158 = vunpack.c.h.b16 %v1768
        %v5159 = vunpack.c.l.b16 %v1769
        %v5160 = vunpack.c.h.b16 %v1769
        %v5161 = vunpack.c.l.b16 %v1770
        %v5162 = vunpack.c.h.b16 %v1770
        %v5163 = vunpack.c.l.b16 %v1771
        %v5164 = vunpack.c.h.b16 %v1771
        %v5165 = vunpack.c.l.b16 %v1772
        %v5166 = vunpack.c.h.b16 %v1772
        %v5167 = vunpack.c.l.b16 %v1773
        %v5168 = vunpack.c.h.b16 %v1773
        %v5169 = vunpack.c.l.b16 %v1774
        %v5170 = vunpack.c.h.b16 %v1774
        %v5171 = vunpack.c.l.b16 %v1775
        %v5172 = vunpack.c.h.b16 %v1775
        %v5173 = vunpack.c.l.b16 %v1776
        %v5174 = vunpack.c.h.b16 %v1776
        %v5175 = vunpack.c.l.b16 %v1777
        %v5176 = vunpack.c.h.b16 %v1777
        %v5177 = vunpack.c.l.b16 %v1778
        %v5178 = vunpack.c.h.b16 %v1778
        %v5179 = vunpack.c.l.b16 %v1779
        %v5180 = vunpack.c.h.b16 %v1779
        %v5181 = vunpack.c.l.b16 %v1780
        %v5182 = vunpack.c.h.b16 %v1780
        %v5183 = vunpack.c.l.b16 %v1781
        %v5184 = vunpack.c.h.b16 %v1781
        %v5185 = vunpack.c.l.b16 %v1782
        %v5186 = vunpack.c.h.b16 %v1782
        %v5187 = vunpack.c.l.b16 %v1783
        %v5188 = vunpack.c.h.b16 %v1783
        %v5189 = vunpack.c.l.b16 %v1784
        %v5190 = vunpack.c.h.b16 %v1784
        %v5191 = vunpack.c.l.b16 %v1785
        %v5192 = vunpack.c.h.b16 %v1785
        %v5193 = vunpack.c.l.b16 %v1786
        %v5194 = vunpack.c.h.b16 %v1786
        %v5195 = vunpack.c.l.b16 %v1787
        %v5196 = vunpack.c.h.b16 %v1787
        %v5197 = vunpack.c.l.b16 %v1788
        %v5198 = vunpack.c.h.b16 %v1788
        %v5199 = vunpack.c.l.b16 %v1789
        %v5200 = vunpack.c.h.b16 %v1789
        %v5201 = vunpack.c.l.b16 %v1790
        %v5202 = vunpack.c.h.b16 %v1790
        %v5203 = vunpack.c.l.b16 %v1791
        %v5204 = vunpack.c.h.b16 %v1791
        %v5205 = vunpack.c.l.b16 %v1792
        %v5206 = vunpack.c.h.b16 %v1792
        %v5207 = vunpack.c.l.b16 %v1793
        %v5208 = vunpack.c.h.b16 %v1793
        %v5209 = vunpack.c.l.b16 %v1794
        %v5210 = vunpack.c.h.b16 %v1794
        %v5211 = vunpack.c.l.b16 %v1795
        %v5212 = vunpack.c.h.b16 %v1795
        %v5213 = vunpack.c.l.b16 %v1796
        %v5214 = vunpack.c.h.b16 %v1796
        %v5215 = vunpack.c.l.b16 %v1797
        %v5216 = vunpack.c.h.b16 %v1797
        %v5217 = vunpack.c.l.b16 %v1798
        %v5218 = vunpack.c.h.b16 %v1798
        %v5219 = vunpack.c.l.b16 %v1799
        %v5220 = vunpack.c.h.b16 %v1799
        %v5221 = vunpack.c.l.b16 %v1800
        %v5222 = vunpack.c.h.b16 %v1800
        %v5223 = vunpack.c.l.b16 %v1801
        %v5224 = vunpack.c.h.b16 %v1801
        %v5225 = vunpack.c.l.b16 %v1802
        %v5226 = vunpack.c.h.b16 %v1802
        %v5227 = vunpack.c.l.b16 %v1803
        %v5228 = vunpack.c.h.b16 %v1803
        %v5229 = vunpack.c.l.b16 %v1804
        %v5230 = vunpack.c.h.b16 %v1804
        %v5231 = vunpack.c.l.b16 %v1805
        %v5232 = vunpack.c.h.b16 %v1805
        %v5233 = vunpack.c.l.b16 %v1806
        %v5234 = vunpack.c.h.b16 %v1806
        %v5235 = vunpack.c.l.b16 %v1807
        %v5236 = vunpack.c.h.b16 %v1807
        %v5237 = vunpack.c.l.b16 %v1808
        %v5238 = vunpack.c.h.b16 %v1808
        %v5239 = vunpack.c.l.b16 %v1809
        %v5240 = vunpack.c.h.b16 %v1809
        %v5241 = vunpack.c.l.b16 %v1810
        %v5242 = vunpack.c.h.b16 %v1810
        %v5243 = vunpack.c.l.b16 %v1811
        %v5244 = vunpack.c.h.b16 %v1811
        %v5245 = vunpack.c.l.b16 %v1812
        %v5246 = vunpack.c.h.b16 %v1812
        %v5247 = vunpack.c.l.b16 %v1813
        %v5248 = vunpack.c.h.b16 %v1813
        %v5249 = vunpack.c.l.b16 %v1814
        %v5250 = vunpack.c.h.b16 %v1814
        %v5251 = vunpack.c.l.b16 %v1815
        %v5252 = vunpack.c.h.b16 %v1815
        %v5253 = vunpack.c.l.b16 %v1816
        %v5254 = vunpack.c.h.b16 %v1816
        %v5255 = vunpack.c.l.b16 %v1817
        %v5256 = vunpack.c.h.b16 %v1817
        %v5257 = vunpack.c.l.b16 %v1818
        %v5258 = vunpack.c.h.b16 %v1818
        %v5259 = vunpack.c.l.b16 %v1819
        %v5260 = vunpack.c.h.b16 %v1819
        %v5261 = vunpack.c.l.b16 %v1820
        %v5262 = vunpack.c.h.b16 %v1820
        %v5263 = vunpack.c.l.b16 %v1821
        %v5264 = vunpack.c.h.b16 %v1821
        %v5265 = vunpack.c.l.b16 %v1822
        %v5266 = vunpack.c.h.b16 %v1822
        %v5267 = vunpack.c.l.b16 %v1823
        %v5268 = vunpack.c.h.b16 %v1823
        %v5269 = vunpack.c.l.b16 %v1824
        %v5270 = vunpack.c.h.b16 %v1824
        %v5271 = vunpack.c.l.b16 %v1825
        %v5272 = vunpack.c.h.b16 %v1825
        %v5273 = vunpack.c.l.b16 %v1826
        %v5274 = vunpack.c.h.b16 %v1826
        %v5275 = vunpack.c.l.b16 %v1827
        %v5276 = vunpack.c.h.b16 %v1827
        %v5277 = vunpack.c.l.b16 %v1828
        %v5278 = vunpack.c.h.b16 %v1828
        %v5279 = vunpack.c.l.b16 %v1829
        %v5280 = vunpack.c.h.b16 %v1829
        %v5281 = vunpack.c.l.b16 %v1830
        %v5282 = vunpack.c.h.b16 %v1830
        %v5283 = vunpack.c.l.b16 %v1831
        %v5284 = vunpack.c.h.b16 %v1831
        %v5285 = vunpack.c.l.b16 %v1832
        %v5286 = vunpack.c.h.b16 %v1832
        %v5287 = vunpack.c.l.b16 %v1833
        %v5288 = vunpack.c.h.b16 %v1833
        %v5289 = vunpack.c.l.b16 %v1834
        %v5290 = vunpack.c.h.b16 %v1834
        %v5291 = vunpack.c.l.b16 %v1835
        %v5292 = vunpack.c.h.b16 %v1835
        %v5293 = vpack.c.b16 %v2997, %v2989
        %v5294 = vpack.c.b16 %v2998, %v2990
        %v5295 = vpack.c.b16 %v2999, %v2991
        %v5296 = vpack.c.b16 %v3000, %v2992
        %v5297 = vpack.c.b16 %v3001, %v2993
        %v5298 = vpack.c.b16 %v3002, %v2994
        %v5299 = vpack.c.b16 %v3003, %v2995
        %v5300 = vpack.c.b16 %v3004, %v2996
        %v5301 = vpack.c.b16 %v3013, %v3005
        %v5302 = vpack.c.b16 %v3014, %v3006
        %v5303 = vpack.c.b16 %v3015, %v3007
        %v5304 = vpack.c.b16 %v3016, %v3008
        %v5305 = vpack.c.b16 %v3017, %v3009
        %v5306 = vpack.c.b16 %v3018, %v3010
        %v5307 = vpack.c.b16 %v3019, %v3011
        %v5308 = vpack.c.b16 %v3020, %v3012
        %v5309 = vpack.c.b16 %v3029, %v3021
        %v5310 = vpack.c.b16 %v3030, %v3022
        %v5311 = vpack.c.b16 %v3031, %v3023
        %v5312 = vpack.c.b16 %v3032, %v3024
        %v5313 = vpack.c.b16 %v3033, %v3025
        %v5314 = vpack.c.b16 %v3034, %v3026
        %v5315 = vpack.c.b16 %v3035, %v3027
        %v5316 = vpack.c.b16 %v3036, %v3028
        %v5317 = vpack.c.b16 %v3045, %v3037
        %v5318 = vpack.c.b16 %v3046, %v3038
        %v5319 = vpack.c.b16 %v3047, %v3039
        %v5320 = vpack.c.b16 %v3048, %v3040
        %v5321 = vpack.c.b16 %v3049, %v3041
        %v5322 = vpack.c.b16 %v3050, %v3042
        %v5323 = vpack.c.b16 %v3051, %v3043
        %v5324 = vpack.c.b16 %v3052, %v3044
        %v5325 = vpack.c.b16 %v3061, %v3053
        %v5326 = vpack.c.b16 %v3062, %v3054
        %v5327 = vpack.c.b16 %v3063, %v3055
        %v5328 = vpack.c.b16 %v3064, %v3056
        %v5329 = vpack.c.b16 %v3065, %v3057
        %v5330 = vpack.c.b16 %v3066, %v3058
        %v5331 = vpack.c.b16 %v3067, %v3059
        %v5332 = vpack.c.b16 %v3068, %v3060
        %v5333 = vpack.c.b16 %v3077, %v3069
        %v5334 = vpack.c.b16 %v3078, %v3070
        %v5335 = vpack.c.b16 %v3079, %v3071
        %v5336 = vpack.c.b16 %v3080, %v3072
        %v5337 = vpack.c.b16 %v3081, %v3073
        %v5338 = vpack.c.b16 %v3082, %v3074
        %v5339 = vpack.c.b16 %v3083, %v3075
        %v5340 = vpack.c.b16 %v3084, %v3076
        %v5341 = vpack.c.b16 %v3093, %v3085
        %v5342 = vpack.c.b16 %v3094, %v3086
        %v5343 = vpack.c.b16 %v3095, %v3087
        %v5344 = vpack.c.b16 %v3096, %v3088
        %v5345 = vpack.c.b16 %v3097, %v3089
        %v5346 = vpack.c.b16 %v3098, %v3090
        %v5347 = vpack.c.b16 %v3099, %v3091
        %v5348 = vpack.c.b16 %v3100, %v3092
        %v5349 = vpack.c.b16 %v3109, %v3101
        %v5350 = vpack.c.b16 %v3110, %v3102
        %v5351 = vpack.c.b16 %v3111, %v3103
        %v5352 = vpack.c.b16 %v3112, %v3104
        %v5353 = vpack.c.b16 %v3113, %v3105
        %v5354 = vpack.c.b16 %v3114, %v3106
        %v5355 = vpack.c.b16 %v3115, %v3107
        %v5356 = vpack.c.b16 %v3116, %v3108
        %v5357 = vpack.c.b16 %v3125, %v3117
        %v5358 = vpack.c.b16 %v3126, %v3118
        %v5359 = vpack.c.b16 %v3127, %v3119
        %v5360 = vpack.c.b16 %v3128, %v3120
        %v5361 = vpack.c.b16 %v3129, %v3121
        %v5362 = vpack.c.b16 %v3130, %v3122
        %v5363 = vpack.c.b16 %v3131, %v3123
        %v5364 = vpack.c.b16 %v3132, %v3124
        %v5365 = vpack.c.b16 %v3141, %v3133
        %v5366 = vpack.c.b16 %v3142, %v3134
        %v5367 = vpack.c.b16 %v3143, %v3135
        %v5368 = vpack.c.b16 %v3144, %v3136
        %v5369 = vpack.c.b16 %v3145, %v3137
        %v5370 = vpack.c.b16 %v3146, %v3138
        %v5371 = vpack.c.b16 %v3147, %v3139
        %v5372 = vpack.c.b16 %v3148, %v3140
        %v5373 = vpack.c.b16 %v3157, %v3149
        %v5374 = vpack.c.b16 %v3158, %v3150
        %v5375 = vpack.c.b16 %v3159, %v3151
        %v5376 = vpack.c.b16 %v3160, %v3152
        %v5377 = vpack.c.b16 %v3161, %v3153
        %v5378 = vpack.c.b16 %v3162, %v3154
        %v5379 = vpack.c.b16 %v3163, %v3155
        %v5380 = vpack.c.b16 %v3164, %v3156
        %v5381 = vpack.c.b16 %v3173, %v3165
        %v5382 = vpack.c.b16 %v3174, %v3166
        %v5383 = vpack.c.b16 %v3175, %v3167
        %v5384 = vpack.c.b16 %v3176, %v3168
        %v5385 = vpack.c.b16 %v3177, %v3169
        %v5386 = vpack.c.b16 %v3178, %v3170
        %v5387 = vpack.c.b16 %v3179, %v3171
        %v5388 = vpack.c.b16 %v3180, %v3172
        %v5389 = vpack.c.b16 %v3189, %v3181
        %v5390 = vpack.c.b16 %v3190, %v3182
        %v5391 = vpack.c.b16 %v3191, %v3183
        %v5392 = vpack.c.b16 %v3192, %v3184
        %v5393 = vpack.c.b16 %v3193, %v3185
        %v5394 = vpack.c.b16 %v3194, %v3186
        %v5395 = vpack.c.b16 %v3195, %v3187
        %v5396 = vpack.c.b16 %v3196, %v3188
        %v5397 = vpack.c.b16 %v3205, %v3197
        %v5398 = vpack.c.b16 %v3206, %v3198
        %v5399 = vpack.c.b16 %v3207, %v3199
        %v5400 = vpack.c.b16 %v3208, %v3200
        %v5401 = vpack.c.b16 %v3209, %v3201
        %v5402 = vpack.c.b16 %v3210, %v3202
        %v5403 = vpack.c.b16 %v3211, %v3203
        %v5404 = vpack.c.b16 %v3212, %v3204
        %v5405 = vpack.c.b16 %v3221, %v3213
        %v5406 = vpack.c.b16 %v3222, %v3214
        %v5407 = vpack.c.b16 %v3223, %v3215
        %v5408 = vpack.c.b16 %v3224, %v3216
        %v5409 = vpack.c.b16 %v3225, %v3217
        %v5410 = vpack.c.b16 %v3226, %v3218
        %v5411 = vpack.c.b16 %v3227, %v3219
        %v5412 = vpack.c.b16 %v3228, %v3220
        %v5413 = vpack.c.b16 %v3237, %v3229
        %v5414 = vpack.c.b16 %v3238, %v3230
        %v5415 = vpack.c.b16 %v3239, %v3231
        %v5416 = vpack.c.b16 %v3240, %v3232
        %v5417 = vpack.c.b16 %v3241, %v3233
        %v5418 = vpack.c.b16 %v3242, %v3234
        %v5419 = vpack.c.b16 %v3243, %v3235
        %v5420 = vpack.c.b16 %v3244, %v3236
        %v5421 = vpack.c.b16 %v3253, %v3245
        %v5422 = vpack.c.b16 %v3254, %v3246
        %v5423 = vpack.c.b16 %v3255, %v3247
        %v5424 = vpack.c.b16 %v3256, %v3248
        %v5425 = vpack.c.b16 %v3257, %v3249
        %v5426 = vpack.c.b16 %v3258, %v3250
        %v5427 = vpack.c.b16 %v3259, %v3251
        %v5428 = vpack.c.b16 %v3260, %v3252
        %v5429 = vpack.c.b16 %v3269, %v3261
        %v5430 = vpack.c.b16 %v3270, %v3262
        %v5431 = vpack.c.b16 %v3271, %v3263
        %v5432 = vpack.c.b16 %v3272, %v3264
        %v5433 = vpack.c.b16 %v3273, %v3265
        %v5434 = vpack.c.b16 %v3274, %v3266
        %v5435 = vpack.c.b16 %v3275, %v3267
        %v5436 = vpack.c.b16 %v3276, %v3268
        %v5437 = vpack.c.b16 %v3285, %v3277
        %v5438 = vpack.c.b16 %v3286, %v3278
        %v5439 = vpack.c.b16 %v3287, %v3279
        %v5440 = vpack.c.b16 %v3288, %v3280
        %v5441 = vpack.c.b16 %v3289, %v3281
        %v5442 = vpack.c.b16 %v3290, %v3282
        %v5443 = vpack.c.b16 %v3291, %v3283
        %v5444 = vpack.c.b16 %v3292, %v3284
        %v5445 = vpack.c.b16 %v3301, %v3293
        %v5446 = vpack.c.b16 %v3302, %v3294
        %v5447 = vpack.c.b16 %v3303, %v3295
        %v5448 = vpack.c.b16 %v3304, %v3296
        %v5449 = vpack.c.b16 %v3305, %v3297
        %v5450 = vpack.c.b16 %v3306, %v3298
        %v5451 = vpack.c.b16 %v3307, %v3299
        %v5452 = vpack.c.b16 %v3308, %v3300
        %v5453 = vpack.c.b16 %v3317, %v3309
        %v5454 = vpack.c.b16 %v3318, %v3310
        %v5455 = vpack.c.b16 %v3319, %v3311
        %v5456 = vpack.c.b16 %v3320, %v3312
        %v5457 = vpack.c.b16 %v3321, %v3313
        %v5458 = vpack.c.b16 %v3322, %v3314
        %v5459 = vpack.c.b16 %v3323, %v3315
        %v5460 = vpack.c.b16 %v3324, %v3316
        %v5461 = vpack.c.b16 %v3333, %v3325
        %v5462 = vpack.c.b16 %v3334, %v3326
        %v5463 = vpack.c.b16 %v3335, %v3327
        %v5464 = vpack.c.b16 %v3336, %v3328
        %v5465 = vpack.c.b16 %v3337, %v3329
        %v5466 = vpack.c.b16 %v3338, %v3330
        %v5467 = vpack.c.b16 %v3339, %v3331
        %v5468 = vpack.c.b16 %v3340, %v3332
        %v5469 = vpack.c.b16 %v3349, %v3341
        %v5470 = vpack.c.b16 %v3350, %v3342
        %v5471 = vpack.c.b16 %v3351, %v3343
        %v5472 = vpack.c.b16 %v3352, %v3344
        %v5473 = vpack.c.b16 %v3353, %v3345
        %v5474 = vpack.c.b16 %v3354, %v3346
        %v5475 = vpack.c.b16 %v3355, %v3347
        %v5476 = vpack.c.b16 %v3356, %v3348
        %v5477 = vpack.c.b16 %v3365, %v3357
        %v5478 = vpack.c.b16 %v3366, %v3358
        %v5479 = vpack.c.b16 %v3367, %v3359
        %v5480 = vpack.c.b16 %v3368, %v3360
        %v5481 = vpack.c.b16 %v3369, %v3361
        %v5482 = vpack.c.b16 %v3370, %v3362
        %v5483 = vpack.c.b16 %v3371, %v3363
        %v5484 = vpack.c.b16 %v3372, %v3364
        %v5485 = vpack.c.b16 %v3381, %v3373
        %v5486 = vpack.c.b16 %v3382, %v3374
        %v5487 = vpack.c.b16 %v3383, %v3375
        %v5488 = vpack.c.b16 %v3384, %v3376
        %v5489 = vpack.c.b16 %v3385, %v3377
        %v5490 = vpack.c.b16 %v3386, %v3378
        %v5491 = vpack.c.b16 %v3387, %v3379
        %v5492 = vpack.c.b16 %v3388, %v3380
        %v5493 = vpack.c.b16 %v3397, %v3389
        %v5494 = vpack.c.b16 %v3398, %v3390
        %v5495 = vpack.c.b16 %v3399, %v3391
        %v5496 = vpack.c.b16 %v3400, %v3392
        %v5497 = vpack.c.b16 %v3401, %v3393
        %v5498 = vpack.c.b16 %v3402, %v3394
        %v5499 = vpack.c.b16 %v3403, %v3395
        %v5500 = vpack.c.b16 %v3404, %v3396
        %v5501 = vpack.c.b16 %v3413, %v3405
        %v5502 = vpack.c.b16 %v3414, %v3406
        %v5503 = vpack.c.b16 %v3415, %v3407
        %v5504 = vpack.c.b16 %v3416, %v3408
        %v5505 = vpack.c.b16 %v3417, %v3409
        %v5506 = vpack.c.b16 %v3418, %v3410
        %v5507 = vpack.c.b16 %v3419, %v3411
        %v5508 = vpack.c.b16 %v3420, %v3412
        %v5509 = vpack.c.b16 %v3429, %v3421
        %v5510 = vpack.c.b16 %v3430, %v3422
        %v5511 = vpack.c.b16 %v3431, %v3423
        %v5512 = vpack.c.b16 %v3432, %v3424
        %v5513 = vpack.c.b16 %v3433, %v3425
        %v5514 = vpack.c.b16 %v3434, %v3426
        %v5515 = vpack.c.b16 %v3435, %v3427
        %v5516 = vpack.c.b16 %v3436, %v3428
        %v5517 = vpack.c.b16 %v3445, %v3437
        %v5518 = vpack.c.b16 %v3446, %v3438
        %v5519 = vpack.c.b16 %v3447, %v3439
        %v5520 = vpack.c.b16 %v3448, %v3440
        %v5521 = vpack.c.b16 %v3449, %v3441
        %v5522 = vpack.c.b16 %v3450, %v3442
        %v5523 = vpack.c.b16 %v3451, %v3443
        %v5524 = vpack.c.b16 %v3452, %v3444
        %v5525 = vpack.c.b16 %v3461, %v3453
        %v5526 = vpack.c.b16 %v3462, %v3454
        %v5527 = vpack.c.b16 %v3463, %v3455
        %v5528 = vpack.c.b16 %v3464, %v3456
        %v5529 = vpack.c.b16 %v3465, %v3457
        %v5530 = vpack.c.b16 %v3466, %v3458
        %v5531 = vpack.c.b16 %v3467, %v3459
        %v5532 = vpack.c.b16 %v3468, %v3460
        %v5533 = vpack.c.b16 %v3477, %v3469
        %v5534 = vpack.c.b16 %v3478, %v3470
        %v5535 = vpack.c.b16 %v3479, %v3471
        %v5536 = vpack.c.b16 %v3480, %v3472
        %v5537 = vpack.c.b16 %v3481, %v3473
        %v5538 = vpack.c.b16 %v3482, %v3474
        %v5539 = vpack.c.b16 %v3483, %v3475
        %v5540 = vpack.c.b16 %v3484, %v3476
        %v5541 = vpack.c.b16 %v3493, %v3485
        %v5542 = vpack.c.b16 %v3494, %v3486
        %v5543 = vpack.c.b16 %v3495, %v3487
        %v5544 = vpack.c.b16 %v3496, %v3488
        %v5545 = vpack.c.b16 %v3497, %v3489
        %v5546 = vpack.c.b16 %v3498, %v3490
        %v5547 = vpack.c.b16 %v3499, %v3491
        %v5548 = vpack.c.b16 %v3500, %v3492
        %v5549 = vpack.c.b16 %v3509, %v3501
        %v5550 = vpack.c.b16 %v3510, %v3502
        %v5551 = vpack.c.b16 %v3511, %v3503
        %v5552 = vpack.c.b16 %v3512, %v3504
        %v5553 = vpack.c.b16 %v3513, %v3505
        %v5554 = vpack.c.b16 %v3514, %v3506
        %v5555 = vpack.c.b16 %v3515, %v3507
        %v5556 = vpack.c.b16 %v3516, %v3508
        %v5557 = vpack.c.b16 %v3525, %v3517
        %v5558 = vpack.c.b16 %v3526, %v3518
        %v5559 = vpack.c.b16 %v3527, %v3519
        %v5560 = vpack.c.b16 %v3528, %v3520
        %v5561 = vpack.c.b16 %v3529, %v3521
        %v5562 = vpack.c.b16 %v3530, %v3522
        %v5563 = vpack.c.b16 %v3531, %v3523
        %v5564 = vpack.c.b16 %v3532, %v3524
        %v5565 = vpack.c.b16 %v3541, %v3533
        %v5566 = vpack.c.b16 %v3542, %v3534
        %v5567 = vpack.c.b16 %v3543, %v3535
        %v5568 = vpack.c.b16 %v3544, %v3536
        %v5569 = vpack.c.b16 %v3545, %v3537
        %v5570 = vpack.c.b16 %v3546, %v3538
        %v5571 = vpack.c.b16 %v3547, %v3539
        %v5572 = vpack.c.b16 %v3548, %v3540
        %v5573 = vpack.c.b16 %v3557, %v3549
        %v5574 = vpack.c.b16 %v3558, %v3550
        %v5575 = vpack.c.b16 %v3559, %v3551
        %v5576 = vpack.c.b16 %v3560, %v3552
        %v5577 = vpack.c.b16 %v3561, %v3553
        %v5578 = vpack.c.b16 %v3562, %v3554
        %v5579 = vpack.c.b16 %v3563, %v3555
        %v5580 = vpack.c.b16 %v3564, %v3556
        %v5581 = vpack.c.b16 %v3573, %v3565
        %v5582 = vpack.c.b16 %v3574, %v3566
        %v5583 = vpack.c.b16 %v3575, %v3567
        %v5584 = vpack.c.b16 %v3576, %v3568
        %v5585 = vpack.c.b16 %v3577, %v3569
        %v5586 = vpack.c.b16 %v3578, %v3570
        %v5587 = vpack.c.b16 %v3579, %v3571
        %v5588 = vpack.c.b16 %v3580, %v3572
        %v5589 = vpack.c.b16 %v3589, %v3581
        %v5590 = vpack.c.b16 %v3590, %v3582
        %v5591 = vpack.c.b16 %v3591, %v3583
        %v5592 = vpack.c.b16 %v3592, %v3584
        %v5593 = vpack.c.b16 %v3593, %v3585
        %v5594 = vpack.c.b16 %v3594, %v3586
        %v5595 = vpack.c.b16 %v3595, %v3587
        %v5596 = vpack.c.b16 %v3596, %v3588
        %v5597 = vpack.c.b16 %v3605, %v3597
        %v5598 = vpack.c.b16 %v3606, %v3598
        %v5599 = vpack.c.b16 %v3607, %v3599
        %v5600 = vpack.c.b16 %v3608, %v3600
        %v5601 = vpack.c.b16 %v3609, %v3601
        %v5602 = vpack.c.b16 %v3610, %v3602
        %v5603 = vpack.c.b16 %v3611, %v3603
        %v5604 = vpack.c.b16 %v3612, %v3604
        %v5605 = vpack.c.b16 %v3621, %v3613
        %v5606 = vpack.c.b16 %v3622, %v3614
        %v5607 = vpack.c.b16 %v3623, %v3615
        %v5608 = vpack.c.b16 %v3624, %v3616
        %v5609 = vpack.c.b16 %v3625, %v3617
        %v5610 = vpack.c.b16 %v3626, %v3618
        %v5611 = vpack.c.b16 %v3627, %v3619
        %v5612 = vpack.c.b16 %v3628, %v3620
        %v5613 = vpack.c.b16 %v3637, %v3629
        %v5614 = vpack.c.b16 %v3638, %v3630
        %v5615 = vpack.c.b16 %v3639, %v3631
        %v5616 = vpack.c.b16 %v3640, %v3632
        %v5617 = vpack.c.b16 %v3641, %v3633
        %v5618 = vpack.c.b16 %v3642, %v3634
        %v5619 = vpack.c.b16 %v3643, %v3635
        %v5620 = vpack.c.b16 %v3644, %v3636
        %v5621 = vpack.c.b16 %v3653, %v3645
        %v5622 = vpack.c.b16 %v3654, %v3646
        %v5623 = vpack.c.b16 %v3655, %v3647
        %v5624 = vpack.c.b16 %v3656, %v3648
        %v5625 = vpack.c.b16 %v3657, %v3649
        %v5626 = vpack.c.b16 %v3658, %v3650
        %v5627 = vpack.c.b16 %v3659, %v3651
        %v5628 = vpack.c.b16 %v3660, %v3652
        %v5629 = vpack.c.b16 %v3669, %v3661
        %v5630 = vpack.c.b16 %v3670, %v3662
        %v5631 = vpack.c.b16 %v3671, %v3663
        %v5632 = vpack.c.b16 %v3672, %v3664
        %v5633 = vpack.c.b16 %v3673, %v3665
        %v5634 = vpack.c.b16 %v3674, %v3666
        %v5635 = vpack.c.b16 %v3675, %v3667
        %v5636 = vpack.c.b16 %v3676, %v3668
        %v5637 = vpack.c.b16 %v3685, %v3677
        %v5638 = vpack.c.b16 %v3686, %v3678
        %v5639 = vpack.c.b16 %v3687, %v3679
        %v5640 = vpack.c.b16 %v3688, %v3680
        %v5641 = vpack.c.b16 %v3689, %v3681
        %v5642 = vpack.c.b16 %v3690, %v3682
        %v5643 = vpack.c.b16 %v3691, %v3683
        %v5644 = vpack.c.b16 %v3692, %v3684
        %v5645 = vpack.c.b16 %v3701, %v3693
        %v5646 = vpack.c.b16 %v3702, %v3694
        %v5647 = vpack.c.b16 %v3703, %v3695
        %v5648 = vpack.c.b16 %v3704, %v3696
        %v5649 = vpack.c.b16 %v3705, %v3697
        %v5650 = vpack.c.b16 %v3706, %v3698
        %v5651 = vpack.c.b16 %v3707, %v3699
        %v5652 = vpack.c.b16 %v3708, %v3700
        %v5653 = vpack.c.b16 %v3717, %v3709
        %v5654 = vpack.c.b16 %v3718, %v3710
        %v5655 = vpack.c.b16 %v3719, %v3711
        %v5656 = vpack.c.b16 %v3720, %v3712
        %v5657 = vpack.c.b16 %v3721, %v3713
        %v5658 = vpack.c.b16 %v3722, %v3714
        %v5659 = vpack.c.b16 %v3723, %v3715
        %v5660 = vpack.c.b16 %v3724, %v3716
        %v5661 = vpack.c.b16 %v3733, %v3725
        %v5662 = vpack.c.b16 %v3734, %v3726
        %v5663 = vpack.c.b16 %v3735, %v3727
        %v5664 = vpack.c.b16 %v3736, %v3728
        %v5665 = vpack.c.b16 %v3737, %v3729
        %v5666 = vpack.c.b16 %v3738, %v3730
        %v5667 = vpack.c.b16 %v3739, %v3731
        %v5668 = vpack.c.b16 %v3740, %v3732
        %v5669 = vpack.c.b16 %v3749, %v3741
        %v5670 = vpack.c.b16 %v3750, %v3742
        %v5671 = vpack.c.b16 %v3751, %v3743
        %v5672 = vpack.c.b16 %v3752, %v3744
        %v5673 = vpack.c.b16 %v3753, %v3745
        %v5674 = vpack.c.b16 %v3754, %v3746
        %v5675 = vpack.c.b16 %v3755, %v3747
        %v5676 = vpack.c.b16 %v3756, %v3748
        %v5677 = vpack.c.b16 %v3765, %v3757
        %v5678 = vpack.c.b16 %v3766, %v3758
        %v5679 = vpack.c.b16 %v3767, %v3759
        %v5680 = vpack.c.b16 %v3768, %v3760
        %v5681 = vpack.c.b16 %v3769, %v3761
        %v5682 = vpack.c.b16 %v3770, %v3762
        %v5683 = vpack.c.b16 %v3771, %v3763
        %v5684 = vpack.c.b16 %v3772, %v3764
        %v5685 = vpack.c.b16 %v3781, %v3773
        %v5686 = vpack.c.b16 %v3782, %v3774
        %v5687 = vpack.c.b16 %v3783, %v3775
        %v5688 = vpack.c.b16 %v3784, %v3776
        %v5689 = vpack.c.b16 %v3785, %v3777
        %v5690 = vpack.c.b16 %v3786, %v3778
        %v5691 = vpack.c.b16 %v3787, %v3779
        %v5692 = vpack.c.b16 %v3788, %v3780
        %v5693 = vpack.c.b16 %v3797, %v3789
        %v5694 = vpack.c.b16 %v3798, %v3790
        %v5695 = vpack.c.b16 %v3799, %v3791
        %v5696 = vpack.c.b16 %v3800, %v3792
        %v5697 = vpack.c.b16 %v3801, %v3793
        %v5698 = vpack.c.b16 %v3802, %v3794
        %v5699 = vpack.c.b16 %v3803, %v3795
        %v5700 = vpack.c.b16 %v3804, %v3796
        %v5701 = vpack.c.b16 %v3813, %v3805
        %v5702 = vpack.c.b16 %v3814, %v3806
        %v5703 = vpack.c.b16 %v3815, %v3807
        %v5704 = vpack.c.b16 %v3816, %v3808
        %v5705 = vpack.c.b16 %v3817, %v3809
        %v5706 = vpack.c.b16 %v3818, %v3810
        %v5707 = vpack.c.b16 %v3819, %v3811
        %v5708 = vpack.c.b16 %v3820, %v3812
        %v5709 = vpack.c.b16 %v3829, %v3821
        %v5710 = vpack.c.b16 %v3830, %v3822
        %v5711 = vpack.c.b16 %v3831, %v3823
        %v5712 = vpack.c.b16 %v3832, %v3824
        %v5713 = vpack.c.b16 %v3833, %v3825
        %v5714 = vpack.c.b16 %v3834, %v3826
        %v5715 = vpack.c.b16 %v3835, %v3827
        %v5716 = vpack.c.b16 %v3836, %v3828
        %v5717 = vpack.c.b16 %v3845, %v3837
        %v5718 = vpack.c.b16 %v3846, %v3838
        %v5719 = vpack.c.b16 %v3847, %v3839
        %v5720 = vpack.c.b16 %v3848, %v3840
        %v5721 = vpack.c.b16 %v3849, %v3841
        %v5722 = vpack.c.b16 %v3850, %v3842
        %v5723 = vpack.c.b16 %v3851, %v3843
        %v5724 = vpack.c.b16 %v3852, %v3844
        %v5725 = vpack.c.b16 %v3861, %v3853
        %v5726 = vpack.c.b16 %v3862, %v3854
        %v5727 = vpack.c.b16 %v3863, %v3855
        %v5728 = vpack.c.b16 %v3864, %v3856
        %v5729 = vpack.c.b16 %v3865, %v3857
        %v5730 = vpack.c.b16 %v3866, %v3858
        %v5731 = vpack.c.b16 %v3867, %v3859
        %v5732 = vpack.c.b16 %v3868, %v3860
        %v5733 = vpack.c.b16 %v3877, %v3869
        %v5734 = vpack.c.b16 %v3878, %v3870
        %v5735 = vpack.c.b16 %v3879, %v3871
        %v5736 = vpack.c.b16 %v3880, %v3872
        %v5737 = vpack.c.b16 %v3881, %v3873
        %v5738 = vpack.c.b16 %v3882, %v3874
        %v5739 = vpack.c.b16 %v3883, %v3875
        %v5740 = vpack.c.b16 %v3884, %v3876
        %v5741 = vpack.c.b16 %v3893, %v3885
        %v5742 = vpack.c.b16 %v3894, %v3886
        %v5743 = vpack.c.b16 %v3895, %v3887
        %v5744 = vpack.c.b16 %v3896, %v3888
        %v5745 = vpack.c.b16 %v3897, %v3889
        %v5746 = vpack.c.b16 %v3898, %v3890
        %v5747 = vpack.c.b16 %v3899, %v3891
        %v5748 = vpack.c.b16 %v3900, %v3892
        %v5749 = vpack.c.b16 %v3909, %v3901
        %v5750 = vpack.c.b16 %v3910, %v3902
        %v5751 = vpack.c.b16 %v3911, %v3903
        %v5752 = vpack.c.b16 %v3912, %v3904
        %v5753 = vpack.c.b16 %v3913, %v3905
        %v5754 = vpack.c.b16 %v3914, %v3906
        %v5755 = vpack.c.b16 %v3915, %v3907
        %v5756 = vpack.c.b16 %v3916, %v3908
        %v5757 = vpack.c.b16 %v3925, %v3917
        %v5758 = vpack.c.b16 %v3926, %v3918
        %v5759 = vpack.c.b16 %v3927, %v3919
        %v5760 = vpack.c.b16 %v3928, %v3920
        %v5761 = vpack.c.b16 %v3929, %v3921
        %v5762 = vpack.c.b16 %v3930, %v3922
        %v5763 = vpack.c.b16 %v3931, %v3923
        %v5764 = vpack.c.b16 %v3932, %v3924
        %v5765 = vpack.c.b16 %v3941, %v3933
        %v5766 = vpack.c.b16 %v3942, %v3934
        %v5767 = vpack.c.b16 %v3943, %v3935
        %v5768 = vpack.c.b16 %v3944, %v3936
        %v5769 = vpack.c.b16 %v3945, %v3937
        %v5770 = vpack.c.b16 %v3946, %v3938
        %v5771 = vpack.c.b16 %v3947, %v3939
        %v5772 = vpack.c.b16 %v3948, %v3940
        %v5773 = vpack.c.b16 %v3957, %v3949
        %v5774 = vpack.c.b16 %v3958, %v3950
        %v5775 = vpack.c.b16 %v3959, %v3951
        %v5776 = vpack.c.b16 %v3960, %v3952
        %v5777 = vpack.c.b16 %v3961, %v3953
        %v5778 = vpack.c.b16 %v3962, %v3954
        %v5779 = vpack.c.b16 %v3963, %v3955
        %v5780 = vpack.c.b16 %v3964, %v3956
        %v5781 = vpack.c.b16 %v3973, %v3965
        %v5782 = vpack.c.b16 %v3974, %v3966
        %v5783 = vpack.c.b16 %v3975, %v3967
        %v5784 = vpack.c.b16 %v3976, %v3968
        %v5785 = vpack.c.b16 %v3977, %v3969
        %v5786 = vpack.c.b16 %v3978, %v3970
        %v5787 = vpack.c.b16 %v3979, %v3971
        %v5788 = vpack.c.b16 %v3980, %v3972
        %v5789 = vpack.c.b16 %v3989, %v3981
        %v5790 = vpack.c.b16 %v3990, %v3982
        %v5791 = vpack.c.b16 %v3991, %v3983
        %v5792 = vpack.c.b16 %v3992, %v3984
        %v5793 = vpack.c.b16 %v3993, %v3985
        %v5794 = vpack.c.b16 %v3994, %v3986
        %v5795 = vpack.c.b16 %v3995, %v3987
        %v5796 = vpack.c.b16 %v3996, %v3988
        %v5797 = vpack.c.b16 %v4005, %v3997
        %v5798 = vpack.c.b16 %v4006, %v3998
        %v5799 = vpack.c.b16 %v4007, %v3999
        %v5800 = vpack.c.b16 %v4008, %v4000
        %v5801 = vpack.c.b16 %v4009, %v4001
        %v5802 = vpack.c.b16 %v4010, %v4002
        %v5803 = vpack.c.b16 %v4011, %v4003
        %v5804 = vpack.c.b16 %v4012, %v4004
        %v5805 = vpack.c.b16 %v4021, %v4013
        %v5806 = vpack.c.b16 %v4022, %v4014
        %v5807 = vpack.c.b16 %v4023, %v4015
        %v5808 = vpack.c.b16 %v4024, %v4016
        %v5809 = vpack.c.b16 %v4025, %v4017
        %v5810 = vpack.c.b16 %v4026, %v4018
        %v5811 = vpack.c.b16 %v4027, %v4019
        %v5812 = vpack.c.b16 %v4028, %v4020
        %v5813 = vpack.c.b16 %v4037, %v4029
        %v5814 = vpack.c.b16 %v4038, %v4030
        %v5815 = vpack.c.b16 %v4039, %v4031
        %v5816 = vpack.c.b16 %v4040, %v4032
        %v5817 = vpack.c.b16 %v4041, %v4033
        %v5818 = vpack.c.b16 %v4042, %v4034
        %v5819 = vpack.c.b16 %v4043, %v4035
        %v5820 = vpack.c.b16 %v4044, %v4036
        %v5821 = vpack.c.b16 %v4053, %v4045
        %v5822 = vpack.c.b16 %v4054, %v4046
        %v5823 = vpack.c.b16 %v4055, %v4047
        %v5824 = vpack.c.b16 %v4056, %v4048
        %v5825 = vpack.c.b16 %v4057, %v4049
        %v5826 = vpack.c.b16 %v4058, %v4050
        %v5827 = vpack.c.b16 %v4059, %v4051
        %v5828 = vpack.c.b16 %v4060, %v4052
        %v5829 = vpack.c.b16 %v4069, %v4061
        %v5830 = vpack.c.b16 %v4070, %v4062
        %v5831 = vpack.c.b16 %v4071, %v4063
        %v5832 = vpack.c.b16 %v4072, %v4064
        %v5833 = vpack.c.b16 %v4073, %v4065
        %v5834 = vpack.c.b16 %v4074, %v4066
        %v5835 = vpack.c.b16 %v4075, %v4067
        %v5836 = vpack.c.b16 %v4076, %v4068
        %v5837 = vpack.c.b16 %v4085, %v4077
        %v5838 = vpack.c.b16 %v4086, %v4078
        %v5839 = vpack.c.b16 %v4087, %v4079
        %v5840 = vpack.c.b16 %v4088, %v4080
        %v5841 = vpack.c.b16 %v4089, %v4081
        %v5842 = vpack.c.b16 %v4090, %v4082
        %v5843 = vpack.c.b16 %v4091, %v4083
        %v5844 = vpack.c.b16 %v4092, %v4084
        %v5845 = vpack.c.b16 %v4101, %v4093
        %v5846 = vpack.c.b16 %v4102, %v4094
        %v5847 = vpack.c.b16 %v4103, %v4095
        %v5848 = vpack.c.b16 %v4104, %v4096
        %v5849 = vpack.c.b16 %v4105, %v4097
        %v5850 = vpack.c.b16 %v4106, %v4098
        %v5851 = vpack.c.b16 %v4107, %v4099
        %v5852 = vpack.c.b16 %v4108, %v4100
        %v5853 = vpack.c.b16 %v4117, %v4109
        %v5854 = vpack.c.b16 %v4118, %v4110
        %v5855 = vpack.c.b16 %v4119, %v4111
        %v5856 = vpack.c.b16 %v4120, %v4112
        %v5857 = vpack.c.b16 %v4121, %v4113
        %v5858 = vpack.c.b16 %v4122, %v4114
        %v5859 = vpack.c.b16 %v4123, %v4115
        %v5860 = vpack.c.b16 %v4124, %v4116
        %v5861 = vpack.c.b16 %v4133, %v4125
        %v5862 = vpack.c.b16 %v4134, %v4126
        %v5863 = vpack.c.b16 %v4135, %v4127
        %v5864 = vpack.c.b16 %v4136, %v4128
        %v5865 = vpack.c.b16 %v4137, %v4129
        %v5866 = vpack.c.b16 %v4138, %v4130
        %v5867 = vpack.c.b16 %v4139, %v4131
        %v5868 = vpack.c.b16 %v4140, %v4132
        %v5869 = vpack.c.b16 %v4149, %v4141
        %v5870 = vpack.c.b16 %v4150, %v4142
        %v5871 = vpack.c.b16 %v4151, %v4143
        %v5872 = vpack.c.b16 %v4152, %v4144
        %v5873 = vpack.c.b16 %v4153, %v4145
        %v5874 = vpack.c.b16 %v4154, %v4146
        %v5875 = vpack.c.b16 %v4155, %v4147
        %v5876 = vpack.c.b16 %v4156, %v4148
        %v5877 = vpack.c.b16 %v4165, %v4157
        %v5878 = vpack.c.b16 %v4166, %v4158
        %v5879 = vpack.c.b16 %v4167, %v4159
        %v5880 = vpack.c.b16 %v4168, %v4160
        %v5881 = vpack.c.b16 %v4169, %v4161
        %v5882 = vpack.c.b16 %v4170, %v4162
        %v5883 = vpack.c.b16 %v4171, %v4163
        %v5884 = vpack.c.b16 %v4172, %v4164
        %v5885 = vpack.c.b16 %v4181, %v4173
        %v5886 = vpack.c.b16 %v4182, %v4174
        %v5887 = vpack.c.b16 %v4183, %v4175
        %v5888 = vpack.c.b16 %v4184, %v4176
        %v5889 = vpack.c.b16 %v4185, %v4177
        %v5890 = vpack.c.b16 %v4186, %v4178
        %v5891 = vpack.c.b16 %v4187, %v4179
        %v5892 = vpack.c.b16 %v4188, %v4180
        %v5893 = vpack.c.b16 %v4197, %v4189
        %v5894 = vpack.c.b16 %v4198, %v4190
        %v5895 = vpack.c.b16 %v4199, %v4191
        %v5896 = vpack.c.b16 %v4200, %v4192
        %v5897 = vpack.c.b16 %v4201, %v4193
        %v5898 = vpack.c.b16 %v4202, %v4194
        %v5899 = vpack.c.b16 %v4203, %v4195
        %v5900 = vpack.c.b16 %v4204, %v4196
        %v5901 = vpack.c.b16 %v4213, %v4205
        %v5902 = vpack.c.b16 %v4214, %v4206
        %v5903 = vpack.c.b16 %v4215, %v4207
        %v5904 = vpack.c.b16 %v4216, %v4208
        %v5905 = vpack.c.b16 %v4217, %v4209
        %v5906 = vpack.c.b16 %v4218, %v4210
        %v5907 = vpack.c.b16 %v4219, %v4211
        %v5908 = vpack.c.b16 %v4220, %v4212
        %v5909 = vpack.c.b16 %v4229, %v4221
        %v5910 = vpack.c.b16 %v4230, %v4222
        %v5911 = vpack.c.b16 %v4231, %v4223
        %v5912 = vpack.c.b16 %v4232, %v4224
        %v5913 = vpack.c.b16 %v4233, %v4225
        %v5914 = vpack.c.b16 %v4234, %v4226
        %v5915 = vpack.c.b16 %v4235, %v4227
        %v5916 = vpack.c.b16 %v4236, %v4228
        %v5917 = vpack.c.b16 %v4245, %v4237
        %v5918 = vpack.c.b16 %v4246, %v4238
        %v5919 = vpack.c.b16 %v4247, %v4239
        %v5920 = vpack.c.b16 %v4248, %v4240
        %v5921 = vpack.c.b16 %v4249, %v4241
        %v5922 = vpack.c.b16 %v4250, %v4242
        %v5923 = vpack.c.b16 %v4251, %v4243
        %v5924 = vpack.c.b16 %v4252, %v4244
        %v5925 = vpack.c.b16 %v4261, %v4253
        %v5926 = vpack.c.b16 %v4262, %v4254
        %v5927 = vpack.c.b16 %v4263, %v4255
        %v5928 = vpack.c.b16 %v4264, %v4256
        %v5929 = vpack.c.b16 %v4265, %v4257
        %v5930 = vpack.c.b16 %v4266, %v4258
        %v5931 = vpack.c.b16 %v4267, %v4259
        %v5932 = vpack.c.b16 %v4268, %v4260
        %v5933 = vpack.c.b16 %v4277, %v4269
        %v5934 = vpack.c.b16 %v4278, %v4270
        %v5935 = vpack.c.b16 %v4279, %v4271
        %v5936 = vpack.c.b16 %v4280, %v4272
        %v5937 = vpack.c.b16 %v4281, %v4273
        %v5938 = vpack.c.b16 %v4282, %v4274
        %v5939 = vpack.c.b16 %v4283, %v4275
        %v5940 = vpack.c.b16 %v4284, %v4276
        %v5941 = vpack.c.b16 %v4293, %v4285
        %v5942 = vpack.c.b16 %v4294, %v4286
        %v5943 = vpack.c.b16 %v4295, %v4287
        %v5944 = vpack.c.b16 %v4296, %v4288
        %v5945 = vpack.c.b16 %v4297, %v4289
        %v5946 = vpack.c.b16 %v4298, %v4290
        %v5947 = vpack.c.b16 %v4299, %v4291
        %v5948 = vpack.c.b16 %v4300, %v4292
        %v5949 = vpack.c.b16 %v4309, %v4301
        %v5950 = vpack.c.b16 %v4310, %v4302
        %v5951 = vpack.c.b16 %v4311, %v4303
        %v5952 = vpack.c.b16 %v4312, %v4304
        %v5953 = vpack.c.b16 %v4313, %v4305
        %v5954 = vpack.c.b16 %v4314, %v4306
        %v5955 = vpack.c.b16 %v4315, %v4307
        %v5956 = vpack.c.b16 %v4316, %v4308
        %v5957 = vpack.c.b16 %v4325, %v4317
        %v5958 = vpack.c.b16 %v4326, %v4318
        %v5959 = vpack.c.b16 %v4327, %v4319
        %v5960 = vpack.c.b16 %v4328, %v4320
        %v5961 = vpack.c.b16 %v4329, %v4321
        %v5962 = vpack.c.b16 %v4330, %v4322
        %v5963 = vpack.c.b16 %v4331, %v4323
        %v5964 = vpack.c.b16 %v4332, %v4324
        %v5965 = vpack.c.b16 %v4341, %v4333
        %v5966 = vpack.c.b16 %v4342, %v4334
        %v5967 = vpack.c.b16 %v4343, %v4335
        %v5968 = vpack.c.b16 %v4344, %v4336
        %v5969 = vpack.c.b16 %v4345, %v4337
        %v5970 = vpack.c.b16 %v4346, %v4338
        %v5971 = vpack.c.b16 %v4347, %v4339
        %v5972 = vpack.c.b16 %v4348, %v4340
        %v5973 = vpack.c.b16 %v4357, %v4349
        %v5974 = vpack.c.b16 %v4358, %v4350
        %v5975 = vpack.c.b16 %v4359, %v4351
        %v5976 = vpack.c.b16 %v4360, %v4352
        %v5977 = vpack.c.b16 %v4361, %v4353
        %v5978 = vpack.c.b16 %v4362, %v4354
        %v5979 = vpack.c.b16 %v4363, %v4355
        %v5980 = vpack.c.b16 %v4364, %v4356
        %v5981 = vpack.c.b16 %v4373, %v4365
        %v5982 = vpack.c.b16 %v4374, %v4366
        %v5983 = vpack.c.b16 %v4375, %v4367
        %v5984 = vpack.c.b16 %v4376, %v4368
        %v5985 = vpack.c.b16 %v4377, %v4369
        %v5986 = vpack.c.b16 %v4378, %v4370
        %v5987 = vpack.c.b16 %v4379, %v4371
        %v5988 = vpack.c.b16 %v4380, %v4372
        %v5989 = vpack.c.b16 %v4389, %v4381
        %v5990 = vpack.c.b16 %v4390, %v4382
        %v5991 = vpack.c.b16 %v4391, %v4383
        %v5992 = vpack.c.b16 %v4392, %v4384
        %v5993 = vpack.c.b16 %v4393, %v4385
        %v5994 = vpack.c.b16 %v4394, %v4386
        %v5995 = vpack.c.b16 %v4395, %v4387
        %v5996 = vpack.c.b16 %v4396, %v4388
        %v5997 = vpack.c.b16 %v4405, %v4397
        %v5998 = vpack.c.b16 %v4406, %v4398
        %v5999 = vpack.c.b16 %v4407, %v4399
        %v6000 = vpack.c.b16 %v4408, %v4400
        %v6001 = vpack.c.b16 %v4409, %v4401
        %v6002 = vpack.c.b16 %v4410, %v4402
        %v6003 = vpack.c.b16 %v4411, %v4403
        %v6004 = vpack.c.b16 %v4412, %v4404
        %v6005 = vpack.c.b16 %v4421, %v4413
        %v6006 = vpack.c.b16 %v4422, %v4414
        %v6007 = vpack.c.b16 %v4423, %v4415
        %v6008 = vpack.c.b16 %v4424, %v4416
        %v6009 = vpack.c.b16 %v4425, %v4417
        %v6010 = vpack.c.b16 %v4426, %v4418
        %v6011 = vpack.c.b16 %v4427, %v4419
        %v6012 = vpack.c.b16 %v4428, %v4420
        %v6013 = vpack.c.b16 %v4437, %v4429
        %v6014 = vpack.c.b16 %v4438, %v4430
        %v6015 = vpack.c.b16 %v4439, %v4431
        %v6016 = vpack.c.b16 %v4440, %v4432
        %v6017 = vpack.c.b16 %v4441, %v4433
        %v6018 = vpack.c.b16 %v4442, %v4434
        %v6019 = vpack.c.b16 %v4443, %v4435
        %v6020 = vpack.c.b16 %v4444, %v4436
        %v6021 = vpack.c.b16 %v4453, %v4445
        %v6022 = vpack.c.b16 %v4454, %v4446
        %v6023 = vpack.c.b16 %v4455, %v4447
        %v6024 = vpack.c.b16 %v4456, %v4448
        %v6025 = vpack.c.b16 %v4457, %v4449
        %v6026 = vpack.c.b16 %v4458, %v4450
        %v6027 = vpack.c.b16 %v4459, %v4451
        %v6028 = vpack.c.b16 %v4460, %v4452
        %v6029 = vpack.c.b16 %v4469, %v4461
        %v6030 = vpack.c.b16 %v4470, %v4462
        %v6031 = vpack.c.b16 %v4471, %v4463
        %v6032 = vpack.c.b16 %v4472, %v4464
        %v6033 = vpack.c.b16 %v4473, %v4465
        %v6034 = vpack.c.b16 %v4474, %v4466
        %v6035 = vpack.c.b16 %v4475, %v4467
        %v6036 = vpack.c.b16 %v4476, %v4468
        %v6037 = vpack.c.b16 %v4485, %v4477
        %v6038 = vpack.c.b16 %v4486, %v4478
        %v6039 = vpack.c.b16 %v4487, %v4479
        %v6040 = vpack.c.b16 %v4488, %v4480
        %v6041 = vpack.c.b16 %v4489, %v4481
        %v6042 = vpack.c.b16 %v4490, %v4482
        %v6043 = vpack.c.b16 %v4491, %v4483
        %v6044 = vpack.c.b16 %v4492, %v4484
        %v6045 = vpack.c.b16 %v4501, %v4493
        %v6046 = vpack.c.b16 %v4502, %v4494
        %v6047 = vpack.c.b16 %v4503, %v4495
        %v6048 = vpack.c.b16 %v4504, %v4496
        %v6049 = vpack.c.b16 %v4505, %v4497
        %v6050 = vpack.c.b16 %v4506, %v4498
        %v6051 = vpack.c.b16 %v4507, %v4499
        %v6052 = vpack.c.b16 %v4508, %v4500
        %v6053 = vpack.c.b16 %v4517, %v4509
        %v6054 = vpack.c.b16 %v4518, %v4510
        %v6055 = vpack.c.b16 %v4519, %v4511
        %v6056 = vpack.c.b16 %v4520, %v4512
        %v6057 = vpack.c.b16 %v4521, %v4513
        %v6058 = vpack.c.b16 %v4522, %v4514
        %v6059 = vpack.c.b16 %v4523, %v4515
        %v6060 = vpack.c.b16 %v4524, %v4516
        %v6061 = vpack.c.b16 %v4533, %v4525
        %v6062 = vpack.c.b16 %v4534, %v4526
        %v6063 = vpack.c.b16 %v4535, %v4527
        %v6064 = vpack.c.b16 %v4536, %v4528
        %v6065 = vpack.c.b16 %v4537, %v4529
        %v6066 = vpack.c.b16 %v4538, %v4530
        %v6067 = vpack.c.b16 %v4539, %v4531
        %v6068 = vpack.c.b16 %v4540, %v4532
        %v6069 = vpack.c.b16 %v4549, %v4541
        %v6070 = vpack.c.b16 %v4550, %v4542
        %v6071 = vpack.c.b16 %v4551, %v4543
        %v6072 = vpack.c.b16 %v4552, %v4544
        %v6073 = vpack.c.b16 %v4553, %v4545
        %v6074 = vpack.c.b16 %v4554, %v4546
        %v6075 = vpack.c.b16 %v4555, %v4547
        %v6076 = vpack.c.b16 %v4556, %v4548
        %v6077 = vpack.c.b16 %v4565, %v4557
        %v6078 = vpack.c.b16 %v4566, %v4558
        %v6079 = vpack.c.b16 %v4567, %v4559
        %v6080 = vpack.c.b16 %v4568, %v4560
        %v6081 = vpack.c.b16 %v4569, %v4561
        %v6082 = vpack.c.b16 %v4570, %v4562
        %v6083 = vpack.c.b16 %v4571, %v4563
        %v6084 = vpack.c.b16 %v4572, %v4564
        %v6085 = vpack.c.b16 %v4581, %v4573
        %v6086 = vpack.c.b16 %v4582, %v4574
        %v6087 = vpack.c.b16 %v4583, %v4575
        %v6088 = vpack.c.b16 %v4584, %v4576
        %v6089 = vpack.c.b16 %v4585, %v4577
        %v6090 = vpack.c.b16 %v4586, %v4578
        %v6091 = vpack.c.b16 %v4587, %v4579
        %v6092 = vpack.c.b16 %v4588, %v4580
        %v6093 = vpack.c.b16 %v4597, %v4589
        %v6094 = vpack.c.b16 %v4598, %v4590
        %v6095 = vpack.c.b16 %v4599, %v4591
        %v6096 = vpack.c.b16 %v4600, %v4592
        %v6097 = vpack.c.b16 %v4601, %v4593
        %v6098 = vpack.c.b16 %v4602, %v4594
        %v6099 = vpack.c.b16 %v4603, %v4595
        %v6100 = vpack.c.b16 %v4604, %v4596
        %v6101 = vpack.c.b16 %v4613, %v4605
        %v6102 = vpack.c.b16 %v4614, %v4606
        %v6103 = vpack.c.b16 %v4615, %v4607
        %v6104 = vpack.c.b16 %v4616, %v4608
        %v6105 = vpack.c.b16 %v4617, %v4609
        %v6106 = vpack.c.b16 %v4618, %v4610
        %v6107 = vpack.c.b16 %v4619, %v4611
        %v6108 = vpack.c.b16 %v4620, %v4612
        %v6109 = vpack.c.b16 %v4629, %v4621
        %v6110 = vpack.c.b16 %v4630, %v4622
        %v6111 = vpack.c.b16 %v4631, %v4623
        %v6112 = vpack.c.b16 %v4632, %v4624
        %v6113 = vpack.c.b16 %v4633, %v4625
        %v6114 = vpack.c.b16 %v4634, %v4626
        %v6115 = vpack.c.b16 %v4635, %v4627
        %v6116 = vpack.c.b16 %v4636, %v4628
        %v6117 = vpack.c.b16 %v4645, %v4637
        %v6118 = vpack.c.b16 %v4646, %v4638
        %v6119 = vpack.c.b16 %v4647, %v4639
        %v6120 = vpack.c.b16 %v4648, %v4640
        %v6121 = vpack.c.b16 %v4649, %v4641
        %v6122 = vpack.c.b16 %v4650, %v4642
        %v6123 = vpack.c.b16 %v4651, %v4643
        %v6124 = vpack.c.b16 %v4652, %v4644
        %v6125 = vpack.c.b16 %v4661, %v4653
        %v6126 = vpack.c.b16 %v4662, %v4654
        %v6127 = vpack.c.b16 %v4663, %v4655
        %v6128 = vpack.c.b16 %v4664, %v4656
        %v6129 = vpack.c.b16 %v4665, %v4657
        %v6130 = vpack.c.b16 %v4666, %v4658
        %v6131 = vpack.c.b16 %v4667, %v4659
        %v6132 = vpack.c.b16 %v4668, %v4660
        %v6133 = vpack.c.b16 %v4677, %v4669
        %v6134 = vpack.c.b16 %v4678, %v4670
        %v6135 = vpack.c.b16 %v4679, %v4671
        %v6136 = vpack.c.b16 %v4680, %v4672
        %v6137 = vpack.c.b16 %v4681, %v4673
        %v6138 = vpack.c.b16 %v4682, %v4674
        %v6139 = vpack.c.b16 %v4683, %v4675
        %v6140 = vpack.c.b16 %v4684, %v4676
        %v6141 = vpack.c.b16 %v4693, %v4685
        %v6142 = vpack.c.b16 %v4694, %v4686
        %v6143 = vpack.c.b16 %v4695, %v4687
        %v6144 = vpack.c.b16 %v4696, %v4688
        %v6145 = vpack.c.b16 %v4697, %v4689
        %v6146 = vpack.c.b16 %v4698, %v4690
        %v6147 = vpack.c.b16 %v4699, %v4691
        %v6148 = vpack.c.b16 %v4700, %v4692
        %v6149 = vpack.c.b16 %v4709, %v4701
        %v6150 = vpack.c.b16 %v4710, %v4702
        %v6151 = vpack.c.b16 %v4711, %v4703
        %v6152 = vpack.c.b16 %v4712, %v4704
        %v6153 = vpack.c.b16 %v4713, %v4705
        %v6154 = vpack.c.b16 %v4714, %v4706
        %v6155 = vpack.c.b16 %v4715, %v4707
        %v6156 = vpack.c.b16 %v4716, %v4708
        %v6157 = vpack.c.b16 %v4725, %v4717
        %v6158 = vpack.c.b16 %v4726, %v4718
        %v6159 = vpack.c.b16 %v4727, %v4719
        %v6160 = vpack.c.b16 %v4728, %v4720
        %v6161 = vpack.c.b16 %v4729, %v4721
        %v6162 = vpack.c.b16 %v4730, %v4722
        %v6163 = vpack.c.b16 %v4731, %v4723
        %v6164 = vpack.c.b16 %v4732, %v4724
        %v6165 = vpack.c.b16 %v4741, %v4733
        %v6166 = vpack.c.b16 %v4742, %v4734
        %v6167 = vpack.c.b16 %v4743, %v4735
        %v6168 = vpack.c.b16 %v4744, %v4736
        %v6169 = vpack.c.b16 %v4745, %v4737
        %v6170 = vpack.c.b16 %v4746, %v4738
        %v6171 = vpack.c.b16 %v4747, %v4739
        %v6172 = vpack.c.b16 %v4748, %v4740
        %v6173 = vpack.c.b16 %v4757, %v4749
        %v6174 = vpack.c.b16 %v4758, %v4750
        %v6175 = vpack.c.b16 %v4759, %v4751
        %v6176 = vpack.c.b16 %v4760, %v4752
        %v6177 = vpack.c.b16 %v4761, %v4753
        %v6178 = vpack.c.b16 %v4762, %v4754
        %v6179 = vpack.c.b16 %v4763, %v4755
        %v6180 = vpack.c.b16 %v4764, %v4756
        %v6181 = vpack.c.b16 %v4773, %v4765
        %v6182 = vpack.c.b16 %v4774, %v4766
        %v6183 = vpack.c.b16 %v4775, %v4767
        %v6184 = vpack.c.b16 %v4776, %v4768
        %v6185 = vpack.c.b16 %v4777, %v4769
        %v6186 = vpack.c.b16 %v4778, %v4770
        %v6187 = vpack.c.b16 %v4779, %v4771
        %v6188 = vpack.c.b16 %v4780, %v4772
        %v6189 = vpack.c.b16 %v4789, %v4781
        %v6190 = vpack.c.b16 %v4790, %v4782
        %v6191 = vpack.c.b16 %v4791, %v4783
        %v6192 = vpack.c.b16 %v4792, %v4784
        %v6193 = vpack.c.b16 %v4793, %v4785
        %v6194 = vpack.c.b16 %v4794, %v4786
        %v6195 = vpack.c.b16 %v4795, %v4787
        %v6196 = vpack.c.b16 %v4796, %v4788
        %v6197 = vpack.c.b16 %v4805, %v4797
        %v6198 = vpack.c.b16 %v4806, %v4798
        %v6199 = vpack.c.b16 %v4807, %v4799
        %v6200 = vpack.c.b16 %v4808, %v4800
        %v6201 = vpack.c.b16 %v4809, %v4801
        %v6202 = vpack.c.b16 %v4810, %v4802
        %v6203 = vpack.c.b16 %v4811, %v4803
        %v6204 = vpack.c.b16 %v4812, %v4804
        %v6205 = vpack.c.b16 %v4821, %v4813
        %v6206 = vpack.c.b16 %v4822, %v4814
        %v6207 = vpack.c.b16 %v4823, %v4815
        %v6208 = vpack.c.b16 %v4824, %v4816
        %v6209 = vpack.c.b16 %v4825, %v4817
        %v6210 = vpack.c.b16 %v4826, %v4818
        %v6211 = vpack.c.b16 %v4827, %v4819
        %v6212 = vpack.c.b16 %v4828, %v4820
        %v6213 = vpack.c.b16 %v4837, %v4829
        %v6214 = vpack.c.b16 %v4838, %v4830
        %v6215 = vpack.c.b16 %v4839, %v4831
        %v6216 = vpack.c.b16 %v4840, %v4832
        %v6217 = vpack.c.b16 %v4841, %v4833
        %v6218 = vpack.c.b16 %v4842, %v4834
        %v6219 = vpack.c.b16 %v4843, %v4835
        %v6220 = vpack.c.b16 %v4844, %v4836
        %v6221 = vpack.c.b16 %v4853, %v4845
        %v6222 = vpack.c.b16 %v4854, %v4846
        %v6223 = vpack.c.b16 %v4855, %v4847
        %v6224 = vpack.c.b16 %v4856, %v4848
        %v6225 = vpack.c.b16 %v4857, %v4849
        %v6226 = vpack.c.b16 %v4858, %v4850
        %v6227 = vpack.c.b16 %v4859, %v4851
        %v6228 = vpack.c.b16 %v4860, %v4852
        %v6229 = vpack.c.b16 %v4869, %v4861
        %v6230 = vpack.c.b16 %v4870, %v4862
        %v6231 = vpack.c.b16 %v4871, %v4863
        %v6232 = vpack.c.b16 %v4872, %v4864
        %v6233 = vpack.c.b16 %v4873, %v4865
        %v6234 = vpack.c.b16 %v4874, %v4866
        %v6235 = vpack.c.b16 %v4875, %v4867
        %v6236 = vpack.c.b16 %v4876, %v4868
        %v6237 = vpack.c.b16 %v4885, %v4877
        %v6238 = vpack.c.b16 %v4886, %v4878
        %v6239 = vpack.c.b16 %v4887, %v4879
        %v6240 = vpack.c.b16 %v4888, %v4880
        %v6241 = vpack.c.b16 %v4889, %v4881
        %v6242 = vpack.c.b16 %v4890, %v4882
        %v6243 = vpack.c.b16 %v4891, %v4883
        %v6244 = vpack.c.b16 %v4892, %v4884
        %v6245 = vpack.c.b16 %v4901, %v4893
        %v6246 = vpack.c.b16 %v4902, %v4894
        %v6247 = vpack.c.b16 %v4903, %v4895
        %v6248 = vpack.c.b16 %v4904, %v4896
        %v6249 = vpack.c.b16 %v4905, %v4897
        %v6250 = vpack.c.b16 %v4906, %v4898
        %v6251 = vpack.c.b16 %v4907, %v4899
        %v6252 = vpack.c.b16 %v4908, %v4900
        %v6253 = vpack.c.b16 %v4917, %v4909
        %v6254 = vpack.c.b16 %v4918, %v4910
        %v6255 = vpack.c.b16 %v4919, %v4911
        %v6256 = vpack.c.b16 %v4920, %v4912
        %v6257 = vpack.c.b16 %v4921, %v4913
        %v6258 = vpack.c.b16 %v4922, %v4914
        %v6259 = vpack.c.b16 %v4923, %v4915
        %v6260 = vpack.c.b16 %v4924, %v4916
        %v6261 = vpack.c.b16 %v4933, %v4925
        %v6262 = vpack.c.b16 %v4934, %v4926
        %v6263 = vpack.c.b16 %v4935, %v4927
        %v6264 = vpack.c.b16 %v4936, %v4928
        %v6265 = vpack.c.b16 %v4937, %v4929
        %v6266 = vpack.c.b16 %v4938, %v4930
        %v6267 = vpack.c.b16 %v4939, %v4931
        %v6268 = vpack.c.b16 %v4940, %v4932
        %v6269 = vpack.c.b16 %v4949, %v4941
        %v6270 = vpack.c.b16 %v4950, %v4942
        %v6271 = vpack.c.b16 %v4951, %v4943
        %v6272 = vpack.c.b16 %v4952, %v4944
        %v6273 = vpack.c.b16 %v4953, %v4945
        %v6274 = vpack.c.b16 %v4954, %v4946
        %v6275 = vpack.c.b16 %v4955, %v4947
        %v6276 = vpack.c.b16 %v4956, %v4948
        %v6277 = vpack.c.b16 %v4965, %v4957
        %v6278 = vpack.c.b16 %v4966, %v4958
        %v6279 = vpack.c.b16 %v4967, %v4959
        %v6280 = vpack.c.b16 %v4968, %v4960
        %v6281 = vpack.c.b16 %v4969, %v4961
        %v6282 = vpack.c.b16 %v4970, %v4962
        %v6283 = vpack.c.b16 %v4971, %v4963
        %v6284 = vpack.c.b16 %v4972, %v4964
        %v6285 = vpack.c.b16 %v4981, %v4973
        %v6286 = vpack.c.b16 %v4982, %v4974
        %v6287 = vpack.c.b16 %v4983, %v4975
        %v6288 = vpack.c.b16 %v4984, %v4976
        %v6289 = vpack.c.b16 %v4985, %v4977
        %v6290 = vpack.c.b16 %v4986, %v4978
        %v6291 = vpack.c.b16 %v4987, %v4979
        %v6292 = vpack.c.b16 %v4988, %v4980
        %v6293 = vpack.c.b16 %v4997, %v4989
        %v6294 = vpack.c.b16 %v4998, %v4990
        %v6295 = vpack.c.b16 %v4999, %v4991
        %v6296 = vpack.c.b16 %v5000, %v4992
        %v6297 = vpack.c.b16 %v5001, %v4993
        %v6298 = vpack.c.b16 %v5002, %v4994
        %v6299 = vpack.c.b16 %v5003, %v4995
        %v6300 = vpack.c.b16 %v5004, %v4996
        %v6301 = vpack.c.b16 %v5013, %v5005
        %v6302 = vpack.c.b16 %v5014, %v5006
        %v6303 = vpack.c.b16 %v5015, %v5007
        %v6304 = vpack.c.b16 %v5016, %v5008
        %v6305 = vpack.c.b16 %v5017, %v5009
        %v6306 = vpack.c.b16 %v5018, %v5010
        %v6307 = vpack.c.b16 %v5019, %v5011
        %v6308 = vpack.c.b16 %v5020, %v5012
        %v6309 = vpack.c.b16 %v5029, %v5021
        %v6310 = vpack.c.b16 %v5030, %v5022
        %v6311 = vpack.c.b16 %v5031, %v5023
        %v6312 = vpack.c.b16 %v5032, %v5024
        %v6313 = vpack.c.b16 %v5033, %v5025
        %v6314 = vpack.c.b16 %v5034, %v5026
        %v6315 = vpack.c.b16 %v5035, %v5027
        %v6316 = vpack.c.b16 %v5036, %v5028
        %v6317 = vpack.c.b16 %v5045, %v5037
        %v6318 = vpack.c.b16 %v5046, %v5038
        %v6319 = vpack.c.b16 %v5047, %v5039
        %v6320 = vpack.c.b16 %v5048, %v5040
        %v6321 = vpack.c.b16 %v5049, %v5041
        %v6322 = vpack.c.b16 %v5050, %v5042
        %v6323 = vpack.c.b16 %v5051, %v5043
        %v6324 = vpack.c.b16 %v5052, %v5044
        %v6325 = vpack.c.b16 %v5061, %v5053
        %v6326 = vpack.c.b16 %v5062, %v5054
        %v6327 = vpack.c.b16 %v5063, %v5055
        %v6328 = vpack.c.b16 %v5064, %v5056
        %v6329 = vpack.c.b16 %v5065, %v5057
        %v6330 = vpack.c.b16 %v5066, %v5058
        %v6331 = vpack.c.b16 %v5067, %v5059
        %v6332 = vpack.c.b16 %v5068, %v5060
        %v6333 = vpack.c.b16 %v5077, %v5069
        %v6334 = vpack.c.b16 %v5078, %v5070
        %v6335 = vpack.c.b16 %v5079, %v5071
        %v6336 = vpack.c.b16 %v5080, %v5072
        %v6337 = vpack.c.b16 %v5081, %v5073
        %v6338 = vpack.c.b16 %v5082, %v5074
        %v6339 = vpack.c.b16 %v5083, %v5075
        %v6340 = vpack.c.b16 %v5084, %v5076
        %v6341 = vpack.c.b16 %v5093, %v5085
        %v6342 = vpack.c.b16 %v5094, %v5086
        %v6343 = vpack.c.b16 %v5095, %v5087
        %v6344 = vpack.c.b16 %v5096, %v5088
        %v6345 = vpack.c.b16 %v5097, %v5089
        %v6346 = vpack.c.b16 %v5098, %v5090
        %v6347 = vpack.c.b16 %v5099, %v5091
        %v6348 = vpack.c.b16 %v5100, %v5092
        %v6349 = vpack.c.b16 %v5109, %v5101
        %v6350 = vpack.c.b16 %v5110, %v5102
        %v6351 = vpack.c.b16 %v5111, %v5103
        %v6352 = vpack.c.b16 %v5112, %v5104
        %v6353 = vpack.c.b16 %v5113, %v5105
        %v6354 = vpack.c.b16 %v5114, %v5106
        %v6355 = vpack.c.b16 %v5115, %v5107
        %v6356 = vpack.c.b16 %v5116, %v5108
        %v6357 = vpack.c.b16 %v5125, %v5117
        %v6358 = vpack.c.b16 %v5126, %v5118
        %v6359 = vpack.c.b16 %v5127, %v5119
        %v6360 = vpack.c.b16 %v5128, %v5120
        %v6361 = vpack.c.b16 %v5129, %v5121
        %v6362 = vpack.c.b16 %v5130, %v5122
        %v6363 = vpack.c.b16 %v5131, %v5123
        %v6364 = vpack.c.b16 %v5132, %v5124
        %v6365 = vpack.c.b16 %v5141, %v5133
        %v6366 = vpack.c.b16 %v5142, %v5134
        %v6367 = vpack.c.b16 %v5143, %v5135
        %v6368 = vpack.c.b16 %v5144, %v5136
        %v6369 = vpack.c.b16 %v5145, %v5137
        %v6370 = vpack.c.b16 %v5146, %v5138
        %v6371 = vpack.c.b16 %v5147, %v5139
        %v6372 = vpack.c.b16 %v5148, %v5140
        %v6373 = vpack.c.b16 %v5157, %v5149
        %v6374 = vpack.c.b16 %v5158, %v5150
        %v6375 = vpack.c.b16 %v5159, %v5151
        %v6376 = vpack.c.b16 %v5160, %v5152
        %v6377 = vpack.c.b16 %v5161, %v5153
        %v6378 = vpack.c.b16 %v5162, %v5154
        %v6379 = vpack.c.b16 %v5163, %v5155
        %v6380 = vpack.c.b16 %v5164, %v5156
        %v6381 = vpack.c.b16 %v5173, %v5165
        %v6382 = vpack.c.b16 %v5174, %v5166
        %v6383 = vpack.c.b16 %v5175, %v5167
        %v6384 = vpack.c.b16 %v5176, %v5168
        %v6385 = vpack.c.b16 %v5177, %v5169
        %v6386 = vpack.c.b16 %v5178, %v5170
        %v6387 = vpack.c.b16 %v5179, %v5171
        %v6388 = vpack.c.b16 %v5180, %v5172
        %v6389 = vpack.c.b16 %v5189, %v5181
        %v6390 = vpack.c.b16 %v5190, %v5182
        %v6391 = vpack.c.b16 %v5191, %v5183
        %v6392 = vpack.c.b16 %v5192, %v5184
        %v6393 = vpack.c.b16 %v5193, %v5185
        %v6394 = vpack.c.b16 %v5194, %v5186
        %v6395 = vpack.c.b16 %v5195, %v5187
        %v6396 = vpack.c.b16 %v5196, %v5188
        %v6397 = vpack.c.b16 %v5205, %v5197
        %v6398 = vpack.c.b16 %v5206, %v5198
        %v6399 = vpack.c.b16 %v5207, %v5199
        %v6400 = vpack.c.b16 %v5208, %v5200
        %v6401 = vpack.c.b16 %v5209, %v5201
        %v6402 = vpack.c.b16 %v5210, %v5202
        %v6403 = vpack.c.b16 %v5211, %v5203
        %v6404 = vpack.c.b16 %v5212, %v5204
        %v6405 = vpack.c.b16 %v5221, %v5213
        %v6406 = vpack.c.b16 %v5222, %v5214
        %v6407 = vpack.c.b16 %v5223, %v5215
        %v6408 = vpack.c.b16 %v5224, %v5216
        %v6409 = vpack.c.b16 %v5225, %v5217
        %v6410 = vpack.c.b16 %v5226, %v5218
        %v6411 = vpack.c.b16 %v5227, %v5219
        %v6412 = vpack.c.b16 %v5228, %v5220
        %v6413 = vpack.c.b16 %v5237, %v5229
        %v6414 = vpack.c.b16 %v5238, %v5230
        %v6415 = vpack.c.b16 %v5239, %v5231
        %v6416 = vpack.c.b16 %v5240, %v5232
        %v6417 = vpack.c.b16 %v5241, %v5233
        %v6418 = vpack.c.b16 %v5242, %v5234
        %v6419 = vpack.c.b16 %v5243, %v5235
        %v6420 = vpack.c.b16 %v5244, %v5236
        %v6421 = vpack.c.b16 %v5253, %v5245
        %v6422 = vpack.c.b16 %v5254, %v5246
        %v6423 = vpack.c.b16 %v5255, %v5247
        %v6424 = vpack.c.b16 %v5256, %v5248
        %v6425 = vpack.c.b16 %v5257, %v5249
        %v6426 = vpack.c.b16 %v5258, %v5250
        %v6427 = vpack.c.b16 %v5259, %v5251
        %v6428 = vpack.c.b16 %v5260, %v5252
        %v6429 = vpack.c.b16 %v5269, %v5261
        %v6430 = vpack.c.b16 %v5270, %v5262
        %v6431 = vpack.c.b16 %v5271, %v5263
        %v6432 = vpack.c.b16 %v5272, %v5264
        %v6433 = vpack.c.b16 %v5273, %v5265
        %v6434 = vpack.c.b16 %v5274, %v5266
        %v6435 = vpack.c.b16 %v5275, %v5267
        %v6436 = vpack.c.b16 %v5276, %v5268
        %v6437 = vpack.c.b16 %v5285, %v5277
        %v6438 = vpack.c.b16 %v5286, %v5278
        %v6439 = vpack.c.b16 %v5287, %v5279
        %v6440 = vpack.c.b16 %v5288, %v5280
        %v6441 = vpack.c.b16 %v5289, %v5281
        %v6442 = vpack.c.b16 %v5290, %v5282
        %v6443 = vpack.c.b16 %v5291, %v5283
        %v6444 = vpack.c.b16 %v5292, %v5284
        %v7598 = vlaneseq
        %v7599 = vshrl.u32 %v7598, 7
        %v7600 = vsub.s32 0, %v7599
        %v7601 = vrot.slane %v1836, %v7600
        %v7602 = vlaneseq
        %v7603 = vshrl.u32 %v7602, 7
        %v7604 = vsub.s32 1, %v7603
        %v7605 = vrot.slane %v1836, %v7604
        %v7606 = vlaneseq
        %v7607 = vshrl.u32 %v7606, 7
        %v7608 = vsub.s32 2, %v7607
        %v7609 = vrot.slane %v1836, %v7608
        %v7610 = vlaneseq
        %v7611 = vshrl.u32 %v7610, 7
        %v7612 = vsub.s32 3, %v7611
        %v7613 = vrot.slane %v1836, %v7612
        %v7614 = vlaneseq
        %v7615 = vshrl.u32 %v7614, 7
        %v7616 = vsub.s32 4, %v7615
        %v7617 = vrot.slane %v1836, %v7616
        %v7618 = vlaneseq
        %v7619 = vshrl.u32 %v7618, 7
        %v7620 = vsub.s32 5, %v7619
        %v7621 = vrot.slane %v1836, %v7620
        %v7622 = vlaneseq
        %v7623 = vshrl.u32 %v7622, 7
        %v7624 = vsub.s32 6, %v7623
        %v7625 = vrot.slane %v1836, %v7624
        %v7626 = vlaneseq
        %v7627 = vshrl.u32 %v7626, 7
        %v7628 = vsub.s32 7, %v7627
        %v7629 = vrot.slane %v1836, %v7628
        %7638 = vmatprep.subr.bf16.mxu0 %v5294
        %7639 = vmatpush1.bf16.msra.mxu0 %v5293
        %7640 = vmatprep.subr.bf16.mxu0 %v5302
        %7641 = vmatpush1.bf16.msra.mxu0 %v5301
        %7642 = vmatprep.subr.bf16.mxu0 %v5310
        %7643 = vmatpush1.bf16.msra.mxu0 %v5309
        %7644 = vmatprep.subr.bf16.mxu0 %v5318
        %7645 = vmatpush1.bf16.msra.mxu0 %v5317
        %7646 = vmatprep.subr.bf16.mxu0 %v5326
        %7647 = vmatpush1.bf16.msra.mxu0 %v5325
        %7648 = vmatprep.subr.bf16.mxu0 %v5334
        %7649 = vmatpush1.bf16.msra.mxu0 %v5333
        %7650 = vmatprep.subr.bf16.mxu0 %v5342
        %7651 = vmatpush1.bf16.msra.mxu0 %v5341
        %7652 = vmatprep.subr.bf16.mxu0 %v5350
        %7653 = vmatpush1.bf16.msra.mxu0 %v5349
        %7654 = vmatprep.subr.bf16.mxu0 %v5358
        %7655 = vmatpush1.bf16.msra.mxu0 %v5357
        %7656 = vmatprep.subr.bf16.mxu0 %v5366
        %7657 = vmatpush1.bf16.msra.mxu0 %v5365
        %7658 = vmatprep.subr.bf16.mxu0 %v5374
        %7659 = vmatpush1.bf16.msra.mxu0 %v5373
        %7660 = vmatprep.subr.bf16.mxu0 %v5382
        %7661 = vmatpush1.bf16.msra.mxu0 %v5381
        %7662 = vmatprep.subr.bf16.mxu0 %v5390
        %7663 = vmatpush1.bf16.msra.mxu0 %v5389
        %7664 = vmatprep.subr.bf16.mxu0 %v5398
        %7665 = vmatpush1.bf16.msra.mxu0 %v5397
        %7666 = vmatprep.subr.bf16.mxu0 %v5406
        %7667 = vmatpush1.bf16.msra.mxu0 %v5405
        %7668 = vmatprep.subr.bf16.mxu0 %v5414
        %7669 = vmatpush1.bf16.msra.mxu0 %v5413
        %7670 = vmatprep.mubr.bf16.mxu0 %v667
        %7671 = vmatmul.mubr.bf16.gmra.mrb[0].mxu0 %v666
        %v7672 = vpop.f32.mrb[0].mxu0
        %v7673 = vadd.f32 %v7601, %v7672
        %v7674 = vpop.f32.mrb[0].mxu0
        %v7675 = vadd.f32 %v7605, %v7674
        %v7676 = vpop.f32.mrb[0].mxu0
        %v7677 = vpop.f32.mrb[0].mxu0
        %7678 = vdwg.mxu0
        %7679 = vmatprep.subr.bf16.mxu0 %v5422
        %7680 = vmatpush1.bf16.msra.mxu0 %v5421
        %7681 = vmatprep.subr.bf16.mxu0 %v5430
        %7682 = vmatpush1.bf16.msra.mxu0 %v5429
        %7683 = vmatprep.subr.bf16.mxu0 %v5438
        %7684 = vmatpush1.bf16.msra.mxu0 %v5437
        %7685 = vmatprep.subr.bf16.mxu0 %v5446
        %7686 = vmatpush1.bf16.msra.mxu0 %v5445
        %7687 = vmatprep.subr.bf16.mxu0 %v5454
        %7688 = vmatpush1.bf16.msra.mxu0 %v5453
        %7689 = vmatprep.subr.bf16.mxu0 %v5462
        %7690 = vmatpush1.bf16.msra.mxu0 %v5461
        %7691 = vmatprep.subr.bf16.mxu0 %v5470
        %7692 = vmatpush1.bf16.msra.mxu0 %v5469
        %7693 = vmatprep.subr.bf16.mxu0 %v5478
        %7694 = vmatpush1.bf16.msra.mxu0 %v5477
        %7695 = vmatprep.subr.bf16.mxu0 %v5486
        %7696 = vmatpush1.bf16.msra.mxu0 %v5485
        %7697 = vmatprep.subr.bf16.mxu0 %v5494
        %7698 = vmatpush1.bf16.msra.mxu0 %v5493
        %7699 = vmatprep.subr.bf16.mxu0 %v5502
        %7700 = vmatpush1.bf16.msra.mxu0 %v5501
        %7701 = vmatprep.subr.bf16.mxu0 %v5510
        %7702 = vmatpush1.bf16.msra.mxu0 %v5509
        %7703 = vmatprep.subr.bf16.mxu0 %v5518
        %7704 = vmatpush1.bf16.msra.mxu0 %v5517
        %7705 = vmatprep.subr.bf16.mxu0 %v5526
        %7706 = vmatpush1.bf16.msra.mxu0 %v5525
        %7707 = vmatprep.subr.bf16.mxu0 %v5534
        %7708 = vmatpush1.bf16.msra.mxu0 %v5533
        %7709 = vmatprep.subr.bf16.mxu0 %v5542
        %7710 = vmatpush1.bf16.msra.mxu0 %v5541
        %7711 = vmatprep.mubr.bf16.mxu0 %v669
        %7712 = vmatmul.mubr.bf16.gmra.mrb[0].mxu0 %v668
        %v7713 = vpop.f32.mrb[0].mxu0
        %v7714 = vadd.f32 %v7673, %v7713
        %v7715 = vpop.f32.mrb[0].mxu0
        %v7716 = vadd.f32 %v7675, %v7715
        %v7717 = vpop.f32.mrb[0].mxu0
        %v7718 = vpop.f32.mrb[0].mxu0
        %7719 = vdwg.mxu0
        %7720 = vmatprep.subr.bf16.mxu0 %v5550
        %7721 = vmatpush1.bf16.msra.mxu0 %v5549
        %7722 = vmatprep.subr.bf16.mxu0 %v5558
        %7723 = vmatpush1.bf16.msra.mxu0 %v5557
        %7724 = vmatprep.subr.bf16.mxu0 %v5566
        %7725 = vmatpush1.bf16.msra.mxu0 %v5565
        %7726 = vmatprep.subr.bf16.mxu0 %v5574
        %7727 = vmatpush1.bf16.msra.mxu0 %v5573
        %7728 = vmatprep.subr.bf16.mxu0 %v5582
        %7729 = vmatpush1.bf16.msra.mxu0 %v5581
        %7730 = vmatprep.subr.bf16.mxu0 %v5590
        %7731 = vmatpush1.bf16.msra.mxu0 %v5589
        %7732 = vmatprep.subr.bf16.mxu0 %v5598
        %7733 = vmatpush1.bf16.msra.mxu0 %v5597
        %7734 = vmatprep.subr.bf16.mxu0 %v5606
        %7735 = vmatpush1.bf16.msra.mxu0 %v5605
        %7736 = vmatprep.subr.bf16.mxu0 %v5614
        %7737 = vmatpush1.bf16.msra.mxu0 %v5613
        %7738 = vmatprep.subr.bf16.mxu0 %v5622
        %7739 = vmatpush1.bf16.msra.mxu0 %v5621
        %7740 = vmatprep.subr.bf16.mxu0 %v5630
        %7741 = vmatpush1.bf16.msra.mxu0 %v5629
        %7742 = vmatprep.subr.bf16.mxu0 %v5638
        %7743 = vmatpush1.bf16.msra.mxu0 %v5637
        %7744 = vmatprep.subr.bf16.mxu0 %v5646
        %7745 = vmatpush1.bf16.msra.mxu0 %v5645
        %7746 = vmatprep.subr.bf16.mxu0 %v5654
        %7747 = vmatpush1.bf16.msra.mxu0 %v5653
        %7748 = vmatprep.subr.bf16.mxu0 %v5662
        %7749 = vmatpush1.bf16.msra.mxu0 %v5661
        %7750 = vmatprep.subr.bf16.mxu0 %v5670
        %7751 = vmatpush1.bf16.msra.mxu0 %v5669
        %7752 = vmatprep.mubr.bf16.mxu0 %v671
        %7753 = vmatmul.mubr.bf16.gmra.mrb[0].mxu0 %v670
        %v7754 = vpop.f32.mrb[0].mxu0
        %v7755 = vadd.f32 %v7714, %v7754
        %v7756 = vpop.f32.mrb[0].mxu0
        %v7757 = vadd.f32 %v7716, %v7756
        %v7758 = vpop.f32.mrb[0].mxu0
        %v7759 = vpop.f32.mrb[0].mxu0
        %7760 = vdwg.mxu0
        %7761 = vmatprep.subr.bf16.mxu0 %v5678
        %7762 = vmatpush1.bf16.msra.mxu0 %v5677
        %7763 = vmatprep.subr.bf16.mxu0 %v5686
        %7764 = vmatpush1.bf16.msra.mxu0 %v5685
        %7765 = vmatprep.subr.bf16.mxu0 %v5694
        %7766 = vmatpush1.bf16.msra.mxu0 %v5693
        %7767 = vmatprep.subr.bf16.mxu0 %v5702
        %7768 = vmatpush1.bf16.msra.mxu0 %v5701
        %7769 = vmatprep.subr.bf16.mxu0 %v5710
        %7770 = vmatpush1.bf16.msra.mxu0 %v5709
        %7771 = vmatprep.subr.bf16.mxu0 %v5718
        %7772 = vmatpush1.bf16.msra.mxu0 %v5717
        %7773 = vmatprep.subr.bf16.mxu0 %v5726
        %7774 = vmatpush1.bf16.msra.mxu0 %v5725
        %7775 = vmatprep.subr.bf16.mxu0 %v5734
        %7776 = vmatpush1.bf16.msra.mxu0 %v5733
        %7777 = vmatprep.subr.bf16.mxu0 %v5742
        %7778 = vmatpush1.bf16.msra.mxu0 %v5741
        %7779 = vmatprep.subr.bf16.mxu0 %v5750
        %7780 = vmatpush1.bf16.msra.mxu0 %v5749
        %7781 = vmatprep.subr.bf16.mxu0 %v5758
        %7782 = vmatpush1.bf16.msra.mxu0 %v5757
        %7783 = vmatprep.subr.bf16.mxu0 %v5766
        %7784 = vmatpush1.bf16.msra.mxu0 %v5765
        %7785 = vmatprep.subr.bf16.mxu0 %v5774
        %7786 = vmatpush1.bf16.msra.mxu0 %v5773
        %7787 = vmatprep.subr.bf16.mxu0 %v5782
        %7788 = vmatpush1.bf16.msra.mxu0 %v5781
        %7789 = vmatprep.subr.bf16.mxu0 %v5790
        %7790 = vmatpush1.bf16.msra.mxu0 %v5789
        %7791 = vmatprep.subr.bf16.mxu0 %v5798
        %7792 = vmatpush1.bf16.msra.mxu0 %v5797
        %7793 = vmatprep.mubr.bf16.mxu0 %v673
        %7794 = vmatmul.mubr.bf16.gmra.mrb[0].mxu0 %v672
        %v7795 = vpop.f32.mrb[0].mxu0
        %v7796 = vadd.f32 %v7755, %v7795
        %v7797 = vpop.f32.mrb[0].mxu0
        %v7798 = vadd.f32 %v7757, %v7797
        %v7799 = vpop.f32.mrb[0].mxu0
        %v7800 = vpop.f32.mrb[0].mxu0
        %7801 = vdwg.mxu0
        %7802 = vmatprep.subr.bf16.mxu0 %v5806
        %7803 = vmatpush1.bf16.msra.mxu0 %v5805
        %7804 = vmatprep.subr.bf16.mxu0 %v5814
        %7805 = vmatpush1.bf16.msra.mxu0 %v5813
        %7806 = vmatprep.subr.bf16.mxu0 %v5822
        %7807 = vmatpush1.bf16.msra.mxu0 %v5821
        %7808 = vmatprep.subr.bf16.mxu0 %v5830
        %7809 = vmatpush1.bf16.msra.mxu0 %v5829
        %7810 = vmatprep.subr.bf16.mxu0 %v5838
        %7811 = vmatpush1.bf16.msra.mxu0 %v5837
        %7812 = vmatprep.subr.bf16.mxu0 %v5846
        %7813 = vmatpush1.bf16.msra.mxu0 %v5845
        %7814 = vmatprep.subr.bf16.mxu0 %v5854
        %7815 = vmatpush1.bf16.msra.mxu0 %v5853
        %7816 = vmatprep.subr.bf16.mxu0 %v5862
        %7817 = vmatpush1.bf16.msra.mxu0 %v5861
        %7818 = vmatprep.subr.bf16.mxu0 %v5870
        %7819 = vmatpush1.bf16.msra.mxu0 %v5869
        %7820 = vmatprep.subr.bf16.mxu0 %v5878
        %7821 = vmatpush1.bf16.msra.mxu0 %v5877
        %7822 = vmatprep.subr.bf16.mxu0 %v5886
        %7823 = vmatpush1.bf16.msra.mxu0 %v5885
        %7824 = vmatprep.subr.bf16.mxu0 %v5894
        %7825 = vmatpush1.bf16.msra.mxu0 %v5893
        %7826 = vmatprep.subr.bf16.mxu0 %v5902
        %7827 = vmatpush1.bf16.msra.mxu0 %v5901
        %7828 = vmatprep.subr.bf16.mxu0 %v5910
        %7829 = vmatpush1.bf16.msra.mxu0 %v5909
        %7830 = vmatprep.subr.bf16.mxu0 %v5918
        %7831 = vmatpush1.bf16.msra.mxu0 %v5917
        %7832 = vmatprep.subr.bf16.mxu0 %v5926
        %7833 = vmatpush1.bf16.msra.mxu0 %v5925
        %7834 = vmatprep.mubr.bf16.mxu0 %v675
        %7835 = vmatmul.mubr.bf16.gmra.mrb[0].mxu0 %v674
        %v7836 = vpop.f32.mrb[0].mxu0
        %v7837 = vadd.f32 %v7796, %v7836
        %v7838 = vpop.f32.mrb[0].mxu0
        %v7839 = vadd.f32 %v7798, %v7838
        %v7840 = vpop.f32.mrb[0].mxu0
        %v7841 = vpop.f32.mrb[0].mxu0
        %7842 = vdwg.mxu0
        %7843 = vmatprep.subr.bf16.mxu0 %v5934
        %7844 = vmatpush1.bf16.msra.mxu0 %v5933
        %7845 = vmatprep.subr.bf16.mxu0 %v5942
        %7846 = vmatpush1.bf16.msra.mxu0 %v5941
        %7847 = vmatprep.subr.bf16.mxu0 %v5950
        %7848 = vmatpush1.bf16.msra.mxu0 %v5949
        %7849 = vmatprep.subr.bf16.mxu0 %v5958
        %7850 = vmatpush1.bf16.msra.mxu0 %v5957
        %7851 = vmatprep.subr.bf16.mxu0 %v5966
        %7852 = vmatpush1.bf16.msra.mxu0 %v5965
        %7853 = vmatprep.subr.bf16.mxu0 %v5974
        %7854 = vmatpush1.bf16.msra.mxu0 %v5973
        %7855 = vmatprep.subr.bf16.mxu0 %v5982
        %7856 = vmatpush1.bf16.msra.mxu0 %v5981
        %7857 = vmatprep.subr.bf16.mxu0 %v5990
        %7858 = vmatpush1.bf16.msra.mxu0 %v5989
        %7859 = vmatprep.subr.bf16.mxu0 %v5998
        %7860 = vmatpush1.bf16.msra.mxu0 %v5997
        %7861 = vmatprep.subr.bf16.mxu0 %v6006
        %7862 = vmatpush1.bf16.msra.mxu0 %v6005
        %7863 = vmatprep.subr.bf16.mxu0 %v6014
        %7864 = vmatpush1.bf16.msra.mxu0 %v6013
        %7865 = vmatprep.subr.bf16.mxu0 %v6022
        %7866 = vmatpush1.bf16.msra.mxu0 %v6021
        %7867 = vmatprep.subr.bf16.mxu0 %v6030
        %7868 = vmatpush1.bf16.msra.mxu0 %v6029
        %7869 = vmatprep.subr.bf16.mxu0 %v6038
        %7870 = vmatpush1.bf16.msra.mxu0 %v6037
        %7871 = vmatprep.subr.bf16.mxu0 %v6046
        %7872 = vmatpush1.bf16.msra.mxu0 %v6045
        %7873 = vmatprep.subr.bf16.mxu0 %v6054
        %7874 = vmatpush1.bf16.msra.mxu0 %v6053
        %7875 = vmatprep.mubr.bf16.mxu0 %v677
        %7876 = vmatmul.mubr.bf16.gmra.mrb[0].mxu0 %v676
        %v7877 = vpop.f32.mrb[0].mxu0
        %v7878 = vadd.f32 %v7837, %v7877
        %v7879 = vpop.f32.mrb[0].mxu0
        %v7880 = vadd.f32 %v7839, %v7879
        %v7881 = vpop.f32.mrb[0].mxu0
        %v7882 = vpop.f32.mrb[0].mxu0
        %7883 = vdwg.mxu0
        %7884 = vmatprep.subr.bf16.mxu0 %v6062
        %7885 = vmatpush1.bf16.msra.mxu0 %v6061
        %7886 = vmatprep.subr.bf16.mxu0 %v6070
        %7887 = vmatpush1.bf16.msra.mxu0 %v6069
        %7888 = vmatprep.subr.bf16.mxu0 %v6078
        %7889 = vmatpush1.bf16.msra.mxu0 %v6077
        %7890 = vmatprep.subr.bf16.mxu0 %v6086
        %7891 = vmatpush1.bf16.msra.mxu0 %v6085
        %7892 = vmatprep.subr.bf16.mxu0 %v6094
        %7893 = vmatpush1.bf16.msra.mxu0 %v6093
        %7894 = vmatprep.subr.bf16.mxu0 %v6102
        %7895 = vmatpush1.bf16.msra.mxu0 %v6101
        %7896 = vmatprep.subr.bf16.mxu0 %v6110
        %7897 = vmatpush1.bf16.msra.mxu0 %v6109
        %7898 = vmatprep.subr.bf16.mxu0 %v6118
        %7899 = vmatpush1.bf16.msra.mxu0 %v6117
        %7900 = vmatprep.subr.bf16.mxu0 %v6126
        %7901 = vmatpush1.bf16.msra.mxu0 %v6125
        %7902 = vmatprep.subr.bf16.mxu0 %v6134
        %7903 = vmatpush1.bf16.msra.mxu0 %v6133
        %7904 = vmatprep.subr.bf16.mxu0 %v6142
        %7905 = vmatpush1.bf16.msra.mxu0 %v6141
        %7906 = vmatprep.subr.bf16.mxu0 %v6150
        %7907 = vmatpush1.bf16.msra.mxu0 %v6149
        %7908 = vmatprep.subr.bf16.mxu0 %v6158
        %7909 = vmatpush1.bf16.msra.mxu0 %v6157
        %7910 = vmatprep.subr.bf16.mxu0 %v6166
        %7911 = vmatpush1.bf16.msra.mxu0 %v6165
        %7912 = vmatprep.subr.bf16.mxu0 %v6174
        %7913 = vmatpush1.bf16.msra.mxu0 %v6173
        %7914 = vmatprep.subr.bf16.mxu0 %v6182
        %7915 = vmatpush1.bf16.msra.mxu0 %v6181
        %7916 = vmatprep.mubr.bf16.mxu0 %v679
        %7917 = vmatmul.mubr.bf16.gmra.mrb[0].mxu0 %v678
        %v7918 = vpop.f32.mrb[0].mxu0
        %v7919 = vadd.f32 %v7878, %v7918
        %v7920 = vpop.f32.mrb[0].mxu0
        %v7921 = vadd.f32 %v7880, %v7920
        %v7922 = vpop.f32.mrb[0].mxu0
        %v7923 = vpop.f32.mrb[0].mxu0
        %7924 = vdwg.mxu0
        %7925 = vmatprep.subr.bf16.mxu0 %v6190
        %7926 = vmatpush1.bf16.msra.mxu0 %v6189
        %7927 = vmatprep.subr.bf16.mxu0 %v6198
        %7928 = vmatpush1.bf16.msra.mxu0 %v6197
        %7929 = vmatprep.subr.bf16.mxu0 %v6206
        %7930 = vmatpush1.bf16.msra.mxu0 %v6205
        %7931 = vmatprep.subr.bf16.mxu0 %v6214
        %7932 = vmatpush1.bf16.msra.mxu0 %v6213
        %7933 = vmatprep.subr.bf16.mxu0 %v6222
        %7934 = vmatpush1.bf16.msra.mxu0 %v6221
        %7935 = vmatprep.subr.bf16.mxu0 %v6230
        %7936 = vmatpush1.bf16.msra.mxu0 %v6229
        %7937 = vmatprep.subr.bf16.mxu0 %v6238
        %7938 = vmatpush1.bf16.msra.mxu0 %v6237
        %7939 = vmatprep.subr.bf16.mxu0 %v6246
        %7940 = vmatpush1.bf16.msra.mxu0 %v6245
        %7941 = vmatprep.subr.bf16.mxu0 %v6254
        %7942 = vmatpush1.bf16.msra.mxu0 %v6253
        %7943 = vmatprep.subr.bf16.mxu0 %v6262
        %7944 = vmatpush1.bf16.msra.mxu0 %v6261
        %7945 = vmatprep.subr.bf16.mxu0 %v6270
        %7946 = vmatpush1.bf16.msra.mxu0 %v6269
        %7947 = vmatprep.subr.bf16.mxu0 %v6278
        %7948 = vmatpush1.bf16.msra.mxu0 %v6277
        %7949 = vmatprep.subr.bf16.mxu0 %v6286
        %7950 = vmatpush1.bf16.msra.mxu0 %v6285
        %7951 = vmatprep.subr.bf16.mxu0 %v6294
        %7952 = vmatpush1.bf16.msra.mxu0 %v6293
        %7953 = vmatprep.subr.bf16.mxu0 %v6302
        %7954 = vmatpush1.bf16.msra.mxu0 %v6301
        %7955 = vmatprep.subr.bf16.mxu0 %v6310
        %7956 = vmatpush1.bf16.msra.mxu0 %v6309
        %7957 = vmatprep.mubr.bf16.mxu0 %v681
        %7958 = vmatmul.mubr.bf16.gmra.mrb[0].mxu0 %v680
        %v7959 = vpop.f32.mrb[0].mxu0
        %v7960 = vadd.f32 %v7919, %v7959
        %v7961 = vpop.f32.mrb[0].mxu0
        %v7962 = vadd.f32 %v7921, %v7961
        %v7963 = vpop.f32.mrb[0].mxu0
        %v7964 = vpop.f32.mrb[0].mxu0
        %7965 = vdwg.mxu0
        %7966 = vmatprep.subr.bf16.mxu0 %v6318
        %7967 = vmatpush1.bf16.msra.mxu0 %v6317
        %7968 = vmatprep.subr.bf16.mxu0 %v6326
        %7969 = vmatpush1.bf16.msra.mxu0 %v6325
        %7970 = vmatprep.subr.bf16.mxu0 %v6334
        %7971 = vmatpush1.bf16.msra.mxu0 %v6333
        %7972 = vmatprep.subr.bf16.mxu0 %v6342
        %7973 = vmatpush1.bf16.msra.mxu0 %v6341
        %7974 = vmatprep.subr.bf16.mxu0 %v6350
        %7975 = vmatpush1.bf16.msra.mxu0 %v6349
        %7976 = vmatprep.subr.bf16.mxu0 %v6358
        %7977 = vmatpush1.bf16.msra.mxu0 %v6357
        %7978 = vmatprep.subr.bf16.mxu0 %v6366
        %7979 = vmatpush1.bf16.msra.mxu0 %v6365
        %7980 = vmatprep.subr.bf16.mxu0 %v6374
        %7981 = vmatpush1.bf16.msra.mxu0 %v6373
        %7982 = vmatprep.subr.bf16.mxu0 %v6382
        %7983 = vmatpush1.bf16.msra.mxu0 %v6381
        %7984 = vmatprep.subr.bf16.mxu0 %v6390
        %7985 = vmatpush1.bf16.msra.mxu0 %v6389
        %7986 = vmatprep.subr.bf16.mxu0 %v6398
        %7987 = vmatpush1.bf16.msra.mxu0 %v6397
        %7988 = vmatprep.subr.bf16.mxu0 %v6406
        %7989 = vmatpush1.bf16.msra.mxu0 %v6405
        %7990 = vmatprep.subr.bf16.mxu0 %v6414
        %7991 = vmatpush1.bf16.msra.mxu0 %v6413
        %7992 = vmatprep.subr.bf16.mxu0 %v6422
        %7993 = vmatpush1.bf16.msra.mxu0 %v6421
        %7994 = vmatprep.subr.bf16.mxu0 %v6430
        %7995 = vmatpush1.bf16.msra.mxu0 %v6429
        %7996 = vmatprep.subr.bf16.mxu0 %v6438
        %7997 = vmatpush1.bf16.msra.mxu0 %v6437
        %7998 = vmatprep.mubr.bf16.mxu0 %v683
        %7999 = vmatmul.mubr.bf16.gmra.mrb[0].mxu0 %v682
        %v8000 = vpop.f32.mrb[0].mxu0
        %v8001 = vadd.f32 %v7960, %v8000
        %v8002 = vpop.f32.mrb[0].mxu0
        %v8003 = vadd.f32 %v7962, %v8002
        %v8004 = vpop.f32.mrb[0].mxu0
        %v8005 = vpop.f32.mrb[0].mxu0
        %8006 = vdwg.mxu0
        %8007 = vmatprep.subr.bf16.mxu0 %v5296
        %8008 = vmatpush1.bf16.msra.mxu0 %v5295
        %8009 = vmatprep.subr.bf16.mxu0 %v5304
        %8010 = vmatpush1.bf16.msra.mxu0 %v5303
        %8011 = vmatprep.subr.bf16.mxu0 %v5312
        %8012 = vmatpush1.bf16.msra.mxu0 %v5311
        %8013 = vmatprep.subr.bf16.mxu0 %v5320
        %8014 = vmatpush1.bf16.msra.mxu0 %v5319
        %8015 = vmatprep.subr.bf16.mxu0 %v5328
        %8016 = vmatpush1.bf16.msra.mxu0 %v5327
        %8017 = vmatprep.subr.bf16.mxu0 %v5336
        %8018 = vmatpush1.bf16.msra.mxu0 %v5335
        %8019 = vmatprep.subr.bf16.mxu0 %v5344
        %8020 = vmatpush1.bf16.msra.mxu0 %v5343
        %8021 = vmatprep.subr.bf16.mxu0 %v5352
        %8022 = vmatpush1.bf16.msra.mxu0 %v5351
        %8023 = vmatprep.subr.bf16.mxu0 %v5360
        %8024 = vmatpush1.bf16.msra.mxu0 %v5359
        %8025 = vmatprep.subr.bf16.mxu0 %v5368
        %8026 = vmatpush1.bf16.msra.mxu0 %v5367
        %8027 = vmatprep.subr.bf16.mxu0 %v5376
        %8028 = vmatpush1.bf16.msra.mxu0 %v5375
        %8029 = vmatprep.subr.bf16.mxu0 %v5384
        %8030 = vmatpush1.bf16.msra.mxu0 %v5383
        %8031 = vmatprep.subr.bf16.mxu0 %v5392
        %8032 = vmatpush1.bf16.msra.mxu0 %v5391
        %8033 = vmatprep.subr.bf16.mxu0 %v5400
        %8034 = vmatpush1.bf16.msra.mxu0 %v5399
        %8035 = vmatprep.subr.bf16.mxu0 %v5408
        %8036 = vmatpush1.bf16.msra.mxu0 %v5407
        %8037 = vmatprep.subr.bf16.mxu0 %v5416
        %8038 = vmatpush1.bf16.msra.mxu0 %v5415
        %8039 = vmatprep.mubr.bf16.mxu0 %v667
        %8040 = vmatmul.mubr.bf16.gmra.mrb[0].mxu0 %v666
        %v8041 = vpop.f32.mrb[0].mxu0
        %v8042 = vadd.f32 %v7609, %v8041
        %v8043 = vpop.f32.mrb[0].mxu0
        %v8044 = vadd.f32 %v7613, %v8043
        %v8045 = vpop.f32.mrb[0].mxu0
        %v8046 = vpop.f32.mrb[0].mxu0
        %8047 = vdwg.mxu0
        %8048 = vmatprep.subr.bf16.mxu0 %v5424
        %8049 = vmatpush1.bf16.msra.mxu0 %v5423
        %8050 = vmatprep.subr.bf16.mxu0 %v5432
        %8051 = vmatpush1.bf16.msra.mxu0 %v5431
        %8052 = vmatprep.subr.bf16.mxu0 %v5440
        %8053 = vmatpush1.bf16.msra.mxu0 %v5439
        %8054 = vmatprep.subr.bf16.mxu0 %v5448
        %8055 = vmatpush1.bf16.msra.mxu0 %v5447
        %8056 = vmatprep.subr.bf16.mxu0 %v5456
        %8057 = vmatpush1.bf16.msra.mxu0 %v5455
        %8058 = vmatprep.subr.bf16.mxu0 %v5464
        %8059 = vmatpush1.bf16.msra.mxu0 %v5463
        %8060 = vmatprep.subr.bf16.mxu0 %v5472
        %8061 = vmatpush1.bf16.msra.mxu0 %v5471
        %8062 = vmatprep.subr.bf16.mxu0 %v5480
        %8063 = vmatpush1.bf16.msra.mxu0 %v5479
        %8064 = vmatprep.subr.bf16.mxu0 %v5488
        %8065 = vmatpush1.bf16.msra.mxu0 %v5487
        %8066 = vmatprep.subr.bf16.mxu0 %v5496
        %8067 = vmatpush1.bf16.msra.mxu0 %v5495
        %8068 = vmatprep.subr.bf16.mxu0 %v5504
        %8069 = vmatpush1.bf16.msra.mxu0 %v5503
        %8070 = vmatprep.subr.bf16.mxu0 %v5512
        %8071 = vmatpush1.bf16.msra.mxu0 %v5511
        %8072 = vmatprep.subr.bf16.mxu0 %v5520
        %8073 = vmatpush1.bf16.msra.mxu0 %v5519
        %8074 = vmatprep.subr.bf16.mxu0 %v5528
        %8075 = vmatpush1.bf16.msra.mxu0 %v5527
        %8076 = vmatprep.subr.bf16.mxu0 %v5536
        %8077 = vmatpush1.bf16.msra.mxu0 %v5535
        %8078 = vmatprep.subr.bf16.mxu0 %v5544
        %8079 = vmatpush1.bf16.msra.mxu0 %v5543
        %8080 = vmatprep.mubr.bf16.mxu0 %v669
        %8081 = vmatmul.mubr.bf16.gmra.mrb[0].mxu0 %v668
        %v8082 = vpop.f32.mrb[0].mxu0
        %v8083 = vadd.f32 %v8042, %v8082
        %v8084 = vpop.f32.mrb[0].mxu0
        %v8085 = vadd.f32 %v8044, %v8084
        %v8086 = vpop.f32.mrb[0].mxu0
        %v8087 = vpop.f32.mrb[0].mxu0
        %8088 = vdwg.mxu0
        %8089 = vmatprep.subr.bf16.mxu0 %v5552
        %8090 = vmatpush1.bf16.msra.mxu0 %v5551
        %8091 = vmatprep.subr.bf16.mxu0 %v5560
        %8092 = vmatpush1.bf16.msra.mxu0 %v5559
        %8093 = vmatprep.subr.bf16.mxu0 %v5568
        %8094 = vmatpush1.bf16.msra.mxu0 %v5567
        %8095 = vmatprep.subr.bf16.mxu0 %v5576
        %8096 = vmatpush1.bf16.msra.mxu0 %v5575
        %8097 = vmatprep.subr.bf16.mxu0 %v5584
        %8098 = vmatpush1.bf16.msra.mxu0 %v5583
        %8099 = vmatprep.subr.bf16.mxu0 %v5592
        %8100 = vmatpush1.bf16.msra.mxu0 %v5591
        %8101 = vmatprep.subr.bf16.mxu0 %v5600
        %8102 = vmatpush1.bf16.msra.mxu0 %v5599
        %8103 = vmatprep.subr.bf16.mxu0 %v5608
        %8104 = vmatpush1.bf16.msra.mxu0 %v5607
        %8105 = vmatprep.subr.bf16.mxu0 %v5616
        %8106 = vmatpush1.bf16.msra.mxu0 %v5615
        %8107 = vmatprep.subr.bf16.mxu0 %v5624
        %8108 = vmatpush1.bf16.msra.mxu0 %v5623
        %8109 = vmatprep.subr.bf16.mxu0 %v5632
        %8110 = vmatpush1.bf16.msra.mxu0 %v5631
        %8111 = vmatprep.subr.bf16.mxu0 %v5640
        %8112 = vmatpush1.bf16.msra.mxu0 %v5639
        %8113 = vmatprep.subr.bf16.mxu0 %v5648
        %8114 = vmatpush1.bf16.msra.mxu0 %v5647
        %8115 = vmatprep.subr.bf16.mxu0 %v5656
        %8116 = vmatpush1.bf16.msra.mxu0 %v5655
        %8117 = vmatprep.subr.bf16.mxu0 %v5664
        %8118 = vmatpush1.bf16.msra.mxu0 %v5663
        %8119 = vmatprep.subr.bf16.mxu0 %v5672
        %8120 = vmatpush1.bf16.msra.mxu0 %v5671
        %8121 = vmatprep.mubr.bf16.mxu0 %v671
        %8122 = vmatmul.mubr.bf16.gmra.mrb[0].mxu0 %v670
        %v8123 = vpop.f32.mrb[0].mxu0
        %v8124 = vadd.f32 %v8083, %v8123
        %v8125 = vpop.f32.mrb[0].mxu0
        %v8126 = vadd.f32 %v8085, %v8125
        %v8127 = vpop.f32.mrb[0].mxu0
        %v8128 = vpop.f32.mrb[0].mxu0
        %8129 = vdwg.mxu0
        %8130 = vmatprep.subr.bf16.mxu0 %v5680
        %8131 = vmatpush1.bf16.msra.mxu0 %v5679
        %8132 = vmatprep.subr.bf16.mxu0 %v5688
        %8133 = vmatpush1.bf16.msra.mxu0 %v5687
        %8134 = vmatprep.subr.bf16.mxu0 %v5696
        %8135 = vmatpush1.bf16.msra.mxu0 %v5695
        %8136 = vmatprep.subr.bf16.mxu0 %v5704
        %8137 = vmatpush1.bf16.msra.mxu0 %v5703
        %8138 = vmatprep.subr.bf16.mxu0 %v5712
        %8139 = vmatpush1.bf16.msra.mxu0 %v5711
        %8140 = vmatprep.subr.bf16.mxu0 %v5720
        %8141 = vmatpush1.bf16.msra.mxu0 %v5719
        %8142 = vmatprep.subr.bf16.mxu0 %v5728
        %8143 = vmatpush1.bf16.msra.mxu0 %v5727
        %8144 = vmatprep.subr.bf16.mxu0 %v5736
        %8145 = vmatpush1.bf16.msra.mxu0 %v5735
        %8146 = vmatprep.subr.bf16.mxu0 %v5744
        %8147 = vmatpush1.bf16.msra.mxu0 %v5743
        %8148 = vmatprep.subr.bf16.mxu0 %v5752
        %8149 = vmatpush1.bf16.msra.mxu0 %v5751
        %8150 = vmatprep.subr.bf16.mxu0 %v5760
        %8151 = vmatpush1.bf16.msra.mxu0 %v5759
        %8152 = vmatprep.subr.bf16.mxu0 %v5768
        %8153 = vmatpush1.bf16.msra.mxu0 %v5767
        %8154 = vmatprep.subr.bf16.mxu0 %v5776
        %8155 = vmatpush1.bf16.msra.mxu0 %v5775
        %8156 = vmatprep.subr.bf16.mxu0 %v5784
        %8157 = vmatpush1.bf16.msra.mxu0 %v5783
        %8158 = vmatprep.subr.bf16.mxu0 %v5792
        %8159 = vmatpush1.bf16.msra.mxu0 %v5791
        %8160 = vmatprep.subr.bf16.mxu0 %v5800
        %8161 = vmatpush1.bf16.msra.mxu0 %v5799
        %8162 = vmatprep.mubr.bf16.mxu0 %v673
        %8163 = vmatmul.mubr.bf16.gmra.mrb[0].mxu0 %v672
        %v8164 = vpop.f32.mrb[0].mxu0
        %v8165 = vadd.f32 %v8124, %v8164
        %v8166 = vpop.f32.mrb[0].mxu0
        %v8167 = vadd.f32 %v8126, %v8166
        %v8168 = vpop.f32.mrb[0].mxu0
        %v8169 = vpop.f32.mrb[0].mxu0
        %8170 = vdwg.mxu0
        %8171 = vmatprep.subr.bf16.mxu0 %v5808
        %8172 = vmatpush1.bf16.msra.mxu0 %v5807
        %8173 = vmatprep.subr.bf16.mxu0 %v5816
        %8174 = vmatpush1.bf16.msra.mxu0 %v5815
        %8175 = vmatprep.subr.bf16.mxu0 %v5824
        %8176 = vmatpush1.bf16.msra.mxu0 %v5823
        %8177 = vmatprep.subr.bf16.mxu0 %v5832
        %8178 = vmatpush1.bf16.msra.mxu0 %v5831
        %8179 = vmatprep.subr.bf16.mxu0 %v5840
        %8180 = vmatpush1.bf16.msra.mxu0 %v5839
        %8181 = vmatprep.subr.bf16.mxu0 %v5848
        %8182 = vmatpush1.bf16.msra.mxu0 %v5847
        %8183 = vmatprep.subr.bf16.mxu0 %v5856
        %8184 = vmatpush1.bf16.msra.mxu0 %v5855
        %8185 = vmatprep.subr.bf16.mxu0 %v5864
        %8186 = vmatpush1.bf16.msra.mxu0 %v5863
        %8187 = vmatprep.subr.bf16.mxu0 %v5872
        %8188 = vmatpush1.bf16.msra.mxu0 %v5871
        %8189 = vmatprep.subr.bf16.mxu0 %v5880
        %8190 = vmatpush1.bf16.msra.mxu0 %v5879
        %8191 = vmatprep.subr.bf16.mxu0 %v5888
        %8192 = vmatpush1.bf16.msra.mxu0 %v5887
        %8193 = vmatprep.subr.bf16.mxu0 %v5896
        %8194 = vmatpush1.bf16.msra.mxu0 %v5895
        %8195 = vmatprep.subr.bf16.mxu0 %v5904
        %8196 = vmatpush1.bf16.msra.mxu0 %v5903
        %8197 = vmatprep.subr.bf16.mxu0 %v5912
        %8198 = vmatpush1.bf16.msra.mxu0 %v5911
        %8199 = vmatprep.subr.bf16.mxu0 %v5920
        %8200 = vmatpush1.bf16.msra.mxu0 %v5919
        %8201 = vmatprep.subr.bf16.mxu0 %v5928
        %8202 = vmatpush1.bf16.msra.mxu0 %v5927
        %8203 = vmatprep.mubr.bf16.mxu0 %v675
        %8204 = vmatmul.mubr.bf16.gmra.mrb[0].mxu0 %v674
        %v8205 = vpop.f32.mrb[0].mxu0
        %v8206 = vadd.f32 %v8165, %v8205
        %v8207 = vpop.f32.mrb[0].mxu0
        %v8208 = vadd.f32 %v8167, %v8207
        %v8209 = vpop.f32.mrb[0].mxu0
        %v8210 = vpop.f32.mrb[0].mxu0
        %8211 = vdwg.mxu0
        %8212 = vmatprep.subr.bf16.mxu0 %v5936
        %8213 = vmatpush1.bf16.msra.mxu0 %v5935
        %8214 = vmatprep.subr.bf16.mxu0 %v5944
        %8215 = vmatpush1.bf16.msra.mxu0 %v5943
        %8216 = vmatprep.subr.bf16.mxu0 %v5952
        %8217 = vmatpush1.bf16.msra.mxu0 %v5951
        %8218 = vmatprep.subr.bf16.mxu0 %v5960
        %8219 = vmatpush1.bf16.msra.mxu0 %v5959
        %8220 = vmatprep.subr.bf16.mxu0 %v5968
        %8221 = vmatpush1.bf16.msra.mxu0 %v5967
        %8222 = vmatprep.subr.bf16.mxu0 %v5976
        %8223 = vmatpush1.bf16.msra.mxu0 %v5975
        %8224 = vmatprep.subr.bf16.mxu0 %v5984
        %8225 = vmatpush1.bf16.msra.mxu0 %v5983
        %8226 = vmatprep.subr.bf16.mxu0 %v5992
        %8227 = vmatpush1.bf16.msra.mxu0 %v5991
        %8228 = vmatprep.subr.bf16.mxu0 %v6000
        %8229 = vmatpush1.bf16.msra.mxu0 %v5999
        %8230 = vmatprep.subr.bf16.mxu0 %v6008
        %8231 = vmatpush1.bf16.msra.mxu0 %v6007
        %8232 = vmatprep.subr.bf16.mxu0 %v6016
        %8233 = vmatpush1.bf16.msra.mxu0 %v6015
        %8234 = vmatprep.subr.bf16.mxu0 %v6024
        %8235 = vmatpush1.bf16.msra.mxu0 %v6023
        %8236 = vmatprep.subr.bf16.mxu0 %v6032
        %8237 = vmatpush1.bf16.msra.mxu0 %v6031
        %8238 = vmatprep.subr.bf16.mxu0 %v6040
        %8239 = vmatpush1.bf16.msra.mxu0 %v6039
        %8240 = vmatprep.subr.bf16.mxu0 %v6048
        %8241 = vmatpush1.bf16.msra.mxu0 %v6047
        %8242 = vmatprep.subr.bf16.mxu0 %v6056
        %8243 = vmatpush1.bf16.msra.mxu0 %v6055
        %8244 = vmatprep.mubr.bf16.mxu0 %v677
        %8245 = vmatmul.mubr.bf16.gmra.mrb[0].mxu0 %v676
        %v8246 = vpop.f32.mrb[0].mxu0
        %v8247 = vadd.f32 %v8206, %v8246
        %v8248 = vpop.f32.mrb[0].mxu0
        %v8249 = vadd.f32 %v8208, %v8248
        %v8250 = vpop.f32.mrb[0].mxu0
        %v8251 = vpop.f32.mrb[0].mxu0
        %8252 = vdwg.mxu0
        %8253 = vmatprep.subr.bf16.mxu0 %v6064
        %8254 = vmatpush1.bf16.msra.mxu0 %v6063
        %8255 = vmatprep.subr.bf16.mxu0 %v6072
        %8256 = vmatpush1.bf16.msra.mxu0 %v6071
        %8257 = vmatprep.subr.bf16.mxu0 %v6080
        %8258 = vmatpush1.bf16.msra.mxu0 %v6079
        %8259 = vmatprep.subr.bf16.mxu0 %v6088
        %8260 = vmatpush1.bf16.msra.mxu0 %v6087
        %8261 = vmatprep.subr.bf16.mxu0 %v6096
        %8262 = vmatpush1.bf16.msra.mxu0 %v6095
        %8263 = vmatprep.subr.bf16.mxu0 %v6104
        %8264 = vmatpush1.bf16.msra.mxu0 %v6103
        %8265 = vmatprep.subr.bf16.mxu0 %v6112
        %8266 = vmatpush1.bf16.msra.mxu0 %v6111
        %8267 = vmatprep.subr.bf16.mxu0 %v6120
        %8268 = vmatpush1.bf16.msra.mxu0 %v6119
        %8269 = vmatprep.subr.bf16.mxu0 %v6128
        %8270 = vmatpush1.bf16.msra.mxu0 %v6127
        %8271 = vmatprep.subr.bf16.mxu0 %v6136
        %8272 = vmatpush1.bf16.msra.mxu0 %v6135
        %8273 = vmatprep.subr.bf16.mxu0 %v6144
        %8274 = vmatpush1.bf16.msra.mxu0 %v6143
        %8275 = vmatprep.subr.bf16.mxu0 %v6152
        %8276 = vmatpush1.bf16.msra.mxu0 %v6151
        %8277 = vmatprep.subr.bf16.mxu0 %v6160
        %8278 = vmatpush1.bf16.msra.mxu0 %v6159
        %8279 = vmatprep.subr.bf16.mxu0 %v6168
        %8280 = vmatpush1.bf16.msra.mxu0 %v6167
        %8281 = vmatprep.subr.bf16.mxu0 %v6176
        %8282 = vmatpush1.bf16.msra.mxu0 %v6175
        %8283 = vmatprep.subr.bf16.mxu0 %v6184
        %8284 = vmatpush1.bf16.msra.mxu0 %v6183
        %8285 = vmatprep.mubr.bf16.mxu0 %v679
        %8286 = vmatmul.mubr.bf16.gmra.mrb[0].mxu0 %v678
        %v8287 = vpop.f32.mrb[0].mxu0
        %v8288 = vadd.f32 %v8247, %v8287
        %v8289 = vpop.f32.mrb[0].mxu0
        %v8290 = vadd.f32 %v8249, %v8289
        %v8291 = vpop.f32.mrb[0].mxu0
        %v8292 = vpop.f32.mrb[0].mxu0
        %8293 = vdwg.mxu0
        %8294 = vmatprep.subr.bf16.mxu0 %v6192
        %8295 = vmatpush1.bf16.msra.mxu0 %v6191
        %8296 = vmatprep.subr.bf16.mxu0 %v6200
        %8297 = vmatpush1.bf16.msra.mxu0 %v6199
        %8298 = vmatprep.subr.bf16.mxu0 %v6208
        %8299 = vmatpush1.bf16.msra.mxu0 %v6207
        %8300 = vmatprep.subr.bf16.mxu0 %v6216
        %8301 = vmatpush1.bf16.msra.mxu0 %v6215
        %8302 = vmatprep.subr.bf16.mxu0 %v6224
        %8303 = vmatpush1.bf16.msra.mxu0 %v6223
        %8304 = vmatprep.subr.bf16.mxu0 %v6232
        %8305 = vmatpush1.bf16.msra.mxu0 %v6231
        %8306 = vmatprep.subr.bf16.mxu0 %v6240
        %8307 = vmatpush1.bf16.msra.mxu0 %v6239
        %8308 = vmatprep.subr.bf16.mxu0 %v6248
        %8309 = vmatpush1.bf16.msra.mxu0 %v6247
        %8310 = vmatprep.subr.bf16.mxu0 %v6256
        %8311 = vmatpush1.bf16.msra.mxu0 %v6255
        %8312 = vmatprep.subr.bf16.mxu0 %v6264
        %8313 = vmatpush1.bf16.msra.mxu0 %v6263
        %8314 = vmatprep.subr.bf16.mxu0 %v6272
        %8315 = vmatpush1.bf16.msra.mxu0 %v6271
        %8316 = vmatprep.subr.bf16.mxu0 %v6280
        %8317 = vmatpush1.bf16.msra.mxu0 %v6279
        %8318 = vmatprep.subr.bf16.mxu0 %v6288
        %8319 = vmatpush1.bf16.msra.mxu0 %v6287
        %8320 = vmatprep.subr.bf16.mxu0 %v6296
        %8321 = vmatpush1.bf16.msra.mxu0 %v6295
        %8322 = vmatprep.subr.bf16.mxu0 %v6304
        %8323 = vmatpush1.bf16.msra.mxu0 %v6303
        %8324 = vmatprep.subr.bf16.mxu0 %v6312
        %8325 = vmatpush1.bf16.msra.mxu0 %v6311
        %8326 = vmatprep.mubr.bf16.mxu0 %v681
        %8327 = vmatmul.mubr.bf16.gmra.mrb[0].mxu0 %v680
        %v8328 = vpop.f32.mrb[0].mxu0
        %v8329 = vadd.f32 %v8288, %v8328
        %v8330 = vpop.f32.mrb[0].mxu0
        %v8331 = vadd.f32 %v8290, %v8330
        %v8332 = vpop.f32.mrb[0].mxu0
        %v8333 = vpop.f32.mrb[0].mxu0
        %8334 = vdwg.mxu0
        %8335 = vmatprep.subr.bf16.mxu0 %v6320
        %8336 = vmatpush1.bf16.msra.mxu0 %v6319
        %8337 = vmatprep.subr.bf16.mxu0 %v6328
        %8338 = vmatpush1.bf16.msra.mxu0 %v6327
        %8339 = vmatprep.subr.bf16.mxu0 %v6336
        %8340 = vmatpush1.bf16.msra.mxu0 %v6335
        %8341 = vmatprep.subr.bf16.mxu0 %v6344
        %8342 = vmatpush1.bf16.msra.mxu0 %v6343
        %8343 = vmatprep.subr.bf16.mxu0 %v6352
        %8344 = vmatpush1.bf16.msra.mxu0 %v6351
        %8345 = vmatprep.subr.bf16.mxu0 %v6360
        %8346 = vmatpush1.bf16.msra.mxu0 %v6359
        %8347 = vmatprep.subr.bf16.mxu0 %v6368
        %8348 = vmatpush1.bf16.msra.mxu0 %v6367
        %8349 = vmatprep.subr.bf16.mxu0 %v6376
        %8350 = vmatpush1.bf16.msra.mxu0 %v6375
        %8351 = vmatprep.subr.bf16.mxu0 %v6384
        %8352 = vmatpush1.bf16.msra.mxu0 %v6383
        %8353 = vmatprep.subr.bf16.mxu0 %v6392
        %8354 = vmatpush1.bf16.msra.mxu0 %v6391
        %8355 = vmatprep.subr.bf16.mxu0 %v6400
        %8356 = vmatpush1.bf16.msra.mxu0 %v6399
        %8357 = vmatprep.subr.bf16.mxu0 %v6408
        %8358 = vmatpush1.bf16.msra.mxu0 %v6407
        %8359 = vmatprep.subr.bf16.mxu0 %v6416
        %8360 = vmatpush1.bf16.msra.mxu0 %v6415
        %8361 = vmatprep.subr.bf16.mxu0 %v6424
        %8362 = vmatpush1.bf16.msra.mxu0 %v6423
        %8363 = vmatprep.subr.bf16.mxu0 %v6432
        %8364 = vmatpush1.bf16.msra.mxu0 %v6431
        %8365 = vmatprep.subr.bf16.mxu0 %v6440
        %8366 = vmatpush1.bf16.msra.mxu0 %v6439
        %8367 = vmatprep.mubr.bf16.mxu0 %v683
        %8368 = vmatmul.mubr.bf16.gmra.mrb[0].mxu0 %v682
        %v8369 = vpop.f32.mrb[0].mxu0
        %v8370 = vadd.f32 %v8329, %v8369
        %v8371 = vpop.f32.mrb[0].mxu0
        %v8372 = vadd.f32 %v8331, %v8371
        %v8373 = vpop.f32.mrb[0].mxu0
        %v8374 = vpop.f32.mrb[0].mxu0
        %8375 = vdwg.mxu0
        %8376 = vmatprep.subr.bf16.mxu0 %v5298
        %8377 = vmatpush1.bf16.msra.mxu0 %v5297
        %8378 = vmatprep.subr.bf16.mxu0 %v5306
        %8379 = vmatpush1.bf16.msra.mxu0 %v5305
        %8380 = vmatprep.subr.bf16.mxu0 %v5314
        %8381 = vmatpush1.bf16.msra.mxu0 %v5313
        %8382 = vmatprep.subr.bf16.mxu0 %v5322
        %8383 = vmatpush1.bf16.msra.mxu0 %v5321
        %8384 = vmatprep.subr.bf16.mxu0 %v5330
        %8385 = vmatpush1.bf16.msra.mxu0 %v5329
        %8386 = vmatprep.subr.bf16.mxu0 %v5338
        %8387 = vmatpush1.bf16.msra.mxu0 %v5337
        %8388 = vmatprep.subr.bf16.mxu0 %v5346
        %8389 = vmatpush1.bf16.msra.mxu0 %v5345
        %8390 = vmatprep.subr.bf16.mxu0 %v5354
        %8391 = vmatpush1.bf16.msra.mxu0 %v5353
        %8392 = vmatprep.subr.bf16.mxu0 %v5362
        %8393 = vmatpush1.bf16.msra.mxu0 %v5361
        %8394 = vmatprep.subr.bf16.mxu0 %v5370
        %8395 = vmatpush1.bf16.msra.mxu0 %v5369
        %8396 = vmatprep.subr.bf16.mxu0 %v5378
        %8397 = vmatpush1.bf16.msra.mxu0 %v5377
        %8398 = vmatprep.subr.bf16.mxu0 %v5386
        %8399 = vmatpush1.bf16.msra.mxu0 %v5385
        %8400 = vmatprep.subr.bf16.mxu0 %v5394
        %8401 = vmatpush1.bf16.msra.mxu0 %v5393
        %8402 = vmatprep.subr.bf16.mxu0 %v5402
        %8403 = vmatpush1.bf16.msra.mxu0 %v5401
        %8404 = vmatprep.subr.bf16.mxu0 %v5410
        %8405 = vmatpush1.bf16.msra.mxu0 %v5409
        %8406 = vmatprep.subr.bf16.mxu0 %v5418
        %8407 = vmatpush1.bf16.msra.mxu0 %v5417
        %8408 = vmatprep.mubr.bf16.mxu0 %v667
        %8409 = vmatmul.mubr.bf16.gmra.mrb[0].mxu0 %v666
        %v8410 = vpop.f32.mrb[0].mxu0
        %v8411 = vadd.f32 %v7617, %v8410
        %v8412 = vpop.f32.mrb[0].mxu0
        %v8413 = vadd.f32 %v7621, %v8412
        %v8414 = vpop.f32.mrb[0].mxu0
        %v8415 = vpop.f32.mrb[0].mxu0
        %8416 = vdwg.mxu0
        %8417 = vmatprep.subr.bf16.mxu0 %v5426
        %8418 = vmatpush1.bf16.msra.mxu0 %v5425
        %8419 = vmatprep.subr.bf16.mxu0 %v5434
        %8420 = vmatpush1.bf16.msra.mxu0 %v5433
        %8421 = vmatprep.subr.bf16.mxu0 %v5442
        %8422 = vmatpush1.bf16.msra.mxu0 %v5441
        %8423 = vmatprep.subr.bf16.mxu0 %v5450
        %8424 = vmatpush1.bf16.msra.mxu0 %v5449
        %8425 = vmatprep.subr.bf16.mxu0 %v5458
        %8426 = vmatpush1.bf16.msra.mxu0 %v5457
        %8427 = vmatprep.subr.bf16.mxu0 %v5466
        %8428 = vmatpush1.bf16.msra.mxu0 %v5465
        %8429 = vmatprep.subr.bf16.mxu0 %v5474
        %8430 = vmatpush1.bf16.msra.mxu0 %v5473
        %8431 = vmatprep.subr.bf16.mxu0 %v5482
        %8432 = vmatpush1.bf16.msra.mxu0 %v5481
        %8433 = vmatprep.subr.bf16.mxu0 %v5490
        %8434 = vmatpush1.bf16.msra.mxu0 %v5489
        %8435 = vmatprep.subr.bf16.mxu0 %v5498
        %8436 = vmatpush1.bf16.msra.mxu0 %v5497
        %8437 = vmatprep.subr.bf16.mxu0 %v5506
        %8438 = vmatpush1.bf16.msra.mxu0 %v5505
        %8439 = vmatprep.subr.bf16.mxu0 %v5514
        %8440 = vmatpush1.bf16.msra.mxu0 %v5513
        %8441 = vmatprep.subr.bf16.mxu0 %v5522
        %8442 = vmatpush1.bf16.msra.mxu0 %v5521
        %8443 = vmatprep.subr.bf16.mxu0 %v5530
        %8444 = vmatpush1.bf16.msra.mxu0 %v5529
        %8445 = vmatprep.subr.bf16.mxu0 %v5538
        %8446 = vmatpush1.bf16.msra.mxu0 %v5537
        %8447 = vmatprep.subr.bf16.mxu0 %v5546
        %8448 = vmatpush1.bf16.msra.mxu0 %v5545
        %8449 = vmatprep.mubr.bf16.mxu0 %v669
        %8450 = vmatmul.mubr.bf16.gmra.mrb[0].mxu0 %v668
        %v8451 = vpop.f32.mrb[0].mxu0
        %v8452 = vadd.f32 %v8411, %v8451
        %v8453 = vpop.f32.mrb[0].mxu0
        %v8454 = vadd.f32 %v8413, %v8453
        %v8455 = vpop.f32.mrb[0].mxu0
        %v8456 = vpop.f32.mrb[0].mxu0
        %8457 = vdwg.mxu0
        %8458 = vmatprep.subr.bf16.mxu0 %v5554
        %8459 = vmatpush1.bf16.msra.mxu0 %v5553
        %8460 = vmatprep.subr.bf16.mxu0 %v5562
        %8461 = vmatpush1.bf16.msra.mxu0 %v5561
        %8462 = vmatprep.subr.bf16.mxu0 %v5570
        %8463 = vmatpush1.bf16.msra.mxu0 %v5569
        %8464 = vmatprep.subr.bf16.mxu0 %v5578
        %8465 = vmatpush1.bf16.msra.mxu0 %v5577
        %8466 = vmatprep.subr.bf16.mxu0 %v5586
        %8467 = vmatpush1.bf16.msra.mxu0 %v5585
        %8468 = vmatprep.subr.bf16.mxu0 %v5594
        %8469 = vmatpush1.bf16.msra.mxu0 %v5593
        %8470 = vmatprep.subr.bf16.mxu0 %v5602
        %8471 = vmatpush1.bf16.msra.mxu0 %v5601
        %8472 = vmatprep.subr.bf16.mxu0 %v5610
        %8473 = vmatpush1.bf16.msra.mxu0 %v5609
        %8474 = vmatprep.subr.bf16.mxu0 %v5618
        %8475 = vmatpush1.bf16.msra.mxu0 %v5617
        %8476 = vmatprep.subr.bf16.mxu0 %v5626
        %8477 = vmatpush1.bf16.msra.mxu0 %v5625
        %8478 = vmatprep.subr.bf16.mxu0 %v5634
        %8479 = vmatpush1.bf16.msra.mxu0 %v5633
        %8480 = vmatprep.subr.bf16.mxu0 %v5642
        %8481 = vmatpush1.bf16.msra.mxu0 %v5641
        %8482 = vmatprep.subr.bf16.mxu0 %v5650
        %8483 = vmatpush1.bf16.msra.mxu0 %v5649
        %8484 = vmatprep.subr.bf16.mxu0 %v5658
        %8485 = vmatpush1.bf16.msra.mxu0 %v5657
        %8486 = vmatprep.subr.bf16.mxu0 %v5666
        %8487 = vmatpush1.bf16.msra.mxu0 %v5665
        %8488 = vmatprep.subr.bf16.mxu0 %v5674
        %8489 = vmatpush1.bf16.msra.mxu0 %v5673
        %8490 = vmatprep.mubr.bf16.mxu0 %v671
        %8491 = vmatmul.mubr.bf16.gmra.mrb[0].mxu0 %v670
        %v8492 = vpop.f32.mrb[0].mxu0
        %v8493 = vadd.f32 %v8452, %v8492
        %v8494 = vpop.f32.mrb[0].mxu0
        %v8495 = vadd.f32 %v8454, %v8494
        %v8496 = vpop.f32.mrb[0].mxu0
        %v8497 = vpop.f32.mrb[0].mxu0
        %8498 = vdwg.mxu0
        %8499 = vmatprep.subr.bf16.mxu0 %v5682
        %8500 = vmatpush1.bf16.msra.mxu0 %v5681
        %8501 = vmatprep.subr.bf16.mxu0 %v5690
        %8502 = vmatpush1.bf16.msra.mxu0 %v5689
        %8503 = vmatprep.subr.bf16.mxu0 %v5698
        %8504 = vmatpush1.bf16.msra.mxu0 %v5697
        %8505 = vmatprep.subr.bf16.mxu0 %v5706
        %8506 = vmatpush1.bf16.msra.mxu0 %v5705
        %8507 = vmatprep.subr.bf16.mxu0 %v5714
        %8508 = vmatpush1.bf16.msra.mxu0 %v5713
        %8509 = vmatprep.subr.bf16.mxu0 %v5722
        %8510 = vmatpush1.bf16.msra.mxu0 %v5721
        %8511 = vmatprep.subr.bf16.mxu0 %v5730
        %8512 = vmatpush1.bf16.msra.mxu0 %v5729
        %8513 = vmatprep.subr.bf16.mxu0 %v5738
        %8514 = vmatpush1.bf16.msra.mxu0 %v5737
        %8515 = vmatprep.subr.bf16.mxu0 %v5746
        %8516 = vmatpush1.bf16.msra.mxu0 %v5745
        %8517 = vmatprep.subr.bf16.mxu0 %v5754
        %8518 = vmatpush1.bf16.msra.mxu0 %v5753
        %8519 = vmatprep.subr.bf16.mxu0 %v5762
        %8520 = vmatpush1.bf16.msra.mxu0 %v5761
        %8521 = vmatprep.subr.bf16.mxu0 %v5770
        %8522 = vmatpush1.bf16.msra.mxu0 %v5769
        %8523 = vmatprep.subr.bf16.mxu0 %v5778
        %8524 = vmatpush1.bf16.msra.mxu0 %v5777
        %8525 = vmatprep.subr.bf16.mxu0 %v5786
        %8526 = vmatpush1.bf16.msra.mxu0 %v5785
        %8527 = vmatprep.subr.bf16.mxu0 %v5794
        %8528 = vmatpush1.bf16.msra.mxu0 %v5793
        %8529 = vmatprep.subr.bf16.mxu0 %v5802
        %8530 = vmatpush1.bf16.msra.mxu0 %v5801
        %8531 = vmatprep.mubr.bf16.mxu0 %v673
        %8532 = vmatmul.mubr.bf16.gmra.mrb[0].mxu0 %v672
        %v8533 = vpop.f32.mrb[0].mxu0
        %v8534 = vadd.f32 %v8493, %v8533
        %v8535 = vpop.f32.mrb[0].mxu0
        %v8536 = vadd.f32 %v8495, %v8535
        %v8537 = vpop.f32.mrb[0].mxu0
        %v8538 = vpop.f32.mrb[0].mxu0
        %8539 = vdwg.mxu0
        %8540 = vmatprep.subr.bf16.mxu0 %v5810
        %8541 = vmatpush1.bf16.msra.mxu0 %v5809
        %8542 = vmatprep.subr.bf16.mxu0 %v5818
        %8543 = vmatpush1.bf16.msra.mxu0 %v5817
        %8544 = vmatprep.subr.bf16.mxu0 %v5826
        %8545 = vmatpush1.bf16.msra.mxu0 %v5825
        %8546 = vmatprep.subr.bf16.mxu0 %v5834
        %8547 = vmatpush1.bf16.msra.mxu0 %v5833
        %8548 = vmatprep.subr.bf16.mxu0 %v5842
        %8549 = vmatpush1.bf16.msra.mxu0 %v5841
        %8550 = vmatprep.subr.bf16.mxu0 %v5850
        %8551 = vmatpush1.bf16.msra.mxu0 %v5849
        %8552 = vmatprep.subr.bf16.mxu0 %v5858
        %8553 = vmatpush1.bf16.msra.mxu0 %v5857
        %8554 = vmatprep.subr.bf16.mxu0 %v5866
        %8555 = vmatpush1.bf16.msra.mxu0 %v5865
        %8556 = vmatprep.subr.bf16.mxu0 %v5874
        %8557 = vmatpush1.bf16.msra.mxu0 %v5873
        %8558 = vmatprep.subr.bf16.mxu0 %v5882
        %8559 = vmatpush1.bf16.msra.mxu0 %v5881
        %8560 = vmatprep.subr.bf16.mxu0 %v5890
        %8561 = vmatpush1.bf16.msra.mxu0 %v5889
        %8562 = vmatprep.subr.bf16.mxu0 %v5898
        %8563 = vmatpush1.bf16.msra.mxu0 %v5897
        %8564 = vmatprep.subr.bf16.mxu0 %v5906
        %8565 = vmatpush1.bf16.msra.mxu0 %v5905
        %8566 = vmatprep.subr.bf16.mxu0 %v5914
        %8567 = vmatpush1.bf16.msra.mxu0 %v5913
        %8568 = vmatprep.subr.bf16.mxu0 %v5922
        %8569 = vmatpush1.bf16.msra.mxu0 %v5921
        %8570 = vmatprep.subr.bf16.mxu0 %v5930
        %8571 = vmatpush1.bf16.msra.mxu0 %v5929
        %8572 = vmatprep.mubr.bf16.mxu0 %v675
        %8573 = vmatmul.mubr.bf16.gmra.mrb[0].mxu0 %v674
        %v8574 = vpop.f32.mrb[0].mxu0
        %v8575 = vadd.f32 %v8534, %v8574
        %v8576 = vpop.f32.mrb[0].mxu0
        %v8577 = vadd.f32 %v8536, %v8576
        %v8578 = vpop.f32.mrb[0].mxu0
        %v8579 = vpop.f32.mrb[0].mxu0
        %8580 = vdwg.mxu0
        %8581 = vmatprep.subr.bf16.mxu0 %v5938
        %8582 = vmatpush1.bf16.msra.mxu0 %v5937
        %8583 = vmatprep.subr.bf16.mxu0 %v5946
        %8584 = vmatpush1.bf16.msra.mxu0 %v5945
        %8585 = vmatprep.subr.bf16.mxu0 %v5954
        %8586 = vmatpush1.bf16.msra.mxu0 %v5953
        %8587 = vmatprep.subr.bf16.mxu0 %v5962
        %8588 = vmatpush1.bf16.msra.mxu0 %v5961
        %8589 = vmatprep.subr.bf16.mxu0 %v5970
        %8590 = vmatpush1.bf16.msra.mxu0 %v5969
        %8591 = vmatprep.subr.bf16.mxu0 %v5978
        %8592 = vmatpush1.bf16.msra.mxu0 %v5977
        %8593 = vmatprep.subr.bf16.mxu0 %v5986
        %8594 = vmatpush1.bf16.msra.mxu0 %v5985
        %8595 = vmatprep.subr.bf16.mxu0 %v5994
        %8596 = vmatpush1.bf16.msra.mxu0 %v5993
        %8597 = vmatprep.subr.bf16.mxu0 %v6002
        %8598 = vmatpush1.bf16.msra.mxu0 %v6001
        %8599 = vmatprep.subr.bf16.mxu0 %v6010
        %8600 = vmatpush1.bf16.msra.mxu0 %v6009
        %8601 = vmatprep.subr.bf16.mxu0 %v6018
        %8602 = vmatpush1.bf16.msra.mxu0 %v6017
        %8603 = vmatprep.subr.bf16.mxu0 %v6026
        %8604 = vmatpush1.bf16.msra.mxu0 %v6025
        %8605 = vmatprep.subr.bf16.mxu0 %v6034
        %8606 = vmatpush1.bf16.msra.mxu0 %v6033
        %8607 = vmatprep.subr.bf16.mxu0 %v6042
        %8608 = vmatpush1.bf16.msra.mxu0 %v6041
        %8609 = vmatprep.subr.bf16.mxu0 %v6050
        %8610 = vmatpush1.bf16.msra.mxu0 %v6049
        %8611 = vmatprep.subr.bf16.mxu0 %v6058
        %8612 = vmatpush1.bf16.msra.mxu0 %v6057
        %8613 = vmatprep.mubr.bf16.mxu0 %v677
        %8614 = vmatmul.mubr.bf16.gmra.mrb[0].mxu0 %v676
        %v8615 = vpop.f32.mrb[0].mxu0
        %v8616 = vadd.f32 %v8575, %v8615
        %v8617 = vpop.f32.mrb[0].mxu0
        %v8618 = vadd.f32 %v8577, %v8617
        %v8619 = vpop.f32.mrb[0].mxu0
        %v8620 = vpop.f32.mrb[0].mxu0
        %8621 = vdwg.mxu0
        %8622 = vmatprep.subr.bf16.mxu0 %v6066
        %8623 = vmatpush1.bf16.msra.mxu0 %v6065
        %8624 = vmatprep.subr.bf16.mxu0 %v6074
        %8625 = vmatpush1.bf16.msra.mxu0 %v6073
        %8626 = vmatprep.subr.bf16.mxu0 %v6082
        %8627 = vmatpush1.bf16.msra.mxu0 %v6081
        %8628 = vmatprep.subr.bf16.mxu0 %v6090
        %8629 = vmatpush1.bf16.msra.mxu0 %v6089
        %8630 = vmatprep.subr.bf16.mxu0 %v6098
        %8631 = vmatpush1.bf16.msra.mxu0 %v6097
        %8632 = vmatprep.subr.bf16.mxu0 %v6106
        %8633 = vmatpush1.bf16.msra.mxu0 %v6105
        %8634 = vmatprep.subr.bf16.mxu0 %v6114
        %8635 = vmatpush1.bf16.msra.mxu0 %v6113
        %8636 = vmatprep.subr.bf16.mxu0 %v6122
        %8637 = vmatpush1.bf16.msra.mxu0 %v6121
        %8638 = vmatprep.subr.bf16.mxu0 %v6130
        %8639 = vmatpush1.bf16.msra.mxu0 %v6129
        %8640 = vmatprep.subr.bf16.mxu0 %v6138
        %8641 = vmatpush1.bf16.msra.mxu0 %v6137
        %8642 = vmatprep.subr.bf16.mxu0 %v6146
        %8643 = vmatpush1.bf16.msra.mxu0 %v6145
        %8644 = vmatprep.subr.bf16.mxu0 %v6154
        %8645 = vmatpush1.bf16.msra.mxu0 %v6153
        %8646 = vmatprep.subr.bf16.mxu0 %v6162
        %8647 = vmatpush1.bf16.msra.mxu0 %v6161
        %8648 = vmatprep.subr.bf16.mxu0 %v6170
        %8649 = vmatpush1.bf16.msra.mxu0 %v6169
        %8650 = vmatprep.subr.bf16.mxu0 %v6178
        %8651 = vmatpush1.bf16.msra.mxu0 %v6177
        %8652 = vmatprep.subr.bf16.mxu0 %v6186
        %8653 = vmatpush1.bf16.msra.mxu0 %v6185
        %8654 = vmatprep.mubr.bf16.mxu0 %v679
        %8655 = vmatmul.mubr.bf16.gmra.mrb[0].mxu0 %v678
        %v8656 = vpop.f32.mrb[0].mxu0
        %v8657 = vadd.f32 %v8616, %v8656
        %v8658 = vpop.f32.mrb[0].mxu0
        %v8659 = vadd.f32 %v8618, %v8658
        %v8660 = vpop.f32.mrb[0].mxu0
        %v8661 = vpop.f32.mrb[0].mxu0
        %8662 = vdwg.mxu0
        %8663 = vmatprep.subr.bf16.mxu0 %v6194
        %8664 = vmatpush1.bf16.msra.mxu0 %v6193
        %8665 = vmatprep.subr.bf16.mxu0 %v6202
        %8666 = vmatpush1.bf16.msra.mxu0 %v6201
        %8667 = vmatprep.subr.bf16.mxu0 %v6210
        %8668 = vmatpush1.bf16.msra.mxu0 %v6209
        %8669 = vmatprep.subr.bf16.mxu0 %v6218
        %8670 = vmatpush1.bf16.msra.mxu0 %v6217
        %8671 = vmatprep.subr.bf16.mxu0 %v6226
        %8672 = vmatpush1.bf16.msra.mxu0 %v6225
        %8673 = vmatprep.subr.bf16.mxu0 %v6234
        %8674 = vmatpush1.bf16.msra.mxu0 %v6233
        %8675 = vmatprep.subr.bf16.mxu0 %v6242
        %8676 = vmatpush1.bf16.msra.mxu0 %v6241
        %8677 = vmatprep.subr.bf16.mxu0 %v6250
        %8678 = vmatpush1.bf16.msra.mxu0 %v6249
        %8679 = vmatprep.subr.bf16.mxu0 %v6258
        %8680 = vmatpush1.bf16.msra.mxu0 %v6257
        %8681 = vmatprep.subr.bf16.mxu0 %v6266
        %8682 = vmatpush1.bf16.msra.mxu0 %v6265
        %8683 = vmatprep.subr.bf16.mxu0 %v6274
        %8684 = vmatpush1.bf16.msra.mxu0 %v6273
        %8685 = vmatprep.subr.bf16.mxu0 %v6282
        %8686 = vmatpush1.bf16.msra.mxu0 %v6281
        %8687 = vmatprep.subr.bf16.mxu0 %v6290
        %8688 = vmatpush1.bf16.msra.mxu0 %v6289
        %8689 = vmatprep.subr.bf16.mxu0 %v6298
        %8690 = vmatpush1.bf16.msra.mxu0 %v6297
        %8691 = vmatprep.subr.bf16.mxu0 %v6306
        %8692 = vmatpush1.bf16.msra.mxu0 %v6305
        %8693 = vmatprep.subr.bf16.mxu0 %v6314
        %8694 = vmatpush1.bf16.msra.mxu0 %v6313
        %8695 = vmatprep.mubr.bf16.mxu0 %v681
        %8696 = vmatmul.mubr.bf16.gmra.mrb[0].mxu0 %v680
        %v8697 = vpop.f32.mrb[0].mxu0
        %v8698 = vadd.f32 %v8657, %v8697
        %v8699 = vpop.f32.mrb[0].mxu0
        %v8700 = vadd.f32 %v8659, %v8699
        %v8701 = vpop.f32.mrb[0].mxu0
        %v8702 = vpop.f32.mrb[0].mxu0
        %8703 = vdwg.mxu0
        %8704 = vmatprep.subr.bf16.mxu0 %v6322
        %8705 = vmatpush1.bf16.msra.mxu0 %v6321
        %8706 = vmatprep.subr.bf16.mxu0 %v6330
        %8707 = vmatpush1.bf16.msra.mxu0 %v6329
        %8708 = vmatprep.subr.bf16.mxu0 %v6338
        %8709 = vmatpush1.bf16.msra.mxu0 %v6337
        %8710 = vmatprep.subr.bf16.mxu0 %v6346
        %8711 = vmatpush1.bf16.msra.mxu0 %v6345
        %8712 = vmatprep.subr.bf16.mxu0 %v6354
        %8713 = vmatpush1.bf16.msra.mxu0 %v6353
        %8714 = vmatprep.subr.bf16.mxu0 %v6362
        %8715 = vmatpush1.bf16.msra.mxu0 %v6361
        %8716 = vmatprep.subr.bf16.mxu0 %v6370
        %8717 = vmatpush1.bf16.msra.mxu0 %v6369
        %8718 = vmatprep.subr.bf16.mxu0 %v6378
        %8719 = vmatpush1.bf16.msra.mxu0 %v6377
        %8720 = vmatprep.subr.bf16.mxu0 %v6386
        %8721 = vmatpush1.bf16.msra.mxu0 %v6385
        %8722 = vmatprep.subr.bf16.mxu0 %v6394
        %8723 = vmatpush1.bf16.msra.mxu0 %v6393
        %8724 = vmatprep.subr.bf16.mxu0 %v6402
        %8725 = vmatpush1.bf16.msra.mxu0 %v6401
        %8726 = vmatprep.subr.bf16.mxu0 %v6410
        %8727 = vmatpush1.bf16.msra.mxu0 %v6409
        %8728 = vmatprep.subr.bf16.mxu0 %v6418
        %8729 = vmatpush1.bf16.msra.mxu0 %v6417
        %8730 = vmatprep.subr.bf16.mxu0 %v6426
        %8731 = vmatpush1.bf16.msra.mxu0 %v6425
        %8732 = vmatprep.subr.bf16.mxu0 %v6434
        %8733 = vmatpush1.bf16.msra.mxu0 %v6433
        %8734 = vmatprep.subr.bf16.mxu0 %v6442
        %8735 = vmatpush1.bf16.msra.mxu0 %v6441
        %8736 = vmatprep.mubr.bf16.mxu0 %v683
        %8737 = vmatmul.mubr.bf16.gmra.mrb[0].mxu0 %v682
        %v8738 = vpop.f32.mrb[0].mxu0
        %v8739 = vadd.f32 %v8698, %v8738
        %v8740 = vpop.f32.mrb[0].mxu0
        %v8741 = vadd.f32 %v8700, %v8740
        %v8742 = vpop.f32.mrb[0].mxu0
        %v8743 = vpop.f32.mrb[0].mxu0
        %8744 = vdwg.mxu0
        %8745 = vmatprep.subr.bf16.mxu0 %v5300
        %8746 = vmatpush1.bf16.msra.mxu0 %v5299
        %8747 = vmatprep.subr.bf16.mxu0 %v5308
        %8748 = vmatpush1.bf16.msra.mxu0 %v5307
        %8749 = vmatprep.subr.bf16.mxu0 %v5316
        %8750 = vmatpush1.bf16.msra.mxu0 %v5315
        %8751 = vmatprep.subr.bf16.mxu0 %v5324
        %8752 = vmatpush1.bf16.msra.mxu0 %v5323
        %8753 = vmatprep.subr.bf16.mxu0 %v5332
        %8754 = vmatpush1.bf16.msra.mxu0 %v5331
        %8755 = vmatprep.subr.bf16.mxu0 %v5340
        %8756 = vmatpush1.bf16.msra.mxu0 %v5339
        %8757 = vmatprep.subr.bf16.mxu0 %v5348
        %8758 = vmatpush1.bf16.msra.mxu0 %v5347
        %8759 = vmatprep.subr.bf16.mxu0 %v5356
        %8760 = vmatpush1.bf16.msra.mxu0 %v5355
        %8761 = vmatprep.subr.bf16.mxu0 %v5364
        %8762 = vmatpush1.bf16.msra.mxu0 %v5363
        %8763 = vmatprep.subr.bf16.mxu0 %v5372
        %8764 = vmatpush1.bf16.msra.mxu0 %v5371
        %8765 = vmatprep.subr.bf16.mxu0 %v5380
        %8766 = vmatpush1.bf16.msra.mxu0 %v5379
        %8767 = vmatprep.subr.bf16.mxu0 %v5388
        %8768 = vmatpush1.bf16.msra.mxu0 %v5387
        %8769 = vmatprep.subr.bf16.mxu0 %v5396
        %8770 = vmatpush1.bf16.msra.mxu0 %v5395
        %8771 = vmatprep.subr.bf16.mxu0 %v5404
        %8772 = vmatpush1.bf16.msra.mxu0 %v5403
        %8773 = vmatprep.subr.bf16.mxu0 %v5412
        %8774 = vmatpush1.bf16.msra.mxu0 %v5411
        %8775 = vmatprep.subr.bf16.mxu0 %v5420
        %8776 = vmatpush1.bf16.msra.mxu0 %v5419
        %8777 = vmatprep.mubr.bf16.mxu0 %v667
        %8778 = vmatmul.mubr.bf16.gmra.mrb[0].mxu0 %v666
        %v8779 = vpop.f32.mrb[0].mxu0
        %v8780 = vadd.f32 %v7625, %v8779
        %v8781 = vpop.f32.mrb[0].mxu0
        %v8782 = vadd.f32 %v7629, %v8781
        %v8783 = vpop.f32.mrb[0].mxu0
        %v8784 = vpop.f32.mrb[0].mxu0
        %8785 = vdwg.mxu0
        %8786 = vmatprep.subr.bf16.mxu0 %v5428
        %8787 = vmatpush1.bf16.msra.mxu0 %v5427
        %8788 = vmatprep.subr.bf16.mxu0 %v5436
        %8789 = vmatpush1.bf16.msra.mxu0 %v5435
        %8790 = vmatprep.subr.bf16.mxu0 %v5444
        %8791 = vmatpush1.bf16.msra.mxu0 %v5443
        %8792 = vmatprep.subr.bf16.mxu0 %v5452
        %8793 = vmatpush1.bf16.msra.mxu0 %v5451
        %8794 = vmatprep.subr.bf16.mxu0 %v5460
        %8795 = vmatpush1.bf16.msra.mxu0 %v5459
        %8796 = vmatprep.subr.bf16.mxu0 %v5468
        %8797 = vmatpush1.bf16.msra.mxu0 %v5467
        %8798 = vmatprep.subr.bf16.mxu0 %v5476
        %8799 = vmatpush1.bf16.msra.mxu0 %v5475
        %8800 = vmatprep.subr.bf16.mxu0 %v5484
        %8801 = vmatpush1.bf16.msra.mxu0 %v5483
        %8802 = vmatprep.subr.bf16.mxu0 %v5492
        %8803 = vmatpush1.bf16.msra.mxu0 %v5491
        %8804 = vmatprep.subr.bf16.mxu0 %v5500
        %8805 = vmatpush1.bf16.msra.mxu0 %v5499
        %8806 = vmatprep.subr.bf16.mxu0 %v5508
        %8807 = vmatpush1.bf16.msra.mxu0 %v5507
        %8808 = vmatprep.subr.bf16.mxu0 %v5516
        %8809 = vmatpush1.bf16.msra.mxu0 %v5515
        %8810 = vmatprep.subr.bf16.mxu0 %v5524
        %8811 = vmatpush1.bf16.msra.mxu0 %v5523
        %8812 = vmatprep.subr.bf16.mxu0 %v5532
        %8813 = vmatpush1.bf16.msra.mxu0 %v5531
        %8814 = vmatprep.subr.bf16.mxu0 %v5540
        %8815 = vmatpush1.bf16.msra.mxu0 %v5539
        %8816 = vmatprep.subr.bf16.mxu0 %v5548
        %8817 = vmatpush1.bf16.msra.mxu0 %v5547
        %8818 = vmatprep.mubr.bf16.mxu0 %v669
        %8819 = vmatmul.mubr.bf16.gmra.mrb[0].mxu0 %v668
        %v8820 = vpop.f32.mrb[0].mxu0
        %v8821 = vadd.f32 %v8780, %v8820
        %v8822 = vpop.f32.mrb[0].mxu0
        %v8823 = vadd.f32 %v8782, %v8822
        %v8824 = vpop.f32.mrb[0].mxu0
        %v8825 = vpop.f32.mrb[0].mxu0
        %8826 = vdwg.mxu0
        %8827 = vmatprep.subr.bf16.mxu0 %v5556
        %8828 = vmatpush1.bf16.msra.mxu0 %v5555
        %8829 = vmatprep.subr.bf16.mxu0 %v5564
        %8830 = vmatpush1.bf16.msra.mxu0 %v5563
        %8831 = vmatprep.subr.bf16.mxu0 %v5572
        %8832 = vmatpush1.bf16.msra.mxu0 %v5571
        %8833 = vmatprep.subr.bf16.mxu0 %v5580
        %8834 = vmatpush1.bf16.msra.mxu0 %v5579
        %8835 = vmatprep.subr.bf16.mxu0 %v5588
        %8836 = vmatpush1.bf16.msra.mxu0 %v5587
        %8837 = vmatprep.subr.bf16.mxu0 %v5596
        %8838 = vmatpush1.bf16.msra.mxu0 %v5595
        %8839 = vmatprep.subr.bf16.mxu0 %v5604
        %8840 = vmatpush1.bf16.msra.mxu0 %v5603
        %8841 = vmatprep.subr.bf16.mxu0 %v5612
        %8842 = vmatpush1.bf16.msra.mxu0 %v5611
        %8843 = vmatprep.subr.bf16.mxu0 %v5620
        %8844 = vmatpush1.bf16.msra.mxu0 %v5619
        %8845 = vmatprep.subr.bf16.mxu0 %v5628
        %8846 = vmatpush1.bf16.msra.mxu0 %v5627
        %8847 = vmatprep.subr.bf16.mxu0 %v5636
        %8848 = vmatpush1.bf16.msra.mxu0 %v5635
        %8849 = vmatprep.subr.bf16.mxu0 %v5644
        %8850 = vmatpush1.bf16.msra.mxu0 %v5643
        %8851 = vmatprep.subr.bf16.mxu0 %v5652
        %8852 = vmatpush1.bf16.msra.mxu0 %v5651
        %8853 = vmatprep.subr.bf16.mxu0 %v5660
        %8854 = vmatpush1.bf16.msra.mxu0 %v5659
        %8855 = vmatprep.subr.bf16.mxu0 %v5668
        %8856 = vmatpush1.bf16.msra.mxu0 %v5667
        %8857 = vmatprep.subr.bf16.mxu0 %v5676
        %8858 = vmatpush1.bf16.msra.mxu0 %v5675
        %8859 = vmatprep.mubr.bf16.mxu0 %v671
        %8860 = vmatmul.mubr.bf16.gmra.mrb[0].mxu0 %v670
        %v8861 = vpop.f32.mrb[0].mxu0
        %v8862 = vadd.f32 %v8821, %v8861
        %v8863 = vpop.f32.mrb[0].mxu0
        %v8864 = vadd.f32 %v8823, %v8863
        %v8865 = vpop.f32.mrb[0].mxu0
        %v8866 = vpop.f32.mrb[0].mxu0
        %8867 = vdwg.mxu0
        %8868 = vmatprep.subr.bf16.mxu0 %v5684
        %8869 = vmatpush1.bf16.msra.mxu0 %v5683
        %8870 = vmatprep.subr.bf16.mxu0 %v5692
        %8871 = vmatpush1.bf16.msra.mxu0 %v5691
        %8872 = vmatprep.subr.bf16.mxu0 %v5700
        %8873 = vmatpush1.bf16.msra.mxu0 %v5699
        %8874 = vmatprep.subr.bf16.mxu0 %v5708
        %8875 = vmatpush1.bf16.msra.mxu0 %v5707
        %8876 = vmatprep.subr.bf16.mxu0 %v5716
        %8877 = vmatpush1.bf16.msra.mxu0 %v5715
        %8878 = vmatprep.subr.bf16.mxu0 %v5724
        %8879 = vmatpush1.bf16.msra.mxu0 %v5723
        %8880 = vmatprep.subr.bf16.mxu0 %v5732
        %8881 = vmatpush1.bf16.msra.mxu0 %v5731
        %8882 = vmatprep.subr.bf16.mxu0 %v5740
        %8883 = vmatpush1.bf16.msra.mxu0 %v5739
        %8884 = vmatprep.subr.bf16.mxu0 %v5748
        %8885 = vmatpush1.bf16.msra.mxu0 %v5747
        %8886 = vmatprep.subr.bf16.mxu0 %v5756
        %8887 = vmatpush1.bf16.msra.mxu0 %v5755
        %8888 = vmatprep.subr.bf16.mxu0 %v5764
        %8889 = vmatpush1.bf16.msra.mxu0 %v5763
        %8890 = vmatprep.subr.bf16.mxu0 %v5772
        %8891 = vmatpush1.bf16.msra.mxu0 %v5771
        %8892 = vmatprep.subr.bf16.mxu0 %v5780
        %8893 = vmatpush1.bf16.msra.mxu0 %v5779
        %8894 = vmatprep.subr.bf16.mxu0 %v5788
        %8895 = vmatpush1.bf16.msra.mxu0 %v5787
        %8896 = vmatprep.subr.bf16.mxu0 %v5796
        %8897 = vmatpush1.bf16.msra.mxu0 %v5795
        %8898 = vmatprep.subr.bf16.mxu0 %v5804
        %8899 = vmatpush1.bf16.msra.mxu0 %v5803
        %8900 = vmatprep.mubr.bf16.mxu0 %v673
        %8901 = vmatmul.mubr.bf16.gmra.mrb[0].mxu0 %v672
        %v8902 = vpop.f32.mrb[0].mxu0
        %v8903 = vadd.f32 %v8862, %v8902
        %v8904 = vpop.f32.mrb[0].mxu0
        %v8905 = vadd.f32 %v8864, %v8904
        %v8906 = vpop.f32.mrb[0].mxu0
        %v8907 = vpop.f32.mrb[0].mxu0
        %8908 = vdwg.mxu0
        %8909 = vmatprep.subr.bf16.mxu0 %v5812
        %8910 = vmatpush1.bf16.msra.mxu0 %v5811
        %8911 = vmatprep.subr.bf16.mxu0 %v5820
        %8912 = vmatpush1.bf16.msra.mxu0 %v5819
        %8913 = vmatprep.subr.bf16.mxu0 %v5828
        %8914 = vmatpush1.bf16.msra.mxu0 %v5827
        %8915 = vmatprep.subr.bf16.mxu0 %v5836
        %8916 = vmatpush1.bf16.msra.mxu0 %v5835
        %8917 = vmatprep.subr.bf16.mxu0 %v5844
        %8918 = vmatpush1.bf16.msra.mxu0 %v5843
        %8919 = vmatprep.subr.bf16.mxu0 %v5852
        %8920 = vmatpush1.bf16.msra.mxu0 %v5851
        %8921 = vmatprep.subr.bf16.mxu0 %v5860
        %8922 = vmatpush1.bf16.msra.mxu0 %v5859
        %8923 = vmatprep.subr.bf16.mxu0 %v5868
        %8924 = vmatpush1.bf16.msra.mxu0 %v5867
        %8925 = vmatprep.subr.bf16.mxu0 %v5876
        %8926 = vmatpush1.bf16.msra.mxu0 %v5875
        %8927 = vmatprep.subr.bf16.mxu0 %v5884
        %8928 = vmatpush1.bf16.msra.mxu0 %v5883
        %8929 = vmatprep.subr.bf16.mxu0 %v5892
        %8930 = vmatpush1.bf16.msra.mxu0 %v5891
        %8931 = vmatprep.subr.bf16.mxu0 %v5900
        %8932 = vmatpush1.bf16.msra.mxu0 %v5899
        %8933 = vmatprep.subr.bf16.mxu0 %v5908
        %8934 = vmatpush1.bf16.msra.mxu0 %v5907
        %8935 = vmatprep.subr.bf16.mxu0 %v5916
        %8936 = vmatpush1.bf16.msra.mxu0 %v5915
        %8937 = vmatprep.subr.bf16.mxu0 %v5924
        %8938 = vmatpush1.bf16.msra.mxu0 %v5923
        %8939 = vmatprep.subr.bf16.mxu0 %v5932
        %8940 = vmatpush1.bf16.msra.mxu0 %v5931
        %8941 = vmatprep.mubr.bf16.mxu0 %v675
        %8942 = vmatmul.mubr.bf16.gmra.mrb[0].mxu0 %v674
        %v8943 = vpop.f32.mrb[0].mxu0
        %v8944 = vadd.f32 %v8903, %v8943
        %v8945 = vpop.f32.mrb[0].mxu0
        %v8946 = vadd.f32 %v8905, %v8945
        %v8947 = vpop.f32.mrb[0].mxu0
        %v8948 = vpop.f32.mrb[0].mxu0
        %8949 = vdwg.mxu0
        %8950 = vmatprep.subr.bf16.mxu0 %v5940
        %8951 = vmatpush1.bf16.msra.mxu0 %v5939
        %8952 = vmatprep.subr.bf16.mxu0 %v5948
        %8953 = vmatpush1.bf16.msra.mxu0 %v5947
        %8954 = vmatprep.subr.bf16.mxu0 %v5956
        %8955 = vmatpush1.bf16.msra.mxu0 %v5955
        %8956 = vmatprep.subr.bf16.mxu0 %v5964
        %8957 = vmatpush1.bf16.msra.mxu0 %v5963
        %8958 = vmatprep.subr.bf16.mxu0 %v5972
        %8959 = vmatpush1.bf16.msra.mxu0 %v5971
        %8960 = vmatprep.subr.bf16.mxu0 %v5980
        %8961 = vmatpush1.bf16.msra.mxu0 %v5979
        %8962 = vmatprep.subr.bf16.mxu0 %v5988
        %8963 = vmatpush1.bf16.msra.mxu0 %v5987
        %8964 = vmatprep.subr.bf16.mxu0 %v5996
        %8965 = vmatpush1.bf16.msra.mxu0 %v5995
        %8966 = vmatprep.subr.bf16.mxu0 %v6004
        %8967 = vmatpush1.bf16.msra.mxu0 %v6003
        %8968 = vmatprep.subr.bf16.mxu0 %v6012
        %8969 = vmatpush1.bf16.msra.mxu0 %v6011
        %8970 = vmatprep.subr.bf16.mxu0 %v6020
        %8971 = vmatpush1.bf16.msra.mxu0 %v6019
        %8972 = vmatprep.subr.bf16.mxu0 %v6028
        %8973 = vmatpush1.bf16.msra.mxu0 %v6027
        %8974 = vmatprep.subr.bf16.mxu0 %v6036
        %8975 = vmatpush1.bf16.msra.mxu0 %v6035
        %8976 = vmatprep.subr.bf16.mxu0 %v6044
        %8977 = vmatpush1.bf16.msra.mxu0 %v6043
        %8978 = vmatprep.subr.bf16.mxu0 %v6052
        %8979 = vmatpush1.bf16.msra.mxu0 %v6051
        %8980 = vmatprep.subr.bf16.mxu0 %v6060
        %8981 = vmatpush1.bf16.msra.mxu0 %v6059
        %8982 = vmatprep.mubr.bf16.mxu0 %v677
        %8983 = vmatmul.mubr.bf16.gmra.mrb[0].mxu0 %v676
        %v8984 = vpop.f32.mrb[0].mxu0
        %v8985 = vadd.f32 %v8944, %v8984
        %v8986 = vpop.f32.mrb[0].mxu0
        %v8987 = vadd.f32 %v8946, %v8986
        %v8988 = vpop.f32.mrb[0].mxu0
        %v8989 = vpop.f32.mrb[0].mxu0
        %8990 = vdwg.mxu0
        %8991 = vmatprep.subr.bf16.mxu0 %v6068
        %8992 = vmatpush1.bf16.msra.mxu0 %v6067
        %8993 = vmatprep.subr.bf16.mxu0 %v6076
        %8994 = vmatpush1.bf16.msra.mxu0 %v6075
        %8995 = vmatprep.subr.bf16.mxu0 %v6084
        %8996 = vmatpush1.bf16.msra.mxu0 %v6083
        %8997 = vmatprep.subr.bf16.mxu0 %v6092
        %8998 = vmatpush1.bf16.msra.mxu0 %v6091
        %8999 = vmatprep.subr.bf16.mxu0 %v6100
        %9000 = vmatpush1.bf16.msra.mxu0 %v6099
        %9001 = vmatprep.subr.bf16.mxu0 %v6108
        %9002 = vmatpush1.bf16.msra.mxu0 %v6107
        %9003 = vmatprep.subr.bf16.mxu0 %v6116
        %9004 = vmatpush1.bf16.msra.mxu0 %v6115
        %9005 = vmatprep.subr.bf16.mxu0 %v6124
        %9006 = vmatpush1.bf16.msra.mxu0 %v6123
        %9007 = vmatprep.subr.bf16.mxu0 %v6132
        %9008 = vmatpush1.bf16.msra.mxu0 %v6131
        %9009 = vmatprep.subr.bf16.mxu0 %v6140
        %9010 = vmatpush1.bf16.msra.mxu0 %v6139
        %9011 = vmatprep.subr.bf16.mxu0 %v6148
        %9012 = vmatpush1.bf16.msra.mxu0 %v6147
        %9013 = vmatprep.subr.bf16.mxu0 %v6156
        %9014 = vmatpush1.bf16.msra.mxu0 %v6155
        %9015 = vmatprep.subr.bf16.mxu0 %v6164
        %9016 = vmatpush1.bf16.msra.mxu0 %v6163
        %9017 = vmatprep.subr.bf16.mxu0 %v6172
        %9018 = vmatpush1.bf16.msra.mxu0 %v6171
        %9019 = vmatprep.subr.bf16.mxu0 %v6180
        %9020 = vmatpush1.bf16.msra.mxu0 %v6179
        %9021 = vmatprep.subr.bf16.mxu0 %v6188
        %9022 = vmatpush1.bf16.msra.mxu0 %v6187
        %9023 = vmatprep.mubr.bf16.mxu0 %v679
        %9024 = vmatmul.mubr.bf16.gmra.mrb[0].mxu0 %v678
        %v9025 = vpop.f32.mrb[0].mxu0
        %v9026 = vadd.f32 %v8985, %v9025
        %v9027 = vpop.f32.mrb[0].mxu0
        %v9028 = vadd.f32 %v8987, %v9027
        %v9029 = vpop.f32.mrb[0].mxu0
        %v9030 = vpop.f32.mrb[0].mxu0
        %9031 = vdwg.mxu0
        %9032 = vmatprep.subr.bf16.mxu0 %v6196
        %9033 = vmatpush1.bf16.msra.mxu0 %v6195
        %9034 = vmatprep.subr.bf16.mxu0 %v6204
        %9035 = vmatpush1.bf16.msra.mxu0 %v6203
        %9036 = vmatprep.subr.bf16.mxu0 %v6212
        %9037 = vmatpush1.bf16.msra.mxu0 %v6211
        %9038 = vmatprep.subr.bf16.mxu0 %v6220
        %9039 = vmatpush1.bf16.msra.mxu0 %v6219
        %9040 = vmatprep.subr.bf16.mxu0 %v6228
        %9041 = vmatpush1.bf16.msra.mxu0 %v6227
        %9042 = vmatprep.subr.bf16.mxu0 %v6236
        %9043 = vmatpush1.bf16.msra.mxu0 %v6235
        %9044 = vmatprep.subr.bf16.mxu0 %v6244
        %9045 = vmatpush1.bf16.msra.mxu0 %v6243
        %9046 = vmatprep.subr.bf16.mxu0 %v6252
        %9047 = vmatpush1.bf16.msra.mxu0 %v6251
        %9048 = vmatprep.subr.bf16.mxu0 %v6260
        %9049 = vmatpush1.bf16.msra.mxu0 %v6259
        %9050 = vmatprep.subr.bf16.mxu0 %v6268
        %9051 = vmatpush1.bf16.msra.mxu0 %v6267
        %9052 = vmatprep.subr.bf16.mxu0 %v6276
        %9053 = vmatpush1.bf16.msra.mxu0 %v6275
        %9054 = vmatprep.subr.bf16.mxu0 %v6284
        %9055 = vmatpush1.bf16.msra.mxu0 %v6283
        %9056 = vmatprep.subr.bf16.mxu0 %v6292
        %9057 = vmatpush1.bf16.msra.mxu0 %v6291
        %9058 = vmatprep.subr.bf16.mxu0 %v6300
        %9059 = vmatpush1.bf16.msra.mxu0 %v6299
        %9060 = vmatprep.subr.bf16.mxu0 %v6308
        %9061 = vmatpush1.bf16.msra.mxu0 %v6307
        %9062 = vmatprep.subr.bf16.mxu0 %v6316
        %9063 = vmatpush1.bf16.msra.mxu0 %v6315
        %9064 = vmatprep.mubr.bf16.mxu0 %v681
        %9065 = vmatmul.mubr.bf16.gmra.mrb[0].mxu0 %v680
        %v9066 = vpop.f32.mrb[0].mxu0
        %v9067 = vadd.f32 %v9026, %v9066
        %v9068 = vpop.f32.mrb[0].mxu0
        %v9069 = vadd.f32 %v9028, %v9068
        %v9070 = vpop.f32.mrb[0].mxu0
        %v9071 = vpop.f32.mrb[0].mxu0
        %9072 = vdwg.mxu0
        %9073 = vmatprep.subr.bf16.mxu0 %v6324
        %9074 = vmatpush1.bf16.msra.mxu0 %v6323
        %9075 = vmatprep.subr.bf16.mxu0 %v6332
        %9076 = vmatpush1.bf16.msra.mxu0 %v6331
        %9077 = vmatprep.subr.bf16.mxu0 %v6340
        %9078 = vmatpush1.bf16.msra.mxu0 %v6339
        %9079 = vmatprep.subr.bf16.mxu0 %v6348
        %9080 = vmatpush1.bf16.msra.mxu0 %v6347
        %9081 = vmatprep.subr.bf16.mxu0 %v6356
        %9082 = vmatpush1.bf16.msra.mxu0 %v6355
        %9083 = vmatprep.subr.bf16.mxu0 %v6364
        %9084 = vmatpush1.bf16.msra.mxu0 %v6363
        %9085 = vmatprep.subr.bf16.mxu0 %v6372
        %9086 = vmatpush1.bf16.msra.mxu0 %v6371
        %9087 = vmatprep.subr.bf16.mxu0 %v6380
        %9088 = vmatpush1.bf16.msra.mxu0 %v6379
        %9089 = vmatprep.subr.bf16.mxu0 %v6388
        %9090 = vmatpush1.bf16.msra.mxu0 %v6387
        %9091 = vmatprep.subr.bf16.mxu0 %v6396
        %9092 = vmatpush1.bf16.msra.mxu0 %v6395
        %9093 = vmatprep.subr.bf16.mxu0 %v6404
        %9094 = vmatpush1.bf16.msra.mxu0 %v6403
        %9095 = vmatprep.subr.bf16.mxu0 %v6412
        %9096 = vmatpush1.bf16.msra.mxu0 %v6411
        %9097 = vmatprep.subr.bf16.mxu0 %v6420
        %9098 = vmatpush1.bf16.msra.mxu0 %v6419
        %9099 = vmatprep.subr.bf16.mxu0 %v6428
        %9100 = vmatpush1.bf16.msra.mxu0 %v6427
        %9101 = vmatprep.subr.bf16.mxu0 %v6436
        %9102 = vmatpush1.bf16.msra.mxu0 %v6435
        %9103 = vmatprep.subr.bf16.mxu0 %v6444
        %9104 = vmatpush1.bf16.msra.mxu0 %v6443
        %9105 = vmatprep.mubr.bf16.mxu0 %v683
        %9106 = vmatmul.mubr.bf16.gmra.mrb[0].mxu0 %v682
        %v9107 = vpop.f32.mrb[0].mxu0
        %v9108 = vadd.f32 %v9067, %v9107
        %v9109 = vpop.f32.mrb[0].mxu0
        %v9110 = vadd.f32 %v9069, %v9109
        %v9111 = vpop.f32.mrb[0].mxu0
        %v9112 = vpop.f32.mrb[0].mxu0
        %9113 = vdwg.mxu0
        %vm9114 = vcmp.gt.f32.partialorder %v8001, 0.0
        %vm9115 = vcmp.gt.f32.partialorder %v8003, 0.0
        %vm9116 = vcmp.gt.f32.partialorder %v8370, 0.0
        %vm9117 = vcmp.gt.f32.partialorder %v8372, 0.0
        %vm9118 = vcmp.gt.f32.partialorder %v8739, 0.0
        %vm9119 = vcmp.gt.f32.partialorder %v8741, 0.0
        %vm9120 = vcmp.gt.f32.partialorder %v9108, 0.0
        %vm9121 = vcmp.gt.f32.partialorder %v9110, 0.0
        %v9122 = vmul.f32 %v8001, 0.01
        %v9123 = vmul.f32 %v8003, 0.01
        %v9124 = vmul.f32 %v8370, 0.01
        %v9125 = vmul.f32 %v8372, 0.01
        %v9126 = vmul.f32 %v8739, 0.01
        %v9127 = vmul.f32 %v8741, 0.01
        %v9128 = vmul.f32 %v9108, 0.01
        %v9129 = vmul.f32 %v9110, 0.01
        %v9130 = vsel %vm9114, %v8001, %v9122
        %v9131 = vsel %vm9115, %v8003, %v9123
        %v9132 = vsel %vm9116, %v8370, %v9124
        %v9133 = vsel %vm9117, %v8372, %v9125
        %v9134 = vsel %vm9118, %v8739, %v9126
        %v9135 = vsel %vm9119, %v8741, %v9127
        %v9136 = vsel %vm9120, %v9108, %v9128
        %v9137 = vsel %vm9121, %v9110, %v9129
        %v9138 = vpack.c.bf16 %v9130, %v9130
        %v9139 = vpack.c.bf16 %v9131, %v9131
        %v9140 = vpack.c.bf16 %v9132, %v9132
        %v9141 = vpack.c.bf16 %v9133, %v9133
        %v9142 = vpack.c.bf16 %v9134, %v9134
        %v9143 = vpack.c.bf16 %v9135, %v9135
        %v9144 = vpack.c.bf16 %v9136, %v9136
        %v9145 = vpack.c.bf16 %v9137, %v9137
        %v9146 = vld [vmem:[#allocation7] sm:$0xff]
        %v9147 = vld [vmem:[#allocation7 + $0x8] sm:$0xff]
        %v9148 = vld [vmem:[#allocation7 + $0x10] sm:$0xff]
        %v9149 = vld [vmem:[#allocation7 + $0x18] sm:$0xff]
        %v9150 = vld [vmem:[#allocation7 + $0x20] sm:$0xff]
        %v9151 = vld [vmem:[#allocation7 + $0x28] sm:$0xff]
        %v9152 = vld [vmem:[#allocation7 + $0x30] sm:$0xff]
        %v9153 = vld [vmem:[#allocation7 + $0x38] sm:$0xff]
        %v9154 = vld [vmem:[#allocation7 + $0x40] sm:$0xff]
        %v9155 = vld [vmem:[#allocation7 + $0x48] sm:$0xff]
        %v9156 = vld [vmem:[#allocation7 + $0x50] sm:$0xff]
        %v9157 = vld [vmem:[#allocation7 + $0x58] sm:$0xff]
        %v9158 = vld [vmem:[#allocation7 + $0x60] sm:$0xff]
        %v9159 = vld [vmem:[#allocation7 + $0x68] sm:$0xff]
        %v9160 = vld [vmem:[#allocation7 + $0x70] sm:$0xff]
        %v9161 = vld [vmem:[#allocation7 + $0x78] sm:$0xff]
        %v9162 = vld [vmem:[#allocation7 + $0x80] sm:$0xff]
        %v9163 = vld [vmem:[#allocation7 + $0x88] sm:$0xff]
        %v9164 = vld [vmem:[#allocation7 + $0x90] sm:$0xff]
        %v9165 = vld [vmem:[#allocation7 + $0x98] sm:$0xff]
        %v9166 = vld [vmem:[#allocation7 + $0xa0] sm:$0xff]
        %v9167 = vld [vmem:[#allocation7 + $0xa8] sm:$0xff]
        %v9168 = vld [vmem:[#allocation7 + $0xb0] sm:$0xff]
        %v9169 = vld [vmem:[#allocation7 + $0xb8] sm:$0xff]
        %v9170 = vld [vmem:[#allocation7 + $0xc0] sm:$0xff]
        %v9171 = vld [vmem:[#allocation7 + $0xc8] sm:$0xff]
        %v9172 = vld [vmem:[#allocation7 + $0xd0] sm:$0xff]
        %v9173 = vld [vmem:[#allocation7 + $0xd8] sm:$0xff]
        %v9174 = vld [vmem:[#allocation7 + $0xe0] sm:$0xff]
        %v9175 = vld [vmem:[#allocation7 + $0xe8] sm:$0xff]
        %v9176 = vld [vmem:[#allocation7 + $0xf0] sm:$0xff]
        %v9177 = vld [vmem:[#allocation7 + $0xf8] sm:$0xff]
        %v9178 = vld [vmem:[#allocation7 + $0x100] sm:$0xff]
        %v9179 = vld [vmem:[#allocation7 + $0x108] sm:$0xff]
        %v9180 = vld [vmem:[#allocation7 + $0x110] sm:$0xff]
        %v9181 = vld [vmem:[#allocation7 + $0x118] sm:$0xff]
        %v9182 = vld [vmem:[#allocation7 + $0x120] sm:$0xff]
        %v9183 = vld [vmem:[#allocation7 + $0x128] sm:$0xff]
        %v9184 = vld [vmem:[#allocation7 + $0x130] sm:$0xff]
        %v9185 = vld [vmem:[#allocation7 + $0x138] sm:$0xff]
        %v9186 = vld [vmem:[#allocation7 + $0x140] sm:$0xff]
        %v9187 = vld [vmem:[#allocation7 + $0x148] sm:$0xff]
        %v9188 = vld [vmem:[#allocation7 + $0x150] sm:$0xff]
        %v9189 = vld [vmem:[#allocation7 + $0x158] sm:$0xff]
        %v9190 = vld [vmem:[#allocation7 + $0x160] sm:$0xff]
        %v9191 = vld [vmem:[#allocation7 + $0x168] sm:$0xff]
        %v9192 = vld [vmem:[#allocation7 + $0x170] sm:$0xff]
        %v9193 = vld [vmem:[#allocation7 + $0x178] sm:$0xff]
        %v9194 = vld [vmem:[#allocation7 + $0x180] sm:$0xff]
        %v9195 = vld [vmem:[#allocation7 + $0x188] sm:$0xff]
        %v9196 = vld [vmem:[#allocation7 + $0x190] sm:$0xff]
        %v9197 = vld [vmem:[#allocation7 + $0x198] sm:$0xff]
        %v9198 = vld [vmem:[#allocation7 + $0x1a0] sm:$0xff]
        %v9199 = vld [vmem:[#allocation7 + $0x1a8] sm:$0xff]
        %v9200 = vld [vmem:[#allocation7 + $0x1b0] sm:$0xff]
        %v9201 = vld [vmem:[#allocation7 + $0x1b8] sm:$0xff]
        %v9202 = vld [vmem:[#allocation7 + $0x1c0] sm:$0xff]
        %v9203 = vld [vmem:[#allocation7 + $0x1c8] sm:$0xff]
        %v9204 = vld [vmem:[#allocation7 + $0x1d0] sm:$0xff]
        %v9205 = vld [vmem:[#allocation7 + $0x1d8] sm:$0xff]
        %v9206 = vld [vmem:[#allocation7 + $0x1e0] sm:$0xff]
        %v9207 = vld [vmem:[#allocation7 + $0x1e8] sm:$0xff]
        %v9208 = vld [vmem:[#allocation7 + $0x1f0] sm:$0xff]
        %v9209 = vld [vmem:[#allocation7 + $0x1f8] sm:$0xff]
        %v9210 = vld [vmem:[#allocation7 + $0x200] sm:$0xff]
        %v9211 = vld [vmem:[#allocation7 + $0x208] sm:$0xff]
        %v9212 = vld [vmem:[#allocation7 + $0x210] sm:$0xff]
        %v9213 = vld [vmem:[#allocation7 + $0x218] sm:$0xff]
        %v9214 = vld [vmem:[#allocation7 + $0x220] sm:$0xff]
        %v9215 = vld [vmem:[#allocation7 + $0x228] sm:$0xff]
        %v9216 = vld [vmem:[#allocation7 + $0x230] sm:$0xff]
        %v9217 = vld [vmem:[#allocation7 + $0x238] sm:$0xff]
        %v9218 = vld [vmem:[#allocation7 + $0x240] sm:$0xff]
        %v9219 = vld [vmem:[#allocation7 + $0x248] sm:$0xff]
        %v9220 = vld [vmem:[#allocation7 + $0x250] sm:$0xff]
        %v9221 = vld [vmem:[#allocation7 + $0x258] sm:$0xff]
        %v9222 = vld [vmem:[#allocation7 + $0x260] sm:$0xff]
        %v9223 = vld [vmem:[#allocation7 + $0x268] sm:$0xff]
        %v9224 = vld [vmem:[#allocation7 + $0x270] sm:$0xff]
        %v9225 = vld [vmem:[#allocation7 + $0x278] sm:$0xff]
        %v9226 = vld [vmem:[#allocation7 + $0x280] sm:$0xff]
        %v9227 = vld [vmem:[#allocation7 + $0x288] sm:$0xff]
        %v9228 = vld [vmem:[#allocation7 + $0x290] sm:$0xff]
        %v9229 = vld [vmem:[#allocation7 + $0x298] sm:$0xff]
        %v9230 = vld [vmem:[#allocation7 + $0x2a0] sm:$0xff]
        %v9231 = vld [vmem:[#allocation7 + $0x2a8] sm:$0xff]
        %v9232 = vld [vmem:[#allocation7 + $0x2b0] sm:$0xff]
        %v9233 = vld [vmem:[#allocation7 + $0x2b8] sm:$0xff]
        %v9234 = vld [vmem:[#allocation7 + $0x2c0] sm:$0xff]
        %v9235 = vld [vmem:[#allocation7 + $0x2c8] sm:$0xff]
        %v9236 = vld [vmem:[#allocation7 + $0x2d0] sm:$0xff]
        %v9237 = vld [vmem:[#allocation7 + $0x2d8] sm:$0xff]
        %v9238 = vld [vmem:[#allocation7 + $0x2e0] sm:$0xff]
        %v9239 = vld [vmem:[#allocation7 + $0x2e8] sm:$0xff]
        %v9240 = vld [vmem:[#allocation7 + $0x2f0] sm:$0xff]
        %v9241 = vld [vmem:[#allocation7 + $0x2f8] sm:$0xff]
        %v9242 = vld [vmem:[#allocation7 + $0x300] sm:$0xff]
        %v9243 = vld [vmem:[#allocation7 + $0x308] sm:$0xff]
        %v9244 = vld [vmem:[#allocation7 + $0x310] sm:$0xff]
        %v9245 = vld [vmem:[#allocation7 + $0x318] sm:$0xff]
        %v9246 = vld [vmem:[#allocation7 + $0x320] sm:$0xff]
        %v9247 = vld [vmem:[#allocation7 + $0x328] sm:$0xff]
        %v9248 = vld [vmem:[#allocation7 + $0x330] sm:$0xff]
        %v9249 = vld [vmem:[#allocation7 + $0x338] sm:$0xff]
        %v9250 = vld [vmem:[#allocation7 + $0x340] sm:$0xff]
        %v9251 = vld [vmem:[#allocation7 + $0x348] sm:$0xff]
        %v9252 = vld [vmem:[#allocation7 + $0x350] sm:$0xff]
        %v9253 = vld [vmem:[#allocation7 + $0x358] sm:$0xff]
        %v9254 = vld [vmem:[#allocation7 + $0x360] sm:$0xff]
        %v9255 = vld [vmem:[#allocation7 + $0x368] sm:$0xff]
        %v9256 = vld [vmem:[#allocation7 + $0x370] sm:$0xff]
        %v9257 = vld [vmem:[#allocation7 + $0x378] sm:$0xff]
        %v9258 = vld [vmem:[#allocation7 + $0x380] sm:$0xff]
        %v9259 = vld [vmem:[#allocation7 + $0x388] sm:$0xff]
        %v9260 = vld [vmem:[#allocation7 + $0x390] sm:$0xff]
        %v9261 = vld [vmem:[#allocation7 + $0x398] sm:$0xff]
        %v9262 = vld [vmem:[#allocation7 + $0x3a0] sm:$0xff]
        %v9263 = vld [vmem:[#allocation7 + $0x3a8] sm:$0xff]
        %v9264 = vld [vmem:[#allocation7 + $0x3b0] sm:$0xff]
        %v9265 = vld [vmem:[#allocation7 + $0x3b8] sm:$0xff]
        %v9266 = vld [vmem:[#allocation7 + $0x3c0] sm:$0xff]
        %v9267 = vld [vmem:[#allocation7 + $0x3c8] sm:$0xff]
        %v9268 = vld [vmem:[#allocation7 + $0x3d0] sm:$0xff]
        %v9269 = vld [vmem:[#allocation7 + $0x3d8] sm:$0xff]
        %v9270 = vld [vmem:[#allocation7 + $0x3e0] sm:$0xff]
        %v9271 = vld [vmem:[#allocation7 + $0x3e8] sm:$0xff]
        %v9272 = vld [vmem:[#allocation7 + $0x3f0] sm:$0xff]
        %v9273 = vld [vmem:[#allocation7 + $0x3f8] sm:$0xff]
        %v9274 = vld [vmem:[#allocation7 + $0x400] sm:$0xff]
        %v9275 = vld [vmem:[#allocation7 + $0x408] sm:$0xff]
        %v9276 = vld [vmem:[#allocation7 + $0x410] sm:$0xff]
        %v9277 = vld [vmem:[#allocation7 + $0x418] sm:$0xff]
        %v9278 = vld [vmem:[#allocation7 + $0x420] sm:$0xff]
        %v9279 = vld [vmem:[#allocation7 + $0x428] sm:$0xff]
        %v9280 = vld [vmem:[#allocation7 + $0x430] sm:$0xff]
        %v9281 = vld [vmem:[#allocation7 + $0x438] sm:$0xff]
        %v9282 = vld [vmem:[#allocation7 + $0x440] sm:$0xff]
        %v9283 = vld [vmem:[#allocation7 + $0x448] sm:$0xff]
        %v9284 = vld [vmem:[#allocation7 + $0x450] sm:$0xff]
        %v9285 = vld [vmem:[#allocation7 + $0x458] sm:$0xff]
        %v9286 = vld [vmem:[#allocation7 + $0x460] sm:$0xff]
        %v9287 = vld [vmem:[#allocation7 + $0x468] sm:$0xff]
        %v9288 = vld [vmem:[#allocation7 + $0x470] sm:$0xff]
        %v9289 = vld [vmem:[#allocation7 + $0x478] sm:$0xff]
        %v9290 = vld [vmem:[#allocation7 + $0x480] sm:$0xff]
        %v9291 = vld [vmem:[#allocation7 + $0x488] sm:$0xff]
        %v9292 = vld [vmem:[#allocation7 + $0x490] sm:$0xff]
        %v9293 = vld [vmem:[#allocation7 + $0x498] sm:$0xff]
        %v9294 = vld [vmem:[#allocation7 + $0x4a0] sm:$0xff]
        %v9295 = vld [vmem:[#allocation7 + $0x4a8] sm:$0xff]
        %v9296 = vld [vmem:[#allocation7 + $0x4b0] sm:$0xff]
        %v9297 = vld [vmem:[#allocation7 + $0x4b8] sm:$0xff]
        %v9298 = vld [vmem:[#allocation7 + $0x4c0] sm:$0xff]
        %v9299 = vld [vmem:[#allocation7 + $0x4c8] sm:$0xff]
        %v9300 = vld [vmem:[#allocation7 + $0x4d0] sm:$0xff]
        %v9301 = vld [vmem:[#allocation7 + $0x4d8] sm:$0xff]
        %v9302 = vld [vmem:[#allocation7 + $0x4e0] sm:$0xff]
        %v9303 = vld [vmem:[#allocation7 + $0x4e8] sm:$0xff]
        %v9304 = vld [vmem:[#allocation7 + $0x4f0] sm:$0xff]
        %v9305 = vld [vmem:[#allocation7 + $0x4f8] sm:$0xff]
        %v9306 = vld [vmem:[#allocation7 + $0x500] sm:$0xff]
        %v9307 = vld [vmem:[#allocation7 + $0x508] sm:$0xff]
        %v9308 = vld [vmem:[#allocation7 + $0x510] sm:$0xff]
        %v9309 = vld [vmem:[#allocation7 + $0x518] sm:$0xff]
        %v9310 = vld [vmem:[#allocation7 + $0x520] sm:$0xff]
        %v9311 = vld [vmem:[#allocation7 + $0x528] sm:$0xff]
        %v9312 = vld [vmem:[#allocation7 + $0x530] sm:$0xff]
        %v9313 = vld [vmem:[#allocation7 + $0x538] sm:$0xff]
        %v9314 = vld [vmem:[#allocation7 + $0x540] sm:$0xff]
        %v9315 = vld [vmem:[#allocation7 + $0x548] sm:$0xff]
        %v9316 = vld [vmem:[#allocation7 + $0x550] sm:$0xff]
        %v9317 = vld [vmem:[#allocation7 + $0x558] sm:$0xff]
        %v9318 = vld [vmem:[#allocation7 + $0x560] sm:$0xff]
        %v9319 = vld [vmem:[#allocation7 + $0x568] sm:$0xff]
        %v9320 = vld [vmem:[#allocation7 + $0x570] sm:$0xff]
        %v9321 = vld [vmem:[#allocation7 + $0x578] sm:$0xff]
        %v9322 = vld [vmem:[#allocation7 + $0x580] sm:$0xff]
        %v9323 = vld [vmem:[#allocation7 + $0x588] sm:$0xff]
        %v9324 = vld [vmem:[#allocation7 + $0x590] sm:$0xff]
        %v9325 = vld [vmem:[#allocation7 + $0x598] sm:$0xff]
        %v9326 = vld [vmem:[#allocation7 + $0x5a0] sm:$0xff]
        %v9327 = vld [vmem:[#allocation7 + $0x5a8] sm:$0xff]
        %v9328 = vld [vmem:[#allocation7 + $0x5b0] sm:$0xff]
        %v9329 = vld [vmem:[#allocation7 + $0x5b8] sm:$0xff]
        %v9330 = vld [vmem:[#allocation7 + $0x5c0] sm:$0xff]
        %v9331 = vld [vmem:[#allocation7 + $0x5c8] sm:$0xff]
        %v9332 = vld [vmem:[#allocation7 + $0x5d0] sm:$0xff]
        %v9333 = vld [vmem:[#allocation7 + $0x5d8] sm:$0xff]
        %v9334 = vld [vmem:[#allocation7 + $0x5e0] sm:$0xff]
        %v9335 = vld [vmem:[#allocation7 + $0x5e8] sm:$0xff]
        %v9336 = vld [vmem:[#allocation7 + $0x5f0] sm:$0xff]
        %v9337 = vld [vmem:[#allocation7 + $0x5f8] sm:$0xff]
        %v9338 = vld [vmem:[#allocation7 + $0x600] sm:$0xff]
        %v9339 = vld [vmem:[#allocation7 + $0x608] sm:$0xff]
        %v9340 = vld [vmem:[#allocation7 + $0x610] sm:$0xff]
        %v9341 = vld [vmem:[#allocation7 + $0x618] sm:$0xff]
        %v9342 = vld [vmem:[#allocation7 + $0x620] sm:$0xff]
        %v9343 = vld [vmem:[#allocation7 + $0x628] sm:$0xff]
        %v9344 = vld [vmem:[#allocation7 + $0x630] sm:$0xff]
        %v9345 = vld [vmem:[#allocation7 + $0x638] sm:$0xff]
        %v9346 = vld [vmem:[#allocation7 + $0x640] sm:$0xff]
        %v9347 = vld [vmem:[#allocation7 + $0x648] sm:$0xff]
        %v9348 = vld [vmem:[#allocation7 + $0x650] sm:$0xff]
        %v9349 = vld [vmem:[#allocation7 + $0x658] sm:$0xff]
        %v9350 = vld [vmem:[#allocation7 + $0x660] sm:$0xff]
        %v9351 = vld [vmem:[#allocation7 + $0x668] sm:$0xff]
        %v9352 = vld [vmem:[#allocation7 + $0x670] sm:$0xff]
        %v9353 = vld [vmem:[#allocation7 + $0x678] sm:$0xff]
        %v9354 = vld [vmem:[#allocation7 + $0x680] sm:$0xff]
        %v9355 = vld [vmem:[#allocation7 + $0x688] sm:$0xff]
        %v9356 = vld [vmem:[#allocation7 + $0x690] sm:$0xff]
        %v9357 = vld [vmem:[#allocation7 + $0x698] sm:$0xff]
        %v9358 = vld [vmem:[#allocation7 + $0x6a0] sm:$0xff]
        %v9359 = vld [vmem:[#allocation7 + $0x6a8] sm:$0xff]
        %v9360 = vld [vmem:[#allocation7 + $0x6b0] sm:$0xff]
        %v9361 = vld [vmem:[#allocation7 + $0x6b8] sm:$0xff]
        %v9362 = vld [vmem:[#allocation7 + $0x6c0] sm:$0xff]
        %v9363 = vld [vmem:[#allocation7 + $0x6c8] sm:$0xff]
        %v9364 = vld [vmem:[#allocation7 + $0x6d0] sm:$0xff]
        %v9365 = vld [vmem:[#allocation7 + $0x6d8] sm:$0xff]
        %v9366 = vld [vmem:[#allocation7 + $0x6e0] sm:$0xff]
        %v9367 = vld [vmem:[#allocation7 + $0x6e8] sm:$0xff]
        %v9368 = vld [vmem:[#allocation7 + $0x6f0] sm:$0xff]
        %v9369 = vld [vmem:[#allocation7 + $0x6f8] sm:$0xff]
        %v9370 = vld [vmem:[#allocation7 + $0x700] sm:$0xff]
        %v9371 = vld [vmem:[#allocation7 + $0x708] sm:$0xff]
        %v9372 = vld [vmem:[#allocation7 + $0x710] sm:$0xff]
        %v9373 = vld [vmem:[#allocation7 + $0x718] sm:$0xff]
        %v9374 = vld [vmem:[#allocation7 + $0x720] sm:$0xff]
        %v9375 = vld [vmem:[#allocation7 + $0x728] sm:$0xff]
        %v9376 = vld [vmem:[#allocation7 + $0x730] sm:$0xff]
        %v9377 = vld [vmem:[#allocation7 + $0x738] sm:$0xff]
        %v9378 = vld [vmem:[#allocation7 + $0x740] sm:$0xff]
        %v9379 = vld [vmem:[#allocation7 + $0x748] sm:$0xff]
        %v9380 = vld [vmem:[#allocation7 + $0x750] sm:$0xff]
        %v9381 = vld [vmem:[#allocation7 + $0x758] sm:$0xff]
        %v9382 = vld [vmem:[#allocation7 + $0x760] sm:$0xff]
        %v9383 = vld [vmem:[#allocation7 + $0x768] sm:$0xff]
        %v9384 = vld [vmem:[#allocation7 + $0x770] sm:$0xff]
        %v9385 = vld [vmem:[#allocation7 + $0x778] sm:$0xff]
        %v9386 = vld [vmem:[#allocation7 + $0x780] sm:$0xff]
        %v9387 = vld [vmem:[#allocation7 + $0x788] sm:$0xff]
        %v9388 = vld [vmem:[#allocation7 + $0x790] sm:$0xff]
        %v9389 = vld [vmem:[#allocation7 + $0x798] sm:$0xff]
        %v9390 = vld [vmem:[#allocation7 + $0x7a0] sm:$0xff]
        %v9391 = vld [vmem:[#allocation7 + $0x7a8] sm:$0xff]
        %v9392 = vld [vmem:[#allocation7 + $0x7b0] sm:$0xff]
        %v9393 = vld [vmem:[#allocation7 + $0x7b8] sm:$0xff]
        %v9394 = vld [vmem:[#allocation7 + $0x7c0] sm:$0xff]
        %v9395 = vld [vmem:[#allocation7 + $0x7c8] sm:$0xff]
        %v9396 = vld [vmem:[#allocation7 + $0x7d0] sm:$0xff]
        %v9397 = vld [vmem:[#allocation7 + $0x7d8] sm:$0xff]
        %v9398 = vld [vmem:[#allocation7 + $0x7e0] sm:$0xff]
        %v9399 = vld [vmem:[#allocation7 + $0x7e8] sm:$0xff]
        %v9400 = vld [vmem:[#allocation7 + $0x7f0] sm:$0xff]
        %v9401 = vld [vmem:[#allocation7 + $0x7f8] sm:$0xff]
        %v9402 = vld [vmem:[#allocation8] sm:$0xf]
        %v9659 = vunpack.c.l.b16 %v9146
        %v9660 = vunpack.c.h.b16 %v9146
        %v9661 = vunpack.c.l.b16 %v9147
        %v9662 = vunpack.c.h.b16 %v9147
        %v9663 = vunpack.c.l.b16 %v9148
        %v9664 = vunpack.c.h.b16 %v9148
        %v9665 = vunpack.c.l.b16 %v9149
        %v9666 = vunpack.c.h.b16 %v9149
        %v9667 = vunpack.c.l.b16 %v9150
        %v9668 = vunpack.c.h.b16 %v9150
        %v9669 = vunpack.c.l.b16 %v9151
        %v9670 = vunpack.c.h.b16 %v9151
        %v9671 = vunpack.c.l.b16 %v9152
        %v9672 = vunpack.c.h.b16 %v9152
        %v9673 = vunpack.c.l.b16 %v9153
        %v9674 = vunpack.c.h.b16 %v9153
        %v9675 = vunpack.c.l.b16 %v9154
        %v9676 = vunpack.c.h.b16 %v9154
        %v9677 = vunpack.c.l.b16 %v9155
        %v9678 = vunpack.c.h.b16 %v9155
        %v9679 = vunpack.c.l.b16 %v9156
        %v9680 = vunpack.c.h.b16 %v9156
        %v9681 = vunpack.c.l.b16 %v9157
        %v9682 = vunpack.c.h.b16 %v9157
        %v9683 = vunpack.c.l.b16 %v9158
        %v9684 = vunpack.c.h.b16 %v9158
        %v9685 = vunpack.c.l.b16 %v9159
        %v9686 = vunpack.c.h.b16 %v9159
        %v9687 = vunpack.c.l.b16 %v9160
        %v9688 = vunpack.c.h.b16 %v9160
        %v9689 = vunpack.c.l.b16 %v9161
        %v9690 = vunpack.c.h.b16 %v9161
        %v9691 = vunpack.c.l.b16 %v9162
        %v9692 = vunpack.c.h.b16 %v9162
        %v9693 = vunpack.c.l.b16 %v9163
        %v9694 = vunpack.c.h.b16 %v9163
        %v9695 = vunpack.c.l.b16 %v9164
        %v9696 = vunpack.c.h.b16 %v9164
        %v9697 = vunpack.c.l.b16 %v9165
        %v9698 = vunpack.c.h.b16 %v9165
        %v9699 = vunpack.c.l.b16 %v9166
        %v9700 = vunpack.c.h.b16 %v9166
        %v9701 = vunpack.c.l.b16 %v9167
        %v9702 = vunpack.c.h.b16 %v9167
        %v9703 = vunpack.c.l.b16 %v9168
        %v9704 = vunpack.c.h.b16 %v9168
        %v9705 = vunpack.c.l.b16 %v9169
        %v9706 = vunpack.c.h.b16 %v9169
        %v9707 = vunpack.c.l.b16 %v9170
        %v9708 = vunpack.c.h.b16 %v9170
        %v9709 = vunpack.c.l.b16 %v9171
        %v9710 = vunpack.c.h.b16 %v9171
        %v9711 = vunpack.c.l.b16 %v9172
        %v9712 = vunpack.c.h.b16 %v9172
        %v9713 = vunpack.c.l.b16 %v9173
        %v9714 = vunpack.c.h.b16 %v9173
        %v9715 = vunpack.c.l.b16 %v9174
        %v9716 = vunpack.c.h.b16 %v9174
        %v9717 = vunpack.c.l.b16 %v9175
        %v9718 = vunpack.c.h.b16 %v9175
        %v9719 = vunpack.c.l.b16 %v9176
        %v9720 = vunpack.c.h.b16 %v9176
        %v9721 = vunpack.c.l.b16 %v9177
        %v9722 = vunpack.c.h.b16 %v9177
        %v9723 = vunpack.c.l.b16 %v9178
        %v9724 = vunpack.c.h.b16 %v9178
        %v9725 = vunpack.c.l.b16 %v9179
        %v9726 = vunpack.c.h.b16 %v9179
        %v9727 = vunpack.c.l.b16 %v9180
        %v9728 = vunpack.c.h.b16 %v9180
        %v9729 = vunpack.c.l.b16 %v9181
        %v9730 = vunpack.c.h.b16 %v9181
        %v9731 = vunpack.c.l.b16 %v9182
        %v9732 = vunpack.c.h.b16 %v9182
        %v9733 = vunpack.c.l.b16 %v9183
        %v9734 = vunpack.c.h.b16 %v9183
        %v9735 = vunpack.c.l.b16 %v9184
        %v9736 = vunpack.c.h.b16 %v9184
        %v9737 = vunpack.c.l.b16 %v9185
        %v9738 = vunpack.c.h.b16 %v9185
        %v9739 = vunpack.c.l.b16 %v9186
        %v9740 = vunpack.c.h.b16 %v9186
        %v9741 = vunpack.c.l.b16 %v9187
        %v9742 = vunpack.c.h.b16 %v9187
        %v9743 = vunpack.c.l.b16 %v9188
        %v9744 = vunpack.c.h.b16 %v9188
        %v9745 = vunpack.c.l.b16 %v9189
        %v9746 = vunpack.c.h.b16 %v9189
        %v9747 = vunpack.c.l.b16 %v9190
        %v9748 = vunpack.c.h.b16 %v9190
        %v9749 = vunpack.c.l.b16 %v9191
        %v9750 = vunpack.c.h.b16 %v9191
        %v9751 = vunpack.c.l.b16 %v9192
        %v9752 = vunpack.c.h.b16 %v9192
        %v9753 = vunpack.c.l.b16 %v9193
        %v9754 = vunpack.c.h.b16 %v9193
        %v9755 = vunpack.c.l.b16 %v9194
        %v9756 = vunpack.c.h.b16 %v9194
        %v9757 = vunpack.c.l.b16 %v9195
        %v9758 = vunpack.c.h.b16 %v9195
        %v9759 = vunpack.c.l.b16 %v9196
        %v9760 = vunpack.c.h.b16 %v9196
        %v9761 = vunpack.c.l.b16 %v9197
        %v9762 = vunpack.c.h.b16 %v9197
        %v9763 = vunpack.c.l.b16 %v9198
        %v9764 = vunpack.c.h.b16 %v9198
        %v9765 = vunpack.c.l.b16 %v9199
        %v9766 = vunpack.c.h.b16 %v9199
        %v9767 = vunpack.c.l.b16 %v9200
        %v9768 = vunpack.c.h.b16 %v9200
        %v9769 = vunpack.c.l.b16 %v9201
        %v9770 = vunpack.c.h.b16 %v9201
        %v9771 = vunpack.c.l.b16 %v9202
        %v9772 = vunpack.c.h.b16 %v9202
        %v9773 = vunpack.c.l.b16 %v9203
        %v9774 = vunpack.c.h.b16 %v9203
        %v9775 = vunpack.c.l.b16 %v9204
        %v9776 = vunpack.c.h.b16 %v9204
        %v9777 = vunpack.c.l.b16 %v9205
        %v9778 = vunpack.c.h.b16 %v9205
        %v9779 = vunpack.c.l.b16 %v9206
        %v9780 = vunpack.c.h.b16 %v9206
        %v9781 = vunpack.c.l.b16 %v9207
        %v9782 = vunpack.c.h.b16 %v9207
        %v9783 = vunpack.c.l.b16 %v9208
        %v9784 = vunpack.c.h.b16 %v9208
        %v9785 = vunpack.c.l.b16 %v9209
        %v9786 = vunpack.c.h.b16 %v9209
        %v9787 = vunpack.c.l.b16 %v9210
        %v9788 = vunpack.c.h.b16 %v9210
        %v9789 = vunpack.c.l.b16 %v9211
        %v9790 = vunpack.c.h.b16 %v9211
        %v9791 = vunpack.c.l.b16 %v9212
        %v9792 = vunpack.c.h.b16 %v9212
        %v9793 = vunpack.c.l.b16 %v9213
        %v9794 = vunpack.c.h.b16 %v9213
        %v9795 = vunpack.c.l.b16 %v9214
        %v9796 = vunpack.c.h.b16 %v9214
        %v9797 = vunpack.c.l.b16 %v9215
        %v9798 = vunpack.c.h.b16 %v9215
        %v9799 = vunpack.c.l.b16 %v9216
        %v9800 = vunpack.c.h.b16 %v9216
        %v9801 = vunpack.c.l.b16 %v9217
        %v9802 = vunpack.c.h.b16 %v9217
        %v9803 = vunpack.c.l.b16 %v9218
        %v9804 = vunpack.c.h.b16 %v9218
        %v9805 = vunpack.c.l.b16 %v9219
        %v9806 = vunpack.c.h.b16 %v9219
        %v9807 = vunpack.c.l.b16 %v9220
        %v9808 = vunpack.c.h.b16 %v9220
        %v9809 = vunpack.c.l.b16 %v9221
        %v9810 = vunpack.c.h.b16 %v9221
        %v9811 = vunpack.c.l.b16 %v9222
        %v9812 = vunpack.c.h.b16 %v9222
        %v9813 = vunpack.c.l.b16 %v9223
        %v9814 = vunpack.c.h.b16 %v9223
        %v9815 = vunpack.c.l.b16 %v9224
        %v9816 = vunpack.c.h.b16 %v9224
        %v9817 = vunpack.c.l.b16 %v9225
        %v9818 = vunpack.c.h.b16 %v9225
        %v9819 = vunpack.c.l.b16 %v9226
        %v9820 = vunpack.c.h.b16 %v9226
        %v9821 = vunpack.c.l.b16 %v9227
        %v9822 = vunpack.c.h.b16 %v9227
        %v9823 = vunpack.c.l.b16 %v9228
        %v9824 = vunpack.c.h.b16 %v9228
        %v9825 = vunpack.c.l.b16 %v9229
        %v9826 = vunpack.c.h.b16 %v9229
        %v9827 = vunpack.c.l.b16 %v9230
        %v9828 = vunpack.c.h.b16 %v9230
        %v9829 = vunpack.c.l.b16 %v9231
        %v9830 = vunpack.c.h.b16 %v9231
        %v9831 = vunpack.c.l.b16 %v9232
        %v9832 = vunpack.c.h.b16 %v9232
        %v9833 = vunpack.c.l.b16 %v9233
        %v9834 = vunpack.c.h.b16 %v9233
        %v9835 = vunpack.c.l.b16 %v9234
        %v9836 = vunpack.c.h.b16 %v9234
        %v9837 = vunpack.c.l.b16 %v9235
        %v9838 = vunpack.c.h.b16 %v9235
        %v9839 = vunpack.c.l.b16 %v9236
        %v9840 = vunpack.c.h.b16 %v9236
        %v9841 = vunpack.c.l.b16 %v9237
        %v9842 = vunpack.c.h.b16 %v9237
        %v9843 = vunpack.c.l.b16 %v9238
        %v9844 = vunpack.c.h.b16 %v9238
        %v9845 = vunpack.c.l.b16 %v9239
        %v9846 = vunpack.c.h.b16 %v9239
        %v9847 = vunpack.c.l.b16 %v9240
        %v9848 = vunpack.c.h.b16 %v9240
        %v9849 = vunpack.c.l.b16 %v9241
        %v9850 = vunpack.c.h.b16 %v9241
        %v9851 = vunpack.c.l.b16 %v9242
        %v9852 = vunpack.c.h.b16 %v9242
        %v9853 = vunpack.c.l.b16 %v9243
        %v9854 = vunpack.c.h.b16 %v9243
        %v9855 = vunpack.c.l.b16 %v9244
        %v9856 = vunpack.c.h.b16 %v9244
        %v9857 = vunpack.c.l.b16 %v9245
        %v9858 = vunpack.c.h.b16 %v9245
        %v9859 = vunpack.c.l.b16 %v9246
        %v9860 = vunpack.c.h.b16 %v9246
        %v9861 = vunpack.c.l.b16 %v9247
        %v9862 = vunpack.c.h.b16 %v9247
        %v9863 = vunpack.c.l.b16 %v9248
        %v9864 = vunpack.c.h.b16 %v9248
        %v9865 = vunpack.c.l.b16 %v9249
        %v9866 = vunpack.c.h.b16 %v9249
        %v9867 = vunpack.c.l.b16 %v9250
        %v9868 = vunpack.c.h.b16 %v9250
        %v9869 = vunpack.c.l.b16 %v9251
        %v9870 = vunpack.c.h.b16 %v9251
        %v9871 = vunpack.c.l.b16 %v9252
        %v9872 = vunpack.c.h.b16 %v9252
        %v9873 = vunpack.c.l.b16 %v9253
        %v9874 = vunpack.c.h.b16 %v9253
        %v9875 = vunpack.c.l.b16 %v9254
        %v9876 = vunpack.c.h.b16 %v9254
        %v9877 = vunpack.c.l.b16 %v9255
        %v9878 = vunpack.c.h.b16 %v9255
        %v9879 = vunpack.c.l.b16 %v9256
        %v9880 = vunpack.c.h.b16 %v9256
        %v9881 = vunpack.c.l.b16 %v9257
        %v9882 = vunpack.c.h.b16 %v9257
        %v9883 = vunpack.c.l.b16 %v9258
        %v9884 = vunpack.c.h.b16 %v9258
        %v9885 = vunpack.c.l.b16 %v9259
        %v9886 = vunpack.c.h.b16 %v9259
        %v9887 = vunpack.c.l.b16 %v9260
        %v9888 = vunpack.c.h.b16 %v9260
        %v9889 = vunpack.c.l.b16 %v9261
        %v9890 = vunpack.c.h.b16 %v9261
        %v9891 = vunpack.c.l.b16 %v9262
        %v9892 = vunpack.c.h.b16 %v9262
        %v9893 = vunpack.c.l.b16 %v9263
        %v9894 = vunpack.c.h.b16 %v9263
        %v9895 = vunpack.c.l.b16 %v9264
        %v9896 = vunpack.c.h.b16 %v9264
        %v9897 = vunpack.c.l.b16 %v9265
        %v9898 = vunpack.c.h.b16 %v9265
        %v9899 = vunpack.c.l.b16 %v9266
        %v9900 = vunpack.c.h.b16 %v9266
        %v9901 = vunpack.c.l.b16 %v9267
        %v9902 = vunpack.c.h.b16 %v9267
        %v9903 = vunpack.c.l.b16 %v9268
        %v9904 = vunpack.c.h.b16 %v9268
        %v9905 = vunpack.c.l.b16 %v9269
        %v9906 = vunpack.c.h.b16 %v9269
        %v9907 = vunpack.c.l.b16 %v9270
        %v9908 = vunpack.c.h.b16 %v9270
        %v9909 = vunpack.c.l.b16 %v9271
        %v9910 = vunpack.c.h.b16 %v9271
        %v9911 = vunpack.c.l.b16 %v9272
        %v9912 = vunpack.c.h.b16 %v9272
        %v9913 = vunpack.c.l.b16 %v9273
        %v9914 = vunpack.c.h.b16 %v9273
        %v9915 = vunpack.c.l.b16 %v9274
        %v9916 = vunpack.c.h.b16 %v9274
        %v9917 = vunpack.c.l.b16 %v9275
        %v9918 = vunpack.c.h.b16 %v9275
        %v9919 = vunpack.c.l.b16 %v9276
        %v9920 = vunpack.c.h.b16 %v9276
        %v9921 = vunpack.c.l.b16 %v9277
        %v9922 = vunpack.c.h.b16 %v9277
        %v9923 = vunpack.c.l.b16 %v9278
        %v9924 = vunpack.c.h.b16 %v9278
        %v9925 = vunpack.c.l.b16 %v9279
        %v9926 = vunpack.c.h.b16 %v9279
        %v9927 = vunpack.c.l.b16 %v9280
        %v9928 = vunpack.c.h.b16 %v9280
        %v9929 = vunpack.c.l.b16 %v9281
        %v9930 = vunpack.c.h.b16 %v9281
        %v9931 = vunpack.c.l.b16 %v9282
        %v9932 = vunpack.c.h.b16 %v9282
        %v9933 = vunpack.c.l.b16 %v9283
        %v9934 = vunpack.c.h.b16 %v9283
        %v9935 = vunpack.c.l.b16 %v9284
        %v9936 = vunpack.c.h.b16 %v9284
        %v9937 = vunpack.c.l.b16 %v9285
        %v9938 = vunpack.c.h.b16 %v9285
        %v9939 = vunpack.c.l.b16 %v9286
        %v9940 = vunpack.c.h.b16 %v9286
        %v9941 = vunpack.c.l.b16 %v9287
        %v9942 = vunpack.c.h.b16 %v9287
        %v9943 = vunpack.c.l.b16 %v9288
        %v9944 = vunpack.c.h.b16 %v9288
        %v9945 = vunpack.c.l.b16 %v9289
        %v9946 = vunpack.c.h.b16 %v9289
        %v9947 = vunpack.c.l.b16 %v9290
        %v9948 = vunpack.c.h.b16 %v9290
        %v9949 = vunpack.c.l.b16 %v9291
        %v9950 = vunpack.c.h.b16 %v9291
        %v9951 = vunpack.c.l.b16 %v9292
        %v9952 = vunpack.c.h.b16 %v9292
        %v9953 = vunpack.c.l.b16 %v9293
        %v9954 = vunpack.c.h.b16 %v9293
        %v9955 = vunpack.c.l.b16 %v9294
        %v9956 = vunpack.c.h.b16 %v9294
        %v9957 = vunpack.c.l.b16 %v9295
        %v9958 = vunpack.c.h.b16 %v9295
        %v9959 = vunpack.c.l.b16 %v9296
        %v9960 = vunpack.c.h.b16 %v9296
        %v9961 = vunpack.c.l.b16 %v9297
        %v9962 = vunpack.c.h.b16 %v9297
        %v9963 = vunpack.c.l.b16 %v9298
        %v9964 = vunpack.c.h.b16 %v9298
        %v9965 = vunpack.c.l.b16 %v9299
        %v9966 = vunpack.c.h.b16 %v9299
        %v9967 = vunpack.c.l.b16 %v9300
        %v9968 = vunpack.c.h.b16 %v9300
        %v9969 = vunpack.c.l.b16 %v9301
        %v9970 = vunpack.c.h.b16 %v9301
        %v9971 = vunpack.c.l.b16 %v9302
        %v9972 = vunpack.c.h.b16 %v9302
        %v9973 = vunpack.c.l.b16 %v9303
        %v9974 = vunpack.c.h.b16 %v9303
        %v9975 = vunpack.c.l.b16 %v9304
        %v9976 = vunpack.c.h.b16 %v9304
        %v9977 = vunpack.c.l.b16 %v9305
        %v9978 = vunpack.c.h.b16 %v9305
        %v9979 = vunpack.c.l.b16 %v9306
        %v9980 = vunpack.c.h.b16 %v9306
        %v9981 = vunpack.c.l.b16 %v9307
        %v9982 = vunpack.c.h.b16 %v9307
        %v9983 = vunpack.c.l.b16 %v9308
        %v9984 = vunpack.c.h.b16 %v9308
        %v9985 = vunpack.c.l.b16 %v9309
        %v9986 = vunpack.c.h.b16 %v9309
        %v9987 = vunpack.c.l.b16 %v9310
        %v9988 = vunpack.c.h.b16 %v9310
        %v9989 = vunpack.c.l.b16 %v9311
        %v9990 = vunpack.c.h.b16 %v9311
        %v9991 = vunpack.c.l.b16 %v9312
        %v9992 = vunpack.c.h.b16 %v9312
        %v9993 = vunpack.c.l.b16 %v9313
        %v9994 = vunpack.c.h.b16 %v9313
        %v9995 = vunpack.c.l.b16 %v9314
        %v9996 = vunpack.c.h.b16 %v9314
        %v9997 = vunpack.c.l.b16 %v9315
        %v9998 = vunpack.c.h.b16 %v9315
        %v9999 = vunpack.c.l.b16 %v9316
        %v10000 = vunpack.c.h.b16 %v9316
        %v10001 = vunpack.c.l.b16 %v9317
        %v10002 = vunpack.c.h.b16 %v9317
        %v10003 = vunpack.c.l.b16 %v9318
        %v10004 = vunpack.c.h.b16 %v9318
        %v10005 = vunpack.c.l.b16 %v9319
        %v10006 = vunpack.c.h.b16 %v9319
        %v10007 = vunpack.c.l.b16 %v9320
        %v10008 = vunpack.c.h.b16 %v9320
        %v10009 = vunpack.c.l.b16 %v9321
        %v10010 = vunpack.c.h.b16 %v9321
        %v10011 = vunpack.c.l.b16 %v9322
        %v10012 = vunpack.c.h.b16 %v9322
        %v10013 = vunpack.c.l.b16 %v9323
        %v10014 = vunpack.c.h.b16 %v9323
        %v10015 = vunpack.c.l.b16 %v9324
        %v10016 = vunpack.c.h.b16 %v9324
        %v10017 = vunpack.c.l.b16 %v9325
        %v10018 = vunpack.c.h.b16 %v9325
        %v10019 = vunpack.c.l.b16 %v9326
        %v10020 = vunpack.c.h.b16 %v9326
        %v10021 = vunpack.c.l.b16 %v9327
        %v10022 = vunpack.c.h.b16 %v9327
        %v10023 = vunpack.c.l.b16 %v9328
        %v10024 = vunpack.c.h.b16 %v9328
        %v10025 = vunpack.c.l.b16 %v9329
        %v10026 = vunpack.c.h.b16 %v9329
        %v10027 = vunpack.c.l.b16 %v9330
        %v10028 = vunpack.c.h.b16 %v9330
        %v10029 = vunpack.c.l.b16 %v9331
        %v10030 = vunpack.c.h.b16 %v9331
        %v10031 = vunpack.c.l.b16 %v9332
        %v10032 = vunpack.c.h.b16 %v9332
        %v10033 = vunpack.c.l.b16 %v9333
        %v10034 = vunpack.c.h.b16 %v9333
        %v10035 = vunpack.c.l.b16 %v9334
        %v10036 = vunpack.c.h.b16 %v9334
        %v10037 = vunpack.c.l.b16 %v9335
        %v10038 = vunpack.c.h.b16 %v9335
        %v10039 = vunpack.c.l.b16 %v9336
        %v10040 = vunpack.c.h.b16 %v9336
        %v10041 = vunpack.c.l.b16 %v9337
        %v10042 = vunpack.c.h.b16 %v9337
        %v10043 = vunpack.c.l.b16 %v9338
        %v10044 = vunpack.c.h.b16 %v9338
        %v10045 = vunpack.c.l.b16 %v9339
        %v10046 = vunpack.c.h.b16 %v9339
        %v10047 = vunpack.c.l.b16 %v9340
        %v10048 = vunpack.c.h.b16 %v9340
        %v10049 = vunpack.c.l.b16 %v9341
        %v10050 = vunpack.c.h.b16 %v9341
        %v10051 = vunpack.c.l.b16 %v9342
        %v10052 = vunpack.c.h.b16 %v9342
        %v10053 = vunpack.c.l.b16 %v9343
        %v10054 = vunpack.c.h.b16 %v9343
        %v10055 = vunpack.c.l.b16 %v9344
        %v10056 = vunpack.c.h.b16 %v9344
        %v10057 = vunpack.c.l.b16 %v9345
        %v10058 = vunpack.c.h.b16 %v9345
        %v10059 = vunpack.c.l.b16 %v9346
        %v10060 = vunpack.c.h.b16 %v9346
        %v10061 = vunpack.c.l.b16 %v9347
        %v10062 = vunpack.c.h.b16 %v9347
        %v10063 = vunpack.c.l.b16 %v9348
        %v10064 = vunpack.c.h.b16 %v9348
        %v10065 = vunpack.c.l.b16 %v9349
        %v10066 = vunpack.c.h.b16 %v9349
        %v10067 = vunpack.c.l.b16 %v9350
        %v10068 = vunpack.c.h.b16 %v9350
        %v10069 = vunpack.c.l.b16 %v9351
        %v10070 = vunpack.c.h.b16 %v9351
        %v10071 = vunpack.c.l.b16 %v9352
        %v10072 = vunpack.c.h.b16 %v9352
        %v10073 = vunpack.c.l.b16 %v9353
        %v10074 = vunpack.c.h.b16 %v9353
        %v10075 = vunpack.c.l.b16 %v9354
        %v10076 = vunpack.c.h.b16 %v9354
        %v10077 = vunpack.c.l.b16 %v9355
        %v10078 = vunpack.c.h.b16 %v9355
        %v10079 = vunpack.c.l.b16 %v9356
        %v10080 = vunpack.c.h.b16 %v9356
        %v10081 = vunpack.c.l.b16 %v9357
        %v10082 = vunpack.c.h.b16 %v9357
        %v10083 = vunpack.c.l.b16 %v9358
        %v10084 = vunpack.c.h.b16 %v9358
        %v10085 = vunpack.c.l.b16 %v9359
        %v10086 = vunpack.c.h.b16 %v9359
        %v10087 = vunpack.c.l.b16 %v9360
        %v10088 = vunpack.c.h.b16 %v9360
        %v10089 = vunpack.c.l.b16 %v9361
        %v10090 = vunpack.c.h.b16 %v9361
        %v10091 = vunpack.c.l.b16 %v9362
        %v10092 = vunpack.c.h.b16 %v9362
        %v10093 = vunpack.c.l.b16 %v9363
        %v10094 = vunpack.c.h.b16 %v9363
        %v10095 = vunpack.c.l.b16 %v9364
        %v10096 = vunpack.c.h.b16 %v9364
        %v10097 = vunpack.c.l.b16 %v9365
        %v10098 = vunpack.c.h.b16 %v9365
        %v10099 = vunpack.c.l.b16 %v9366
        %v10100 = vunpack.c.h.b16 %v9366
        %v10101 = vunpack.c.l.b16 %v9367
        %v10102 = vunpack.c.h.b16 %v9367
        %v10103 = vunpack.c.l.b16 %v9368
        %v10104 = vunpack.c.h.b16 %v9368
        %v10105 = vunpack.c.l.b16 %v9369
        %v10106 = vunpack.c.h.b16 %v9369
        %v10107 = vunpack.c.l.b16 %v9370
        %v10108 = vunpack.c.h.b16 %v9370
        %v10109 = vunpack.c.l.b16 %v9371
        %v10110 = vunpack.c.h.b16 %v9371
        %v10111 = vunpack.c.l.b16 %v9372
        %v10112 = vunpack.c.h.b16 %v9372
        %v10113 = vunpack.c.l.b16 %v9373
        %v10114 = vunpack.c.h.b16 %v9373
        %v10115 = vunpack.c.l.b16 %v9374
        %v10116 = vunpack.c.h.b16 %v9374
        %v10117 = vunpack.c.l.b16 %v9375
        %v10118 = vunpack.c.h.b16 %v9375
        %v10119 = vunpack.c.l.b16 %v9376
        %v10120 = vunpack.c.h.b16 %v9376
        %v10121 = vunpack.c.l.b16 %v9377
        %v10122 = vunpack.c.h.b16 %v9377
        %v10123 = vunpack.c.l.b16 %v9378
        %v10124 = vunpack.c.h.b16 %v9378
        %v10125 = vunpack.c.l.b16 %v9379
        %v10126 = vunpack.c.h.b16 %v9379
        %v10127 = vunpack.c.l.b16 %v9380
        %v10128 = vunpack.c.h.b16 %v9380
        %v10129 = vunpack.c.l.b16 %v9381
        %v10130 = vunpack.c.h.b16 %v9381
        %v10131 = vunpack.c.l.b16 %v9382
        %v10132 = vunpack.c.h.b16 %v9382
        %v10133 = vunpack.c.l.b16 %v9383
        %v10134 = vunpack.c.h.b16 %v9383
        %v10135 = vunpack.c.l.b16 %v9384
        %v10136 = vunpack.c.h.b16 %v9384
        %v10137 = vunpack.c.l.b16 %v9385
        %v10138 = vunpack.c.h.b16 %v9385
        %v10139 = vunpack.c.l.b16 %v9386
        %v10140 = vunpack.c.h.b16 %v9386
        %v10141 = vunpack.c.l.b16 %v9387
        %v10142 = vunpack.c.h.b16 %v9387
        %v10143 = vunpack.c.l.b16 %v9388
        %v10144 = vunpack.c.h.b16 %v9388
        %v10145 = vunpack.c.l.b16 %v9389
        %v10146 = vunpack.c.h.b16 %v9389
        %v10147 = vunpack.c.l.b16 %v9390
        %v10148 = vunpack.c.h.b16 %v9390
        %v10149 = vunpack.c.l.b16 %v9391
        %v10150 = vunpack.c.h.b16 %v9391
        %v10151 = vunpack.c.l.b16 %v9392
        %v10152 = vunpack.c.h.b16 %v9392
        %v10153 = vunpack.c.l.b16 %v9393
        %v10154 = vunpack.c.h.b16 %v9393
        %v10155 = vunpack.c.l.b16 %v9394
        %v10156 = vunpack.c.h.b16 %v9394
        %v10157 = vunpack.c.l.b16 %v9395
        %v10158 = vunpack.c.h.b16 %v9395
        %v10159 = vunpack.c.l.b16 %v9396
        %v10160 = vunpack.c.h.b16 %v9396
        %v10161 = vunpack.c.l.b16 %v9397
        %v10162 = vunpack.c.h.b16 %v9397
        %v10163 = vunpack.c.l.b16 %v9398
        %v10164 = vunpack.c.h.b16 %v9398
        %v10165 = vunpack.c.l.b16 %v9399
        %v10166 = vunpack.c.h.b16 %v9399
        %v10167 = vunpack.c.l.b16 %v9400
        %v10168 = vunpack.c.h.b16 %v9400
        %v10169 = vunpack.c.l.b16 %v9401
        %v10170 = vunpack.c.h.b16 %v9401
        %v10171 = vpack.c.b16 %v9663, %v9659
        %v10172 = vpack.c.b16 %v9664, %v9660
        %v10173 = vpack.c.b16 %v9665, %v9661
        %v10174 = vpack.c.b16 %v9666, %v9662
        %v10175 = vpack.c.b16 %v9671, %v9667
        %v10176 = vpack.c.b16 %v9672, %v9668
        %v10177 = vpack.c.b16 %v9673, %v9669
        %v10178 = vpack.c.b16 %v9674, %v9670
        %v10179 = vpack.c.b16 %v9679, %v9675
        %v10180 = vpack.c.b16 %v9680, %v9676
        %v10181 = vpack.c.b16 %v9681, %v9677
        %v10182 = vpack.c.b16 %v9682, %v9678
        %v10183 = vpack.c.b16 %v9687, %v9683
        %v10184 = vpack.c.b16 %v9688, %v9684
        %v10185 = vpack.c.b16 %v9689, %v9685
        %v10186 = vpack.c.b16 %v9690, %v9686
        %v10187 = vpack.c.b16 %v9695, %v9691
        %v10188 = vpack.c.b16 %v9696, %v9692
        %v10189 = vpack.c.b16 %v9697, %v9693
        %v10190 = vpack.c.b16 %v9698, %v9694
        %v10191 = vpack.c.b16 %v9703, %v9699
        %v10192 = vpack.c.b16 %v9704, %v9700
        %v10193 = vpack.c.b16 %v9705, %v9701
        %v10194 = vpack.c.b16 %v9706, %v9702
        %v10195 = vpack.c.b16 %v9711, %v9707
        %v10196 = vpack.c.b16 %v9712, %v9708
        %v10197 = vpack.c.b16 %v9713, %v9709
        %v10198 = vpack.c.b16 %v9714, %v9710
        %v10199 = vpack.c.b16 %v9719, %v9715
        %v10200 = vpack.c.b16 %v9720, %v9716
        %v10201 = vpack.c.b16 %v9721, %v9717
        %v10202 = vpack.c.b16 %v9722, %v9718
        %v10203 = vpack.c.b16 %v9727, %v9723
        %v10204 = vpack.c.b16 %v9728, %v9724
        %v10205 = vpack.c.b16 %v9729, %v9725
        %v10206 = vpack.c.b16 %v9730, %v9726
        %v10207 = vpack.c.b16 %v9735, %v9731
        %v10208 = vpack.c.b16 %v9736, %v9732
        %v10209 = vpack.c.b16 %v9737, %v9733
        %v10210 = vpack.c.b16 %v9738, %v9734
        %v10211 = vpack.c.b16 %v9743, %v9739
        %v10212 = vpack.c.b16 %v9744, %v9740
        %v10213 = vpack.c.b16 %v9745, %v9741
        %v10214 = vpack.c.b16 %v9746, %v9742
        %v10215 = vpack.c.b16 %v9751, %v9747
        %v10216 = vpack.c.b16 %v9752, %v9748
        %v10217 = vpack.c.b16 %v9753, %v9749
        %v10218 = vpack.c.b16 %v9754, %v9750
        %v10219 = vpack.c.b16 %v9759, %v9755
        %v10220 = vpack.c.b16 %v9760, %v9756
        %v10221 = vpack.c.b16 %v9761, %v9757
        %v10222 = vpack.c.b16 %v9762, %v9758
        %v10223 = vpack.c.b16 %v9767, %v9763
        %v10224 = vpack.c.b16 %v9768, %v9764
        %v10225 = vpack.c.b16 %v9769, %v9765
        %v10226 = vpack.c.b16 %v9770, %v9766
        %v10227 = vpack.c.b16 %v9775, %v9771
        %v10228 = vpack.c.b16 %v9776, %v9772
        %v10229 = vpack.c.b16 %v9777, %v9773
        %v10230 = vpack.c.b16 %v9778, %v9774
        %v10231 = vpack.c.b16 %v9783, %v9779
        %v10232 = vpack.c.b16 %v9784, %v9780
        %v10233 = vpack.c.b16 %v9785, %v9781
        %v10234 = vpack.c.b16 %v9786, %v9782
        %v10235 = vpack.c.b16 %v9791, %v9787
        %v10236 = vpack.c.b16 %v9792, %v9788
        %v10237 = vpack.c.b16 %v9793, %v9789
        %v10238 = vpack.c.b16 %v9794, %v9790
        %v10239 = vpack.c.b16 %v9799, %v9795
        %v10240 = vpack.c.b16 %v9800, %v9796
        %v10241 = vpack.c.b16 %v9801, %v9797
        %v10242 = vpack.c.b16 %v9802, %v9798
        %v10243 = vpack.c.b16 %v9807, %v9803
        %v10244 = vpack.c.b16 %v9808, %v9804
        %v10245 = vpack.c.b16 %v9809, %v9805
        %v10246 = vpack.c.b16 %v9810, %v9806
        %v10247 = vpack.c.b16 %v9815, %v9811
        %v10248 = vpack.c.b16 %v9816, %v9812
        %v10249 = vpack.c.b16 %v9817, %v9813
        %v10250 = vpack.c.b16 %v9818, %v9814
        %v10251 = vpack.c.b16 %v9823, %v9819
        %v10252 = vpack.c.b16 %v9824, %v9820
        %v10253 = vpack.c.b16 %v9825, %v9821
        %v10254 = vpack.c.b16 %v9826, %v9822
        %v10255 = vpack.c.b16 %v9831, %v9827
        %v10256 = vpack.c.b16 %v9832, %v9828
        %v10257 = vpack.c.b16 %v9833, %v9829
        %v10258 = vpack.c.b16 %v9834, %v9830
        %v10259 = vpack.c.b16 %v9839, %v9835
        %v10260 = vpack.c.b16 %v9840, %v9836
        %v10261 = vpack.c.b16 %v9841, %v9837
        %v10262 = vpack.c.b16 %v9842, %v9838
        %v10263 = vpack.c.b16 %v9847, %v9843
        %v10264 = vpack.c.b16 %v9848, %v9844
        %v10265 = vpack.c.b16 %v9849, %v9845
        %v10266 = vpack.c.b16 %v9850, %v9846
        %v10267 = vpack.c.b16 %v9855, %v9851
        %v10268 = vpack.c.b16 %v9856, %v9852
        %v10269 = vpack.c.b16 %v9857, %v9853
        %v10270 = vpack.c.b16 %v9858, %v9854
        %v10271 = vpack.c.b16 %v9863, %v9859
        %v10272 = vpack.c.b16 %v9864, %v9860
        %v10273 = vpack.c.b16 %v9865, %v9861
        %v10274 = vpack.c.b16 %v9866, %v9862
        %v10275 = vpack.c.b16 %v9871, %v9867
        %v10276 = vpack.c.b16 %v9872, %v9868
        %v10277 = vpack.c.b16 %v9873, %v9869
        %v10278 = vpack.c.b16 %v9874, %v9870
        %v10279 = vpack.c.b16 %v9879, %v9875
        %v10280 = vpack.c.b16 %v9880, %v9876
        %v10281 = vpack.c.b16 %v9881, %v9877
        %v10282 = vpack.c.b16 %v9882, %v9878
        %v10283 = vpack.c.b16 %v9887, %v9883
        %v10284 = vpack.c.b16 %v9888, %v9884
        %v10285 = vpack.c.b16 %v9889, %v9885
        %v10286 = vpack.c.b16 %v9890, %v9886
        %v10287 = vpack.c.b16 %v9895, %v9891
        %v10288 = vpack.c.b16 %v9896, %v9892
        %v10289 = vpack.c.b16 %v9897, %v9893
        %v10290 = vpack.c.b16 %v9898, %v9894
        %v10291 = vpack.c.b16 %v9903, %v9899
        %v10292 = vpack.c.b16 %v9904, %v9900
        %v10293 = vpack.c.b16 %v9905, %v9901
        %v10294 = vpack.c.b16 %v9906, %v9902
        %v10295 = vpack.c.b16 %v9911, %v9907
        %v10296 = vpack.c.b16 %v9912, %v9908
        %v10297 = vpack.c.b16 %v9913, %v9909
        %v10298 = vpack.c.b16 %v9914, %v9910
        %v10299 = vpack.c.b16 %v9919, %v9915
        %v10300 = vpack.c.b16 %v9920, %v9916
        %v10301 = vpack.c.b16 %v9921, %v9917
        %v10302 = vpack.c.b16 %v9922, %v9918
        %v10303 = vpack.c.b16 %v9927, %v9923
        %v10304 = vpack.c.b16 %v9928, %v9924
        %v10305 = vpack.c.b16 %v9929, %v9925
        %v10306 = vpack.c.b16 %v9930, %v9926
        %v10307 = vpack.c.b16 %v9935, %v9931
        %v10308 = vpack.c.b16 %v9936, %v9932
        %v10309 = vpack.c.b16 %v9937, %v9933
        %v10310 = vpack.c.b16 %v9938, %v9934
        %v10311 = vpack.c.b16 %v9943, %v9939
        %v10312 = vpack.c.b16 %v9944, %v9940
        %v10313 = vpack.c.b16 %v9945, %v9941
        %v10314 = vpack.c.b16 %v9946, %v9942
        %v10315 = vpack.c.b16 %v9951, %v9947
        %v10316 = vpack.c.b16 %v9952, %v9948
        %v10317 = vpack.c.b16 %v9953, %v9949
        %v10318 = vpack.c.b16 %v9954, %v9950
        %v10319 = vpack.c.b16 %v9959, %v9955
        %v10320 = vpack.c.b16 %v9960, %v9956
        %v10321 = vpack.c.b16 %v9961, %v9957
        %v10322 = vpack.c.b16 %v9962, %v9958
        %v10323 = vpack.c.b16 %v9967, %v9963
        %v10324 = vpack.c.b16 %v9968, %v9964
        %v10325 = vpack.c.b16 %v9969, %v9965
        %v10326 = vpack.c.b16 %v9970, %v9966
        %v10327 = vpack.c.b16 %v9975, %v9971
        %v10328 = vpack.c.b16 %v9976, %v9972
        %v10329 = vpack.c.b16 %v9977, %v9973
        %v10330 = vpack.c.b16 %v9978, %v9974
        %v10331 = vpack.c.b16 %v9983, %v9979
        %v10332 = vpack.c.b16 %v9984, %v9980
        %v10333 = vpack.c.b16 %v9985, %v9981
        %v10334 = vpack.c.b16 %v9986, %v9982
        %v10335 = vpack.c.b16 %v9991, %v9987
        %v10336 = vpack.c.b16 %v9992, %v9988
        %v10337 = vpack.c.b16 %v9993, %v9989
        %v10338 = vpack.c.b16 %v9994, %v9990
        %v10339 = vpack.c.b16 %v9999, %v9995
        %v10340 = vpack.c.b16 %v10000, %v9996
        %v10341 = vpack.c.b16 %v10001, %v9997
        %v10342 = vpack.c.b16 %v10002, %v9998
        %v10343 = vpack.c.b16 %v10007, %v10003
        %v10344 = vpack.c.b16 %v10008, %v10004
        %v10345 = vpack.c.b16 %v10009, %v10005
        %v10346 = vpack.c.b16 %v10010, %v10006
        %v10347 = vpack.c.b16 %v10015, %v10011
        %v10348 = vpack.c.b16 %v10016, %v10012
        %v10349 = vpack.c.b16 %v10017, %v10013
        %v10350 = vpack.c.b16 %v10018, %v10014
        %v10351 = vpack.c.b16 %v10023, %v10019
        %v10352 = vpack.c.b16 %v10024, %v10020
        %v10353 = vpack.c.b16 %v10025, %v10021
        %v10354 = vpack.c.b16 %v10026, %v10022
        %v10355 = vpack.c.b16 %v10031, %v10027
        %v10356 = vpack.c.b16 %v10032, %v10028
        %v10357 = vpack.c.b16 %v10033, %v10029
        %v10358 = vpack.c.b16 %v10034, %v10030
        %v10359 = vpack.c.b16 %v10039, %v10035
        %v10360 = vpack.c.b16 %v10040, %v10036
        %v10361 = vpack.c.b16 %v10041, %v10037
        %v10362 = vpack.c.b16 %v10042, %v10038
        %v10363 = vpack.c.b16 %v10047, %v10043
        %v10364 = vpack.c.b16 %v10048, %v10044
        %v10365 = vpack.c.b16 %v10049, %v10045
        %v10366 = vpack.c.b16 %v10050, %v10046
        %v10367 = vpack.c.b16 %v10055, %v10051
        %v10368 = vpack.c.b16 %v10056, %v10052
        %v10369 = vpack.c.b16 %v10057, %v10053
        %v10370 = vpack.c.b16 %v10058, %v10054
        %v10371 = vpack.c.b16 %v10063, %v10059
        %v10372 = vpack.c.b16 %v10064, %v10060
        %v10373 = vpack.c.b16 %v10065, %v10061
        %v10374 = vpack.c.b16 %v10066, %v10062
        %v10375 = vpack.c.b16 %v10071, %v10067
        %v10376 = vpack.c.b16 %v10072, %v10068
        %v10377 = vpack.c.b16 %v10073, %v10069
        %v10378 = vpack.c.b16 %v10074, %v10070
        %v10379 = vpack.c.b16 %v10079, %v10075
        %v10380 = vpack.c.b16 %v10080, %v10076
        %v10381 = vpack.c.b16 %v10081, %v10077
        %v10382 = vpack.c.b16 %v10082, %v10078
        %v10383 = vpack.c.b16 %v10087, %v10083
        %v10384 = vpack.c.b16 %v10088, %v10084
        %v10385 = vpack.c.b16 %v10089, %v10085
        %v10386 = vpack.c.b16 %v10090, %v10086
        %v10387 = vpack.c.b16 %v10095, %v10091
        %v10388 = vpack.c.b16 %v10096, %v10092
        %v10389 = vpack.c.b16 %v10097, %v10093
        %v10390 = vpack.c.b16 %v10098, %v10094
        %v10391 = vpack.c.b16 %v10103, %v10099
        %v10392 = vpack.c.b16 %v10104, %v10100
        %v10393 = vpack.c.b16 %v10105, %v10101
        %v10394 = vpack.c.b16 %v10106, %v10102
        %v10395 = vpack.c.b16 %v10111, %v10107
        %v10396 = vpack.c.b16 %v10112, %v10108
        %v10397 = vpack.c.b16 %v10113, %v10109
        %v10398 = vpack.c.b16 %v10114, %v10110
        %v10399 = vpack.c.b16 %v10119, %v10115
        %v10400 = vpack.c.b16 %v10120, %v10116
        %v10401 = vpack.c.b16 %v10121, %v10117
        %v10402 = vpack.c.b16 %v10122, %v10118
        %v10403 = vpack.c.b16 %v10127, %v10123
        %v10404 = vpack.c.b16 %v10128, %v10124
        %v10405 = vpack.c.b16 %v10129, %v10125
        %v10406 = vpack.c.b16 %v10130, %v10126
        %v10407 = vpack.c.b16 %v10135, %v10131
        %v10408 = vpack.c.b16 %v10136, %v10132
        %v10409 = vpack.c.b16 %v10137, %v10133
        %v10410 = vpack.c.b16 %v10138, %v10134
        %v10411 = vpack.c.b16 %v10143, %v10139
        %v10412 = vpack.c.b16 %v10144, %v10140
        %v10413 = vpack.c.b16 %v10145, %v10141
        %v10414 = vpack.c.b16 %v10146, %v10142
        %v10415 = vpack.c.b16 %v10151, %v10147
        %v10416 = vpack.c.b16 %v10152, %v10148
        %v10417 = vpack.c.b16 %v10153, %v10149
        %v10418 = vpack.c.b16 %v10154, %v10150
        %v10419 = vpack.c.b16 %v10159, %v10155
        %v10420 = vpack.c.b16 %v10160, %v10156
        %v10421 = vpack.c.b16 %v10161, %v10157
        %v10422 = vpack.c.b16 %v10162, %v10158
        %v10423 = vpack.c.b16 %v10167, %v10163
        %v10424 = vpack.c.b16 %v10168, %v10164
        %v10425 = vpack.c.b16 %v10169, %v10165
        %v10426 = vpack.c.b16 %v10170, %v10166
        %v10684 = vlaneseq
        %v10685 = vshrl.u32 %v10684, 7
        %v10686 = vsub.s32 0, %v10685
        %v10687 = vrot.slane %v9402, %v10686
        %v10688 = vlaneseq
        %v10689 = vshrl.u32 %v10688, 7
        %v10690 = vsub.s32 1, %v10689
        %v10691 = vrot.slane %v9402, %v10690
        %v10692 = vlaneseq
        %v10693 = vshrl.u32 %v10692, 7
        %v10694 = vsub.s32 2, %v10693
        %v10695 = vrot.slane %v9402, %v10694
        %v10696 = vlaneseq
        %v10697 = vshrl.u32 %v10696, 7
        %v10698 = vsub.s32 3, %v10697
        %v10699 = vrot.slane %v9402, %v10698
        %10704 = vmatprep.subr.bf16.mxu0 %v10172
        %10705 = vmatpush1.bf16.msra.mxu0 %v10171
        %10706 = vmatprep.subr.bf16.mxu0 %v10176
        %10707 = vmatpush1.bf16.msra.mxu0 %v10175
        %10708 = vmatprep.subr.bf16.mxu0 %v10180
        %10709 = vmatpush1.bf16.msra.mxu0 %v10179
        %10710 = vmatprep.subr.bf16.mxu0 %v10184
        %10711 = vmatpush1.bf16.msra.mxu0 %v10183
        %10712 = vmatprep.subr.bf16.mxu0 %v10188
        %10713 = vmatpush1.bf16.msra.mxu0 %v10187
        %10714 = vmatprep.subr.bf16.mxu0 %v10192
        %10715 = vmatpush1.bf16.msra.mxu0 %v10191
        %10716 = vmatprep.subr.bf16.mxu0 %v10196
        %10717 = vmatpush1.bf16.msra.mxu0 %v10195
        %10718 = vmatprep.subr.bf16.mxu0 %v10200
        %10719 = vmatpush1.bf16.msra.mxu0 %v10199
        %10720 = vmatprep.subr.bf16.mxu0 %v10204
        %10721 = vmatpush1.bf16.msra.mxu0 %v10203
        %10722 = vmatprep.subr.bf16.mxu0 %v10208
        %10723 = vmatpush1.bf16.msra.mxu0 %v10207
        %10724 = vmatprep.subr.bf16.mxu0 %v10212
        %10725 = vmatpush1.bf16.msra.mxu0 %v10211
        %10726 = vmatprep.subr.bf16.mxu0 %v10216
        %10727 = vmatpush1.bf16.msra.mxu0 %v10215
        %10728 = vmatprep.subr.bf16.mxu0 %v10220
        %10729 = vmatpush1.bf16.msra.mxu0 %v10219
        %10730 = vmatprep.subr.bf16.mxu0 %v10224
        %10731 = vmatpush1.bf16.msra.mxu0 %v10223
        %10732 = vmatprep.subr.bf16.mxu0 %v10228
        %10733 = vmatpush1.bf16.msra.mxu0 %v10227
        %10734 = vmatprep.subr.bf16.mxu0 %v10232
        %10735 = vmatpush1.bf16.msra.mxu0 %v10231
        %10736 = vmatprep.mubr.bf16.mxu0 %v9139
        %10737 = vmatmul.mubr.bf16.gmra.mrb[0].mxu0 %v9138
        %v10738 = vpop.f32.mrb[0].mxu0
        %v10739 = vadd.f32 %v10687, %v10738
        %v10740 = vpop.f32.mrb[0].mxu0
        %v10741 = vadd.f32 %v10691, %v10740
        %v10742 = vpop.f32.mrb[0].mxu0
        %v10743 = vpop.f32.mrb[0].mxu0
        %10744 = vdwg.mxu0
        %10745 = vmatprep.subr.bf16.mxu0 %v10236
        %10746 = vmatpush1.bf16.msra.mxu0 %v10235
        %10747 = vmatprep.subr.bf16.mxu0 %v10240
        %10748 = vmatpush1.bf16.msra.mxu0 %v10239
        %10749 = vmatprep.subr.bf16.mxu0 %v10244
        %10750 = vmatpush1.bf16.msra.mxu0 %v10243
        %10751 = vmatprep.subr.bf16.mxu0 %v10248
        %10752 = vmatpush1.bf16.msra.mxu0 %v10247
        %10753 = vmatprep.subr.bf16.mxu0 %v10252
        %10754 = vmatpush1.bf16.msra.mxu0 %v10251
        %10755 = vmatprep.subr.bf16.mxu0 %v10256
        %10756 = vmatpush1.bf16.msra.mxu0 %v10255
        %10757 = vmatprep.subr.bf16.mxu0 %v10260
        %10758 = vmatpush1.bf16.msra.mxu0 %v10259
        %10759 = vmatprep.subr.bf16.mxu0 %v10264
        %10760 = vmatpush1.bf16.msra.mxu0 %v10263
        %10761 = vmatprep.subr.bf16.mxu0 %v10268
        %10762 = vmatpush1.bf16.msra.mxu0 %v10267
        %10763 = vmatprep.subr.bf16.mxu0 %v10272
        %10764 = vmatpush1.bf16.msra.mxu0 %v10271
        %10765 = vmatprep.subr.bf16.mxu0 %v10276
        %10766 = vmatpush1.bf16.msra.mxu0 %v10275
        %10767 = vmatprep.subr.bf16.mxu0 %v10280
        %10768 = vmatpush1.bf16.msra.mxu0 %v10279
        %10769 = vmatprep.subr.bf16.mxu0 %v10284
        %10770 = vmatpush1.bf16.msra.mxu0 %v10283
        %10771 = vmatprep.subr.bf16.mxu0 %v10288
        %10772 = vmatpush1.bf16.msra.mxu0 %v10287
        %10773 = vmatprep.subr.bf16.mxu0 %v10292
        %10774 = vmatpush1.bf16.msra.mxu0 %v10291
        %10775 = vmatprep.subr.bf16.mxu0 %v10296
        %10776 = vmatpush1.bf16.msra.mxu0 %v10295
        %10777 = vmatprep.mubr.bf16.mxu0 %v9141
        %10778 = vmatmul.mubr.bf16.gmra.mrb[0].mxu0 %v9140
        %v10779 = vpop.f32.mrb[0].mxu0
        %v10780 = vadd.f32 %v10739, %v10779
        %v10781 = vpop.f32.mrb[0].mxu0
        %v10782 = vadd.f32 %v10741, %v10781
        %v10783 = vpop.f32.mrb[0].mxu0
        %v10784 = vpop.f32.mrb[0].mxu0
        %10785 = vdwg.mxu0
        %10786 = vmatprep.subr.bf16.mxu0 %v10300
        %10787 = vmatpush1.bf16.msra.mxu0 %v10299
        %10788 = vmatprep.subr.bf16.mxu0 %v10304
        %10789 = vmatpush1.bf16.msra.mxu0 %v10303
        %10790 = vmatprep.subr.bf16.mxu0 %v10308
        %10791 = vmatpush1.bf16.msra.mxu0 %v10307
        %10792 = vmatprep.subr.bf16.mxu0 %v10312
        %10793 = vmatpush1.bf16.msra.mxu0 %v10311
        %10794 = vmatprep.subr.bf16.mxu0 %v10316
        %10795 = vmatpush1.bf16.msra.mxu0 %v10315
        %10796 = vmatprep.subr.bf16.mxu0 %v10320
        %10797 = vmatpush1.bf16.msra.mxu0 %v10319
        %10798 = vmatprep.subr.bf16.mxu0 %v10324
        %10799 = vmatpush1.bf16.msra.mxu0 %v10323
        %10800 = vmatprep.subr.bf16.mxu0 %v10328
        %10801 = vmatpush1.bf16.msra.mxu0 %v10327
        %10802 = vmatprep.subr.bf16.mxu0 %v10332
        %10803 = vmatpush1.bf16.msra.mxu0 %v10331
        %10804 = vmatprep.subr.bf16.mxu0 %v10336
        %10805 = vmatpush1.bf16.msra.mxu0 %v10335
        %10806 = vmatprep.subr.bf16.mxu0 %v10340
        %10807 = vmatpush1.bf16.msra.mxu0 %v10339
        %10808 = vmatprep.subr.bf16.mxu0 %v10344
        %10809 = vmatpush1.bf16.msra.mxu0 %v10343
        %10810 = vmatprep.subr.bf16.mxu0 %v10348
        %10811 = vmatpush1.bf16.msra.mxu0 %v10347
        %10812 = vmatprep.subr.bf16.mxu0 %v10352
        %10813 = vmatpush1.bf16.msra.mxu0 %v10351
        %10814 = vmatprep.subr.bf16.mxu0 %v10356
        %10815 = vmatpush1.bf16.msra.mxu0 %v10355
        %10816 = vmatprep.subr.bf16.mxu0 %v10360
        %10817 = vmatpush1.bf16.msra.mxu0 %v10359
        %10818 = vmatprep.mubr.bf16.mxu0 %v9143
        %10819 = vmatmul.mubr.bf16.gmra.mrb[0].mxu0 %v9142
        %v10820 = vpop.f32.mrb[0].mxu0
        %v10821 = vadd.f32 %v10780, %v10820
        %v10822 = vpop.f32.mrb[0].mxu0
        %v10823 = vadd.f32 %v10782, %v10822
        %v10824 = vpop.f32.mrb[0].mxu0
        %v10825 = vpop.f32.mrb[0].mxu0
        %10826 = vdwg.mxu0
        %10827 = vmatprep.subr.bf16.mxu0 %v10364
        %10828 = vmatpush1.bf16.msra.mxu0 %v10363
        %10829 = vmatprep.subr.bf16.mxu0 %v10368
        %10830 = vmatpush1.bf16.msra.mxu0 %v10367
        %10831 = vmatprep.subr.bf16.mxu0 %v10372
        %10832 = vmatpush1.bf16.msra.mxu0 %v10371
        %10833 = vmatprep.subr.bf16.mxu0 %v10376
        %10834 = vmatpush1.bf16.msra.mxu0 %v10375
        %10835 = vmatprep.subr.bf16.mxu0 %v10380
        %10836 = vmatpush1.bf16.msra.mxu0 %v10379
        %10837 = vmatprep.subr.bf16.mxu0 %v10384
        %10838 = vmatpush1.bf16.msra.mxu0 %v10383
        %10839 = vmatprep.subr.bf16.mxu0 %v10388
        %10840 = vmatpush1.bf16.msra.mxu0 %v10387
        %10841 = vmatprep.subr.bf16.mxu0 %v10392
        %10842 = vmatpush1.bf16.msra.mxu0 %v10391
        %10843 = vmatprep.subr.bf16.mxu0 %v10396
        %10844 = vmatpush1.bf16.msra.mxu0 %v10395
        %10845 = vmatprep.subr.bf16.mxu0 %v10400
        %10846 = vmatpush1.bf16.msra.mxu0 %v10399
        %10847 = vmatprep.subr.bf16.mxu0 %v10404
        %10848 = vmatpush1.bf16.msra.mxu0 %v10403
        %10849 = vmatprep.subr.bf16.mxu0 %v10408
        %10850 = vmatpush1.bf16.msra.mxu0 %v10407
        %10851 = vmatprep.subr.bf16.mxu0 %v10412
        %10852 = vmatpush1.bf16.msra.mxu0 %v10411
        %10853 = vmatprep.subr.bf16.mxu0 %v10416
        %10854 = vmatpush1.bf16.msra.mxu0 %v10415
        %10855 = vmatprep.subr.bf16.mxu0 %v10420
        %10856 = vmatpush1.bf16.msra.mxu0 %v10419
        %10857 = vmatprep.subr.bf16.mxu0 %v10424
        %10858 = vmatpush1.bf16.msra.mxu0 %v10423
        %10859 = vmatprep.mubr.bf16.mxu0 %v9145
        %10860 = vmatmul.mubr.bf16.gmra.mrb[0].mxu0 %v9144
        %v10861 = vpop.f32.mrb[0].mxu0
        %v10862 = vadd.f32 %v10821, %v10861
        %v10863 = vpop.f32.mrb[0].mxu0
        %v10864 = vadd.f32 %v10823, %v10863
        %v10865 = vpop.f32.mrb[0].mxu0
        %v10866 = vpop.f32.mrb[0].mxu0
        %10867 = vdwg.mxu0
        %10868 = vmatprep.subr.bf16.mxu0 %v10174
        %10869 = vmatpush1.bf16.msra.mxu0 %v10173
        %10870 = vmatprep.subr.bf16.mxu0 %v10178
        %10871 = vmatpush1.bf16.msra.mxu0 %v10177
        %10872 = vmatprep.subr.bf16.mxu0 %v10182
        %10873 = vmatpush1.bf16.msra.mxu0 %v10181
        %10874 = vmatprep.subr.bf16.mxu0 %v10186
        %10875 = vmatpush1.bf16.msra.mxu0 %v10185
        %10876 = vmatprep.subr.bf16.mxu0 %v10190
        %10877 = vmatpush1.bf16.msra.mxu0 %v10189
        %10878 = vmatprep.subr.bf16.mxu0 %v10194
        %10879 = vmatpush1.bf16.msra.mxu0 %v10193
        %10880 = vmatprep.subr.bf16.mxu0 %v10198
        %10881 = vmatpush1.bf16.msra.mxu0 %v10197
        %10882 = vmatprep.subr.bf16.mxu0 %v10202
        %10883 = vmatpush1.bf16.msra.mxu0 %v10201
        %10884 = vmatprep.subr.bf16.mxu0 %v10206
        %10885 = vmatpush1.bf16.msra.mxu0 %v10205
        %10886 = vmatprep.subr.bf16.mxu0 %v10210
        %10887 = vmatpush1.bf16.msra.mxu0 %v10209
        %10888 = vmatprep.subr.bf16.mxu0 %v10214
        %10889 = vmatpush1.bf16.msra.mxu0 %v10213
        %10890 = vmatprep.subr.bf16.mxu0 %v10218
        %10891 = vmatpush1.bf16.msra.mxu0 %v10217
        %10892 = vmatprep.subr.bf16.mxu0 %v10222
        %10893 = vmatpush1.bf16.msra.mxu0 %v10221
        %10894 = vmatprep.subr.bf16.mxu0 %v10226
        %10895 = vmatpush1.bf16.msra.mxu0 %v10225
        %10896 = vmatprep.subr.bf16.mxu0 %v10230
        %10897 = vmatpush1.bf16.msra.mxu0 %v10229
        %10898 = vmatprep.subr.bf16.mxu0 %v10234
        %10899 = vmatpush1.bf16.msra.mxu0 %v10233
        %10900 = vmatprep.mubr.bf16.mxu0 %v9139
        %10901 = vmatmul.mubr.bf16.gmra.mrb[0].mxu0 %v9138
        %v10902 = vpop.f32.mrb[0].mxu0
        %v10903 = vadd.f32 %v10695, %v10902
        %v10904 = vpop.f32.mrb[0].mxu0
        %v10905 = vadd.f32 %v10699, %v10904
        %v10906 = vpop.f32.mrb[0].mxu0
        %v10907 = vpop.f32.mrb[0].mxu0
        %10908 = vdwg.mxu0
        %10909 = vmatprep.subr.bf16.mxu0 %v10238
        %10910 = vmatpush1.bf16.msra.mxu0 %v10237
        %10911 = vmatprep.subr.bf16.mxu0 %v10242
        %10912 = vmatpush1.bf16.msra.mxu0 %v10241
        %10913 = vmatprep.subr.bf16.mxu0 %v10246
        %10914 = vmatpush1.bf16.msra.mxu0 %v10245
        %10915 = vmatprep.subr.bf16.mxu0 %v10250
        %10916 = vmatpush1.bf16.msra.mxu0 %v10249
        %10917 = vmatprep.subr.bf16.mxu0 %v10254
        %10918 = vmatpush1.bf16.msra.mxu0 %v10253
        %10919 = vmatprep.subr.bf16.mxu0 %v10258
        %10920 = vmatpush1.bf16.msra.mxu0 %v10257
        %10921 = vmatprep.subr.bf16.mxu0 %v10262
        %10922 = vmatpush1.bf16.msra.mxu0 %v10261
        %10923 = vmatprep.subr.bf16.mxu0 %v10266
        %10924 = vmatpush1.bf16.msra.mxu0 %v10265
        %10925 = vmatprep.subr.bf16.mxu0 %v10270
        %10926 = vmatpush1.bf16.msra.mxu0 %v10269
        %10927 = vmatprep.subr.bf16.mxu0 %v10274
        %10928 = vmatpush1.bf16.msra.mxu0 %v10273
        %10929 = vmatprep.subr.bf16.mxu0 %v10278
        %10930 = vmatpush1.bf16.msra.mxu0 %v10277
        %10931 = vmatprep.subr.bf16.mxu0 %v10282
        %10932 = vmatpush1.bf16.msra.mxu0 %v10281
        %10933 = vmatprep.subr.bf16.mxu0 %v10286
        %10934 = vmatpush1.bf16.msra.mxu0 %v10285
        %10935 = vmatprep.subr.bf16.mxu0 %v10290
        %10936 = vmatpush1.bf16.msra.mxu0 %v10289
        %10937 = vmatprep.subr.bf16.mxu0 %v10294
        %10938 = vmatpush1.bf16.msra.mxu0 %v10293
        %10939 = vmatprep.subr.bf16.mxu0 %v10298
        %10940 = vmatpush1.bf16.msra.mxu0 %v10297
        %10941 = vmatprep.mubr.bf16.mxu0 %v9141
        %10942 = vmatmul.mubr.bf16.gmra.mrb[0].mxu0 %v9140
        %v10943 = vpop.f32.mrb[0].mxu0
        %v10944 = vadd.f32 %v10903, %v10943
        %v10945 = vpop.f32.mrb[0].mxu0
        %v10946 = vadd.f32 %v10905, %v10945
        %v10947 = vpop.f32.mrb[0].mxu0
        %v10948 = vpop.f32.mrb[0].mxu0
        %10949 = vdwg.mxu0
        %10950 = vmatprep.subr.bf16.mxu0 %v10302
        %10951 = vmatpush1.bf16.msra.mxu0 %v10301
        %10952 = vmatprep.subr.bf16.mxu0 %v10306
        %10953 = vmatpush1.bf16.msra.mxu0 %v10305
        %10954 = vmatprep.subr.bf16.mxu0 %v10310
        %10955 = vmatpush1.bf16.msra.mxu0 %v10309
        %10956 = vmatprep.subr.bf16.mxu0 %v10314
        %10957 = vmatpush1.bf16.msra.mxu0 %v10313
        %10958 = vmatprep.subr.bf16.mxu0 %v10318
        %10959 = vmatpush1.bf16.msra.mxu0 %v10317
        %10960 = vmatprep.subr.bf16.mxu0 %v10322
        %10961 = vmatpush1.bf16.msra.mxu0 %v10321
        %10962 = vmatprep.subr.bf16.mxu0 %v10326
        %10963 = vmatpush1.bf16.msra.mxu0 %v10325
        %10964 = vmatprep.subr.bf16.mxu0 %v10330
        %10965 = vmatpush1.bf16.msra.mxu0 %v10329
        %10966 = vmatprep.subr.bf16.mxu0 %v10334
        %10967 = vmatpush1.bf16.msra.mxu0 %v10333
        %10968 = vmatprep.subr.bf16.mxu0 %v10338
        %10969 = vmatpush1.bf16.msra.mxu0 %v10337
        %10970 = vmatprep.subr.bf16.mxu0 %v10342
        %10971 = vmatpush1.bf16.msra.mxu0 %v10341
        %10972 = vmatprep.subr.bf16.mxu0 %v10346
        %10973 = vmatpush1.bf16.msra.mxu0 %v10345
        %10974 = vmatprep.subr.bf16.mxu0 %v10350
        %10975 = vmatpush1.bf16.msra.mxu0 %v10349
        %10976 = vmatprep.subr.bf16.mxu0 %v10354
        %10977 = vmatpush1.bf16.msra.mxu0 %v10353
        %10978 = vmatprep.subr.bf16.mxu0 %v10358
        %10979 = vmatpush1.bf16.msra.mxu0 %v10357
        %10980 = vmatprep.subr.bf16.mxu0 %v10362
        %10981 = vmatpush1.bf16.msra.mxu0 %v10361
        %10982 = vmatprep.mubr.bf16.mxu0 %v9143
        %10983 = vmatmul.mubr.bf16.gmra.mrb[0].mxu0 %v9142
        %v10984 = vpop.f32.mrb[0].mxu0
        %v10985 = vadd.f32 %v10944, %v10984
        %v10986 = vpop.f32.mrb[0].mxu0
        %v10987 = vadd.f32 %v10946, %v10986
        %v10988 = vpop.f32.mrb[0].mxu0
        %v10989 = vpop.f32.mrb[0].mxu0
        %10990 = vdwg.mxu0
        %10991 = vmatprep.subr.bf16.mxu0 %v10366
        %10992 = vmatpush1.bf16.msra.mxu0 %v10365
        %10993 = vmatprep.subr.bf16.mxu0 %v10370
        %10994 = vmatpush1.bf16.msra.mxu0 %v10369
        %10995 = vmatprep.subr.bf16.mxu0 %v10374
        %10996 = vmatpush1.bf16.msra.mxu0 %v10373
        %10997 = vmatprep.subr.bf16.mxu0 %v10378
        %10998 = vmatpush1.bf16.msra.mxu0 %v10377
        %10999 = vmatprep.subr.bf16.mxu0 %v10382
        %11000 = vmatpush1.bf16.msra.mxu0 %v10381
        %11001 = vmatprep.subr.bf16.mxu0 %v10386
        %11002 = vmatpush1.bf16.msra.mxu0 %v10385
        %11003 = vmatprep.subr.bf16.mxu0 %v10390
        %11004 = vmatpush1.bf16.msra.mxu0 %v10389
        %11005 = vmatprep.subr.bf16.mxu0 %v10394
        %11006 = vmatpush1.bf16.msra.mxu0 %v10393
        %11007 = vmatprep.subr.bf16.mxu0 %v10398
        %11008 = vmatpush1.bf16.msra.mxu0 %v10397
        %11009 = vmatprep.subr.bf16.mxu0 %v10402
        %11010 = vmatpush1.bf16.msra.mxu0 %v10401
        %11011 = vmatprep.subr.bf16.mxu0 %v10406
        %11012 = vmatpush1.bf16.msra.mxu0 %v10405
        %11013 = vmatprep.subr.bf16.mxu0 %v10410
        %11014 = vmatpush1.bf16.msra.mxu0 %v10409
        %11015 = vmatprep.subr.bf16.mxu0 %v10414
        %11016 = vmatpush1.bf16.msra.mxu0 %v10413
        %11017 = vmatprep.subr.bf16.mxu0 %v10418
        %11018 = vmatpush1.bf16.msra.mxu0 %v10417
        %11019 = vmatprep.subr.bf16.mxu0 %v10422
        %11020 = vmatpush1.bf16.msra.mxu0 %v10421
        %11021 = vmatprep.subr.bf16.mxu0 %v10426
        %11022 = vmatpush1.bf16.msra.mxu0 %v10425
        %11023 = vmatprep.mubr.bf16.mxu0 %v9145
        %11024 = vmatmul.mubr.bf16.gmra.mrb[0].mxu0 %v9144
        %v11025 = vpop.f32.mrb[0].mxu0
        %v11026 = vadd.f32 %v10985, %v11025
        %v11027 = vpop.f32.mrb[0].mxu0
        %v11028 = vadd.f32 %v10987, %v11027
        %v11029 = vpop.f32.mrb[0].mxu0
        %v11030 = vpop.f32.mrb[0].mxu0
        %11031 = vdwg.mxu0
        %vm11032 = vcmp.gt.f32.partialorder %v10862, 0.0
        %vm11033 = vcmp.gt.f32.partialorder %v10864, 0.0
        %vm11034 = vcmp.gt.f32.partialorder %v11026, 0.0
        %vm11035 = vcmp.gt.f32.partialorder %v11028, 0.0
        %v11036 = vmul.f32 %v10862, 0.01
        %v11037 = vmul.f32 %v10864, 0.01
        %v11038 = vmul.f32 %v11026, 0.01
        %v11039 = vmul.f32 %v11028, 0.01
        %v11040 = vsel %vm11032, %v10862, %v11036
        %v11041 = vsel %vm11033, %v10864, %v11037
        %v11042 = vsel %vm11034, %v11026, %v11038
        %v11043 = vsel %vm11035, %v11028, %v11039
        %v11044 = vpack.c.bf16 %v11040, %v11040
        %v11045 = vpack.c.bf16 %v11041, %v11041
        %v11046 = vpack.c.bf16 %v11042, %v11042
        %v11047 = vpack.c.bf16 %v11043, %v11043
        %v11048 = vld [vmem:[#allocation10] sm:$0xff]
        %v11049 = vld [vmem:[#allocation10 + $0x8] sm:$0xff]
        %v11050 = vld [vmem:[#allocation10 + $0x10] sm:$0xff]
        %v11051 = vld [vmem:[#allocation10 + $0x18] sm:$0xff]
        %v11052 = vld [vmem:[#allocation10 + $0x20] sm:$0xff]
        %v11053 = vld [vmem:[#allocation10 + $0x28] sm:$0xff]
        %v11054 = vld [vmem:[#allocation10 + $0x30] sm:$0xff]
        %v11055 = vld [vmem:[#allocation10 + $0x38] sm:$0xff]
        %v11056 = vld [vmem:[#allocation10 + $0x40] sm:$0xff]
        %v11057 = vld [vmem:[#allocation10 + $0x48] sm:$0xff]
        %v11058 = vld [vmem:[#allocation10 + $0x50] sm:$0xff]
        %v11059 = vld [vmem:[#allocation10 + $0x58] sm:$0xff]
        %v11060 = vld [vmem:[#allocation10 + $0x60] sm:$0xff]
        %v11061 = vld [vmem:[#allocation10 + $0x68] sm:$0xff]
        %v11062 = vld [vmem:[#allocation10 + $0x70] sm:$0xff]
        %v11063 = vld [vmem:[#allocation10 + $0x78] sm:$0xff]
        %v11064 = vld [vmem:[#allocation10 + $0x80] sm:$0xff]
        %v11065 = vld [vmem:[#allocation10 + $0x88] sm:$0xff]
        %v11066 = vld [vmem:[#allocation10 + $0x90] sm:$0xff]
        %v11067 = vld [vmem:[#allocation10 + $0x98] sm:$0xff]
        %v11068 = vld [vmem:[#allocation10 + $0xa0] sm:$0xff]
        %v11069 = vld [vmem:[#allocation10 + $0xa8] sm:$0xff]
        %v11070 = vld [vmem:[#allocation10 + $0xb0] sm:$0xff]
        %v11071 = vld [vmem:[#allocation10 + $0xb8] sm:$0xff]
        %v11072 = vld [vmem:[#allocation10 + $0xc0] sm:$0xff]
        %v11073 = vld [vmem:[#allocation10 + $0xc8] sm:$0xff]
        %v11074 = vld [vmem:[#allocation10 + $0xd0] sm:$0xff]
        %v11075 = vld [vmem:[#allocation10 + $0xd8] sm:$0xff]
        %v11076 = vld [vmem:[#allocation10 + $0xe0] sm:$0xff]
        %v11077 = vld [vmem:[#allocation10 + $0xe8] sm:$0xff]
        %v11078 = vld [vmem:[#allocation10 + $0xf0] sm:$0xff]
        %v11079 = vld [vmem:[#allocation10 + $0xf8] sm:$0xff]
        %v11080 = vld [vmem:[#allocation10 + $0x100] sm:$0xff]
        %v11081 = vld [vmem:[#allocation10 + $0x108] sm:$0xff]
        %v11082 = vld [vmem:[#allocation10 + $0x110] sm:$0xff]
        %v11083 = vld [vmem:[#allocation10 + $0x118] sm:$0xff]
        %v11084 = vld [vmem:[#allocation10 + $0x120] sm:$0xff]
        %v11085 = vld [vmem:[#allocation10 + $0x128] sm:$0xff]
        %v11086 = vld [vmem:[#allocation10 + $0x130] sm:$0xff]
        %v11087 = vld [vmem:[#allocation10 + $0x138] sm:$0xff]
        %v11088 = vld [vmem:[#allocation10 + $0x140] sm:$0xff]
        %v11089 = vld [vmem:[#allocation10 + $0x148] sm:$0xff]
        %v11090 = vld [vmem:[#allocation10 + $0x150] sm:$0xff]
        %v11091 = vld [vmem:[#allocation10 + $0x158] sm:$0xff]
        %v11092 = vld [vmem:[#allocation10 + $0x160] sm:$0xff]
        %v11093 = vld [vmem:[#allocation10 + $0x168] sm:$0xff]
        %v11094 = vld [vmem:[#allocation10 + $0x170] sm:$0xff]
        %v11095 = vld [vmem:[#allocation10 + $0x178] sm:$0xff]
        %v11096 = vld [vmem:[#allocation10 + $0x180] sm:$0xff]
        %v11097 = vld [vmem:[#allocation10 + $0x188] sm:$0xff]
        %v11098 = vld [vmem:[#allocation10 + $0x190] sm:$0xff]
        %v11099 = vld [vmem:[#allocation10 + $0x198] sm:$0xff]
        %v11100 = vld [vmem:[#allocation10 + $0x1a0] sm:$0xff]
        %v11101 = vld [vmem:[#allocation10 + $0x1a8] sm:$0xff]
        %v11102 = vld [vmem:[#allocation10 + $0x1b0] sm:$0xff]
        %v11103 = vld [vmem:[#allocation10 + $0x1b8] sm:$0xff]
        %v11104 = vld [vmem:[#allocation10 + $0x1c0] sm:$0xff]
        %v11105 = vld [vmem:[#allocation10 + $0x1c8] sm:$0xff]
        %v11106 = vld [vmem:[#allocation10 + $0x1d0] sm:$0xff]
        %v11107 = vld [vmem:[#allocation10 + $0x1d8] sm:$0xff]
        %v11108 = vld [vmem:[#allocation10 + $0x1e0] sm:$0xff]
        %v11109 = vld [vmem:[#allocation10 + $0x1e8] sm:$0xff]
        %v11110 = vld [vmem:[#allocation10 + $0x1f0] sm:$0xff]
        %v11111 = vld [vmem:[#allocation10 + $0x1f8] sm:$0xff]
        %v11112 = vld [vmem:[#allocation11] sm:$0x3]
        %v11177 = vunpack.c.l.b16 %v11048
        %v11178 = vunpack.c.h.b16 %v11048
        %v11179 = vunpack.c.l.b16 %v11049
        %v11180 = vunpack.c.h.b16 %v11049
        %v11181 = vunpack.c.l.b16 %v11050
        %v11182 = vunpack.c.h.b16 %v11050
        %v11183 = vunpack.c.l.b16 %v11051
        %v11184 = vunpack.c.h.b16 %v11051
        %v11185 = vunpack.c.l.b16 %v11052
        %v11186 = vunpack.c.h.b16 %v11052
        %v11187 = vunpack.c.l.b16 %v11053
        %v11188 = vunpack.c.h.b16 %v11053
        %v11189 = vunpack.c.l.b16 %v11054
        %v11190 = vunpack.c.h.b16 %v11054
        %v11191 = vunpack.c.l.b16 %v11055
        %v11192 = vunpack.c.h.b16 %v11055
        %v11193 = vunpack.c.l.b16 %v11056
        %v11194 = vunpack.c.h.b16 %v11056
        %v11195 = vunpack.c.l.b16 %v11057
        %v11196 = vunpack.c.h.b16 %v11057
        %v11197 = vunpack.c.l.b16 %v11058
        %v11198 = vunpack.c.h.b16 %v11058
        %v11199 = vunpack.c.l.b16 %v11059
        %v11200 = vunpack.c.h.b16 %v11059
        %v11201 = vunpack.c.l.b16 %v11060
        %v11202 = vunpack.c.h.b16 %v11060
        %v11203 = vunpack.c.l.b16 %v11061
        %v11204 = vunpack.c.h.b16 %v11061
        %v11205 = vunpack.c.l.b16 %v11062
        %v11206 = vunpack.c.h.b16 %v11062
        %v11207 = vunpack.c.l.b16 %v11063
        %v11208 = vunpack.c.h.b16 %v11063
        %v11209 = vunpack.c.l.b16 %v11064
        %v11210 = vunpack.c.h.b16 %v11064
        %v11211 = vunpack.c.l.b16 %v11065
        %v11212 = vunpack.c.h.b16 %v11065
        %v11213 = vunpack.c.l.b16 %v11066
        %v11214 = vunpack.c.h.b16 %v11066
        %v11215 = vunpack.c.l.b16 %v11067
        %v11216 = vunpack.c.h.b16 %v11067
        %v11217 = vunpack.c.l.b16 %v11068
        %v11218 = vunpack.c.h.b16 %v11068
        %v11219 = vunpack.c.l.b16 %v11069
        %v11220 = vunpack.c.h.b16 %v11069
        %v11221 = vunpack.c.l.b16 %v11070
        %v11222 = vunpack.c.h.b16 %v11070
        %v11223 = vunpack.c.l.b16 %v11071
        %v11224 = vunpack.c.h.b16 %v11071
        %v11225 = vunpack.c.l.b16 %v11072
        %v11226 = vunpack.c.h.b16 %v11072
        %v11227 = vunpack.c.l.b16 %v11073
        %v11228 = vunpack.c.h.b16 %v11073
        %v11229 = vunpack.c.l.b16 %v11074
        %v11230 = vunpack.c.h.b16 %v11074
        %v11231 = vunpack.c.l.b16 %v11075
        %v11232 = vunpack.c.h.b16 %v11075
        %v11233 = vunpack.c.l.b16 %v11076
        %v11234 = vunpack.c.h.b16 %v11076
        %v11235 = vunpack.c.l.b16 %v11077
        %v11236 = vunpack.c.h.b16 %v11077
        %v11237 = vunpack.c.l.b16 %v11078
        %v11238 = vunpack.c.h.b16 %v11078
        %v11239 = vunpack.c.l.b16 %v11079
        %v11240 = vunpack.c.h.b16 %v11079
        %v11241 = vunpack.c.l.b16 %v11080
        %v11242 = vunpack.c.h.b16 %v11080
        %v11243 = vunpack.c.l.b16 %v11081
        %v11244 = vunpack.c.h.b16 %v11081
        %v11245 = vunpack.c.l.b16 %v11082
        %v11246 = vunpack.c.h.b16 %v11082
        %v11247 = vunpack.c.l.b16 %v11083
        %v11248 = vunpack.c.h.b16 %v11083
        %v11249 = vunpack.c.l.b16 %v11084
        %v11250 = vunpack.c.h.b16 %v11084
        %v11251 = vunpack.c.l.b16 %v11085
        %v11252 = vunpack.c.h.b16 %v11085
        %v11253 = vunpack.c.l.b16 %v11086
        %v11254 = vunpack.c.h.b16 %v11086
        %v11255 = vunpack.c.l.b16 %v11087
        %v11256 = vunpack.c.h.b16 %v11087
        %v11257 = vunpack.c.l.b16 %v11088
        %v11258 = vunpack.c.h.b16 %v11088
        %v11259 = vunpack.c.l.b16 %v11089
        %v11260 = vunpack.c.h.b16 %v11089
        %v11261 = vunpack.c.l.b16 %v11090
        %v11262 = vunpack.c.h.b16 %v11090
        %v11263 = vunpack.c.l.b16 %v11091
        %v11264 = vunpack.c.h.b16 %v11091
        %v11265 = vunpack.c.l.b16 %v11092
        %v11266 = vunpack.c.h.b16 %v11092
        %v11267 = vunpack.c.l.b16 %v11093
        %v11268 = vunpack.c.h.b16 %v11093
        %v11269 = vunpack.c.l.b16 %v11094
        %v11270 = vunpack.c.h.b16 %v11094
        %v11271 = vunpack.c.l.b16 %v11095
        %v11272 = vunpack.c.h.b16 %v11095
        %v11273 = vunpack.c.l.b16 %v11096
        %v11274 = vunpack.c.h.b16 %v11096
        %v11275 = vunpack.c.l.b16 %v11097
        %v11276 = vunpack.c.h.b16 %v11097
        %v11277 = vunpack.c.l.b16 %v11098
        %v11278 = vunpack.c.h.b16 %v11098
        %v11279 = vunpack.c.l.b16 %v11099
        %v11280 = vunpack.c.h.b16 %v11099
        %v11281 = vunpack.c.l.b16 %v11100
        %v11282 = vunpack.c.h.b16 %v11100
        %v11283 = vunpack.c.l.b16 %v11101
        %v11284 = vunpack.c.h.b16 %v11101
        %v11285 = vunpack.c.l.b16 %v11102
        %v11286 = vunpack.c.h.b16 %v11102
        %v11287 = vunpack.c.l.b16 %v11103
        %v11288 = vunpack.c.h.b16 %v11103
        %v11289 = vunpack.c.l.b16 %v11104
        %v11290 = vunpack.c.h.b16 %v11104
        %v11291 = vunpack.c.l.b16 %v11105
        %v11292 = vunpack.c.h.b16 %v11105
        %v11293 = vunpack.c.l.b16 %v11106
        %v11294 = vunpack.c.h.b16 %v11106
        %v11295 = vunpack.c.l.b16 %v11107
        %v11296 = vunpack.c.h.b16 %v11107
        %v11297 = vunpack.c.l.b16 %v11108
        %v11298 = vunpack.c.h.b16 %v11108
        %v11299 = vunpack.c.l.b16 %v11109
        %v11300 = vunpack.c.h.b16 %v11109
        %v11301 = vunpack.c.l.b16 %v11110
        %v11302 = vunpack.c.h.b16 %v11110
        %v11303 = vunpack.c.l.b16 %v11111
        %v11304 = vunpack.c.h.b16 %v11111
        %v11305 = vpack.c.b16 %v11179, %v11177
        %v11306 = vpack.c.b16 %v11180, %v11178
        %v11307 = vpack.c.b16 %v11183, %v11181
        %v11308 = vpack.c.b16 %v11184, %v11182
        %v11309 = vpack.c.b16 %v11187, %v11185
        %v11310 = vpack.c.b16 %v11188, %v11186
        %v11311 = vpack.c.b16 %v11191, %v11189
        %v11312 = vpack.c.b16 %v11192, %v11190
        %v11313 = vpack.c.b16 %v11195, %v11193
        %v11314 = vpack.c.b16 %v11196, %v11194
        %v11315 = vpack.c.b16 %v11199, %v11197
        %v11316 = vpack.c.b16 %v11200, %v11198
        %v11317 = vpack.c.b16 %v11203, %v11201
        %v11318 = vpack.c.b16 %v11204, %v11202
        %v11319 = vpack.c.b16 %v11207, %v11205
        %v11320 = vpack.c.b16 %v11208, %v11206
        %v11321 = vpack.c.b16 %v11211, %v11209
        %v11322 = vpack.c.b16 %v11212, %v11210
        %v11323 = vpack.c.b16 %v11215, %v11213
        %v11324 = vpack.c.b16 %v11216, %v11214
        %v11325 = vpack.c.b16 %v11219, %v11217
        %v11326 = vpack.c.b16 %v11220, %v11218
        %v11327 = vpack.c.b16 %v11223, %v11221
        %v11328 = vpack.c.b16 %v11224, %v11222
        %v11329 = vpack.c.b16 %v11227, %v11225
        %v11330 = vpack.c.b16 %v11228, %v11226
        %v11331 = vpack.c.b16 %v11231, %v11229
        %v11332 = vpack.c.b16 %v11232, %v11230
        %v11333 = vpack.c.b16 %v11235, %v11233
        %v11334 = vpack.c.b16 %v11236, %v11234
        %v11335 = vpack.c.b16 %v11239, %v11237
        %v11336 = vpack.c.b16 %v11240, %v11238
        %v11337 = vpack.c.b16 %v11243, %v11241
        %v11338 = vpack.c.b16 %v11244, %v11242
        %v11339 = vpack.c.b16 %v11247, %v11245
        %v11340 = vpack.c.b16 %v11248, %v11246
        %v11341 = vpack.c.b16 %v11251, %v11249
        %v11342 = vpack.c.b16 %v11252, %v11250
        %v11343 = vpack.c.b16 %v11255, %v11253
        %v11344 = vpack.c.b16 %v11256, %v11254
        %v11345 = vpack.c.b16 %v11259, %v11257
        %v11346 = vpack.c.b16 %v11260, %v11258
        %v11347 = vpack.c.b16 %v11263, %v11261
        %v11348 = vpack.c.b16 %v11264, %v11262
        %v11349 = vpack.c.b16 %v11267, %v11265
        %v11350 = vpack.c.b16 %v11268, %v11266
        %v11351 = vpack.c.b16 %v11271, %v11269
        %v11352 = vpack.c.b16 %v11272, %v11270
        %v11353 = vpack.c.b16 %v11275, %v11273
        %v11354 = vpack.c.b16 %v11276, %v11274
        %v11355 = vpack.c.b16 %v11279, %v11277
        %v11356 = vpack.c.b16 %v11280, %v11278
        %v11357 = vpack.c.b16 %v11283, %v11281
        %v11358 = vpack.c.b16 %v11284, %v11282
        %v11359 = vpack.c.b16 %v11287, %v11285
        %v11360 = vpack.c.b16 %v11288, %v11286
        %v11361 = vpack.c.b16 %v11291, %v11289
        %v11362 = vpack.c.b16 %v11292, %v11290
        %v11363 = vpack.c.b16 %v11295, %v11293
        %v11364 = vpack.c.b16 %v11296, %v11294
        %v11365 = vpack.c.b16 %v11299, %v11297
        %v11366 = vpack.c.b16 %v11300, %v11298
        %v11367 = vpack.c.b16 %v11303, %v11301
        %v11368 = vpack.c.b16 %v11304, %v11302
        %v11434 = vlaneseq
        %v11435 = vshrl.u32 %v11434, 7
        %v11436 = vsub.s32 0, %v11435
        %v11437 = vrot.slane %v11112, %v11436
        %v11438 = vlaneseq
        %v11439 = vshrl.u32 %v11438, 7
        %v11440 = vsub.s32 1, %v11439
        %v11441 = vrot.slane %v11112, %v11440
        %11444 = vmatprep.subr.bf16.mxu0 %v11306
        %11445 = vmatpush1.bf16.msra.mxu0 %v11305
        %11446 = vmatprep.subr.bf16.mxu0 %v11308
        %11447 = vmatpush1.bf16.msra.mxu0 %v11307
        %11448 = vmatprep.subr.bf16.mxu0 %v11310
        %11449 = vmatpush1.bf16.msra.mxu0 %v11309
        %11450 = vmatprep.subr.bf16.mxu0 %v11312
        %11451 = vmatpush1.bf16.msra.mxu0 %v11311
        %11452 = vmatprep.subr.bf16.mxu0 %v11314
        %11453 = vmatpush1.bf16.msra.mxu0 %v11313
        %11454 = vmatprep.subr.bf16.mxu0 %v11316
        %11455 = vmatpush1.bf16.msra.mxu0 %v11315
        %11456 = vmatprep.subr.bf16.mxu0 %v11318
        %11457 = vmatpush1.bf16.msra.mxu0 %v11317
        %11458 = vmatprep.subr.bf16.mxu0 %v11320
        %11459 = vmatpush1.bf16.msra.mxu0 %v11319
        %11460 = vmatprep.subr.bf16.mxu0 %v11322
        %11461 = vmatpush1.bf16.msra.mxu0 %v11321
        %11462 = vmatprep.subr.bf16.mxu0 %v11324
        %11463 = vmatpush1.bf16.msra.mxu0 %v11323
        %11464 = vmatprep.subr.bf16.mxu0 %v11326
        %11465 = vmatpush1.bf16.msra.mxu0 %v11325
        %11466 = vmatprep.subr.bf16.mxu0 %v11328
        %11467 = vmatpush1.bf16.msra.mxu0 %v11327
        %11468 = vmatprep.subr.bf16.mxu0 %v11330
        %11469 = vmatpush1.bf16.msra.mxu0 %v11329
        %11470 = vmatprep.subr.bf16.mxu0 %v11332
        %11471 = vmatpush1.bf16.msra.mxu0 %v11331
        %11472 = vmatprep.subr.bf16.mxu0 %v11334
        %11473 = vmatpush1.bf16.msra.mxu0 %v11333
        %11474 = vmatprep.subr.bf16.mxu0 %v11336
        %11475 = vmatpush1.bf16.msra.mxu0 %v11335
        %11476 = vmatprep.mubr.bf16.mxu0 %v11045
        %11477 = vmatmul.mubr.bf16.gmra.mrb[0].mxu0 %v11044
        %v11478 = vpop.f32.mrb[0].mxu0
        %v11479 = vadd.f32 %v11437, %v11478
        %v11480 = vpop.f32.mrb[0].mxu0
        %v11481 = vadd.f32 %v11441, %v11480
        %v11482 = vpop.f32.mrb[0].mxu0
        %v11483 = vpop.f32.mrb[0].mxu0
        %11484 = vdwg.mxu0
        %11485 = vmatprep.subr.bf16.mxu0 %v11338
        %11486 = vmatpush1.bf16.msra.mxu0 %v11337
        %11487 = vmatprep.subr.bf16.mxu0 %v11340
        %11488 = vmatpush1.bf16.msra.mxu0 %v11339
        %11489 = vmatprep.subr.bf16.mxu0 %v11342
        %11490 = vmatpush1.bf16.msra.mxu0 %v11341
        %11491 = vmatprep.subr.bf16.mxu0 %v11344
        %11492 = vmatpush1.bf16.msra.mxu0 %v11343
        %11493 = vmatprep.subr.bf16.mxu0 %v11346
        %11494 = vmatpush1.bf16.msra.mxu0 %v11345
        %11495 = vmatprep.subr.bf16.mxu0 %v11348
        %11496 = vmatpush1.bf16.msra.mxu0 %v11347
        %11497 = vmatprep.subr.bf16.mxu0 %v11350
        %11498 = vmatpush1.bf16.msra.mxu0 %v11349
        %11499 = vmatprep.subr.bf16.mxu0 %v11352
        %11500 = vmatpush1.bf16.msra.mxu0 %v11351
        %11501 = vmatprep.subr.bf16.mxu0 %v11354
        %11502 = vmatpush1.bf16.msra.mxu0 %v11353
        %11503 = vmatprep.subr.bf16.mxu0 %v11356
        %11504 = vmatpush1.bf16.msra.mxu0 %v11355
        %11505 = vmatprep.subr.bf16.mxu0 %v11358
        %11506 = vmatpush1.bf16.msra.mxu0 %v11357
        %11507 = vmatprep.subr.bf16.mxu0 %v11360
        %11508 = vmatpush1.bf16.msra.mxu0 %v11359
        %11509 = vmatprep.subr.bf16.mxu0 %v11362
        %11510 = vmatpush1.bf16.msra.mxu0 %v11361
        %11511 = vmatprep.subr.bf16.mxu0 %v11364
        %11512 = vmatpush1.bf16.msra.mxu0 %v11363
        %11513 = vmatprep.subr.bf16.mxu0 %v11366
        %11514 = vmatpush1.bf16.msra.mxu0 %v11365
        %11515 = vmatprep.subr.bf16.mxu0 %v11368
        %11516 = vmatpush1.bf16.msra.mxu0 %v11367
        %11517 = vmatprep.mubr.bf16.mxu0 %v11047
        %11518 = vmatmul.mubr.bf16.gmra.mrb[0].mxu0 %v11046
        %v11519 = vpop.f32.mrb[0].mxu0
        %v11520 = vadd.f32 %v11479, %v11519
        %v11521 = vpop.f32.mrb[0].mxu0
        %v11522 = vadd.f32 %v11481, %v11521
        %v11523 = vpop.f32.mrb[0].mxu0
        %v11524 = vpop.f32.mrb[0].mxu0
        %11525 = vdwg.mxu0
        %vm11526 = vcmp.gt.f32.partialorder %v11520, 0.0
        %vm11527 = vcmp.gt.f32.partialorder %v11522, 0.0
        %v11528 = vmul.f32 %v11520, 0.01
        %v11529 = vmul.f32 %v11522, 0.01
        %v11530 = vsel %vm11526, %v11520, %v11528
        %v11531 = vsel %vm11527, %v11522, %v11529
        %v11532 = vpack.c.bf16 %v11530, %v11530
        %v11533 = vpack.c.bf16 %v11531, %v11531
        %v11534 = vld [vmem:[#allocation13] sm:$0xff]
        %v11535 = vld [vmem:[#allocation13 + $0x8] sm:$0xff]
        %v11536 = vld [vmem:[#allocation13 + $0x10] sm:$0xff]
        %v11537 = vld [vmem:[#allocation13 + $0x18] sm:$0xff]
        %v11538 = vld [vmem:[#allocation13 + $0x20] sm:$0xff]
        %v11539 = vld [vmem:[#allocation13 + $0x28] sm:$0xff]
        %v11540 = vld [vmem:[#allocation13 + $0x30] sm:$0xff]
        %v11541 = vld [vmem:[#allocation13 + $0x38] sm:$0xff]
        %v11542 = vld [vmem:[#allocation13 + $0x40] sm:$0xff]
        %v11543 = vld [vmem:[#allocation13 + $0x48] sm:$0xff]
        %v11544 = vld [vmem:[#allocation13 + $0x50] sm:$0xff]
        %v11545 = vld [vmem:[#allocation13 + $0x58] sm:$0xff]
        %v11546 = vld [vmem:[#allocation13 + $0x60] sm:$0xff]
        %v11547 = vld [vmem:[#allocation13 + $0x68] sm:$0xff]
        %v11548 = vld [vmem:[#allocation13 + $0x70] sm:$0xff]
        %v11549 = vld [vmem:[#allocation13 + $0x78] sm:$0xff]
        %v11550 = vld [vmem:[#allocation13 + $0x80] sm:$0xff]
        %v11551 = vld [vmem:[#allocation13 + $0x88] sm:$0xff]
        %v11552 = vld [vmem:[#allocation13 + $0x90] sm:$0xff]
        %v11553 = vld [vmem:[#allocation13 + $0x98] sm:$0xff]
        %v11554 = vld [vmem:[#allocation13 + $0xa0] sm:$0xff]
        %v11555 = vld [vmem:[#allocation13 + $0xa8] sm:$0xff]
        %v11556 = vld [vmem:[#allocation13 + $0xb0] sm:$0xff]
        %v11557 = vld [vmem:[#allocation13 + $0xb8] sm:$0xff]
        %v11558 = vld [vmem:[#allocation13 + $0xc0] sm:$0xff]
        %v11559 = vld [vmem:[#allocation13 + $0xc8] sm:$0xff]
        %v11560 = vld [vmem:[#allocation13 + $0xd0] sm:$0xff]
        %v11561 = vld [vmem:[#allocation13 + $0xd8] sm:$0xff]
        %v11562 = vld [vmem:[#allocation13 + $0xe0] sm:$0xff]
        %v11563 = vld [vmem:[#allocation13 + $0xe8] sm:$0xff]
        %v11564 = vld [vmem:[#allocation13 + $0xf0] sm:$0xff]
        %v11565 = vld [vmem:[#allocation13 + $0xf8] sm:$0xff]
        %v11566 = vld [vmem:[#allocation14] sm:$0x3]
        %v11599 = vunpack.c.l.b16 %v11534
        %v11600 = vunpack.c.h.b16 %v11534
        %v11601 = vunpack.c.l.b16 %v11535
        %v11602 = vunpack.c.h.b16 %v11535
        %v11603 = vunpack.c.l.b16 %v11536
        %v11604 = vunpack.c.h.b16 %v11536
        %v11605 = vunpack.c.l.b16 %v11537
        %v11606 = vunpack.c.h.b16 %v11537
        %v11607 = vunpack.c.l.b16 %v11538
        %v11608 = vunpack.c.h.b16 %v11538
        %v11609 = vunpack.c.l.b16 %v11539
        %v11610 = vunpack.c.h.b16 %v11539
        %v11611 = vunpack.c.l.b16 %v11540
        %v11612 = vunpack.c.h.b16 %v11540
        %v11613 = vunpack.c.l.b16 %v11541
        %v11614 = vunpack.c.h.b16 %v11541
        %v11615 = vunpack.c.l.b16 %v11542
        %v11616 = vunpack.c.h.b16 %v11542
        %v11617 = vunpack.c.l.b16 %v11543
        %v11618 = vunpack.c.h.b16 %v11543
        %v11619 = vunpack.c.l.b16 %v11544
        %v11620 = vunpack.c.h.b16 %v11544
        %v11621 = vunpack.c.l.b16 %v11545
        %v11622 = vunpack.c.h.b16 %v11545
        %v11623 = vunpack.c.l.b16 %v11546
        %v11624 = vunpack.c.h.b16 %v11546
        %v11625 = vunpack.c.l.b16 %v11547
        %v11626 = vunpack.c.h.b16 %v11547
        %v11627 = vunpack.c.l.b16 %v11548
        %v11628 = vunpack.c.h.b16 %v11548
        %v11629 = vunpack.c.l.b16 %v11549
        %v11630 = vunpack.c.h.b16 %v11549
        %v11631 = vunpack.c.l.b16 %v11550
        %v11632 = vunpack.c.h.b16 %v11550
        %v11633 = vunpack.c.l.b16 %v11551
        %v11634 = vunpack.c.h.b16 %v11551
        %v11635 = vunpack.c.l.b16 %v11552
        %v11636 = vunpack.c.h.b16 %v11552
        %v11637 = vunpack.c.l.b16 %v11553
        %v11638 = vunpack.c.h.b16 %v11553
        %v11639 = vunpack.c.l.b16 %v11554
        %v11640 = vunpack.c.h.b16 %v11554
        %v11641 = vunpack.c.l.b16 %v11555
        %v11642 = vunpack.c.h.b16 %v11555
        %v11643 = vunpack.c.l.b16 %v11556
        %v11644 = vunpack.c.h.b16 %v11556
        %v11645 = vunpack.c.l.b16 %v11557
        %v11646 = vunpack.c.h.b16 %v11557
        %v11647 = vunpack.c.l.b16 %v11558
        %v11648 = vunpack.c.h.b16 %v11558
        %v11649 = vunpack.c.l.b16 %v11559
        %v11650 = vunpack.c.h.b16 %v11559
        %v11651 = vunpack.c.l.b16 %v11560
        %v11652 = vunpack.c.h.b16 %v11560
        %v11653 = vunpack.c.l.b16 %v11561
        %v11654 = vunpack.c.h.b16 %v11561
        %v11655 = vunpack.c.l.b16 %v11562
        %v11656 = vunpack.c.h.b16 %v11562
        %v11657 = vunpack.c.l.b16 %v11563
        %v11658 = vunpack.c.h.b16 %v11563
        %v11659 = vunpack.c.l.b16 %v11564
        %v11660 = vunpack.c.h.b16 %v11564
        %v11661 = vunpack.c.l.b16 %v11565
        %v11662 = vunpack.c.h.b16 %v11565
        %v11663 = vpack.c.b16 %v11601, %v11599
        %v11664 = vpack.c.b16 %v11602, %v11600
        %v11665 = vpack.c.b16 %v11605, %v11603
        %v11666 = vpack.c.b16 %v11606, %v11604
        %v11667 = vpack.c.b16 %v11609, %v11607
        %v11668 = vpack.c.b16 %v11610, %v11608
        %v11669 = vpack.c.b16 %v11613, %v11611
        %v11670 = vpack.c.b16 %v11614, %v11612
        %v11671 = vpack.c.b16 %v11617, %v11615
        %v11672 = vpack.c.b16 %v11618, %v11616
        %v11673 = vpack.c.b16 %v11621, %v11619
        %v11674 = vpack.c.b16 %v11622, %v11620
        %v11675 = vpack.c.b16 %v11625, %v11623
        %v11676 = vpack.c.b16 %v11626, %v11624
        %v11677 = vpack.c.b16 %v11629, %v11627
        %v11678 = vpack.c.b16 %v11630, %v11628
        %v11679 = vpack.c.b16 %v11633, %v11631
        %v11680 = vpack.c.b16 %v11634, %v11632
        %v11681 = vpack.c.b16 %v11637, %v11635
        %v11682 = vpack.c.b16 %v11638, %v11636
        %v11683 = vpack.c.b16 %v11641, %v11639
        %v11684 = vpack.c.b16 %v11642, %v11640
        %v11685 = vpack.c.b16 %v11645, %v11643
        %v11686 = vpack.c.b16 %v11646, %v11644
        %v11687 = vpack.c.b16 %v11649, %v11647
        %v11688 = vpack.c.b16 %v11650, %v11648
        %v11689 = vpack.c.b16 %v11653, %v11651
        %v11690 = vpack.c.b16 %v11654, %v11652
        %v11691 = vpack.c.b16 %v11657, %v11655
        %v11692 = vpack.c.b16 %v11658, %v11656
        %v11693 = vpack.c.b16 %v11661, %v11659
        %v11694 = vpack.c.b16 %v11662, %v11660
        %v11728 = vlaneseq
        %v11729 = vshrl.u32 %v11728, 7
        %v11730 = vsub.s32 0, %v11729
        %v11731 = vrot.slane %v11566, %v11730
        %v11732 = vlaneseq
        %v11733 = vshrl.u32 %v11732, 7
        %v11734 = vsub.s32 1, %v11733
        %v11735 = vrot.slane %v11566, %v11734
        %11738 = vmatprep.subr.bf16.mxu0 %v11664
        %11739 = vmatpush1.bf16.msra.mxu0 %v11663
        %11740 = vmatprep.subr.bf16.mxu0 %v11666
        %11741 = vmatpush1.bf16.msra.mxu0 %v11665
        %11742 = vmatprep.subr.bf16.mxu0 %v11668
        %11743 = vmatpush1.bf16.msra.mxu0 %v11667
        %11744 = vmatprep.subr.bf16.mxu0 %v11670
        %11745 = vmatpush1.bf16.msra.mxu0 %v11669
        %11746 = vmatprep.subr.bf16.mxu0 %v11672
        %11747 = vmatpush1.bf16.msra.mxu0 %v11671
        %11748 = vmatprep.subr.bf16.mxu0 %v11674
        %11749 = vmatpush1.bf16.msra.mxu0 %v11673
        %11750 = vmatprep.subr.bf16.mxu0 %v11676
        %11751 = vmatpush1.bf16.msra.mxu0 %v11675
        %11752 = vmatprep.subr.bf16.mxu0 %v11678
        %11753 = vmatpush1.bf16.msra.mxu0 %v11677
        %11754 = vmatprep.subr.bf16.mxu0 %v11680
        %11755 = vmatpush1.bf16.msra.mxu0 %v11679
        %11756 = vmatprep.subr.bf16.mxu0 %v11682
        %11757 = vmatpush1.bf16.msra.mxu0 %v11681
        %11758 = vmatprep.subr.bf16.mxu0 %v11684
        %11759 = vmatpush1.bf16.msra.mxu0 %v11683
        %11760 = vmatprep.subr.bf16.mxu0 %v11686
        %11761 = vmatpush1.bf16.msra.mxu0 %v11685
        %11762 = vmatprep.subr.bf16.mxu0 %v11688
        %11763 = vmatpush1.bf16.msra.mxu0 %v11687
        %11764 = vmatprep.subr.bf16.mxu0 %v11690
        %11765 = vmatpush1.bf16.msra.mxu0 %v11689
        %11766 = vmatprep.subr.bf16.mxu0 %v11692
        %11767 = vmatpush1.bf16.msra.mxu0 %v11691
        %11768 = vmatprep.subr.bf16.mxu0 %v11694
        %11769 = vmatpush1.bf16.msra.mxu0 %v11693
        %11770 = vmatprep.mubr.bf16.mxu0 %v11533
        %11771 = vmatmul.mubr.bf16.gmra.mrb[0].mxu0 %v11532
        %v11772 = vpop.f32.mrb[0].mxu0
        %v11773 = vadd.f32 %v11731, %v11772
        %v11774 = vpop.f32.mrb[0].mxu0
        %v11775 = vadd.f32 %v11735, %v11774
        %v11776 = vpop.f32.mrb[0].mxu0
        %v11777 = vpop.f32.mrb[0].mxu0
        %11778 = vdwg.mxu0
        %v11779 = vpack.c.bf16 %v11773, %v11773
        %v11780 = vpack.c.bf16 %v11775, %v11775
        %v11781 = vld [vmem:[%s9] sm:$0xf]
        %v11782 = vld [vmem:[%s9 + $0x4] sm:$0xf]
        %v11783 = vld [vmem:[%s9 + $0x8] sm:$0xf]
        %v11784 = vld [vmem:[%s9 + $0xc] sm:$0xf]
        %v11785 = vld [vmem:[%s9 + $0x10] sm:$0xf]
        %v11786 = vld [vmem:[%s9 + $0x14] sm:$0xf]
        %v11787 = vld [vmem:[%s9 + $0x18] sm:$0xf]
        %v11788 = vld [vmem:[%s9 + $0x1c] sm:$0xf]
        %v11789 = vld [vmem:[%s9 + $0x20] sm:$0xf]
        %v11790 = vld [vmem:[%s9 + $0x24] sm:$0xf]
        %v11791 = vld [vmem:[%s9 + $0x28] sm:$0xf]
        %v11792 = vld [vmem:[%s9 + $0x2c] sm:$0xf]
        %v11793 = vld [vmem:[%s9 + $0x30] sm:$0xf]
        %v11794 = vld [vmem:[%s9 + $0x34] sm:$0xf]
        %v11795 = vld [vmem:[%s9 + $0x38] sm:$0xf]
        %v11796 = vld [vmem:[%s9 + $0x3c] sm:$0xf]
        %v11797 = vld [vmem:[%s9 + $0x40] sm:$0xf]
        %v11798 = vld [vmem:[%s9 + $0x44] sm:$0xf]
        %v11799 = vld [vmem:[%s9 + $0x48] sm:$0xf]
        %v11800 = vld [vmem:[%s9 + $0x4c] sm:$0xf]
        %v11801 = vld [vmem:[%s9 + $0x50] sm:$0xf]
        %v11802 = vld [vmem:[%s9 + $0x54] sm:$0xf]
        %v11803 = vld [vmem:[%s9 + $0x58] sm:$0xf]
        %v11804 = vld [vmem:[%s9 + $0x5c] sm:$0xf]
        %v11805 = vld [vmem:[%s9 + $0x60] sm:$0xf]
        %v11806 = vld [vmem:[%s9 + $0x64] sm:$0xf]
        %v11807 = vld [vmem:[%s9 + $0x68] sm:$0xf]
        %v11808 = vld [vmem:[%s9 + $0x6c] sm:$0xf]
        %v11809 = vld [vmem:[%s9 + $0x70] sm:$0xf]
        %v11810 = vld [vmem:[%s9 + $0x74] sm:$0xf]
        %v11811 = vld [vmem:[%s9 + $0x78] sm:$0xf]
        %v11812 = vld [vmem:[%s9 + $0x7c] sm:$0xf]
        %v11813 = vld [vmem:[#allocation16] sm:$0x1]
        %v11846 = vunpack.c.l.b16 %v11781
        %v11847 = vunpack.c.l.b16 %v11782
        %v11848 = vunpack.c.l.b16 %v11783
        %v11849 = vunpack.c.l.b16 %v11784
        %v11850 = vunpack.c.l.b16 %v11785
        %v11851 = vunpack.c.l.b16 %v11786
        %v11852 = vunpack.c.l.b16 %v11787
        %v11853 = vunpack.c.l.b16 %v11788
        %v11854 = vunpack.c.l.b16 %v11789
        %v11855 = vunpack.c.l.b16 %v11790
        %v11856 = vunpack.c.l.b16 %v11791
        %v11857 = vunpack.c.l.b16 %v11792
        %v11858 = vunpack.c.l.b16 %v11793
        %v11859 = vunpack.c.l.b16 %v11794
        %v11860 = vunpack.c.l.b16 %v11795
        %v11861 = vunpack.c.l.b16 %v11796
        %v11862 = vunpack.c.l.b16 %v11797
        %v11863 = vunpack.c.l.b16 %v11798
        %v11864 = vunpack.c.l.b16 %v11799
        %v11865 = vunpack.c.l.b16 %v11800
        %v11866 = vunpack.c.l.b16 %v11801
        %v11867 = vunpack.c.l.b16 %v11802
        %v11868 = vunpack.c.l.b16 %v11803
        %v11869 = vunpack.c.l.b16 %v11804
        %v11870 = vunpack.c.l.b16 %v11805
        %v11871 = vunpack.c.l.b16 %v11806
        %v11872 = vunpack.c.l.b16 %v11807
        %v11873 = vunpack.c.l.b16 %v11808
        %v11874 = vunpack.c.l.b16 %v11809
        %v11875 = vunpack.c.l.b16 %v11810
        %v11876 = vunpack.c.l.b16 %v11811
        %v11877 = vunpack.c.l.b16 %v11812
        %v11878 = vpack.c.b16 %v11847, %v11846
        %v11879 = vpack.c.b16 %v11849, %v11848
        %v11880 = vpack.c.b16 %v11851, %v11850
        %v11881 = vpack.c.b16 %v11853, %v11852
        %v11882 = vpack.c.b16 %v11855, %v11854
        %v11883 = vpack.c.b16 %v11857, %v11856
        %v11884 = vpack.c.b16 %v11859, %v11858
        %v11885 = vpack.c.b16 %v11861, %v11860
        %v11886 = vpack.c.b16 %v11863, %v11862
        %v11887 = vpack.c.b16 %v11865, %v11864
        %v11888 = vpack.c.b16 %v11867, %v11866
        %v11889 = vpack.c.b16 %v11869, %v11868
        %v11890 = vpack.c.b16 %v11871, %v11870
        %v11891 = vpack.c.b16 %v11873, %v11872
        %v11892 = vpack.c.b16 %v11875, %v11874
        %v11893 = vpack.c.b16 %v11877, %v11876
        %11910 = vmatprep.subr.bf16.mxu0 0
        %11911 = vmatpush1.bf16.msra.mxu0 %v11878
        %11912 = vmatprep.subr.bf16.mxu0 0
        %11913 = vmatpush1.bf16.msra.mxu0 %v11879
        %11914 = vmatprep.subr.bf16.mxu0 0
        %11915 = vmatpush1.bf16.msra.mxu0 %v11880
        %11916 = vmatprep.subr.bf16.mxu0 0
        %11917 = vmatpush1.bf16.msra.mxu0 %v11881
        %11918 = vmatprep.subr.bf16.mxu0 0
        %11919 = vmatpush1.bf16.msra.mxu0 %v11882
        %11920 = vmatprep.subr.bf16.mxu0 0
        %11921 = vmatpush1.bf16.msra.mxu0 %v11883
        %11922 = vmatprep.subr.bf16.mxu0 0
        %11923 = vmatpush1.bf16.msra.mxu0 %v11884
        %11924 = vmatprep.subr.bf16.mxu0 0
        %11925 = vmatpush1.bf16.msra.mxu0 %v11885
        %11926 = vmatprep.subr.bf16.mxu0 0
        %11927 = vmatpush1.bf16.msra.mxu0 %v11886
        %11928 = vmatprep.subr.bf16.mxu0 0
        %11929 = vmatpush1.bf16.msra.mxu0 %v11887
        %11930 = vmatprep.subr.bf16.mxu0 0
        %11931 = vmatpush1.bf16.msra.mxu0 %v11888
        %11932 = vmatprep.subr.bf16.mxu0 0
        %11933 = vmatpush1.bf16.msra.mxu0 %v11889
        %11934 = vmatprep.subr.bf16.mxu0 0
        %11935 = vmatpush1.bf16.msra.mxu0 %v11890
        %11936 = vmatprep.subr.bf16.mxu0 0
        %11937 = vmatpush1.bf16.msra.mxu0 %v11891
        %11938 = vmatprep.subr.bf16.mxu0 0
        %11939 = vmatpush1.bf16.msra.mxu0 %v11892
        %11940 = vmatprep.subr.bf16.mxu0 0
        %11941 = vmatpush1.bf16.msra.mxu0 %v11893
        %11942 = vmatprep.mubr.bf16.mxu0 %v11780
        %11943 = vmatmul.mubr.bf16.gmra.mrb[0].mxu0 %v11779
        %v11944 = vpop.f32.mrb[0].mxu0
        %v11945 = vadd.f32 %v11813, %v11944
        %v11946 = vpop.f32.mrb[0].mxu0
        %v11947 = vpop.f32.mrb[0].mxu0
        %v11948 = vpop.f32.mrb[0].mxu0
        %11949 = vdwg.mxu0
        %v11950 = vpack.c.bf16 %v11945, %v11945
        %v11951 = vld [vmem:[%s11] sm:$0xf]
        %v11952 = vld [vmem:[%s11 + $0x4] sm:$0xf]
        %v11953 = vld [vmem:[%s11 + $0x8] sm:$0xf]
        %v11954 = vld [vmem:[%s11 + $0xc] sm:$0xf]
        %v11955 = vld [vmem:[#allocation17] sm:$0x1]
        %v11960 = vunpack.c.l.b16 %v11951
        %v11961 = vunpack.c.l.b16 %v11952
        %v11962 = vunpack.c.l.b16 %v11953
        %v11963 = vunpack.c.l.b16 %v11954
        %v11964 = vpack.c.b16 %v11961, %v11960
        %v11965 = vpack.c.b16 %v11963, %v11962
        %vm11968 = vcmask 261120
        %v11970 = vsel %vm11968, %v11950, 0
        %11972 = vmatprep.subr.bf16.mxu0 0
        %11973 = vmatpush1.bf16.msra.mxu0 %v11964
        %11974 = vmatprep.subr.bf16.mxu0 0
        %11975 = vmatpush1.bf16.msra.mxu0 %v11965
        %11976 = vmatprep.subr.bf16.mxu0 0
        %11977 = vmatpush1.bf16.msra.mxu0 0
        %11978 = vmatprep.subr.bf16.mxu0 0
        %11979 = vmatpush1.bf16.msra.mxu0 0
        %11980 = vmatprep.subr.bf16.mxu0 0
        %11981 = vmatpush1.bf16.msra.mxu0 0
        %11982 = vmatprep.subr.bf16.mxu0 0
        %11983 = vmatpush1.bf16.msra.mxu0 0
        %11984 = vmatprep.subr.bf16.mxu0 0
        %11985 = vmatpush1.bf16.msra.mxu0 0
        %11986 = vmatprep.subr.bf16.mxu0 0
        %11987 = vmatpush1.bf16.msra.mxu0 0
        %11988 = vmatprep.subr.bf16.mxu0 0
        %11989 = vmatpush1.bf16.msra.mxu0 0
        %11990 = vmatprep.subr.bf16.mxu0 0
        %11991 = vmatpush1.bf16.msra.mxu0 0
        %11992 = vmatprep.subr.bf16.mxu0 0
        %11993 = vmatpush1.bf16.msra.mxu0 0
        %11994 = vmatprep.subr.bf16.mxu0 0
        %11995 = vmatpush1.bf16.msra.mxu0 0
        %11996 = vmatprep.subr.bf16.mxu0 0
        %11997 = vmatpush1.bf16.msra.mxu0 0
        %11998 = vmatprep.subr.bf16.mxu0 0
        %11999 = vmatpush1.bf16.msra.mxu0 0
        %12000 = vmatprep.subr.bf16.mxu0 0
        %12001 = vmatpush1.bf16.msra.mxu0 0
        %12002 = vmatprep.subr.bf16.mxu0 0
        %12003 = vmatpush1.bf16.msra.mxu0 0
        %12004 = vmatprep.mubr.bf16.mxu0 0
        %12005 = vmatmul.mubr.bf16.gmra.mrb[0].mxu0 %v11970
        %v12006 = vpop.f32.mrb[0].mxu0
        %v12007 = vadd.f32 %v11955, %v12006
        %v12008 = vpop.f32.mrb[0].mxu0
        %v12009 = vpop.f32.mrb[0].mxu0
        %v12010 = vpop.f32.mrb[0].mxu0
        %12011 = vdwg.mxu0
        %v12012 = vtanh.pop %v12007
        %v12013 = vadd.f32 %v12012, 0.0
        %vm12014 = vcmask 24576
        %12015 = vst.msk [vmem:[%s564] sm:$0x1] %vm12014, %v12013
        %s12016 = sand.u32 %s319, 1
        %s12017 = scalar_lea.sflag [#allocation4], %s12016
        %s12018 = sand.u32 %s319, 1
        %s12019 = scalar_lea.vmem [#allocation19], %s12018
        // Predicated region
        $region113: #{deterministic_policy_forward.1} parent=71 // pred_check
          %p12020 = pneg %p329
        $region114: #{deterministic_policy_forward.1} parent=71 // pred_check_branch
          %12022 = sbr.rel (%p12020) target = $region116
        $region115: #{deterministic_policy_forward.1} parent=71 // pred_region
          %s12024 = ssub.s32 16, 16
          %12025 = vsyncadd %s12017, %s12024
          %s12026 = smul.addr %s33, 16
          %s12027 = scalar_lea.hbm %s13, %s12026
          %s12029 = sshll.u32 %s12019, 4
          %s12030 = int_to_ptr.vmem [resolvable:$true] %s12029
          %12032 = dma.vmem_to_hbm [thread:$0]  %s12030, 16, %s12027, %s12017
        $region116: #{deterministic_policy_forward.1} parent=71 // pred_fallthru
          _
      $region72: #{deterministic_policy_forward.1} parent=5 // pred_fallthru
        _
      %p12033 = scmp.le.s32.totalorder 2, %s28
      // Predicated region
      $region117: #{deterministic_policy_forward.1} parent=5 // pred_check
        %p12034 = pneg %p12033
      $region118: #{deterministic_policy_forward.1} parent=5 // pred_check_branch
        %12036 = sbr.rel (%p12034) target = $region120
      $region119: #{deterministic_policy_forward.1} parent=5 // pred_region
        %s12037 = ssub.s32 %s28, 2
        // Predicated region
        $region121: #{deterministic_policy_forward.1} parent=119 // pred_check
          %p12038 = pneg %p335
        $region122: #{deterministic_policy_forward.1} parent=119 // pred_check_branch
          %12040 = sbr.rel (%p12038) target = $region124
        $region123: #{deterministic_policy_forward.1} parent=119 // pred_region
          %s12041 = sand.u32 %s320, 1
          %s12042 = scalar_lea.sflag [#allocation4], %s12041
          %s12043 = sand.u32 %s320, 1
          %s12044 = scalar_lea.vmem [#allocation19], %s12043
          %12045 = dma.done %s12042, 16
        $region124: #{deterministic_policy_forward.1} parent=119 // pred_fallthru
          _
      $region120: #{deterministic_policy_forward.1} parent=5 // pred_fallthru
        _
    $region6: #{deterministic_policy_forward.1} parent=1 // loop_footer
      %s32 = sadd.s32 1, %s28
    $region7: #{deterministic_policy_forward.1} parent=1 // loop_footer_branch
      %27 = sbr.rel target = $region3
    $region8: #{deterministic_policy_forward.1} parent=1 // loop_exit
      _
    %12046 = vsyncpa [#allocation3], 1
    %s12047 = scalar_lea.sflag [#allocation3], 1
    %12048 = vsyncpa %s12047, 1
    %12049 = vsyncpa [#allocation6], 1
    %12050 = vsyncpa [#allocation9], 1
    %12051 = vsyncpa [#allocation12], 1
    %12052 = vsyncpa [#allocation15], 1
    %12053 = vsyncpa [#allocation18], 1
    %12054 = vsyncpa [#allocation4], 1
    %s12055 = scalar_lea.sflag [#allocation4], 1
    %12056 = vsyncpa %s12055, 1

</llo_original>
